<compile_context>
chip_gen: v6e
topology: v6e:2x2x1
jax: 0.10.0
libtpu: 0.0.40
codegen_flags: <defaults>
</compile_context>

<pallas_src>
import numpy as np

import jax
import jax.numpy as jnp
from jax import lax
from jax.experimental import pallas as pl
from jax.experimental.pallas import tpu as pltpu

# Keep XLA-side matmuls/convs in full f32 so the pure-JAX reference and the
# parameter folding match the Pallas kernel's f32 accumulation.
jax.config.update("jax_default_matmul_precision", "highest")

_SIZEH = 9                       # lin1 = Linear(64, 16) forces (9-1)^2 = 64
_NPIX = _SIZEH * _SIZEH          # 81
_NFEAT = (_SIZEH - 1) ** 2       # 64
_BATCH_TILE = 512                # review fix: 8 -> 512 (sublane-aligned, 128x lanes)
_VMEM_LIMIT = 16 * 1024 * 1024   # safe on v5e/v6e (128 MiB) and v7x (64 MiB)


# ----------------------------------------------------------------------------
# Conv -> dense-matrix folding (parameter prep, plain JAX / numpy constants)
# ----------------------------------------------------------------------------

def _build_conv_patterns():
    """0/1 scatter patterns turning the fixed-size convs into dense matrices."""
    S, O = _SIZEH, _SIZEH - 1
    p3 = np.zeros((3, 3, S * S, S * S), np.float32)      # conv3: 3x3, pad=1
    for ky in range(3):
        for kx in range(3):
            for oy in range(S):
                for ox in range(S):
                    iy, ix = oy + ky - 1, ox + kx - 1
                    if 0 <= iy < S and 0 <= ix < S:
                        p3[ky, kx, oy * S + ox, iy * S + ix] = 1.0
    p2 = np.zeros((2, 2, O * O, S * S), np.float32)      # conv2: 2x2, valid
    for ky in range(2):
        for kx in range(2):
            for oy in range(O):
                for ox in range(O):
                    p2[ky, kx, oy * O + ox, (oy + ky) * S + (ox + kx)] = 1.0
    return jnp.asarray(p3), jnp.asarray(p2)


_P3, _P2 = _build_conv_patterns()


def _fold_block_params(layer, T, t):
    """Fold T, t, conv3, conv2 (all linear) into one (81 -> 64) affine map."""
    w3 = layer["conv3_w"].reshape(3, 3)
    b3 = layer["conv3_b"].reshape(())
    w2 = layer["conv2_w"].reshape(2, 2)
    b2 = layer["conv2_b"].reshape(())
    M3 = jnp.einsum("kl,klos->os", w3, _P3)               # (81, 81)
    M2 = jnp.einsum("kl,klos->os", w2, _P2)               # (64, 81)
    A_full = M2 @ M3 @ T                                   # (64, 81)
    c = M2 @ (M3 @ t.reshape(_NPIX) + b3) + b2             # (64,)
    return dict(
        A=A_full.T,                                        # (81, 64)
        c=c.reshape(1, _NFEAT),                            # (1, 64)
        W1t=layer["lin1_w"].T,                             # (64, 16)
        b1=layer["lin1_b"].reshape(1, 16),                 # (1, 16)
        w3row=layer["lin3_w"].reshape(1, 16),              # (1, 16)
        b3lin=layer["lin3_b"].reshape(1),                  # (1,)  -> SMEM scalar
    )


# ----------------------------------------------------------------------------
# Pallas kernel: fused  (T@h+t) -> convs -> softplus -> lin1 -> lin3 -> xi
# ----------------------------------------------------------------------------

def _softplus(x):
    # Stable softplus using only Mosaic-supported ops (EUP exp/log).
    return jnp.maximum(x, 0.0) + jnp.log(1.0 + jnp.exp(-jnp.abs(x)))


def _block_xi_kernel(h_ref, a_ref, c_ref, w1_ref, b1_ref, w3r_ref, b3_ref,
                     xi_ref):
    """h_ref: (TB, 81) batch tile of flattened h_vec; xi_ref: (1, TB)."""
    h = h_ref[...]                                                      # (TB,81)
    # Folded (T,t,conv3,conv2): z1 = conv2(conv3(reshape(T h + t)))     # (TB,64)
    z1 = jnp.dot(h, a_ref[...], preferred_element_type=jnp.float32) + c_ref[...]
    x = _softplus(z1)
    # Linear(64, 16) + softplus
    z2 = jnp.dot(x, w1_ref[...], preferred_element_type=jnp.float32) + b1_ref[...]
    x = _softplus(z2)                                                   # (TB,16)
    # Linear(16, 1): computed as w_row @ x^T so the result lands with the
    # batch on the LANE axis -> lane-dense (1, TB) store (no width-1 vst.msk).
    z3 = jnp.dot(w3r_ref[...], x.T,
                 preferred_element_type=jnp.float32) + b3_ref[0]        # (1,TB)
    xi_ref[...] = _softplus(z3) * 100000000.0


def _xi_tiles(folded, h_rows, n_tiles, tb):
    """Run the fused kernel over `n_tiles` batch tiles of width `tb`.

    h_rows: (n_rows, 81) with n_rows >= n_tiles * tb (only full, in-bounds
    tiles are touched -> no input padding / copying needed for the bulk).
    Returns xi tiles of shape (n_tiles, 1, tb), batch on the lane axis.
    """
    return pl.pallas_call(
        _block_xi_kernel,
        out_shape=jax.ShapeDtypeStruct((n_tiles, 1, tb), jnp.float32),
        grid_spec=pltpu.PrefetchScalarGridSpec(
            num_scalar_prefetch=0,
            grid=(n_tiles,),
            in_specs=[
                pl.BlockSpec((tb, _NPIX), lambda i: (i, 0)),      # h tile
                pl.BlockSpec((_NPIX, _NFEAT), lambda i: (0, 0)),  # folded A
                pl.BlockSpec((1, _NFEAT), lambda i: (0, 0)),      # folded bias
                pl.BlockSpec((_NFEAT, 16), lambda i: (0, 0)),     # lin1 W^T
                pl.BlockSpec((1, 16), lambda i: (0, 0)),          # lin1 b
                pl.BlockSpec((1, 16), lambda i: (0, 0)),          # lin3 w row
                pl.BlockSpec(memory_space=pltpu.MemorySpace.SMEM),  # lin3 b
            ],
            out_specs=pl.BlockSpec((None, 1, tb), lambda i: (i, 0, 0)),
        ),
        compiler_params=pltpu.CompilerParams(
            dimension_semantics=("parallel",),      # megacore-shardable batch
            vmem_limit_bytes=_VMEM_LIMIT),
    )(h_rows, folded["A"], folded["c"], folded["W1t"], folded["b1"],
      folded["w3row"], folded["b3lin"])


def cnn_bar_xi_pallas(folded, h_flat, tb=_BATCH_TILE):
    """h_flat: (N, 81) f32 -> xi: (N,) f32."""
    n = h_flat.shape[0]
    parts = []

    # Aligned bulk: read straight from the caller's array (grid covers only
    # full tiles) -- no jnp.pad / slice copy of the big input.
    n_bulk = (n // tb) * tb
    if n_bulk:
        out = _xi_tiles(folded, h_flat, n_bulk // tb, tb)   # (nt, 1, tb)
        parts.append(out.reshape(n_bulk))

    # Small remainder (< tb rows): pad only the tail up to a sublane-aligned
    # tile and run one extra tiny grid step.
    rem = n - n_bulk
    if rem:
        rem_tile = ((rem + 7) // 8) * 8
        tail = h_flat[n_bulk:]
        if rem_tile != rem:
            tail = jnp.pad(tail, ((0, rem_tile - rem), (0, 0)))
        out = _xi_tiles(folded, tail, 1, rem_tile)          # (1, 1, rem_tile)
        parts.append(out.reshape(rem_tile)[:rem])

    return parts[0] if len(parts) == 1 else jnp.concatenate(parts)


# ----------------------------------------------------------------------------
# Parameters (deterministic synthetic init mimicking PyTorch defaults)
# ----------------------------------------------------------------------------

def _uniform(key, shape, bound):
    return jax.random.uniform(key, shape, jnp.float32, -bound, bound)


def _init_cnn_bar(key):
    ks = jax.random.split(key, 8)
    return dict(
        conv3_w=_uniform(ks[0], (1, 1, 3, 3), 1.0 / 3.0),
        conv3_b=_uniform(ks[1], (1,), 1.0 / 3.0),
        conv2_w=_uniform(ks[2], (1, 1, 2, 2), 0.5),
        conv2_b=_uniform(ks[3], (1,), 0.5),
        lin1_w=_uniform(ks[4], (16, 64), 0.125),
        lin1_b=_uniform(ks[5], (16,), 0.125),
        lin3_w=_uniform(ks[6], (1, 16), 0.25),
        lin3_b=_uniform(ks[7], (1,), 0.25),
    )


def init_model_params(key, n_layers):
    keys = jax.random.split(key, 2 + n_layers)
    # Synthetic stand-ins for the .mat-loaded T (81x81) and t (81x1).
    T = jax.random.normal(keys[0], (_NPIX, _NPIX), jnp.float32) / float(_SIZEH)
    t = 0.1 * jax.random.normal(keys[1], (_NPIX, 1), jnp.float32)
    layers = [_init_cnn_bar(k) for k in keys[2:]]
    return dict(T=T, t=t, layers=layers)


# ----------------------------------------------------------------------------
# Model forward (translatable part of myModel / Block) + pure-JAX reference
# ----------------------------------------------------------------------------

def my_model_forward(params, h_vec, block=0):
    """xi prediction of Layers[block] (mode='first_layer'/'greedy' path).

    h_vec: (batch, 81, 1).  Returns xi: (batch,).
    The subsequent cardan.apply VBA update is not reproducible (see TODOs).
    """
    folded = _fold_block_params(params["layers"][block], params["T"], params["t"])
    h_flat = h_vec.reshape(h_vec.shape[0], -1)
    return cnn_bar_xi_pallas(folded, h_flat)


def _reference_forward(params, h_vec, block=0):
    """Literal (un-folded) JAX port of Block.forward's xi path, for checking."""
    layer = params["layers"][block]
    T, t = params["T"], params["t"]
    batch = h_vec.shape[0]
    hhat = jnp.einsum("ij,bjk->bik", T, h_vec) + t                  # (B,81,1)
    img = hhat.reshape(batch, 1, _SIZEH, _SIZEH)
    dn = ("NCHW", "OIHW", "NCHW")
    y = lax.conv_general_dilated(img, layer["conv3_w"], (1, 1),
                                 [(1, 1), (1, 1)], dimension_numbers=dn)
    y = y + layer["conv3_b"].reshape(1, 1, 1, 1)
    y = lax.conv_general_dilated(y, layer["conv2_w"], (1, 1),
                                 [(0, 0), (0, 0)], dimension_numbers=dn)
    y = y + layer["conv2_b"].reshape(1, 1, 1, 1)
    y = jax.nn.softplus(y)
    y = y.reshape(batch, -1)                                        # (B,64)
    y = jax.nn.softplus(y @ layer["lin1_w"].T + layer["lin1_b"])
    y = jax.nn.softplus(y @ layer["lin3_w"].T + layer["lin3_b"])
    return y.reshape(-1) * 100000000.0


if __name__ == "__main__":
    key = jax.random.PRNGKey(0)
    k_params, k_h = jax.random.split(key)

    n_layers = 3
    # 2 full 512-row tiles (so the "parallel" grid can use both v7x TCs)
    # plus a 3-row remainder to exercise the tail path.
    batch = 2 * _BATCH_TILE + 3
    params = init_model_params(k_params, n_layers)
    h_vec = 0.1 * jax.random.normal(k_h, (batch, _NPIX, 1), jnp.float32)

    fwd = jax.jit(my_model_forward, static_argnames=("block",))
    xi = jax.block_until_ready(fwd(params, h_vec, block=0))

    assert xi.shape == (batch,), xi.shape
    assert bool(jnp.all(jnp.isfinite(xi)))

    # Loose tolerance is intentional: *1e8 output scaling plus reassociation
    # from folding T/convs into one matrix (not a kernel bug).
    xi_ref = _reference_forward(params, h_vec, block=0)
    np.testing.assert_allclose(np.asarray(xi), np.asarray(xi_ref),
                               rtol=1e-2, atol=1e3)
    print("KERNEL_OK")
</pallas_src>

<mosaic_0001>
module attributes {stable_mosaic.version = 11 : i64} {
  func.func @_block_xi_kernel(%arg0: i32, %arg1: memref<512x81xf32, #tpu.memory_space<vmem>>, %arg2: memref<81x64xf32, #tpu.memory_space<vmem>>, %arg3: memref<1x64xf32, #tpu.memory_space<vmem>>, %arg4: memref<64x16xf32, #tpu.memory_space<vmem>>, %arg5: memref<1x16xf32, #tpu.memory_space<vmem>>, %arg6: memref<1x16xf32, #tpu.memory_space<vmem>>, %arg7: memref<1xf32, #tpu.memory_space<smem>>, %arg8: memref<1x1x512xf32, #tpu.memory_space<vmem>>) attributes {dimension_semantics = [#tpu.dimension_semantics<parallel>], iteration_bounds = array<i64: 2>, scalar_prefetch = 0 : i64, scratch_operands = 0 : i64, tpu.core_type = #tpu.core_type<tc>, window_params = [{transform_indices = @transform_0, window_bounds = array<i64: 512, 81>}, {pipeline_mode = #tpu.pipeline_mode<synchronous>, transform_indices = @transform_1, window_bounds = array<i64: 81, 64>}, {pipeline_mode = #tpu.pipeline_mode<synchronous>, transform_indices = @transform_2, window_bounds = array<i64: 1, 64>}, {pipeline_mode = #tpu.pipeline_mode<synchronous>, transform_indices = @transform_3, window_bounds = array<i64: 64, 16>}, {pipeline_mode = #tpu.pipeline_mode<synchronous>, transform_indices = @transform_4, window_bounds = array<i64: 1, 16>}, {pipeline_mode = #tpu.pipeline_mode<synchronous>, transform_indices = @transform_5, window_bounds = array<i64: 1, 16>}, {transform_indices = @transform_6, window_bounds = array<i64: 1>}, {transform_indices = @transform_7, window_bounds = array<i64: 1, 1, 512>}]} {
    %c0 = arith.constant 0 : index
    %c0_0 = arith.constant 0 : index
    %0 = vector.load %arg1[%c0, %c0_0] : memref<512x81xf32, #tpu.memory_space<vmem>>, vector<512x81xf32>
    %c0_1 = arith.constant 0 : index
    %c0_2 = arith.constant 0 : index
    %1 = vector.load %arg2[%c0_1, %c0_2] : memref<81x64xf32, #tpu.memory_space<vmem>>, vector<81x64xf32>
    %cst = arith.constant dense<0.000000e+00> : vector<512x64xf32>
    %2 = tpu.matmul %0, %1, %cst {dimension_numbers = #tpu.dot_dimension_numbers<[1], [0], [0], [1], [0, 0, 1, 1], [], []>, precision = #tpu.contract_precision<fp32>} : vector<512x81xf32>, vector<81x64xf32>, vector<512x64xf32> -> vector<512x64xf32>
    %c0_3 = arith.constant 0 : index
    %c0_4 = arith.constant 0 : index
    %3 = vector.load %arg3[%c0_3, %c0_4] : memref<1x64xf32, #tpu.memory_space<vmem>>, vector<1x64xf32>
    %4 = vector.broadcast %3 : vector<1x64xf32> to vector<512x64xf32>
    %5 = arith.addf %2, %4 : vector<512x64xf32>
    %cst_5 = arith.constant 0.000000e+00 : f32
    %6 = vector.broadcast %cst_5 : f32 to vector<512x64xf32>
    %7 = arith.maximumf %5, %6 : vector<512x64xf32>
    %8 = math.absf %5 : vector<512x64xf32>
    %cst_6 = arith.constant 0.000000e+00 : f32
    %9 = vector.broadcast %cst_6 : f32 to vector<512x64xf32>
    %10 = arith.subf %9, %8 : vector<512x64xf32>
    %11 = math.exp %10 : vector<512x64xf32>
    %cst_7 = arith.constant 1.000000e+00 : f32
    %12 = vector.broadcast %cst_7 : f32 to vector<512x64xf32>
    %13 = arith.addf %12, %11 : vector<512x64xf32>
    %14 = math.log %13 : vector<512x64xf32>
    %15 = arith.addf %7, %14 : vector<512x64xf32>
    %c0_8 = arith.constant 0 : index
    %c0_9 = arith.constant 0 : index
    %16 = vector.load %arg4[%c0_8, %c0_9] : memref<64x16xf32, #tpu.memory_space<vmem>>, vector<64x16xf32>
    %cst_10 = arith.constant dense<0.000000e+00> : vector<512x16xf32>
    %17 = tpu.matmul %15, %16, %cst_10 {dimension_numbers = #tpu.dot_dimension_numbers<[1], [0], [0], [1], [0, 0, 1, 1], [], []>, precision = #tpu.contract_precision<fp32>} : vector<512x64xf32>, vector<64x16xf32>, vector<512x16xf32> -> vector<512x16xf32>
    %c0_11 = arith.constant 0 : index
    %c0_12 = arith.constant 0 : index
    %18 = vector.load %arg5[%c0_11, %c0_12] : memref<1x16xf32, #tpu.memory_space<vmem>>, vector<1x16xf32>
    %19 = vector.broadcast %18 : vector<1x16xf32> to vector<512x16xf32>
    %20 = arith.addf %17, %19 : vector<512x16xf32>
    %cst_13 = arith.constant 0.000000e+00 : f32
    %21 = vector.broadcast %cst_13 : f32 to vector<512x16xf32>
    %22 = arith.maximumf %20, %21 : vector<512x16xf32>
    %23 = math.absf %20 : vector<512x16xf32>
    %cst_14 = arith.constant 0.000000e+00 : f32
    %24 = vector.broadcast %cst_14 : f32 to vector<512x16xf32>
    %25 = arith.subf %24, %23 : vector<512x16xf32>
    %26 = math.exp %25 : vector<512x16xf32>
    %cst_15 = arith.constant 1.000000e+00 : f32
    %27 = vector.broadcast %cst_15 : f32 to vector<512x16xf32>
    %28 = arith.addf %27, %26 : vector<512x16xf32>
    %29 = math.log %28 : vector<512x16xf32>
    %30 = arith.addf %22, %29 : vector<512x16xf32>
    %c0_16 = arith.constant 0 : index
    %c0_17 = arith.constant 0 : index
    %31 = vector.load %arg6[%c0_16, %c0_17] : memref<1x16xf32, #tpu.memory_space<vmem>>, vector<1x16xf32>
    %32 = tpu.transpose %30, [1, 0] : vector<512x16xf32> -> vector<16x512xf32>
    %cst_18 = arith.constant dense<0.000000e+00> : vector<1x512xf32>
    %33 = tpu.matmul %31, %32, %cst_18 {dimension_numbers = #tpu.dot_dimension_numbers<[1], [0], [0], [1], [0, 0, 1, 1], [], []>, precision = #tpu.contract_precision<fp32>} : vector<1x16xf32>, vector<16x512xf32>, vector<1x512xf32> -> vector<1x512xf32>
    %c0_19 = arith.constant 0 : index
    %34 = memref.load %arg7[%c0_19] : memref<1xf32, #tpu.memory_space<smem>>
    %35 = vector.broadcast %34 : f32 to vector<1x512xf32>
    %36 = arith.addf %33, %35 : vector<1x512xf32>
    %cst_20 = arith.constant 0.000000e+00 : f32
    %37 = vector.broadcast %cst_20 : f32 to vector<1x512xf32>
    %38 = arith.maximumf %36, %37 : vector<1x512xf32>
    %39 = math.absf %36 : vector<1x512xf32>
    %cst_21 = arith.constant 0.000000e+00 : f32
    %40 = vector.broadcast %cst_21 : f32 to vector<1x512xf32>
    %41 = arith.subf %40, %39 : vector<1x512xf32>
    %42 = math.exp %41 : vector<1x512xf32>
    %cst_22 = arith.constant 1.000000e+00 : f32
    %43 = vector.broadcast %cst_22 : f32 to vector<1x512xf32>
    %44 = arith.addf %43, %42 : vector<1x512xf32>
    %45 = math.log %44 : vector<1x512xf32>
    %46 = arith.addf %38, %45 : vector<1x512xf32>
    %cst_23 = arith.constant 1.000000e+08 : f32
    %47 = vector.broadcast %cst_23 : f32 to vector<1x512xf32>
    %48 = arith.mulf %46, %47 : vector<1x512xf32>
    %c0_24 = arith.constant 0 : index
    %c0_25 = arith.constant 0 : index
    %c0_26 = arith.constant 0 : index
    %49 = vector.load %arg8[%c0_24, %c0_25, %c0_26] : memref<1x1x512xf32, #tpu.memory_space<vmem>>, vector<1x1x512xf32>
    %50 = vector.shape_cast %49 : vector<1x1x512xf32> to vector<1x512xf32>
    %51 = vector.shape_cast %48 : vector<1x512xf32> to vector<1x1x512xf32>
    tpu.vector_store %arg8[%c0_24, %c0_25, %c0_26], %51 {strides = array<i32>} : memref<1x1x512xf32, #tpu.memory_space<vmem>>, vector<1x1x512xf32>,
    return
  }
  func.func @transform_0(%arg0: i32) -> (i32, i32) {
    %c0_i32 = arith.constant 0 : i32
    %c0_i32_0 = arith.constant 0 : i32
    return %arg0, %c0_i32 : i32, i32
  }
  func.func @transform_1(%arg0: i32) -> (i32, i32) {
    %c0_i32 = arith.constant 0 : i32
    %c0_i32_0 = arith.constant 0 : i32
    %c0_i32_1 = arith.constant 0 : i32
    return %c0_i32, %c0_i32_0 : i32, i32
  }
  func.func @transform_2(%arg0: i32) -> (i32, i32) {
    %c0_i32 = arith.constant 0 : i32
    %c0_i32_0 = arith.constant 0 : i32
    %c0_i32_1 = arith.constant 0 : i32
    return %c0_i32, %c0_i32_0 : i32, i32
  }
  func.func @transform_3(%arg0: i32) -> (i32, i32) {
    %c0_i32 = arith.constant 0 : i32
    %c0_i32_0 = arith.constant 0 : i32
    %c0_i32_1 = arith.constant 0 : i32
    return %c0_i32, %c0_i32_0 : i32, i32
  }
  func.func @transform_4(%arg0: i32) -> (i32, i32) {
    %c0_i32 = arith.constant 0 : i32
    %c0_i32_0 = arith.constant 0 : i32
    %c0_i32_1 = arith.constant 0 : i32
    return %c0_i32, %c0_i32_0 : i32, i32
  }
  func.func @transform_5(%arg0: i32) -> (i32, i32) {
    %c0_i32 = arith.constant 0 : i32
    %c0_i32_0 = arith.constant 0 : i32
    %c0_i32_1 = arith.constant 0 : i32
    return %c0_i32, %c0_i32_0 : i32, i32
  }
  func.func @transform_6(%arg0: i32) -> i32 {
    %c0_i32 = arith.constant 0 : i32
    %c0_i32_0 = arith.constant 0 : i32
    return %c0_i32 : i32
  }
  func.func @transform_7(%arg0: i32) -> (i32, i32, i32) {
    %c0_i32 = arith.constant 0 : i32
    %c0_i32_0 = arith.constant 0 : i32
    %c0_i32_1 = arith.constant 0 : i32
    return %arg0, %c0_i32, %c0_i32_0 : i32, i32, i32
  }
}

module attributes {stable_mosaic.version = 11 : i64} {
  func.func @_block_xi_kernel(%arg0: i32, %arg1: memref<8x81xf32, #tpu.memory_space<vmem>>, %arg2: memref<81x64xf32, #tpu.memory_space<vmem>>, %arg3: memref<1x64xf32, #tpu.memory_space<vmem>>, %arg4: memref<64x16xf32, #tpu.memory_space<vmem>>, %arg5: memref<1x16xf32, #tpu.memory_space<vmem>>, %arg6: memref<1x16xf32, #tpu.memory_space<vmem>>, %arg7: memref<1xf32, #tpu.memory_space<smem>>, %arg8: memref<1x1x8xf32, #tpu.memory_space<vmem>>) attributes {dimension_semantics = [#tpu.dimension_semantics<parallel>], iteration_bounds = array<i64: 1>, scalar_prefetch = 0 : i64, scratch_operands = 0 : i64, tpu.core_type = #tpu.core_type<tc>, window_params = [{transform_indices = @transform_0, window_bounds = array<i64: 8, 81>}, {pipeline_mode = #tpu.pipeline_mode<synchronous>, transform_indices = @transform_1, window_bounds = array<i64: 81, 64>}, {pipeline_mode = #tpu.pipeline_mode<synchronous>, transform_indices = @transform_2, window_bounds = array<i64: 1, 64>}, {pipeline_mode = #tpu.pipeline_mode<synchronous>, transform_indices = @transform_3, window_bounds = array<i64: 64, 16>}, {pipeline_mode = #tpu.pipeline_mode<synchronous>, transform_indices = @transform_4, window_bounds = array<i64: 1, 16>}, {pipeline_mode = #tpu.pipeline_mode<synchronous>, transform_indices = @transform_5, window_bounds = array<i64: 1, 16>}, {transform_indices = @transform_6, window_bounds = array<i64: 1>}, {transform_indices = @transform_7, window_bounds = array<i64: 1, 1, 8>}]} {
    %c0 = arith.constant 0 : index
    %c0_0 = arith.constant 0 : index
    %0 = vector.load %arg1[%c0, %c0_0] : memref<8x81xf32, #tpu.memory_space<vmem>>, vector<8x81xf32>
    %c0_1 = arith.constant 0 : index
    %c0_2 = arith.constant 0 : index
    %1 = vector.load %arg2[%c0_1, %c0_2] : memref<81x64xf32, #tpu.memory_space<vmem>>, vector<81x64xf32>
    %cst = arith.constant dense<0.000000e+00> : vector<8x64xf32>
    %2 = tpu.matmul %0, %1, %cst {dimension_numbers = #tpu.dot_dimension_numbers<[1], [0], [0], [1], [0, 0, 1, 1], [], []>, precision = #tpu.contract_precision<fp32>} : vector<8x81xf32>, vector<81x64xf32>, vector<8x64xf32> -> vector<8x64xf32>
    %c0_3 = arith.constant 0 : index
    %c0_4 = arith.constant 0 : index
    %3 = vector.load %arg3[%c0_3, %c0_4] : memref<1x64xf32, #tpu.memory_space<vmem>>, vector<1x64xf32>
    %4 = vector.broadcast %3 : vector<1x64xf32> to vector<8x64xf32>
    %5 = arith.addf %2, %4 : vector<8x64xf32>
    %cst_5 = arith.constant 0.000000e+00 : f32
    %6 = vector.broadcast %cst_5 : f32 to vector<8x64xf32>
    %7 = arith.maximumf %5, %6 : vector<8x64xf32>
    %8 = math.absf %5 : vector<8x64xf32>
    %cst_6 = arith.constant 0.000000e+00 : f32
    %9 = vector.broadcast %cst_6 : f32 to vector<8x64xf32>
    %10 = arith.subf %9, %8 : vector<8x64xf32>
    %11 = math.exp %10 : vector<8x64xf32>
    %cst_7 = arith.constant 1.000000e+00 : f32
    %12 = vector.broadcast %cst_7 : f32 to vector<8x64xf32>
    %13 = arith.addf %12, %11 : vector<8x64xf32>
    %14 = math.log %13 : vector<8x64xf32>
    %15 = arith.addf %7, %14 : vector<8x64xf32>
    %c0_8 = arith.constant 0 : index
    %c0_9 = arith.constant 0 : index
    %16 = vector.load %arg4[%c0_8, %c0_9] : memref<64x16xf32, #tpu.memory_space<vmem>>, vector<64x16xf32>
    %cst_10 = arith.constant dense<0.000000e+00> : vector<8x16xf32>
    %17 = tpu.matmul %15, %16, %cst_10 {dimension_numbers = #tpu.dot_dimension_numbers<[1], [0], [0], [1], [0, 0, 1, 1], [], []>, precision = #tpu.contract_precision<fp32>} : vector<8x64xf32>, vector<64x16xf32>, vector<8x16xf32> -> vector<8x16xf32>
    %c0_11 = arith.constant 0 : index
    %c0_12 = arith.constant 0 : index
    %18 = vector.load %arg5[%c0_11, %c0_12] : memref<1x16xf32, #tpu.memory_space<vmem>>, vector<1x16xf32>
    %19 = vector.broadcast %18 : vector<1x16xf32> to vector<8x16xf32>
    %20 = arith.addf %17, %19 : vector<8x16xf32>
    %cst_13 = arith.constant 0.000000e+00 : f32
    %21 = vector.broadcast %cst_13 : f32 to vector<8x16xf32>
    %22 = arith.maximumf %20, %21 : vector<8x16xf32>
    %23 = math.absf %20 : vector<8x16xf32>
    %cst_14 = arith.constant 0.000000e+00 : f32
    %24 = vector.broadcast %cst_14 : f32 to vector<8x16xf32>
    %25 = arith.subf %24, %23 : vector<8x16xf32>
    %26 = math.exp %25 : vector<8x16xf32>
    %cst_15 = arith.constant 1.000000e+00 : f32
    %27 = vector.broadcast %cst_15 : f32 to vector<8x16xf32>
    %28 = arith.addf %27, %26 : vector<8x16xf32>
    %29 = math.log %28 : vector<8x16xf32>
    %30 = arith.addf %22, %29 : vector<8x16xf32>
    %c0_16 = arith.constant 0 : index
    %c0_17 = arith.constant 0 : index
    %31 = vector.load %arg6[%c0_16, %c0_17] : memref<1x16xf32, #tpu.memory_space<vmem>>, vector<1x16xf32>
    %32 = tpu.transpose %30, [1, 0] : vector<8x16xf32> -> vector<16x8xf32>
    %cst_18 = arith.constant dense<0.000000e+00> : vector<1x8xf32>
    %33 = tpu.matmul %31, %32, %cst_18 {dimension_numbers = #tpu.dot_dimension_numbers<[1], [0], [0], [1], [0, 0, 1, 1], [], []>, precision = #tpu.contract_precision<fp32>} : vector<1x16xf32>, vector<16x8xf32>, vector<1x8xf32> -> vector<1x8xf32>
    %c0_19 = arith.constant 0 : index
    %34 = memref.load %arg7[%c0_19] : memref<1xf32, #tpu.memory_space<smem>>
    %35 = vector.broadcast %34 : f32 to vector<1x8xf32>
    %36 = arith.addf %33, %35 : vector<1x8xf32>
    %cst_20 = arith.constant 0.000000e+00 : f32
    %37 = vector.broadcast %cst_20 : f32 to vector<1x8xf32>
    %38 = arith.maximumf %36, %37 : vector<1x8xf32>
    %39 = math.absf %36 : vector<1x8xf32>
    %cst_21 = arith.constant 0.000000e+00 : f32
    %40 = vector.broadcast %cst_21 : f32 to vector<1x8xf32>
    %41 = arith.subf %40, %39 : vector<1x8xf32>
    %42 = math.exp %41 : vector<1x8xf32>
    %cst_22 = arith.constant 1.000000e+00 : f32
    %43 = vector.broadcast %cst_22 : f32 to vector<1x8xf32>
    %44 = arith.addf %43, %42 : vector<1x8xf32>
    %45 = math.log %44 : vector<1x8xf32>
    %46 = arith.addf %38, %45 : vector<1x8xf32>
    %cst_23 = arith.constant 1.000000e+08 : f32
    %47 = vector.broadcast %cst_23 : f32 to vector<1x8xf32>
    %48 = arith.mulf %46, %47 : vector<1x8xf32>
    %c0_24 = arith.constant 0 : index
    %c0_25 = arith.constant 0 : index
    %c0_26 = arith.constant 0 : index
    %49 = vector.load %arg8[%c0_24, %c0_25, %c0_26] : memref<1x1x8xf32, #tpu.memory_space<vmem>>, vector<1x1x8xf32>
    %50 = vector.shape_cast %49 : vector<1x1x8xf32> to vector<1x8xf32>
    %51 = vector.shape_cast %48 : vector<1x8xf32> to vector<1x1x8xf32>
    tpu.vector_store %arg8[%c0_24, %c0_25, %c0_26], %51 {strides = array<i32>} : memref<1x1x8xf32, #tpu.memory_space<vmem>>, vector<1x1x8xf32>,
    return
  }
  func.func @transform_0(%arg0: i32) -> (i32, i32) {
    %c0_i32 = arith.constant 0 : i32
    %c0_i32_0 = arith.constant 0 : i32
    return %arg0, %c0_i32 : i32, i32
  }
  func.func @transform_1(%arg0: i32) -> (i32, i32) {
    %c0_i32 = arith.constant 0 : i32
    %c0_i32_0 = arith.constant 0 : i32
    %c0_i32_1 = arith.constant 0 : i32
    return %c0_i32, %c0_i32_0 : i32, i32
  }
  func.func @transform_2(%arg0: i32) -> (i32, i32) {
    %c0_i32 = arith.constant 0 : i32
    %c0_i32_0 = arith.constant 0 : i32
    %c0_i32_1 = arith.constant 0 : i32
    return %c0_i32, %c0_i32_0 : i32, i32
  }
  func.func @transform_3(%arg0: i32) -> (i32, i32) {
    %c0_i32 = arith.constant 0 : i32
    %c0_i32_0 = arith.constant 0 : i32
    %c0_i32_1 = arith.constant 0 : i32
    return %c0_i32, %c0_i32_0 : i32, i32
  }
  func.func @transform_4(%arg0: i32) -> (i32, i32) {
    %c0_i32 = arith.constant 0 : i32
    %c0_i32_0 = arith.constant 0 : i32
    %c0_i32_1 = arith.constant 0 : i32
    return %c0_i32, %c0_i32_0 : i32, i32
  }
  func.func @transform_5(%arg0: i32) -> (i32, i32) {
    %c0_i32 = arith.constant 0 : i32
    %c0_i32_0 = arith.constant 0 : i32
    %c0_i32_1 = arith.constant 0 : i32
    return %c0_i32, %c0_i32_0 : i32, i32
  }
  func.func @transform_6(%arg0: i32) -> i32 {
    %c0_i32 = arith.constant 0 : i32
    %c0_i32_0 = arith.constant 0 : i32
    return %c0_i32 : i32
  }
  func.func @transform_7(%arg0: i32) -> (i32, i32, i32) {
    %c0_i32 = arith.constant 0 : i32
    %c0_i32_0 = arith.constant 0 : i32
    %c0_i32_1 = arith.constant 0 : i32
    return %arg0, %c0_i32, %c0_i32_0 : i32, i32, i32
  }
}

</mosaic_0001>

<llo_original>
// kernel: my_model_forward.3
$region0: #{my_model_forward.3}
  #allocation0 [shape = 'u32[]', space=smem, size = 0x4, offset = 0x4, fixed_abs, tag = 'smem constant byte address 0x4 - core index']
  #allocation1 [shape = 'u32[144,128]{1,0:T(1,128)}', space=vmem, size = 0x12000, scoped, tag = 'internal scratch']
  #allocation2 [shape = 'f32[1]{0:T(128)S(6)}', space=smem, size = 0x200, scoped, tag = 'scoped memory for my_model_forward.3']
  %s0 = inlined_call_operand.vmem [shape: f32[8,81], index: 0, kind: input, shape index: {}]
  %s1 = inlined_call_operand.vmem [shape: f32[81,64], index: 1, kind: input, shape index: {}]
  %s2 = inlined_call_operand.vmem [shape: f32[1,64], index: 2, kind: input, shape index: {}]
  %s3 = inlined_call_operand.vmem [shape: f32[64,16], index: 3, kind: input, shape index: {}]
  %s4 = inlined_call_operand.vmem [shape: f32[1,16], index: 4, kind: input, shape index: {}]
  %s5 = inlined_call_operand.vmem [shape: f32[1,16], index: 5, kind: input, shape index: {}]
  %s6 = inlined_call_operand.<no memory space> [shape: f32[1], index: 6, kind: input, shape index: {}]
  %s7 = inlined_call_operand.vmem [shape: f32[1,1,8], index: 7, kind: output, shape index: {}]
  %s8 = sld [smem:[#allocation0]]
  $region38: #{my_model_forward.3} parent=0
    _
  %s10 = ssub.s32 1, %s8
  %s11 = scalar_select 0, %s10, %s8
  %12 = sst [smem:[#allocation2]] %s6
  // Predicated region
  $region2: #{my_model_forward.3} parent=0 // pred_check
    _
  $region3: #{my_model_forward.3} parent=0 // pred_check_branch
    %14 = sbr.rel (0) target = $region5
  $region4: #{my_model_forward.3} parent=0 // pred_region
    _
  $region5: #{my_model_forward.3} parent=0 // pred_fallthru
    _
  // Predicated region
  $region6: #{my_model_forward.3} parent=0 // pred_check
    _
  $region7: #{my_model_forward.3} parent=0 // pred_check_branch
    %16 = sbr.rel (0) target = $region9
  $region8: #{my_model_forward.3} parent=0 // pred_region
    _
  $region9: #{my_model_forward.3} parent=0 // pred_fallthru
    _
  // Predicated region
  $region10: #{my_model_forward.3} parent=0 // pred_check
    _
  $region11: #{my_model_forward.3} parent=0 // pred_check_branch
    %18 = sbr.rel (0) target = $region13
  $region12: #{my_model_forward.3} parent=0 // pred_region
    _
  $region13: #{my_model_forward.3} parent=0 // pred_fallthru
    _
  // Predicated region
  $region14: #{my_model_forward.3} parent=0 // pred_check
    _
  $region15: #{my_model_forward.3} parent=0 // pred_check_branch
    %20 = sbr.rel (0) target = $region17
  $region16: #{my_model_forward.3} parent=0 // pred_region
    _
  $region17: #{my_model_forward.3} parent=0 // pred_fallthru
    _
  // Predicated region
  $region18: #{my_model_forward.3} parent=0 // pred_check
    _
  $region19: #{my_model_forward.3} parent=0 // pred_check_branch
    %22 = sbr.rel (0) target = $region21
  $region20: #{my_model_forward.3} parent=0 // pred_region
    _
  $region21: #{my_model_forward.3} parent=0 // pred_fallthru
    _
  // Predicated region
  $region22: #{my_model_forward.3} parent=0 // pred_check
    _
  $region23: #{my_model_forward.3} parent=0 // pred_check_branch
    %24 = sbr.rel (0) target = $region25
  $region24: #{my_model_forward.3} parent=0 // pred_region
    _
  $region25: #{my_model_forward.3} parent=0 // pred_fallthru
    _
  // Predicated region
  $region26: #{my_model_forward.3} parent=0 // pred_check
    _
  $region27: #{my_model_forward.3} parent=0 // pred_check_branch
    %26 = sbr.rel (0) target = $region29
  $region28: #{my_model_forward.3} parent=0 // pred_region
    _
  $region29: #{my_model_forward.3} parent=0 // pred_fallthru
    _
  %v27 = vld [vmem:[%s0] sm:$0xff]
  %v28 = vld [vmem:[%s1] sm:$0xff]
  %v29 = vld [vmem:[%s1 + $0x8] sm:$0xff]
  %v30 = vld [vmem:[%s1 + $0x10] sm:$0xff]
  %v31 = vld [vmem:[%s1 + $0x18] sm:$0xff]
  %v32 = vld [vmem:[%s1 + $0x20] sm:$0xff]
  %v33 = vld [vmem:[%s1 + $0x28] sm:$0xff]
  %v34 = vld [vmem:[%s1 + $0x30] sm:$0xff]
  %v35 = vld [vmem:[%s1 + $0x38] sm:$0xff]
  %v36 = vld [vmem:[%s1 + $0x40] sm:$0xff]
  %v37 = vld [vmem:[%s1 + $0x48] sm:$0xff]
  %v38 = vld [vmem:[%s1 + $0x50] sm:$0x1]
  %v39 = vld [vmem:[%s2] sm:$0x1]
  %v41 = vlaneseq
  %v42 = vshrl.u32 %v41, 7
  %v43 = vsub.s32 0, %v42
  %v44 = vrot.slane %v39, %v43
  %vm46 = vcmask 662528
  %v48 = vsel %vm46, %v27, 0
  %vm50 = vcmask 1040384
  %v52 = vsel %vm50, %v38, 0
  %54 = vmatprep.subr.mxu0 0.0
  %55 = vmatpush1.msra.mxu0 0.0
  %56 = vmatprep.subr.mxu0 0.0
  %57 = vmatpush1.msra.mxu0 0.0
  %58 = vmatprep.subr.mxu0 0.0
  %59 = vmatpush1.msra.mxu0 0.0
  %60 = vmatprep.subr.mxu0 0.0
  %61 = vmatpush1.msra.mxu0 0.0
  %62 = vmatprep.subr.mxu0 0.0
  %63 = vmatpush1.msra.mxu0 0.0
  %64 = vmatprep.subr.mxu0 0.0
  %v65 = vand.u32 %v52, 4294901760
  %66 = vmatpush1.msra.mxu0 %v65
  %67 = vmatprep.subr.mxu0 0.0
  %v68 = vand.u32 %v37, 4294901760
  %69 = vmatpush1.msra.mxu0 %v68
  %70 = vmatprep.subr.mxu0 0.0
  %v71 = vand.u32 %v36, 4294901760
  %72 = vmatpush1.msra.mxu0 %v71
  %73 = vmatprep.subr.mxu0 0.0
  %v74 = vand.u32 %v35, 4294901760
  %75 = vmatpush1.msra.mxu0 %v74
  %76 = vmatprep.subr.mxu0 0.0
  %v77 = vand.u32 %v34, 4294901760
  %78 = vmatpush1.msra.mxu0 %v77
  %79 = vmatprep.subr.mxu0 0.0
  %v80 = vand.u32 %v33, 4294901760
  %81 = vmatpush1.msra.mxu0 %v80
  %82 = vmatprep.subr.mxu0 0.0
  %v83 = vand.u32 %v32, 4294901760
  %84 = vmatpush1.msra.mxu0 %v83
  %85 = vmatprep.subr.mxu0 0.0
  %v86 = vand.u32 %v31, 4294901760
  %87 = vmatpush1.msra.mxu0 %v86
  %88 = vmatprep.subr.mxu0 0.0
  %v89 = vand.u32 %v30, 4294901760
  %90 = vmatpush1.msra.mxu0 %v89
  %91 = vmatprep.subr.mxu0 0.0
  %v92 = vand.u32 %v29, 4294901760
  %93 = vmatpush1.msra.mxu0 %v92
  %94 = vmatprep.subr.mxu0 0.0
  %v95 = vand.u32 %v28, 4294901760
  %96 = vmatpush1.msra.mxu0 %v95
  %97 = vmatprep.subr.mxu0 0.0
  %98 = vmatpush2.msra.mxu0 0.0
  %99 = vmatprep.subr.mxu0 0.0
  %100 = vmatpush2.msra.mxu0 0.0
  %101 = vmatprep.subr.mxu0 0.0
  %102 = vmatpush2.msra.mxu0 0.0
  %103 = vmatprep.subr.mxu0 0.0
  %104 = vmatpush2.msra.mxu0 0.0
  %105 = vmatprep.subr.mxu0 0.0
  %106 = vmatpush2.msra.mxu0 0.0
  %107 = vmatprep.subr.mxu0 0.0
  %108 = vmatpush2.msra.mxu0 0.0
  %109 = vmatprep.subr.mxu0 0.0
  %110 = vmatpush2.msra.mxu0 0.0
  %111 = vmatprep.subr.mxu0 0.0
  %112 = vmatpush2.msra.mxu0 0.0
  %113 = vmatprep.subr.mxu0 0.0
  %114 = vmatpush2.msra.mxu0 0.0
  %115 = vmatprep.subr.mxu0 0.0
  %116 = vmatpush2.msra.mxu0 0.0
  %117 = vmatprep.subr.mxu0 0.0
  %118 = vmatpush2.msra.mxu0 0.0
  %119 = vmatprep.subr.mxu0 0.0
  %120 = vmatpush2.msra.mxu0 0.0
  %121 = vmatprep.subr.mxu0 0.0
  %122 = vmatpush2.msra.mxu0 0.0
  %123 = vmatprep.subr.mxu0 0.0
  %124 = vmatpush2.msra.mxu0 0.0
  %125 = vmatprep.subr.mxu0 0.0
  %126 = vmatpush2.msra.mxu0 0.0
  %127 = vmatprep.subr.mxu0 0.0
  %128 = vmatpush2.msra.mxu0 0.0
  %129 = vmatprep.mubr.f32.mxu0 0.0
  %v130 = vand.u32 %v48, 4294901760
  %v131 = vsub.f32 %v48, %v130
  %v132 = vand.u32 %v131, 4294901760
  %v133 = vsub.f32 %v131, %v132
  %v134 = vand.u32 %v133, 4294901760
  %135 = vmatmul.mubr.f32.gmra.mxu0 %v134
  %v136 = vpop.f32.mrf.mxu0
  %v137 = vadd.f32 %v44, %v136
  %v138 = vpop.f32.mrf.mxu0
  %139 = vdwg.mxu0
  %140 = vmatprep.subr.mxu0 0.0
  %141 = vmatpush1.msra.mxu0 0.0
  %142 = vmatprep.subr.mxu0 0.0
  %143 = vmatpush1.msra.mxu0 0.0
  %144 = vmatprep.subr.mxu0 0.0
  %145 = vmatpush1.msra.mxu0 0.0
  %146 = vmatprep.subr.mxu0 0.0
  %147 = vmatpush1.msra.mxu0 0.0
  %148 = vmatprep.subr.mxu0 0.0
  %149 = vmatpush1.msra.mxu0 0.0
  %150 = vmatprep.subr.mxu0 0.0
  %v151 = vand.u32 %v52, 4294901760
  %v152 = vsub.f32 %v52, %v151
  %v153 = vand.u32 %v152, 4294901760
  %v154 = vsub.f32 %v152, %v153
  %v155 = vand.u32 %v154, 4294901760
  %156 = vmatpush1.msra.mxu0 %v155
  %157 = vmatprep.subr.mxu0 0.0
  %v158 = vand.u32 %v37, 4294901760
  %v159 = vsub.f32 %v37, %v158
  %v160 = vand.u32 %v159, 4294901760
  %v161 = vsub.f32 %v159, %v160
  %v162 = vand.u32 %v161, 4294901760
  %163 = vmatpush1.msra.mxu0 %v162
  %164 = vmatprep.subr.mxu0 0.0
  %v165 = vand.u32 %v36, 4294901760
  %v166 = vsub.f32 %v36, %v165
  %v167 = vand.u32 %v166, 4294901760
  %v168 = vsub.f32 %v166, %v167
  %v169 = vand.u32 %v168, 4294901760
  %170 = vmatpush1.msra.mxu0 %v169
  %171 = vmatprep.subr.mxu0 0.0
  %v172 = vand.u32 %v35, 4294901760
  %v173 = vsub.f32 %v35, %v172
  %v174 = vand.u32 %v173, 4294901760
  %v175 = vsub.f32 %v173, %v174
  %v176 = vand.u32 %v175, 4294901760
  %177 = vmatpush1.msra.mxu0 %v176
  %178 = vmatprep.subr.mxu0 0.0
  %v179 = vand.u32 %v34, 4294901760
  %v180 = vsub.f32 %v34, %v179
  %v181 = vand.u32 %v180, 4294901760
  %v182 = vsub.f32 %v180, %v181
  %v183 = vand.u32 %v182, 4294901760
  %184 = vmatpush1.msra.mxu0 %v183
  %185 = vmatprep.subr.mxu0 0.0
  %v186 = vand.u32 %v33, 4294901760
  %v187 = vsub.f32 %v33, %v186
  %v188 = vand.u32 %v187, 4294901760
  %v189 = vsub.f32 %v187, %v188
  %v190 = vand.u32 %v189, 4294901760
  %191 = vmatpush1.msra.mxu0 %v190
  %192 = vmatprep.subr.mxu0 0.0
  %v193 = vand.u32 %v32, 4294901760
  %v194 = vsub.f32 %v32, %v193
  %v195 = vand.u32 %v194, 4294901760
  %v196 = vsub.f32 %v194, %v195
  %v197 = vand.u32 %v196, 4294901760
  %198 = vmatpush1.msra.mxu0 %v197
  %199 = vmatprep.subr.mxu0 0.0
  %v200 = vand.u32 %v31, 4294901760
  %v201 = vsub.f32 %v31, %v200
  %v202 = vand.u32 %v201, 4294901760
  %v203 = vsub.f32 %v201, %v202
  %v204 = vand.u32 %v203, 4294901760
  %205 = vmatpush1.msra.mxu0 %v204
  %206 = vmatprep.subr.mxu0 0.0
  %v207 = vand.u32 %v30, 4294901760
  %v208 = vsub.f32 %v30, %v207
  %v209 = vand.u32 %v208, 4294901760
  %v210 = vsub.f32 %v208, %v209
  %v211 = vand.u32 %v210, 4294901760
  %212 = vmatpush1.msra.mxu0 %v211
  %213 = vmatprep.subr.mxu0 0.0
  %v214 = vand.u32 %v29, 4294901760
  %v215 = vsub.f32 %v29, %v214
  %v216 = vand.u32 %v215, 4294901760
  %v217 = vsub.f32 %v215, %v216
  %v218 = vand.u32 %v217, 4294901760
  %219 = vmatpush1.msra.mxu0 %v218
  %220 = vmatprep.subr.mxu0 0.0
  %v221 = vand.u32 %v28, 4294901760
  %v222 = vsub.f32 %v28, %v221
  %v223 = vand.u32 %v222, 4294901760
  %v224 = vsub.f32 %v222, %v223
  %v225 = vand.u32 %v224, 4294901760
  %226 = vmatpush1.msra.mxu0 %v225
  %227 = vmatprep.subr.mxu0 0.0
  %228 = vmatpush2.msra.mxu0 0.0
  %229 = vmatprep.subr.mxu0 0.0
  %230 = vmatpush2.msra.mxu0 0.0
  %231 = vmatprep.subr.mxu0 0.0
  %232 = vmatpush2.msra.mxu0 0.0
  %233 = vmatprep.subr.mxu0 0.0
  %234 = vmatpush2.msra.mxu0 0.0
  %235 = vmatprep.subr.mxu0 0.0
  %236 = vmatpush2.msra.mxu0 0.0
  %237 = vmatprep.subr.mxu0 0.0
  %238 = vmatpush2.msra.mxu0 0.0
  %239 = vmatprep.subr.mxu0 0.0
  %240 = vmatpush2.msra.mxu0 0.0
  %241 = vmatprep.subr.mxu0 0.0
  %242 = vmatpush2.msra.mxu0 0.0
  %243 = vmatprep.subr.mxu0 0.0
  %244 = vmatpush2.msra.mxu0 0.0
  %245 = vmatprep.subr.mxu0 0.0
  %246 = vmatpush2.msra.mxu0 0.0
  %247 = vmatprep.subr.mxu0 0.0
  %248 = vmatpush2.msra.mxu0 0.0
  %249 = vmatprep.subr.mxu0 0.0
  %250 = vmatpush2.msra.mxu0 0.0
  %251 = vmatprep.subr.mxu0 0.0
  %252 = vmatpush2.msra.mxu0 0.0
  %253 = vmatprep.subr.mxu0 0.0
  %254 = vmatpush2.msra.mxu0 0.0
  %255 = vmatprep.subr.mxu0 0.0
  %256 = vmatpush2.msra.mxu0 0.0
  %257 = vmatprep.subr.mxu0 0.0
  %258 = vmatpush2.msra.mxu0 0.0
  %259 = vmatprep.mubr.f32.mxu0 0.0
  %v260 = vand.u32 %v48, 4294901760
  %261 = vmatmul.mubr.f32.gmra.mxu0 %v260
  %v262 = vpop.f32.mrf.mxu0
  %v263 = vadd.f32 %v137, %v262
  %v264 = vpop.f32.mrf.mxu0
  %265 = vdwg.mxu0
  %266 = vmatprep.subr.mxu0 0.0
  %267 = vmatpush1.msra.mxu0 0.0
  %268 = vmatprep.subr.mxu0 0.0
  %269 = vmatpush1.msra.mxu0 0.0
  %270 = vmatprep.subr.mxu0 0.0
  %271 = vmatpush1.msra.mxu0 0.0
  %272 = vmatprep.subr.mxu0 0.0
  %273 = vmatpush1.msra.mxu0 0.0
  %274 = vmatprep.subr.mxu0 0.0
  %275 = vmatpush1.msra.mxu0 0.0
  %276 = vmatprep.subr.mxu0 0.0
  %v277 = vand.u32 %v52, 4294901760
  %v278 = vsub.f32 %v52, %v277
  %279 = vmatpush1.msra.mxu0 %v278
  %280 = vmatprep.subr.mxu0 0.0
  %v281 = vand.u32 %v37, 4294901760
  %v282 = vsub.f32 %v37, %v281
  %283 = vmatpush1.msra.mxu0 %v282
  %284 = vmatprep.subr.mxu0 0.0
  %v285 = vand.u32 %v36, 4294901760
  %v286 = vsub.f32 %v36, %v285
  %287 = vmatpush1.msra.mxu0 %v286
  %288 = vmatprep.subr.mxu0 0.0
  %v289 = vand.u32 %v35, 4294901760
  %v290 = vsub.f32 %v35, %v289
  %291 = vmatpush1.msra.mxu0 %v290
  %292 = vmatprep.subr.mxu0 0.0
  %v293 = vand.u32 %v34, 4294901760
  %v294 = vsub.f32 %v34, %v293
  %295 = vmatpush1.msra.mxu0 %v294
  %296 = vmatprep.subr.mxu0 0.0
  %v297 = vand.u32 %v33, 4294901760
  %v298 = vsub.f32 %v33, %v297
  %299 = vmatpush1.msra.mxu0 %v298
  %300 = vmatprep.subr.mxu0 0.0
  %v301 = vand.u32 %v32, 4294901760
  %v302 = vsub.f32 %v32, %v301
  %303 = vmatpush1.msra.mxu0 %v302
  %304 = vmatprep.subr.mxu0 0.0
  %v305 = vand.u32 %v31, 4294901760
  %v306 = vsub.f32 %v31, %v305
  %307 = vmatpush1.msra.mxu0 %v306
  %308 = vmatprep.subr.mxu0 0.0
  %v309 = vand.u32 %v30, 4294901760
  %v310 = vsub.f32 %v30, %v309
  %311 = vmatpush1.msra.mxu0 %v310
  %312 = vmatprep.subr.mxu0 0.0
  %v313 = vand.u32 %v29, 4294901760
  %v314 = vsub.f32 %v29, %v313
  %315 = vmatpush1.msra.mxu0 %v314
  %316 = vmatprep.subr.mxu0 0.0
  %v317 = vand.u32 %v28, 4294901760
  %v318 = vsub.f32 %v28, %v317
  %319 = vmatpush1.msra.mxu0 %v318
  %320 = vmatprep.subr.mxu0 0.0
  %321 = vmatpush2.msra.mxu0 0.0
  %322 = vmatprep.subr.mxu0 0.0
  %323 = vmatpush2.msra.mxu0 0.0
  %324 = vmatprep.subr.mxu0 0.0
  %325 = vmatpush2.msra.mxu0 0.0
  %326 = vmatprep.subr.mxu0 0.0
  %327 = vmatpush2.msra.mxu0 0.0
  %328 = vmatprep.subr.mxu0 0.0
  %329 = vmatpush2.msra.mxu0 0.0
  %330 = vmatprep.subr.mxu0 0.0
  %331 = vmatpush2.msra.mxu0 0.0
  %332 = vmatprep.subr.mxu0 0.0
  %333 = vmatpush2.msra.mxu0 0.0
  %334 = vmatprep.subr.mxu0 0.0
  %335 = vmatpush2.msra.mxu0 0.0
  %336 = vmatprep.subr.mxu0 0.0
  %337 = vmatpush2.msra.mxu0 0.0
  %338 = vmatprep.subr.mxu0 0.0
  %339 = vmatpush2.msra.mxu0 0.0
  %340 = vmatprep.subr.mxu0 0.0
  %341 = vmatpush2.msra.mxu0 0.0
  %342 = vmatprep.subr.mxu0 0.0
  %343 = vmatpush2.msra.mxu0 0.0
  %344 = vmatprep.subr.mxu0 0.0
  %345 = vmatpush2.msra.mxu0 0.0
  %346 = vmatprep.subr.mxu0 0.0
  %347 = vmatpush2.msra.mxu0 0.0
  %348 = vmatprep.subr.mxu0 0.0
  %349 = vmatpush2.msra.mxu0 0.0
  %350 = vmatprep.subr.mxu0 0.0
  %351 = vmatpush2.msra.mxu0 0.0
  %352 = vmatprep.mubr.f32.mxu0 0.0
  %v353 = vand.u32 %v48, 4294901760
  %v354 = vsub.f32 %v48, %v353
  %355 = vmatmul.mubr.f32.gmra.mxu0 %v354
  %v356 = vpop.f32.mrf.mxu0
  %v357 = vadd.f32 %v263, %v356
  %v358 = vpop.f32.mrf.mxu0
  %359 = vdwg.mxu0
  %360 = vmatprep.subr.mxu0 0.0
  %361 = vmatpush1.msra.mxu0 0.0
  %362 = vmatprep.subr.mxu0 0.0
  %363 = vmatpush1.msra.mxu0 0.0
  %364 = vmatprep.subr.mxu0 0.0
  %365 = vmatpush1.msra.mxu0 0.0
  %366 = vmatprep.subr.mxu0 0.0
  %367 = vmatpush1.msra.mxu0 0.0
  %368 = vmatprep.subr.mxu0 0.0
  %369 = vmatpush1.msra.mxu0 0.0
  %370 = vmatprep.subr.mxu0 0.0
  %v371 = vand.u32 %v52, 4294901760
  %372 = vmatpush1.msra.mxu0 %v371
  %373 = vmatprep.subr.mxu0 0.0
  %v374 = vand.u32 %v37, 4294901760
  %375 = vmatpush1.msra.mxu0 %v374
  %376 = vmatprep.subr.mxu0 0.0
  %v377 = vand.u32 %v36, 4294901760
  %378 = vmatpush1.msra.mxu0 %v377
  %379 = vmatprep.subr.mxu0 0.0
  %v380 = vand.u32 %v35, 4294901760
  %381 = vmatpush1.msra.mxu0 %v380
  %382 = vmatprep.subr.mxu0 0.0
  %v383 = vand.u32 %v34, 4294901760
  %384 = vmatpush1.msra.mxu0 %v383
  %385 = vmatprep.subr.mxu0 0.0
  %v386 = vand.u32 %v33, 4294901760
  %387 = vmatpush1.msra.mxu0 %v386
  %388 = vmatprep.subr.mxu0 0.0
  %v389 = vand.u32 %v32, 4294901760
  %390 = vmatpush1.msra.mxu0 %v389
  %391 = vmatprep.subr.mxu0 0.0
  %v392 = vand.u32 %v31, 4294901760
  %393 = vmatpush1.msra.mxu0 %v392
  %394 = vmatprep.subr.mxu0 0.0
  %v395 = vand.u32 %v30, 4294901760
  %396 = vmatpush1.msra.mxu0 %v395
  %397 = vmatprep.subr.mxu0 0.0
  %v398 = vand.u32 %v29, 4294901760
  %399 = vmatpush1.msra.mxu0 %v398
  %400 = vmatprep.subr.mxu0 0.0
  %v401 = vand.u32 %v28, 4294901760
  %402 = vmatpush1.msra.mxu0 %v401
  %403 = vmatprep.subr.mxu0 0.0
  %404 = vmatpush2.msra.mxu0 0.0
  %405 = vmatprep.subr.mxu0 0.0
  %406 = vmatpush2.msra.mxu0 0.0
  %407 = vmatprep.subr.mxu0 0.0
  %408 = vmatpush2.msra.mxu0 0.0
  %409 = vmatprep.subr.mxu0 0.0
  %410 = vmatpush2.msra.mxu0 0.0
  %411 = vmatprep.subr.mxu0 0.0
  %412 = vmatpush2.msra.mxu0 0.0
  %413 = vmatprep.subr.mxu0 0.0
  %414 = vmatpush2.msra.mxu0 0.0
  %415 = vmatprep.subr.mxu0 0.0
  %416 = vmatpush2.msra.mxu0 0.0
  %417 = vmatprep.subr.mxu0 0.0
  %418 = vmatpush2.msra.mxu0 0.0
  %419 = vmatprep.subr.mxu0 0.0
  %420 = vmatpush2.msra.mxu0 0.0
  %421 = vmatprep.subr.mxu0 0.0
  %422 = vmatpush2.msra.mxu0 0.0
  %423 = vmatprep.subr.mxu0 0.0
  %424 = vmatpush2.msra.mxu0 0.0
  %425 = vmatprep.subr.mxu0 0.0
  %426 = vmatpush2.msra.mxu0 0.0
  %427 = vmatprep.subr.mxu0 0.0
  %428 = vmatpush2.msra.mxu0 0.0
  %429 = vmatprep.subr.mxu0 0.0
  %430 = vmatpush2.msra.mxu0 0.0
  %431 = vmatprep.subr.mxu0 0.0
  %432 = vmatpush2.msra.mxu0 0.0
  %433 = vmatprep.subr.mxu0 0.0
  %434 = vmatpush2.msra.mxu0 0.0
  %435 = vmatprep.mubr.f32.mxu0 0.0
  %v436 = vand.u32 %v48, 4294901760
  %v437 = vsub.f32 %v48, %v436
  %v438 = vand.u32 %v437, 4294901760
  %439 = vmatmul.mubr.f32.gmra.mxu0 %v438
  %v440 = vpop.f32.mrf.mxu0
  %v441 = vadd.f32 %v357, %v440
  %v442 = vpop.f32.mrf.mxu0
  %443 = vdwg.mxu0
  %444 = vmatprep.subr.mxu0 0.0
  %445 = vmatpush1.msra.mxu0 0.0
  %446 = vmatprep.subr.mxu0 0.0
  %447 = vmatpush1.msra.mxu0 0.0
  %448 = vmatprep.subr.mxu0 0.0
  %449 = vmatpush1.msra.mxu0 0.0
  %450 = vmatprep.subr.mxu0 0.0
  %451 = vmatpush1.msra.mxu0 0.0
  %452 = vmatprep.subr.mxu0 0.0
  %453 = vmatpush1.msra.mxu0 0.0
  %454 = vmatprep.subr.mxu0 0.0
  %v455 = vand.u32 %v52, 4294901760
  %v456 = vsub.f32 %v52, %v455
  %v457 = vand.u32 %v456, 4294901760
  %458 = vmatpush1.msra.mxu0 %v457
  %459 = vmatprep.subr.mxu0 0.0
  %v460 = vand.u32 %v37, 4294901760
  %v461 = vsub.f32 %v37, %v460
  %v462 = vand.u32 %v461, 4294901760
  %463 = vmatpush1.msra.mxu0 %v462
  %464 = vmatprep.subr.mxu0 0.0
  %v465 = vand.u32 %v36, 4294901760
  %v466 = vsub.f32 %v36, %v465
  %v467 = vand.u32 %v466, 4294901760
  %468 = vmatpush1.msra.mxu0 %v467
  %469 = vmatprep.subr.mxu0 0.0
  %v470 = vand.u32 %v35, 4294901760
  %v471 = vsub.f32 %v35, %v470
  %v472 = vand.u32 %v471, 4294901760
  %473 = vmatpush1.msra.mxu0 %v472
  %474 = vmatprep.subr.mxu0 0.0
  %v475 = vand.u32 %v34, 4294901760
  %v476 = vsub.f32 %v34, %v475
  %v477 = vand.u32 %v476, 4294901760
  %478 = vmatpush1.msra.mxu0 %v477
  %479 = vmatprep.subr.mxu0 0.0
  %v480 = vand.u32 %v33, 4294901760
  %v481 = vsub.f32 %v33, %v480
  %v482 = vand.u32 %v481, 4294901760
  %483 = vmatpush1.msra.mxu0 %v482
  %484 = vmatprep.subr.mxu0 0.0
  %v485 = vand.u32 %v32, 4294901760
  %v486 = vsub.f32 %v32, %v485
  %v487 = vand.u32 %v486, 4294901760
  %488 = vmatpush1.msra.mxu0 %v487
  %489 = vmatprep.subr.mxu0 0.0
  %v490 = vand.u32 %v31, 4294901760
  %v491 = vsub.f32 %v31, %v490
  %v492 = vand.u32 %v491, 4294901760
  %493 = vmatpush1.msra.mxu0 %v492
  %494 = vmatprep.subr.mxu0 0.0
  %v495 = vand.u32 %v30, 4294901760
  %v496 = vsub.f32 %v30, %v495
  %v497 = vand.u32 %v496, 4294901760
  %498 = vmatpush1.msra.mxu0 %v497
  %499 = vmatprep.subr.mxu0 0.0
  %v500 = vand.u32 %v29, 4294901760
  %v501 = vsub.f32 %v29, %v500
  %v502 = vand.u32 %v501, 4294901760
  %503 = vmatpush1.msra.mxu0 %v502
  %504 = vmatprep.subr.mxu0 0.0
  %v505 = vand.u32 %v28, 4294901760
  %v506 = vsub.f32 %v28, %v505
  %v507 = vand.u32 %v506, 4294901760
  %508 = vmatpush1.msra.mxu0 %v507
  %509 = vmatprep.subr.mxu0 0.0
  %510 = vmatpush2.msra.mxu0 0.0
  %511 = vmatprep.subr.mxu0 0.0
  %512 = vmatpush2.msra.mxu0 0.0
  %513 = vmatprep.subr.mxu0 0.0
  %514 = vmatpush2.msra.mxu0 0.0
  %515 = vmatprep.subr.mxu0 0.0
  %516 = vmatpush2.msra.mxu0 0.0
  %517 = vmatprep.subr.mxu0 0.0
  %518 = vmatpush2.msra.mxu0 0.0
  %519 = vmatprep.subr.mxu0 0.0
  %520 = vmatpush2.msra.mxu0 0.0
  %521 = vmatprep.subr.mxu0 0.0
  %522 = vmatpush2.msra.mxu0 0.0
  %523 = vmatprep.subr.mxu0 0.0
  %524 = vmatpush2.msra.mxu0 0.0
  %525 = vmatprep.subr.mxu0 0.0
  %526 = vmatpush2.msra.mxu0 0.0
  %527 = vmatprep.subr.mxu0 0.0
  %528 = vmatpush2.msra.mxu0 0.0
  %529 = vmatprep.subr.mxu0 0.0
  %530 = vmatpush2.msra.mxu0 0.0
  %531 = vmatprep.subr.mxu0 0.0
  %532 = vmatpush2.msra.mxu0 0.0
  %533 = vmatprep.subr.mxu0 0.0
  %534 = vmatpush2.msra.mxu0 0.0
  %535 = vmatprep.subr.mxu0 0.0
  %536 = vmatpush2.msra.mxu0 0.0
  %537 = vmatprep.subr.mxu0 0.0
  %538 = vmatpush2.msra.mxu0 0.0
  %539 = vmatprep.subr.mxu0 0.0
  %540 = vmatpush2.msra.mxu0 0.0
  %541 = vmatprep.mubr.f32.mxu0 0.0
  %v542 = vand.u32 %v48, 4294901760
  %543 = vmatmul.mubr.f32.gmra.mxu0 %v542
  %v544 = vpop.f32.mrf.mxu0
  %v545 = vadd.f32 %v441, %v544
  %v546 = vpop.f32.mrf.mxu0
  %547 = vdwg.mxu0
  %548 = vmatprep.subr.mxu0 0.0
  %549 = vmatpush1.msra.mxu0 0.0
  %550 = vmatprep.subr.mxu0 0.0
  %551 = vmatpush1.msra.mxu0 0.0
  %552 = vmatprep.subr.mxu0 0.0
  %553 = vmatpush1.msra.mxu0 0.0
  %554 = vmatprep.subr.mxu0 0.0
  %555 = vmatpush1.msra.mxu0 0.0
  %556 = vmatprep.subr.mxu0 0.0
  %557 = vmatpush1.msra.mxu0 0.0
  %558 = vmatprep.subr.mxu0 0.0
  %v559 = vand.u32 %v52, 4294901760
  %560 = vmatpush1.msra.mxu0 %v559
  %561 = vmatprep.subr.mxu0 0.0
  %v562 = vand.u32 %v37, 4294901760
  %563 = vmatpush1.msra.mxu0 %v562
  %564 = vmatprep.subr.mxu0 0.0
  %v565 = vand.u32 %v36, 4294901760
  %566 = vmatpush1.msra.mxu0 %v565
  %567 = vmatprep.subr.mxu0 0.0
  %v568 = vand.u32 %v35, 4294901760
  %569 = vmatpush1.msra.mxu0 %v568
  %570 = vmatprep.subr.mxu0 0.0
  %v571 = vand.u32 %v34, 4294901760
  %572 = vmatpush1.msra.mxu0 %v571
  %573 = vmatprep.subr.mxu0 0.0
  %v574 = vand.u32 %v33, 4294901760
  %575 = vmatpush1.msra.mxu0 %v574
  %576 = vmatprep.subr.mxu0 0.0
  %v577 = vand.u32 %v32, 4294901760
  %578 = vmatpush1.msra.mxu0 %v577
  %579 = vmatprep.subr.mxu0 0.0
  %v580 = vand.u32 %v31, 4294901760
  %581 = vmatpush1.msra.mxu0 %v580
  %582 = vmatprep.subr.mxu0 0.0
  %v583 = vand.u32 %v30, 4294901760
  %584 = vmatpush1.msra.mxu0 %v583
  %585 = vmatprep.subr.mxu0 0.0
  %v586 = vand.u32 %v29, 4294901760
  %587 = vmatpush1.msra.mxu0 %v586
  %588 = vmatprep.subr.mxu0 0.0
  %v589 = vand.u32 %v28, 4294901760
  %590 = vmatpush1.msra.mxu0 %v589
  %591 = vmatprep.subr.mxu0 0.0
  %592 = vmatpush2.msra.mxu0 0.0
  %593 = vmatprep.subr.mxu0 0.0
  %594 = vmatpush2.msra.mxu0 0.0
  %595 = vmatprep.subr.mxu0 0.0
  %596 = vmatpush2.msra.mxu0 0.0
  %597 = vmatprep.subr.mxu0 0.0
  %598 = vmatpush2.msra.mxu0 0.0
  %599 = vmatprep.subr.mxu0 0.0
  %600 = vmatpush2.msra.mxu0 0.0
  %601 = vmatprep.subr.mxu0 0.0
  %602 = vmatpush2.msra.mxu0 0.0
  %603 = vmatprep.subr.mxu0 0.0
  %604 = vmatpush2.msra.mxu0 0.0
  %605 = vmatprep.subr.mxu0 0.0
  %606 = vmatpush2.msra.mxu0 0.0
  %607 = vmatprep.subr.mxu0 0.0
  %608 = vmatpush2.msra.mxu0 0.0
  %609 = vmatprep.subr.mxu0 0.0
  %610 = vmatpush2.msra.mxu0 0.0
  %611 = vmatprep.subr.mxu0 0.0
  %612 = vmatpush2.msra.mxu0 0.0
  %613 = vmatprep.subr.mxu0 0.0
  %614 = vmatpush2.msra.mxu0 0.0
  %615 = vmatprep.subr.mxu0 0.0
  %616 = vmatpush2.msra.mxu0 0.0
  %617 = vmatprep.subr.mxu0 0.0
  %618 = vmatpush2.msra.mxu0 0.0
  %619 = vmatprep.subr.mxu0 0.0
  %620 = vmatpush2.msra.mxu0 0.0
  %621 = vmatprep.subr.mxu0 0.0
  %622 = vmatpush2.msra.mxu0 0.0
  %623 = vmatprep.mubr.f32.mxu0 0.0
  %v624 = vand.u32 %v48, 4294901760
  %625 = vmatmul.mubr.f32.gmra.mxu0 %v624
  %v626 = vpop.f32.mrf.mxu0
  %v627 = vadd.f32 %v545, %v626
  %v628 = vpop.f32.mrf.mxu0
  %629 = vdwg.mxu0
  %v630 = vmax.f32 %v627, 0.0
  %v631 = vand.u32 2147483647, %v627
  %v632 = vsub.f32 0.0, %v631
  %v633 = vmul.f32 %v632, 1.442695
  %v634 = vpow.pop %v633
  %v635 = vadd.f32 %v634, 1.0
  %v636 = vlog2.pop %v635
  %v637 = vmul.f32 %v636, 0.6931472
  %v638 = vadd.f32 %v630, %v637
  %v639 = vld [vmem:[%s3] sm:$0xff]
  %v640 = vld [vmem:[%s3 + $0x8] sm:$0xff]
  %v641 = vld [vmem:[%s3 + $0x10] sm:$0xff]
  %v642 = vld [vmem:[%s3 + $0x18] sm:$0xff]
  %v643 = vld [vmem:[%s3 + $0x20] sm:$0xff]
  %v644 = vld [vmem:[%s3 + $0x28] sm:$0xff]
  %v645 = vld [vmem:[%s3 + $0x30] sm:$0xff]
  %v646 = vld [vmem:[%s3 + $0x38] sm:$0xff]
  %v647 = vld [vmem:[%s4] sm:$0x1]
  %v649 = vlaneseq
  %v650 = vshrl.u32 %v649, 7
  %v651 = vsub.s32 0, %v650
  %v652 = vrot.slane %v647, %v651
  %vm654 = vcmask 523264
  %v656 = vsel %vm654, %v638, 0
  %658 = vmatprep.subr.mxu0 0.0
  %659 = vmatpush1.msra.mxu0 0.0
  %660 = vmatprep.subr.mxu0 0.0
  %661 = vmatpush1.msra.mxu0 0.0
  %662 = vmatprep.subr.mxu0 0.0
  %663 = vmatpush1.msra.mxu0 0.0
  %664 = vmatprep.subr.mxu0 0.0
  %665 = vmatpush1.msra.mxu0 0.0
  %666 = vmatprep.subr.mxu0 0.0
  %667 = vmatpush1.msra.mxu0 0.0
  %668 = vmatprep.subr.mxu0 0.0
  %669 = vmatpush1.msra.mxu0 0.0
  %670 = vmatprep.subr.mxu0 0.0
  %671 = vmatpush1.msra.mxu0 0.0
  %672 = vmatprep.subr.mxu0 0.0
  %673 = vmatpush1.msra.mxu0 0.0
  %674 = vmatprep.subr.mxu0 0.0
  %v675 = vand.u32 %v646, 4294901760
  %676 = vmatpush1.msra.mxu0 %v675
  %677 = vmatprep.subr.mxu0 0.0
  %v678 = vand.u32 %v645, 4294901760
  %679 = vmatpush1.msra.mxu0 %v678
  %680 = vmatprep.subr.mxu0 0.0
  %v681 = vand.u32 %v644, 4294901760
  %682 = vmatpush1.msra.mxu0 %v681
  %683 = vmatprep.subr.mxu0 0.0
  %v684 = vand.u32 %v643, 4294901760
  %685 = vmatpush1.msra.mxu0 %v684
  %686 = vmatprep.subr.mxu0 0.0
  %v687 = vand.u32 %v642, 4294901760
  %688 = vmatpush1.msra.mxu0 %v687
  %689 = vmatprep.subr.mxu0 0.0
  %v690 = vand.u32 %v641, 4294901760
  %691 = vmatpush1.msra.mxu0 %v690
  %692 = vmatprep.subr.mxu0 0.0
  %v693 = vand.u32 %v640, 4294901760
  %694 = vmatpush1.msra.mxu0 %v693
  %695 = vmatprep.subr.mxu0 0.0
  %v696 = vand.u32 %v639, 4294901760
  %697 = vmatpush1.msra.mxu0 %v696
  %698 = vmatprep.subr.mxu0 0.0
  %699 = vmatpush2.msra.mxu0 0.0
  %700 = vmatprep.subr.mxu0 0.0
  %701 = vmatpush2.msra.mxu0 0.0
  %702 = vmatprep.subr.mxu0 0.0
  %703 = vmatpush2.msra.mxu0 0.0
  %704 = vmatprep.subr.mxu0 0.0
  %705 = vmatpush2.msra.mxu0 0.0
  %706 = vmatprep.subr.mxu0 0.0
  %707 = vmatpush2.msra.mxu0 0.0
  %708 = vmatprep.subr.mxu0 0.0
  %709 = vmatpush2.msra.mxu0 0.0
  %710 = vmatprep.subr.mxu0 0.0
  %711 = vmatpush2.msra.mxu0 0.0
  %712 = vmatprep.subr.mxu0 0.0
  %713 = vmatpush2.msra.mxu0 0.0
  %714 = vmatprep.subr.mxu0 0.0
  %715 = vmatpush2.msra.mxu0 0.0
  %716 = vmatprep.subr.mxu0 0.0
  %717 = vmatpush2.msra.mxu0 0.0
  %718 = vmatprep.subr.mxu0 0.0
  %719 = vmatpush2.msra.mxu0 0.0
  %720 = vmatprep.subr.mxu0 0.0
  %721 = vmatpush2.msra.mxu0 0.0
  %722 = vmatprep.subr.mxu0 0.0
  %723 = vmatpush2.msra.mxu0 0.0
  %724 = vmatprep.subr.mxu0 0.0
  %725 = vmatpush2.msra.mxu0 0.0
  %726 = vmatprep.subr.mxu0 0.0
  %727 = vmatpush2.msra.mxu0 0.0
  %728 = vmatprep.subr.mxu0 0.0
  %729 = vmatpush2.msra.mxu0 0.0
  %730 = vmatprep.mubr.f32.mxu0 0.0
  %v731 = vand.u32 %v656, 4294901760
  %v732 = vsub.f32 %v656, %v731
  %v733 = vand.u32 %v732, 4294901760
  %v734 = vsub.f32 %v732, %v733
  %v735 = vand.u32 %v734, 4294901760
  %736 = vmatmul.mubr.f32.gmra.mxu0 %v735
  %v737 = vpop.f32.mrf.mxu0
  %v738 = vadd.f32 %v652, %v737
  %v739 = vpop.f32.mrf.mxu0
  %740 = vdwg.mxu0
  %741 = vmatprep.subr.mxu0 0.0
  %742 = vmatpush1.msra.mxu0 0.0
  %743 = vmatprep.subr.mxu0 0.0
  %744 = vmatpush1.msra.mxu0 0.0
  %745 = vmatprep.subr.mxu0 0.0
  %746 = vmatpush1.msra.mxu0 0.0
  %747 = vmatprep.subr.mxu0 0.0
  %748 = vmatpush1.msra.mxu0 0.0
  %749 = vmatprep.subr.mxu0 0.0
  %750 = vmatpush1.msra.mxu0 0.0
  %751 = vmatprep.subr.mxu0 0.0
  %752 = vmatpush1.msra.mxu0 0.0
  %753 = vmatprep.subr.mxu0 0.0
  %754 = vmatpush1.msra.mxu0 0.0
  %755 = vmatprep.subr.mxu0 0.0
  %756 = vmatpush1.msra.mxu0 0.0
  %757 = vmatprep.subr.mxu0 0.0
  %v758 = vand.u32 %v646, 4294901760
  %v759 = vsub.f32 %v646, %v758
  %v760 = vand.u32 %v759, 4294901760
  %v761 = vsub.f32 %v759, %v760
  %v762 = vand.u32 %v761, 4294901760
  %763 = vmatpush1.msra.mxu0 %v762
  %764 = vmatprep.subr.mxu0 0.0
  %v765 = vand.u32 %v645, 4294901760
  %v766 = vsub.f32 %v645, %v765
  %v767 = vand.u32 %v766, 4294901760
  %v768 = vsub.f32 %v766, %v767
  %v769 = vand.u32 %v768, 4294901760
  %770 = vmatpush1.msra.mxu0 %v769
  %771 = vmatprep.subr.mxu0 0.0
  %v772 = vand.u32 %v644, 4294901760
  %v773 = vsub.f32 %v644, %v772
  %v774 = vand.u32 %v773, 4294901760
  %v775 = vsub.f32 %v773, %v774
  %v776 = vand.u32 %v775, 4294901760
  %777 = vmatpush1.msra.mxu0 %v776
  %778 = vmatprep.subr.mxu0 0.0
  %v779 = vand.u32 %v643, 4294901760
  %v780 = vsub.f32 %v643, %v779
  %v781 = vand.u32 %v780, 4294901760
  %v782 = vsub.f32 %v780, %v781
  %v783 = vand.u32 %v782, 4294901760
  %784 = vmatpush1.msra.mxu0 %v783
  %785 = vmatprep.subr.mxu0 0.0
  %v786 = vand.u32 %v642, 4294901760
  %v787 = vsub.f32 %v642, %v786
  %v788 = vand.u32 %v787, 4294901760
  %v789 = vsub.f32 %v787, %v788
  %v790 = vand.u32 %v789, 4294901760
  %791 = vmatpush1.msra.mxu0 %v790
  %792 = vmatprep.subr.mxu0 0.0
  %v793 = vand.u32 %v641, 4294901760
  %v794 = vsub.f32 %v641, %v793
  %v795 = vand.u32 %v794, 4294901760
  %v796 = vsub.f32 %v794, %v795
  %v797 = vand.u32 %v796, 4294901760
  %798 = vmatpush1.msra.mxu0 %v797
  %799 = vmatprep.subr.mxu0 0.0
  %v800 = vand.u32 %v640, 4294901760
  %v801 = vsub.f32 %v640, %v800
  %v802 = vand.u32 %v801, 4294901760
  %v803 = vsub.f32 %v801, %v802
  %v804 = vand.u32 %v803, 4294901760
  %805 = vmatpush1.msra.mxu0 %v804
  %806 = vmatprep.subr.mxu0 0.0
  %v807 = vand.u32 %v639, 4294901760
  %v808 = vsub.f32 %v639, %v807
  %v809 = vand.u32 %v808, 4294901760
  %v810 = vsub.f32 %v808, %v809
  %v811 = vand.u32 %v810, 4294901760
  %812 = vmatpush1.msra.mxu0 %v811
  %813 = vmatprep.subr.mxu0 0.0
  %814 = vmatpush2.msra.mxu0 0.0
  %815 = vmatprep.subr.mxu0 0.0
  %816 = vmatpush2.msra.mxu0 0.0
  %817 = vmatprep.subr.mxu0 0.0
  %818 = vmatpush2.msra.mxu0 0.0
  %819 = vmatprep.subr.mxu0 0.0
  %820 = vmatpush2.msra.mxu0 0.0
  %821 = vmatprep.subr.mxu0 0.0
  %822 = vmatpush2.msra.mxu0 0.0
  %823 = vmatprep.subr.mxu0 0.0
  %824 = vmatpush2.msra.mxu0 0.0
  %825 = vmatprep.subr.mxu0 0.0
  %826 = vmatpush2.msra.mxu0 0.0
  %827 = vmatprep.subr.mxu0 0.0
  %828 = vmatpush2.msra.mxu0 0.0
  %829 = vmatprep.subr.mxu0 0.0
  %830 = vmatpush2.msra.mxu0 0.0
  %831 = vmatprep.subr.mxu0 0.0
  %832 = vmatpush2.msra.mxu0 0.0
  %833 = vmatprep.subr.mxu0 0.0
  %834 = vmatpush2.msra.mxu0 0.0
  %835 = vmatprep.subr.mxu0 0.0
  %836 = vmatpush2.msra.mxu0 0.0
  %837 = vmatprep.subr.mxu0 0.0
  %838 = vmatpush2.msra.mxu0 0.0
  %839 = vmatprep.subr.mxu0 0.0
  %840 = vmatpush2.msra.mxu0 0.0
  %841 = vmatprep.subr.mxu0 0.0
  %842 = vmatpush2.msra.mxu0 0.0
  %843 = vmatprep.subr.mxu0 0.0
  %844 = vmatpush2.msra.mxu0 0.0
  %845 = vmatprep.mubr.f32.mxu0 0.0
  %v846 = vand.u32 %v656, 4294901760
  %847 = vmatmul.mubr.f32.gmra.mxu0 %v846
  %v848 = vpop.f32.mrf.mxu0
  %v849 = vadd.f32 %v738, %v848
  %v850 = vpop.f32.mrf.mxu0
  %851 = vdwg.mxu0
  %852 = vmatprep.subr.mxu0 0.0
  %853 = vmatpush1.msra.mxu0 0.0
  %854 = vmatprep.subr.mxu0 0.0
  %855 = vmatpush1.msra.mxu0 0.0
  %856 = vmatprep.subr.mxu0 0.0
  %857 = vmatpush1.msra.mxu0 0.0
  %858 = vmatprep.subr.mxu0 0.0
  %859 = vmatpush1.msra.mxu0 0.0
  %860 = vmatprep.subr.mxu0 0.0
  %861 = vmatpush1.msra.mxu0 0.0
  %862 = vmatprep.subr.mxu0 0.0
  %863 = vmatpush1.msra.mxu0 0.0
  %864 = vmatprep.subr.mxu0 0.0
  %865 = vmatpush1.msra.mxu0 0.0
  %866 = vmatprep.subr.mxu0 0.0
  %867 = vmatpush1.msra.mxu0 0.0
  %868 = vmatprep.subr.mxu0 0.0
  %v869 = vand.u32 %v646, 4294901760
  %v870 = vsub.f32 %v646, %v869
  %871 = vmatpush1.msra.mxu0 %v870
  %872 = vmatprep.subr.mxu0 0.0
  %v873 = vand.u32 %v645, 4294901760
  %v874 = vsub.f32 %v645, %v873
  %875 = vmatpush1.msra.mxu0 %v874
  %876 = vmatprep.subr.mxu0 0.0
  %v877 = vand.u32 %v644, 4294901760
  %v878 = vsub.f32 %v644, %v877
  %879 = vmatpush1.msra.mxu0 %v878
  %880 = vmatprep.subr.mxu0 0.0
  %v881 = vand.u32 %v643, 4294901760
  %v882 = vsub.f32 %v643, %v881
  %883 = vmatpush1.msra.mxu0 %v882
  %884 = vmatprep.subr.mxu0 0.0
  %v885 = vand.u32 %v642, 4294901760
  %v886 = vsub.f32 %v642, %v885
  %887 = vmatpush1.msra.mxu0 %v886
  %888 = vmatprep.subr.mxu0 0.0
  %v889 = vand.u32 %v641, 4294901760
  %v890 = vsub.f32 %v641, %v889
  %891 = vmatpush1.msra.mxu0 %v890
  %892 = vmatprep.subr.mxu0 0.0
  %v893 = vand.u32 %v640, 4294901760
  %v894 = vsub.f32 %v640, %v893
  %895 = vmatpush1.msra.mxu0 %v894
  %896 = vmatprep.subr.mxu0 0.0
  %v897 = vand.u32 %v639, 4294901760
  %v898 = vsub.f32 %v639, %v897
  %899 = vmatpush1.msra.mxu0 %v898
  %900 = vmatprep.subr.mxu0 0.0
  %901 = vmatpush2.msra.mxu0 0.0
  %902 = vmatprep.subr.mxu0 0.0
  %903 = vmatpush2.msra.mxu0 0.0
  %904 = vmatprep.subr.mxu0 0.0
  %905 = vmatpush2.msra.mxu0 0.0
  %906 = vmatprep.subr.mxu0 0.0
  %907 = vmatpush2.msra.mxu0 0.0
  %908 = vmatprep.subr.mxu0 0.0
  %909 = vmatpush2.msra.mxu0 0.0
  %910 = vmatprep.subr.mxu0 0.0
  %911 = vmatpush2.msra.mxu0 0.0
  %912 = vmatprep.subr.mxu0 0.0
  %913 = vmatpush2.msra.mxu0 0.0
  %914 = vmatprep.subr.mxu0 0.0
  %915 = vmatpush2.msra.mxu0 0.0
  %916 = vmatprep.subr.mxu0 0.0
  %917 = vmatpush2.msra.mxu0 0.0
  %918 = vmatprep.subr.mxu0 0.0
  %919 = vmatpush2.msra.mxu0 0.0
  %920 = vmatprep.subr.mxu0 0.0
  %921 = vmatpush2.msra.mxu0 0.0
  %922 = vmatprep.subr.mxu0 0.0
  %923 = vmatpush2.msra.mxu0 0.0
  %924 = vmatprep.subr.mxu0 0.0
  %925 = vmatpush2.msra.mxu0 0.0
  %926 = vmatprep.subr.mxu0 0.0
  %927 = vmatpush2.msra.mxu0 0.0
  %928 = vmatprep.subr.mxu0 0.0
  %929 = vmatpush2.msra.mxu0 0.0
  %930 = vmatprep.subr.mxu0 0.0
  %931 = vmatpush2.msra.mxu0 0.0
  %932 = vmatprep.mubr.f32.mxu0 0.0
  %v933 = vand.u32 %v656, 4294901760
  %v934 = vsub.f32 %v656, %v933
  %935 = vmatmul.mubr.f32.gmra.mxu0 %v934
  %v936 = vpop.f32.mrf.mxu0
  %v937 = vadd.f32 %v849, %v936
  %v938 = vpop.f32.mrf.mxu0
  %939 = vdwg.mxu0
  %940 = vmatprep.subr.mxu0 0.0
  %941 = vmatpush1.msra.mxu0 0.0
  %942 = vmatprep.subr.mxu0 0.0
  %943 = vmatpush1.msra.mxu0 0.0
  %944 = vmatprep.subr.mxu0 0.0
  %945 = vmatpush1.msra.mxu0 0.0
  %946 = vmatprep.subr.mxu0 0.0
  %947 = vmatpush1.msra.mxu0 0.0
  %948 = vmatprep.subr.mxu0 0.0
  %949 = vmatpush1.msra.mxu0 0.0
  %950 = vmatprep.subr.mxu0 0.0
  %951 = vmatpush1.msra.mxu0 0.0
  %952 = vmatprep.subr.mxu0 0.0
  %953 = vmatpush1.msra.mxu0 0.0
  %954 = vmatprep.subr.mxu0 0.0
  %955 = vmatpush1.msra.mxu0 0.0
  %956 = vmatprep.subr.mxu0 0.0
  %v957 = vand.u32 %v646, 4294901760
  %958 = vmatpush1.msra.mxu0 %v957
  %959 = vmatprep.subr.mxu0 0.0
  %v960 = vand.u32 %v645, 4294901760
  %961 = vmatpush1.msra.mxu0 %v960
  %962 = vmatprep.subr.mxu0 0.0
  %v963 = vand.u32 %v644, 4294901760
  %964 = vmatpush1.msra.mxu0 %v963
  %965 = vmatprep.subr.mxu0 0.0
  %v966 = vand.u32 %v643, 4294901760
  %967 = vmatpush1.msra.mxu0 %v966
  %968 = vmatprep.subr.mxu0 0.0
  %v969 = vand.u32 %v642, 4294901760
  %970 = vmatpush1.msra.mxu0 %v969
  %971 = vmatprep.subr.mxu0 0.0
  %v972 = vand.u32 %v641, 4294901760
  %973 = vmatpush1.msra.mxu0 %v972
  %974 = vmatprep.subr.mxu0 0.0
  %v975 = vand.u32 %v640, 4294901760
  %976 = vmatpush1.msra.mxu0 %v975
  %977 = vmatprep.subr.mxu0 0.0
  %v978 = vand.u32 %v639, 4294901760
  %979 = vmatpush1.msra.mxu0 %v978
  %980 = vmatprep.subr.mxu0 0.0
  %981 = vmatpush2.msra.mxu0 0.0
  %982 = vmatprep.subr.mxu0 0.0
  %983 = vmatpush2.msra.mxu0 0.0
  %984 = vmatprep.subr.mxu0 0.0
  %985 = vmatpush2.msra.mxu0 0.0
  %986 = vmatprep.subr.mxu0 0.0
  %987 = vmatpush2.msra.mxu0 0.0
  %988 = vmatprep.subr.mxu0 0.0
  %989 = vmatpush2.msra.mxu0 0.0
  %990 = vmatprep.subr.mxu0 0.0
  %991 = vmatpush2.msra.mxu0 0.0
  %992 = vmatprep.subr.mxu0 0.0
  %993 = vmatpush2.msra.mxu0 0.0
  %994 = vmatprep.subr.mxu0 0.0
  %995 = vmatpush2.msra.mxu0 0.0
  %996 = vmatprep.subr.mxu0 0.0
  %997 = vmatpush2.msra.mxu0 0.0
  %998 = vmatprep.subr.mxu0 0.0
  %999 = vmatpush2.msra.mxu0 0.0
  %1000 = vmatprep.subr.mxu0 0.0
  %1001 = vmatpush2.msra.mxu0 0.0
  %1002 = vmatprep.subr.mxu0 0.0
  %1003 = vmatpush2.msra.mxu0 0.0
  %1004 = vmatprep.subr.mxu0 0.0
  %1005 = vmatpush2.msra.mxu0 0.0
  %1006 = vmatprep.subr.mxu0 0.0
  %1007 = vmatpush2.msra.mxu0 0.0
  %1008 = vmatprep.subr.mxu0 0.0
  %1009 = vmatpush2.msra.mxu0 0.0
  %1010 = vmatprep.subr.mxu0 0.0
  %1011 = vmatpush2.msra.mxu0 0.0
  %1012 = vmatprep.mubr.f32.mxu0 0.0
  %v1013 = vand.u32 %v656, 4294901760
  %v1014 = vsub.f32 %v656, %v1013
  %v1015 = vand.u32 %v1014, 4294901760
  %1016 = vmatmul.mubr.f32.gmra.mxu0 %v1015
  %v1017 = vpop.f32.mrf.mxu0
  %v1018 = vadd.f32 %v937, %v1017
  %v1019 = vpop.f32.mrf.mxu0
  %1020 = vdwg.mxu0
  %1021 = vmatprep.subr.mxu0 0.0
  %1022 = vmatpush1.msra.mxu0 0.0
  %1023 = vmatprep.subr.mxu0 0.0
  %1024 = vmatpush1.msra.mxu0 0.0
  %1025 = vmatprep.subr.mxu0 0.0
  %1026 = vmatpush1.msra.mxu0 0.0
  %1027 = vmatprep.subr.mxu0 0.0
  %1028 = vmatpush1.msra.mxu0 0.0
  %1029 = vmatprep.subr.mxu0 0.0
  %1030 = vmatpush1.msra.mxu0 0.0
  %1031 = vmatprep.subr.mxu0 0.0
  %1032 = vmatpush1.msra.mxu0 0.0
  %1033 = vmatprep.subr.mxu0 0.0
  %1034 = vmatpush1.msra.mxu0 0.0
  %1035 = vmatprep.subr.mxu0 0.0
  %1036 = vmatpush1.msra.mxu0 0.0
  %1037 = vmatprep.subr.mxu0 0.0
  %v1038 = vand.u32 %v646, 4294901760
  %v1039 = vsub.f32 %v646, %v1038
  %v1040 = vand.u32 %v1039, 4294901760
  %1041 = vmatpush1.msra.mxu0 %v1040
  %1042 = vmatprep.subr.mxu0 0.0
  %v1043 = vand.u32 %v645, 4294901760
  %v1044 = vsub.f32 %v645, %v1043
  %v1045 = vand.u32 %v1044, 4294901760
  %1046 = vmatpush1.msra.mxu0 %v1045
  %1047 = vmatprep.subr.mxu0 0.0
  %v1048 = vand.u32 %v644, 4294901760
  %v1049 = vsub.f32 %v644, %v1048
  %v1050 = vand.u32 %v1049, 4294901760
  %1051 = vmatpush1.msra.mxu0 %v1050
  %1052 = vmatprep.subr.mxu0 0.0
  %v1053 = vand.u32 %v643, 4294901760
  %v1054 = vsub.f32 %v643, %v1053
  %v1055 = vand.u32 %v1054, 4294901760
  %1056 = vmatpush1.msra.mxu0 %v1055
  %1057 = vmatprep.subr.mxu0 0.0
  %v1058 = vand.u32 %v642, 4294901760
  %v1059 = vsub.f32 %v642, %v1058
  %v1060 = vand.u32 %v1059, 4294901760
  %1061 = vmatpush1.msra.mxu0 %v1060
  %1062 = vmatprep.subr.mxu0 0.0
  %v1063 = vand.u32 %v641, 4294901760
  %v1064 = vsub.f32 %v641, %v1063
  %v1065 = vand.u32 %v1064, 4294901760
  %1066 = vmatpush1.msra.mxu0 %v1065
  %1067 = vmatprep.subr.mxu0 0.0
  %v1068 = vand.u32 %v640, 4294901760
  %v1069 = vsub.f32 %v640, %v1068
  %v1070 = vand.u32 %v1069, 4294901760
  %1071 = vmatpush1.msra.mxu0 %v1070
  %1072 = vmatprep.subr.mxu0 0.0
  %v1073 = vand.u32 %v639, 4294901760
  %v1074 = vsub.f32 %v639, %v1073
  %v1075 = vand.u32 %v1074, 4294901760
  %1076 = vmatpush1.msra.mxu0 %v1075
  %1077 = vmatprep.subr.mxu0 0.0
  %1078 = vmatpush2.msra.mxu0 0.0
  %1079 = vmatprep.subr.mxu0 0.0
  %1080 = vmatpush2.msra.mxu0 0.0
  %1081 = vmatprep.subr.mxu0 0.0
  %1082 = vmatpush2.msra.mxu0 0.0
  %1083 = vmatprep.subr.mxu0 0.0
  %1084 = vmatpush2.msra.mxu0 0.0
  %1085 = vmatprep.subr.mxu0 0.0
  %1086 = vmatpush2.msra.mxu0 0.0
  %1087 = vmatprep.subr.mxu0 0.0
  %1088 = vmatpush2.msra.mxu0 0.0
  %1089 = vmatprep.subr.mxu0 0.0
  %1090 = vmatpush2.msra.mxu0 0.0
  %1091 = vmatprep.subr.mxu0 0.0
  %1092 = vmatpush2.msra.mxu0 0.0
  %1093 = vmatprep.subr.mxu0 0.0
  %1094 = vmatpush2.msra.mxu0 0.0
  %1095 = vmatprep.subr.mxu0 0.0
  %1096 = vmatpush2.msra.mxu0 0.0
  %1097 = vmatprep.subr.mxu0 0.0
  %1098 = vmatpush2.msra.mxu0 0.0
  %1099 = vmatprep.subr.mxu0 0.0
  %1100 = vmatpush2.msra.mxu0 0.0
  %1101 = vmatprep.subr.mxu0 0.0
  %1102 = vmatpush2.msra.mxu0 0.0
  %1103 = vmatprep.subr.mxu0 0.0
  %1104 = vmatpush2.msra.mxu0 0.0
  %1105 = vmatprep.subr.mxu0 0.0
  %1106 = vmatpush2.msra.mxu0 0.0
  %1107 = vmatprep.subr.mxu0 0.0
  %1108 = vmatpush2.msra.mxu0 0.0
  %1109 = vmatprep.mubr.f32.mxu0 0.0
  %v1110 = vand.u32 %v656, 4294901760
  %1111 = vmatmul.mubr.f32.gmra.mxu0 %v1110
  %v1112 = vpop.f32.mrf.mxu0
  %v1113 = vadd.f32 %v1018, %v1112
  %v1114 = vpop.f32.mrf.mxu0
  %1115 = vdwg.mxu0
  %1116 = vmatprep.subr.mxu0 0.0
  %1117 = vmatpush1.msra.mxu0 0.0
  %1118 = vmatprep.subr.mxu0 0.0
  %1119 = vmatpush1.msra.mxu0 0.0
  %1120 = vmatprep.subr.mxu0 0.0
  %1121 = vmatpush1.msra.mxu0 0.0
  %1122 = vmatprep.subr.mxu0 0.0
  %1123 = vmatpush1.msra.mxu0 0.0
  %1124 = vmatprep.subr.mxu0 0.0
  %1125 = vmatpush1.msra.mxu0 0.0
  %1126 = vmatprep.subr.mxu0 0.0
  %1127 = vmatpush1.msra.mxu0 0.0
  %1128 = vmatprep.subr.mxu0 0.0
  %1129 = vmatpush1.msra.mxu0 0.0
  %1130 = vmatprep.subr.mxu0 0.0
  %1131 = vmatpush1.msra.mxu0 0.0
  %1132 = vmatprep.subr.mxu0 0.0
  %v1133 = vand.u32 %v646, 4294901760
  %1134 = vmatpush1.msra.mxu0 %v1133
  %1135 = vmatprep.subr.mxu0 0.0
  %v1136 = vand.u32 %v645, 4294901760
  %1137 = vmatpush1.msra.mxu0 %v1136
  %1138 = vmatprep.subr.mxu0 0.0
  %v1139 = vand.u32 %v644, 4294901760
  %1140 = vmatpush1.msra.mxu0 %v1139
  %1141 = vmatprep.subr.mxu0 0.0
  %v1142 = vand.u32 %v643, 4294901760
  %1143 = vmatpush1.msra.mxu0 %v1142
  %1144 = vmatprep.subr.mxu0 0.0
  %v1145 = vand.u32 %v642, 4294901760
  %1146 = vmatpush1.msra.mxu0 %v1145
  %1147 = vmatprep.subr.mxu0 0.0
  %v1148 = vand.u32 %v641, 4294901760
  %1149 = vmatpush1.msra.mxu0 %v1148
  %1150 = vmatprep.subr.mxu0 0.0
  %v1151 = vand.u32 %v640, 4294901760
  %1152 = vmatpush1.msra.mxu0 %v1151
  %1153 = vmatprep.subr.mxu0 0.0
  %v1154 = vand.u32 %v639, 4294901760
  %1155 = vmatpush1.msra.mxu0 %v1154
  %1156 = vmatprep.subr.mxu0 0.0
  %1157 = vmatpush2.msra.mxu0 0.0
  %1158 = vmatprep.subr.mxu0 0.0
  %1159 = vmatpush2.msra.mxu0 0.0
  %1160 = vmatprep.subr.mxu0 0.0
  %1161 = vmatpush2.msra.mxu0 0.0
  %1162 = vmatprep.subr.mxu0 0.0
  %1163 = vmatpush2.msra.mxu0 0.0
  %1164 = vmatprep.subr.mxu0 0.0
  %1165 = vmatpush2.msra.mxu0 0.0
  %1166 = vmatprep.subr.mxu0 0.0
  %1167 = vmatpush2.msra.mxu0 0.0
  %1168 = vmatprep.subr.mxu0 0.0
  %1169 = vmatpush2.msra.mxu0 0.0
  %1170 = vmatprep.subr.mxu0 0.0
  %1171 = vmatpush2.msra.mxu0 0.0
  %1172 = vmatprep.subr.mxu0 0.0
  %1173 = vmatpush2.msra.mxu0 0.0
  %1174 = vmatprep.subr.mxu0 0.0
  %1175 = vmatpush2.msra.mxu0 0.0
  %1176 = vmatprep.subr.mxu0 0.0
  %1177 = vmatpush2.msra.mxu0 0.0
  %1178 = vmatprep.subr.mxu0 0.0
  %1179 = vmatpush2.msra.mxu0 0.0
  %1180 = vmatprep.subr.mxu0 0.0
  %1181 = vmatpush2.msra.mxu0 0.0
  %1182 = vmatprep.subr.mxu0 0.0
  %1183 = vmatpush2.msra.mxu0 0.0
  %1184 = vmatprep.subr.mxu0 0.0
  %1185 = vmatpush2.msra.mxu0 0.0
  %1186 = vmatprep.subr.mxu0 0.0
  %1187 = vmatpush2.msra.mxu0 0.0
  %1188 = vmatprep.mubr.f32.mxu0 0.0
  %v1189 = vand.u32 %v656, 4294901760
  %1190 = vmatmul.mubr.f32.gmra.mxu0 %v1189
  %v1191 = vpop.f32.mrf.mxu0
  %v1192 = vadd.f32 %v1113, %v1191
  %v1193 = vpop.f32.mrf.mxu0
  %1194 = vdwg.mxu0
  %v1195 = vmax.f32 %v1192, 0.0
  %v1196 = vand.u32 2147483647, %v1192
  %v1197 = vsub.f32 0.0, %v1196
  %v1198 = vmul.f32 %v1197, 1.442695
  %v1199 = vpow.pop %v1198
  %v1200 = vadd.f32 %v1199, 1.0
  %v1201 = vlog2.pop %v1200
  %v1202 = vmul.f32 %v1201, 0.6931472
  %v1203 = vadd.f32 %v1195, %v1202
  %v1204 = vld [vmem:[%s5] sm:$0x1]
  %s1205 = sld [smem:[#allocation2]]
  %v1206 = vstv %s1205
  %vm1207 = vcmask 130048
  %v1209 = vsel %vm1207, %v1204, 0
  %v1212 = vsel %vm1207, %v1203, 0
  %1214 = vmatprep.subr.mxu0 0.0
  %1215 = vmatpush1.xpose.msra.mxu0 0.0
  %1216 = vmatprep.subr.mxu0 0.0
  %1217 = vmatpush1.xpose.msra.mxu0 0.0
  %1218 = vmatprep.subr.mxu0 0.0
  %1219 = vmatpush1.xpose.msra.mxu0 0.0
  %1220 = vmatprep.subr.mxu0 0.0
  %1221 = vmatpush1.xpose.msra.mxu0 0.0
  %1222 = vmatprep.subr.mxu0 0.0
  %1223 = vmatpush1.xpose.msra.mxu0 0.0
  %1224 = vmatprep.subr.mxu0 0.0
  %1225 = vmatpush1.xpose.msra.mxu0 0.0
  %1226 = vmatprep.subr.mxu0 0.0
  %1227 = vmatpush1.xpose.msra.mxu0 0.0
  %1228 = vmatprep.subr.mxu0 0.0
  %1229 = vmatpush1.xpose.msra.mxu0 0.0
  %1230 = vmatprep.subr.mxu0 0.0
  %1231 = vmatpush1.xpose.msra.mxu0 0.0
  %1232 = vmatprep.subr.mxu0 0.0
  %1233 = vmatpush1.xpose.msra.mxu0 0.0
  %1234 = vmatprep.subr.mxu0 0.0
  %1235 = vmatpush1.xpose.msra.mxu0 0.0
  %1236 = vmatprep.subr.mxu0 0.0
  %1237 = vmatpush1.xpose.msra.mxu0 0.0
  %1238 = vmatprep.subr.mxu0 0.0
  %1239 = vmatpush1.xpose.msra.mxu0 0.0
  %1240 = vmatprep.subr.mxu0 0.0
  %1241 = vmatpush1.xpose.msra.mxu0 0.0
  %1242 = vmatprep.subr.mxu0 0.0
  %1243 = vmatpush1.xpose.msra.mxu0 0.0
  %1244 = vmatprep.subr.mxu0 0.0
  %v1245 = vand.u32 %v1212, 4294901760
  %1246 = vmatpush1.xpose.msra.mxu0 %v1245
  %1247 = vmatprep.subr.mxu0 0.0
  %1248 = vmatpush2.xpose.msra.mxu0 0.0
  %1249 = vmatprep.subr.mxu0 0.0
  %1250 = vmatpush2.xpose.msra.mxu0 0.0
  %1251 = vmatprep.subr.mxu0 0.0
  %1252 = vmatpush2.xpose.msra.mxu0 0.0
  %1253 = vmatprep.subr.mxu0 0.0
  %1254 = vmatpush2.xpose.msra.mxu0 0.0
  %1255 = vmatprep.subr.mxu0 0.0
  %1256 = vmatpush2.xpose.msra.mxu0 0.0
  %1257 = vmatprep.subr.mxu0 0.0
  %1258 = vmatpush2.xpose.msra.mxu0 0.0
  %1259 = vmatprep.subr.mxu0 0.0
  %1260 = vmatpush2.xpose.msra.mxu0 0.0
  %1261 = vmatprep.subr.mxu0 0.0
  %1262 = vmatpush2.xpose.msra.mxu0 0.0
  %1263 = vmatprep.subr.mxu0 0.0
  %1264 = vmatpush2.xpose.msra.mxu0 0.0
  %1265 = vmatprep.subr.mxu0 0.0
  %1266 = vmatpush2.xpose.msra.mxu0 0.0
  %1267 = vmatprep.subr.mxu0 0.0
  %1268 = vmatpush2.xpose.msra.mxu0 0.0
  %1269 = vmatprep.subr.mxu0 0.0
  %1270 = vmatpush2.xpose.msra.mxu0 0.0
  %1271 = vmatprep.subr.mxu0 0.0
  %1272 = vmatpush2.xpose.msra.mxu0 0.0
  %1273 = vmatprep.subr.mxu0 0.0
  %1274 = vmatpush2.xpose.msra.mxu0 0.0
  %1275 = vmatprep.subr.mxu0 0.0
  %1276 = vmatpush2.xpose.msra.mxu0 0.0
  %1277 = vmatprep.subr.mxu0 0.0
  %1278 = vmatpush2.xpose.msra.mxu0 0.0
  %1279 = vmatprep.mubr.f32.mxu0 0.0
  %v1280 = vand.u32 %v1209, 4294901760
  %v1281 = vsub.f32 %v1209, %v1280
  %v1282 = vand.u32 %v1281, 4294901760
  %v1283 = vsub.f32 %v1281, %v1282
  %v1284 = vand.u32 %v1283, 4294901760
  %1285 = vmatmul.mubr.f32.gmra.mxu0 %v1284
  %v1286 = vpop.f32.mrf.mxu0
  %v1287 = vadd.f32 %v1206, %v1286
  %v1288 = vpop.f32.mrf.mxu0
  %1289 = vdwg.mxu0
  %1290 = vmatprep.subr.mxu0 0.0
  %1291 = vmatpush1.xpose.msra.mxu0 0.0
  %1292 = vmatprep.subr.mxu0 0.0
  %1293 = vmatpush1.xpose.msra.mxu0 0.0
  %1294 = vmatprep.subr.mxu0 0.0
  %1295 = vmatpush1.xpose.msra.mxu0 0.0
  %1296 = vmatprep.subr.mxu0 0.0
  %1297 = vmatpush1.xpose.msra.mxu0 0.0
  %1298 = vmatprep.subr.mxu0 0.0
  %1299 = vmatpush1.xpose.msra.mxu0 0.0
  %1300 = vmatprep.subr.mxu0 0.0
  %1301 = vmatpush1.xpose.msra.mxu0 0.0
  %1302 = vmatprep.subr.mxu0 0.0
  %1303 = vmatpush1.xpose.msra.mxu0 0.0
  %1304 = vmatprep.subr.mxu0 0.0
  %1305 = vmatpush1.xpose.msra.mxu0 0.0
  %1306 = vmatprep.subr.mxu0 0.0
  %1307 = vmatpush1.xpose.msra.mxu0 0.0
  %1308 = vmatprep.subr.mxu0 0.0
  %1309 = vmatpush1.xpose.msra.mxu0 0.0
  %1310 = vmatprep.subr.mxu0 0.0
  %1311 = vmatpush1.xpose.msra.mxu0 0.0
  %1312 = vmatprep.subr.mxu0 0.0
  %1313 = vmatpush1.xpose.msra.mxu0 0.0
  %1314 = vmatprep.subr.mxu0 0.0
  %1315 = vmatpush1.xpose.msra.mxu0 0.0
  %1316 = vmatprep.subr.mxu0 0.0
  %1317 = vmatpush1.xpose.msra.mxu0 0.0
  %1318 = vmatprep.subr.mxu0 0.0
  %1319 = vmatpush1.xpose.msra.mxu0 0.0
  %1320 = vmatprep.subr.mxu0 0.0
  %v1321 = vand.u32 %v1212, 4294901760
  %v1322 = vsub.f32 %v1212, %v1321
  %v1323 = vand.u32 %v1322, 4294901760
  %v1324 = vsub.f32 %v1322, %v1323
  %v1325 = vand.u32 %v1324, 4294901760
  %1326 = vmatpush1.xpose.msra.mxu0 %v1325
  %1327 = vmatprep.subr.mxu0 0.0
  %1328 = vmatpush2.xpose.msra.mxu0 0.0
  %1329 = vmatprep.subr.mxu0 0.0
  %1330 = vmatpush2.xpose.msra.mxu0 0.0
  %1331 = vmatprep.subr.mxu0 0.0
  %1332 = vmatpush2.xpose.msra.mxu0 0.0
  %1333 = vmatprep.subr.mxu0 0.0
  %1334 = vmatpush2.xpose.msra.mxu0 0.0
  %1335 = vmatprep.subr.mxu0 0.0
  %1336 = vmatpush2.xpose.msra.mxu0 0.0
  %1337 = vmatprep.subr.mxu0 0.0
  %1338 = vmatpush2.xpose.msra.mxu0 0.0
  %1339 = vmatprep.subr.mxu0 0.0
  %1340 = vmatpush2.xpose.msra.mxu0 0.0
  %1341 = vmatprep.subr.mxu0 0.0
  %1342 = vmatpush2.xpose.msra.mxu0 0.0
  %1343 = vmatprep.subr.mxu0 0.0
  %1344 = vmatpush2.xpose.msra.mxu0 0.0
  %1345 = vmatprep.subr.mxu0 0.0
  %1346 = vmatpush2.xpose.msra.mxu0 0.0
  %1347 = vmatprep.subr.mxu0 0.0
  %1348 = vmatpush2.xpose.msra.mxu0 0.0
  %1349 = vmatprep.subr.mxu0 0.0
  %1350 = vmatpush2.xpose.msra.mxu0 0.0
  %1351 = vmatprep.subr.mxu0 0.0
  %1352 = vmatpush2.xpose.msra.mxu0 0.0
  %1353 = vmatprep.subr.mxu0 0.0
  %1354 = vmatpush2.xpose.msra.mxu0 0.0
  %1355 = vmatprep.subr.mxu0 0.0
  %1356 = vmatpush2.xpose.msra.mxu0 0.0
  %1357 = vmatprep.subr.mxu0 0.0
  %1358 = vmatpush2.xpose.msra.mxu0 0.0
  %1359 = vmatprep.mubr.f32.mxu0 0.0
  %v1360 = vand.u32 %v1209, 4294901760
  %1361 = vmatmul.mubr.f32.gmra.mxu0 %v1360
  %v1362 = vpop.f32.mrf.mxu0
  %v1363 = vadd.f32 %v1287, %v1362
  %v1364 = vpop.f32.mrf.mxu0
  %1365 = vdwg.mxu0
  %1366 = vmatprep.subr.mxu0 0.0
  %1367 = vmatpush1.xpose.msra.mxu0 0.0
  %1368 = vmatprep.subr.mxu0 0.0
  %1369 = vmatpush1.xpose.msra.mxu0 0.0
  %1370 = vmatprep.subr.mxu0 0.0
  %1371 = vmatpush1.xpose.msra.mxu0 0.0
  %1372 = vmatprep.subr.mxu0 0.0
  %1373 = vmatpush1.xpose.msra.mxu0 0.0
  %1374 = vmatprep.subr.mxu0 0.0
  %1375 = vmatpush1.xpose.msra.mxu0 0.0
  %1376 = vmatprep.subr.mxu0 0.0
  %1377 = vmatpush1.xpose.msra.mxu0 0.0
  %1378 = vmatprep.subr.mxu0 0.0
  %1379 = vmatpush1.xpose.msra.mxu0 0.0
  %1380 = vmatprep.subr.mxu0 0.0
  %1381 = vmatpush1.xpose.msra.mxu0 0.0
  %1382 = vmatprep.subr.mxu0 0.0
  %1383 = vmatpush1.xpose.msra.mxu0 0.0
  %1384 = vmatprep.subr.mxu0 0.0
  %1385 = vmatpush1.xpose.msra.mxu0 0.0
  %1386 = vmatprep.subr.mxu0 0.0
  %1387 = vmatpush1.xpose.msra.mxu0 0.0
  %1388 = vmatprep.subr.mxu0 0.0
  %1389 = vmatpush1.xpose.msra.mxu0 0.0
  %1390 = vmatprep.subr.mxu0 0.0
  %1391 = vmatpush1.xpose.msra.mxu0 0.0
  %1392 = vmatprep.subr.mxu0 0.0
  %1393 = vmatpush1.xpose.msra.mxu0 0.0
  %1394 = vmatprep.subr.mxu0 0.0
  %1395 = vmatpush1.xpose.msra.mxu0 0.0
  %1396 = vmatprep.subr.mxu0 0.0
  %v1397 = vand.u32 %v1212, 4294901760
  %v1398 = vsub.f32 %v1212, %v1397
  %1399 = vmatpush1.xpose.msra.mxu0 %v1398
  %1400 = vmatprep.subr.mxu0 0.0
  %1401 = vmatpush2.xpose.msra.mxu0 0.0
  %1402 = vmatprep.subr.mxu0 0.0
  %1403 = vmatpush2.xpose.msra.mxu0 0.0
  %1404 = vmatprep.subr.mxu0 0.0
  %1405 = vmatpush2.xpose.msra.mxu0 0.0
  %1406 = vmatprep.subr.mxu0 0.0
  %1407 = vmatpush2.xpose.msra.mxu0 0.0
  %1408 = vmatprep.subr.mxu0 0.0
  %1409 = vmatpush2.xpose.msra.mxu0 0.0
  %1410 = vmatprep.subr.mxu0 0.0
  %1411 = vmatpush2.xpose.msra.mxu0 0.0
  %1412 = vmatprep.subr.mxu0 0.0
  %1413 = vmatpush2.xpose.msra.mxu0 0.0
  %1414 = vmatprep.subr.mxu0 0.0
  %1415 = vmatpush2.xpose.msra.mxu0 0.0
  %1416 = vmatprep.subr.mxu0 0.0
  %1417 = vmatpush2.xpose.msra.mxu0 0.0
  %1418 = vmatprep.subr.mxu0 0.0
  %1419 = vmatpush2.xpose.msra.mxu0 0.0
  %1420 = vmatprep.subr.mxu0 0.0
  %1421 = vmatpush2.xpose.msra.mxu0 0.0
  %1422 = vmatprep.subr.mxu0 0.0
  %1423 = vmatpush2.xpose.msra.mxu0 0.0
  %1424 = vmatprep.subr.mxu0 0.0
  %1425 = vmatpush2.xpose.msra.mxu0 0.0
  %1426 = vmatprep.subr.mxu0 0.0
  %1427 = vmatpush2.xpose.msra.mxu0 0.0
  %1428 = vmatprep.subr.mxu0 0.0
  %1429 = vmatpush2.xpose.msra.mxu0 0.0
  %1430 = vmatprep.subr.mxu0 0.0
  %1431 = vmatpush2.xpose.msra.mxu0 0.0
  %1432 = vmatprep.mubr.f32.mxu0 0.0
  %v1433 = vand.u32 %v1209, 4294901760
  %v1434 = vsub.f32 %v1209, %v1433
  %1435 = vmatmul.mubr.f32.gmra.mxu0 %v1434
  %v1436 = vpop.f32.mrf.mxu0
  %v1437 = vadd.f32 %v1363, %v1436
  %v1438 = vpop.f32.mrf.mxu0
  %1439 = vdwg.mxu0
  %1440 = vmatprep.subr.mxu0 0.0
  %1441 = vmatpush1.xpose.msra.mxu0 0.0
  %1442 = vmatprep.subr.mxu0 0.0
  %1443 = vmatpush1.xpose.msra.mxu0 0.0
  %1444 = vmatprep.subr.mxu0 0.0
  %1445 = vmatpush1.xpose.msra.mxu0 0.0
  %1446 = vmatprep.subr.mxu0 0.0
  %1447 = vmatpush1.xpose.msra.mxu0 0.0
  %1448 = vmatprep.subr.mxu0 0.0
  %1449 = vmatpush1.xpose.msra.mxu0 0.0
  %1450 = vmatprep.subr.mxu0 0.0
  %1451 = vmatpush1.xpose.msra.mxu0 0.0
  %1452 = vmatprep.subr.mxu0 0.0
  %1453 = vmatpush1.xpose.msra.mxu0 0.0
  %1454 = vmatprep.subr.mxu0 0.0
  %1455 = vmatpush1.xpose.msra.mxu0 0.0
  %1456 = vmatprep.subr.mxu0 0.0
  %1457 = vmatpush1.xpose.msra.mxu0 0.0
  %1458 = vmatprep.subr.mxu0 0.0
  %1459 = vmatpush1.xpose.msra.mxu0 0.0
  %1460 = vmatprep.subr.mxu0 0.0
  %1461 = vmatpush1.xpose.msra.mxu0 0.0
  %1462 = vmatprep.subr.mxu0 0.0
  %1463 = vmatpush1.xpose.msra.mxu0 0.0
  %1464 = vmatprep.subr.mxu0 0.0
  %1465 = vmatpush1.xpose.msra.mxu0 0.0
  %1466 = vmatprep.subr.mxu0 0.0
  %1467 = vmatpush1.xpose.msra.mxu0 0.0
  %1468 = vmatprep.subr.mxu0 0.0
  %1469 = vmatpush1.xpose.msra.mxu0 0.0
  %1470 = vmatprep.subr.mxu0 0.0
  %v1471 = vand.u32 %v1212, 4294901760
  %1472 = vmatpush1.xpose.msra.mxu0 %v1471
  %1473 = vmatprep.subr.mxu0 0.0
  %1474 = vmatpush2.xpose.msra.mxu0 0.0
  %1475 = vmatprep.subr.mxu0 0.0
  %1476 = vmatpush2.xpose.msra.mxu0 0.0
  %1477 = vmatprep.subr.mxu0 0.0
  %1478 = vmatpush2.xpose.msra.mxu0 0.0
  %1479 = vmatprep.subr.mxu0 0.0
  %1480 = vmatpush2.xpose.msra.mxu0 0.0
  %1481 = vmatprep.subr.mxu0 0.0
  %1482 = vmatpush2.xpose.msra.mxu0 0.0
  %1483 = vmatprep.subr.mxu0 0.0
  %1484 = vmatpush2.xpose.msra.mxu0 0.0
  %1485 = vmatprep.subr.mxu0 0.0
  %1486 = vmatpush2.xpose.msra.mxu0 0.0
  %1487 = vmatprep.subr.mxu0 0.0
  %1488 = vmatpush2.xpose.msra.mxu0 0.0
  %1489 = vmatprep.subr.mxu0 0.0
  %1490 = vmatpush2.xpose.msra.mxu0 0.0
  %1491 = vmatprep.subr.mxu0 0.0
  %1492 = vmatpush2.xpose.msra.mxu0 0.0
  %1493 = vmatprep.subr.mxu0 0.0
  %1494 = vmatpush2.xpose.msra.mxu0 0.0
  %1495 = vmatprep.subr.mxu0 0.0
  %1496 = vmatpush2.xpose.msra.mxu0 0.0
  %1497 = vmatprep.subr.mxu0 0.0
  %1498 = vmatpush2.xpose.msra.mxu0 0.0
  %1499 = vmatprep.subr.mxu0 0.0
  %1500 = vmatpush2.xpose.msra.mxu0 0.0
  %1501 = vmatprep.subr.mxu0 0.0
  %1502 = vmatpush2.xpose.msra.mxu0 0.0
  %1503 = vmatprep.subr.mxu0 0.0
  %1504 = vmatpush2.xpose.msra.mxu0 0.0
  %1505 = vmatprep.mubr.f32.mxu0 0.0
  %v1506 = vand.u32 %v1209, 4294901760
  %v1507 = vsub.f32 %v1209, %v1506
  %v1508 = vand.u32 %v1507, 4294901760
  %1509 = vmatmul.mubr.f32.gmra.mxu0 %v1508
  %v1510 = vpop.f32.mrf.mxu0
  %v1511 = vadd.f32 %v1437, %v1510
  %v1512 = vpop.f32.mrf.mxu0
  %1513 = vdwg.mxu0
  %1514 = vmatprep.subr.mxu0 0.0
  %1515 = vmatpush1.xpose.msra.mxu0 0.0
  %1516 = vmatprep.subr.mxu0 0.0
  %1517 = vmatpush1.xpose.msra.mxu0 0.0
  %1518 = vmatprep.subr.mxu0 0.0
  %1519 = vmatpush1.xpose.msra.mxu0 0.0
  %1520 = vmatprep.subr.mxu0 0.0
  %1521 = vmatpush1.xpose.msra.mxu0 0.0
  %1522 = vmatprep.subr.mxu0 0.0
  %1523 = vmatpush1.xpose.msra.mxu0 0.0
  %1524 = vmatprep.subr.mxu0 0.0
  %1525 = vmatpush1.xpose.msra.mxu0 0.0
  %1526 = vmatprep.subr.mxu0 0.0
  %1527 = vmatpush1.xpose.msra.mxu0 0.0
  %1528 = vmatprep.subr.mxu0 0.0
  %1529 = vmatpush1.xpose.msra.mxu0 0.0
  %1530 = vmatprep.subr.mxu0 0.0
  %1531 = vmatpush1.xpose.msra.mxu0 0.0
  %1532 = vmatprep.subr.mxu0 0.0
  %1533 = vmatpush1.xpose.msra.mxu0 0.0
  %1534 = vmatprep.subr.mxu0 0.0
  %1535 = vmatpush1.xpose.msra.mxu0 0.0
  %1536 = vmatprep.subr.mxu0 0.0
  %1537 = vmatpush1.xpose.msra.mxu0 0.0
  %1538 = vmatprep.subr.mxu0 0.0
  %1539 = vmatpush1.xpose.msra.mxu0 0.0
  %1540 = vmatprep.subr.mxu0 0.0
  %1541 = vmatpush1.xpose.msra.mxu0 0.0
  %1542 = vmatprep.subr.mxu0 0.0
  %1543 = vmatpush1.xpose.msra.mxu0 0.0
  %1544 = vmatprep.subr.mxu0 0.0
  %v1545 = vand.u32 %v1212, 4294901760
  %v1546 = vsub.f32 %v1212, %v1545
  %v1547 = vand.u32 %v1546, 4294901760
  %1548 = vmatpush1.xpose.msra.mxu0 %v1547
  %1549 = vmatprep.subr.mxu0 0.0
  %1550 = vmatpush2.xpose.msra.mxu0 0.0
  %1551 = vmatprep.subr.mxu0 0.0
  %1552 = vmatpush2.xpose.msra.mxu0 0.0
  %1553 = vmatprep.subr.mxu0 0.0
  %1554 = vmatpush2.xpose.msra.mxu0 0.0
  %1555 = vmatprep.subr.mxu0 0.0
  %1556 = vmatpush2.xpose.msra.mxu0 0.0
  %1557 = vmatprep.subr.mxu0 0.0
  %1558 = vmatpush2.xpose.msra.mxu0 0.0
  %1559 = vmatprep.subr.mxu0 0.0
  %1560 = vmatpush2.xpose.msra.mxu0 0.0
  %1561 = vmatprep.subr.mxu0 0.0
  %1562 = vmatpush2.xpose.msra.mxu0 0.0
  %1563 = vmatprep.subr.mxu0 0.0
  %1564 = vmatpush2.xpose.msra.mxu0 0.0
  %1565 = vmatprep.subr.mxu0 0.0
  %1566 = vmatpush2.xpose.msra.mxu0 0.0
  %1567 = vmatprep.subr.mxu0 0.0
  %1568 = vmatpush2.xpose.msra.mxu0 0.0
  %1569 = vmatprep.subr.mxu0 0.0
  %1570 = vmatpush2.xpose.msra.mxu0 0.0
  %1571 = vmatprep.subr.mxu0 0.0
  %1572 = vmatpush2.xpose.msra.mxu0 0.0
  %1573 = vmatprep.subr.mxu0 0.0
  %1574 = vmatpush2.xpose.msra.mxu0 0.0
  %1575 = vmatprep.subr.mxu0 0.0
  %1576 = vmatpush2.xpose.msra.mxu0 0.0
  %1577 = vmatprep.subr.mxu0 0.0
  %1578 = vmatpush2.xpose.msra.mxu0 0.0
  %1579 = vmatprep.subr.mxu0 0.0
  %1580 = vmatpush2.xpose.msra.mxu0 0.0
  %1581 = vmatprep.mubr.f32.mxu0 0.0
  %v1582 = vand.u32 %v1209, 4294901760
  %1583 = vmatmul.mubr.f32.gmra.mxu0 %v1582
  %v1584 = vpop.f32.mrf.mxu0
  %v1585 = vadd.f32 %v1511, %v1584
  %v1586 = vpop.f32.mrf.mxu0
  %1587 = vdwg.mxu0
  %1588 = vmatprep.subr.mxu0 0.0
  %1589 = vmatpush1.xpose.msra.mxu0 0.0
  %1590 = vmatprep.subr.mxu0 0.0
  %1591 = vmatpush1.xpose.msra.mxu0 0.0
  %1592 = vmatprep.subr.mxu0 0.0
  %1593 = vmatpush1.xpose.msra.mxu0 0.0
  %1594 = vmatprep.subr.mxu0 0.0
  %1595 = vmatpush1.xpose.msra.mxu0 0.0
  %1596 = vmatprep.subr.mxu0 0.0
  %1597 = vmatpush1.xpose.msra.mxu0 0.0
  %1598 = vmatprep.subr.mxu0 0.0
  %1599 = vmatpush1.xpose.msra.mxu0 0.0
  %1600 = vmatprep.subr.mxu0 0.0
  %1601 = vmatpush1.xpose.msra.mxu0 0.0
  %1602 = vmatprep.subr.mxu0 0.0
  %1603 = vmatpush1.xpose.msra.mxu0 0.0
  %1604 = vmatprep.subr.mxu0 0.0
  %1605 = vmatpush1.xpose.msra.mxu0 0.0
  %1606 = vmatprep.subr.mxu0 0.0
  %1607 = vmatpush1.xpose.msra.mxu0 0.0
  %1608 = vmatprep.subr.mxu0 0.0
  %1609 = vmatpush1.xpose.msra.mxu0 0.0
  %1610 = vmatprep.subr.mxu0 0.0
  %1611 = vmatpush1.xpose.msra.mxu0 0.0
  %1612 = vmatprep.subr.mxu0 0.0
  %1613 = vmatpush1.xpose.msra.mxu0 0.0
  %1614 = vmatprep.subr.mxu0 0.0
  %1615 = vmatpush1.xpose.msra.mxu0 0.0
  %1616 = vmatprep.subr.mxu0 0.0
  %1617 = vmatpush1.xpose.msra.mxu0 0.0
  %1618 = vmatprep.subr.mxu0 0.0
  %v1619 = vand.u32 %v1212, 4294901760
  %1620 = vmatpush1.xpose.msra.mxu0 %v1619
  %1621 = vmatprep.subr.mxu0 0.0
  %1622 = vmatpush2.xpose.msra.mxu0 0.0
  %1623 = vmatprep.subr.mxu0 0.0
  %1624 = vmatpush2.xpose.msra.mxu0 0.0
  %1625 = vmatprep.subr.mxu0 0.0
  %1626 = vmatpush2.xpose.msra.mxu0 0.0
  %1627 = vmatprep.subr.mxu0 0.0
  %1628 = vmatpush2.xpose.msra.mxu0 0.0
  %1629 = vmatprep.subr.mxu0 0.0
  %1630 = vmatpush2.xpose.msra.mxu0 0.0
  %1631 = vmatprep.subr.mxu0 0.0
  %1632 = vmatpush2.xpose.msra.mxu0 0.0
  %1633 = vmatprep.subr.mxu0 0.0
  %1634 = vmatpush2.xpose.msra.mxu0 0.0
  %1635 = vmatprep.subr.mxu0 0.0
  %1636 = vmatpush2.xpose.msra.mxu0 0.0
  %1637 = vmatprep.subr.mxu0 0.0
  %1638 = vmatpush2.xpose.msra.mxu0 0.0
  %1639 = vmatprep.subr.mxu0 0.0
  %1640 = vmatpush2.xpose.msra.mxu0 0.0
  %1641 = vmatprep.subr.mxu0 0.0
  %1642 = vmatpush2.xpose.msra.mxu0 0.0
  %1643 = vmatprep.subr.mxu0 0.0
  %1644 = vmatpush2.xpose.msra.mxu0 0.0
  %1645 = vmatprep.subr.mxu0 0.0
  %1646 = vmatpush2.xpose.msra.mxu0 0.0
  %1647 = vmatprep.subr.mxu0 0.0
  %1648 = vmatpush2.xpose.msra.mxu0 0.0
  %1649 = vmatprep.subr.mxu0 0.0
  %1650 = vmatpush2.xpose.msra.mxu0 0.0
  %1651 = vmatprep.subr.mxu0 0.0
  %1652 = vmatpush2.xpose.msra.mxu0 0.0
  %1653 = vmatprep.mubr.f32.mxu0 0.0
  %v1654 = vand.u32 %v1209, 4294901760
  %1655 = vmatmul.mubr.f32.gmra.mxu0 %v1654
  %v1656 = vpop.f32.mrf.mxu0
  %v1657 = vadd.f32 %v1585, %v1656
  %v1658 = vpop.f32.mrf.mxu0
  %1659 = vdwg.mxu0
  %v1660 = vmax.f32 %v1657, 0.0
  %v1661 = vand.u32 2147483647, %v1657
  %v1662 = vsub.f32 0.0, %v1661
  %v1663 = vmul.f32 %v1662, 1.442695
  %v1664 = vpow.pop %v1663
  %v1665 = vadd.f32 %v1664, 1.0
  %v1666 = vlog2.pop %v1665
  %v1667 = vmul.f32 %v1666, 0.6931472
  %v1668 = vadd.f32 %v1660, %v1667
  %v1669 = vmul.f32 %v1668, 1e+08
  %vm1670 = vcmask 57344
  %1671 = vst.msk [vmem:[%s7] sm:$0x1] %vm1670, %v1669
  // Predicated region
  $region30: #{my_model_forward.3} parent=0 // pred_check
    _
  $region31: #{my_model_forward.3} parent=0 // pred_check_branch
    %1673 = sbr.rel (0) target = $region33
  $region32: #{my_model_forward.3} parent=0 // pred_region
    _
  $region33: #{my_model_forward.3} parent=0 // pred_fallthru
    _
  // Predicated region
  $region34: #{my_model_forward.3} parent=0 // pred_check
    _
  $region35: #{my_model_forward.3} parent=0 // pred_check_branch
    %1675 = sbr.rel (0) target = $region37
  $region36: #{my_model_forward.3} parent=0 // pred_region
    _
  $region37: #{my_model_forward.3} parent=0 // pred_fallthru
    _

// kernel: my_model_forward.2
$region0: #{my_model_forward.2}
  #allocation0 [shape = 'u32[]', space=smem, size = 0x4, offset = 0x4, fixed_abs, tag = 'smem constant byte address 0x4 - core index']
  #allocation1 [shape = 'u32[144,128]{1,0:T(1,128)}', space=vmem, size = 0x12000, scoped, tag = 'internal scratch']
  #allocation2 [shape = 'f32[1]{0:T(128)S(6)}', space=smem, size = 0x200, scoped, tag = 'scoped memory for my_model_forward.2']
  %s0 = inlined_call_operand.vmem [shape: f32[1027,81], index: 0, kind: input, shape index: {}]
  %s1 = inlined_call_operand.vmem [shape: f32[81,64], index: 1, kind: input, shape index: {}]
  %s2 = inlined_call_operand.vmem [shape: f32[1,64], index: 2, kind: input, shape index: {}]
  %s3 = inlined_call_operand.vmem [shape: f32[64,16], index: 3, kind: input, shape index: {}]
  %s4 = inlined_call_operand.vmem [shape: f32[1,16], index: 4, kind: input, shape index: {}]
  %s5 = inlined_call_operand.vmem [shape: f32[1,16], index: 5, kind: input, shape index: {}]
  %s6 = inlined_call_operand.<no memory space> [shape: f32[1], index: 6, kind: input, shape index: {}]
  %s7 = inlined_call_operand.vmem [shape: f32[2,1,512], index: 7, kind: output, shape index: {}]
  %s8 = sld [smem:[#allocation0]]
  $region61: #{my_model_forward.2} parent=0
    _
  %s10 = ssub.s32 1, %s8
  %s11 = scalar_select 0, %s10, %s8
  %12 = sst [smem:[#allocation2]] %s6
  loop: start=0, step=1, limit=4
  $region2: #{my_model_forward.2} parent=0 // loop_pre_header
    _
  $region3: #{my_model_forward.2} parent=0 // loop_header
    %s14 = sphi 0, %s18
    %p15 = scmp.ge.s32.totalorder %s14, 4
    %s24 = sphi 0, %s26
    %s27 = sphi 0, %s24
    %s28 = sphi 0, %s27
    %s44 = sphi 0, %s28
    %s48 = sphi 0, %s48
    %s50 = sphi 0, %s48
    %s51 = sphi 0, %s50
    %s65 = sphi 0, %s51
    %s69 = sphi 0, %s69
    %s71 = sphi 0, %s69
    %s72 = sphi 0, %s71
    %s86 = sphi 0, %s72
    %s90 = sphi 0, %s90
    %s92 = sphi 0, %s90
    %s93 = sphi 0, %s92
    %s107 = sphi 0, %s93
    %s111 = sphi 0, %s111
    %s113 = sphi 0, %s111
    %s114 = sphi 0, %s113
    %s128 = sphi 0, %s114
    %s132 = sphi 0, %s132
    %s134 = sphi 0, %s132
    %s135 = sphi 0, %s134
    %s149 = sphi 0, %s135
    %s153 = sphi 0, %s153
    %s155 = sphi 0, %s153
    %s156 = sphi 0, %s155
    %s170 = sphi 0, %s156
    %s176 = sphi 0, %s178
    %s179 = sphi 0, %s176
    %s180 = sphi 0, %s179
    %s196 = sphi 0, %s180
  $region4: #{my_model_forward.2} parent=0 // loop_header_branch
    %17 = sbr.rel (%p15) target = $region8
  $region5: #{my_model_forward.2} parent=0 // loop_body
    %s19 = ssub.s32 %s14, 1
    %s20 = ssub.s32 %s14, 2
    %s21 = sadd.s32 %s14, 1
    %s22 = ssub.s32 %s14, %s21
    %p23 = scmp.eq.s32.totalorder %s22, 0
    %s25 = sadd.s32 %s24, 1
    %s26 = scalar_select %p23, %s24, %s25
    %p29 = pneg %p23
    %p30 = scmp.eq.s32.totalorder %s14, 1
    %p31 = por %p29, %p30
    %p32 = scmp.ne.s32.totalorder %s24, %s27
    %p33 = scmp.eq.s32.totalorder %s14, 0
    %p34 = por %p32, %p33
    %p35 = scmp.ne.s32.totalorder %s24, %s27
    %p36 = scmp.eq.s32.totalorder %s19, 1
    %p37 = por %p35, %p36
    %p38 = scmp.ne.s32.totalorder %s27, %s28
    %p39 = scmp.eq.s32.totalorder %s19, 0
    %p40 = por %p38, %p39
    %p41 = scmp.ne.s32.totalorder %s27, %s28
    %p42 = scmp.eq.s32.totalorder %s20, 1
    %p43 = por %p41, %p42
    %p45 = scmp.ne.s32.totalorder %s28, %s44
    %p46 = scmp.eq.s32.totalorder %s20, 0
    %p47 = por %p45, %p46
    %s49 = sadd.s32 %s48, 1
    %p52 = scmp.eq.s32.totalorder %s14, 1
    %p53 = scmp.ne.s32.totalorder %s48, %s50
    %p54 = scmp.eq.s32.totalorder %s14, 0
    %p55 = por %p53, %p54
    %p56 = scmp.ne.s32.totalorder %s48, %s50
    %p57 = scmp.eq.s32.totalorder %s19, 1
    %p58 = por %p56, %p57
    %p59 = scmp.ne.s32.totalorder %s50, %s51
    %p60 = scmp.eq.s32.totalorder %s19, 0
    %p61 = por %p59, %p60
    %p62 = scmp.ne.s32.totalorder %s50, %s51
    %p63 = scmp.eq.s32.totalorder %s20, 1
    %p64 = por %p62, %p63
    %p66 = scmp.ne.s32.totalorder %s51, %s65
    %p67 = scmp.eq.s32.totalorder %s20, 0
    %p68 = por %p66, %p67
    %s70 = sadd.s32 %s69, 1
    %p73 = scmp.eq.s32.totalorder %s14, 1
    %p74 = scmp.ne.s32.totalorder %s69, %s71
    %p75 = scmp.eq.s32.totalorder %s14, 0
    %p76 = por %p74, %p75
    %p77 = scmp.ne.s32.totalorder %s69, %s71
    %p78 = scmp.eq.s32.totalorder %s19, 1
    %p79 = por %p77, %p78
    %p80 = scmp.ne.s32.totalorder %s71, %s72
    %p81 = scmp.eq.s32.totalorder %s19, 0
    %p82 = por %p80, %p81
    %p83 = scmp.ne.s32.totalorder %s71, %s72
    %p84 = scmp.eq.s32.totalorder %s20, 1
    %p85 = por %p83, %p84
    %p87 = scmp.ne.s32.totalorder %s72, %s86
    %p88 = scmp.eq.s32.totalorder %s20, 0
    %p89 = por %p87, %p88
    %s91 = sadd.s32 %s90, 1
    %p94 = scmp.eq.s32.totalorder %s14, 1
    %p95 = scmp.ne.s32.totalorder %s90, %s92
    %p96 = scmp.eq.s32.totalorder %s14, 0
    %p97 = por %p95, %p96
    %p98 = scmp.ne.s32.totalorder %s90, %s92
    %p99 = scmp.eq.s32.totalorder %s19, 1
    %p100 = por %p98, %p99
    %p101 = scmp.ne.s32.totalorder %s92, %s93
    %p102 = scmp.eq.s32.totalorder %s19, 0
    %p103 = por %p101, %p102
    %p104 = scmp.ne.s32.totalorder %s92, %s93
    %p105 = scmp.eq.s32.totalorder %s20, 1
    %p106 = por %p104, %p105
    %p108 = scmp.ne.s32.totalorder %s93, %s107
    %p109 = scmp.eq.s32.totalorder %s20, 0
    %p110 = por %p108, %p109
    %s112 = sadd.s32 %s111, 1
    %p115 = scmp.eq.s32.totalorder %s14, 1
    %p116 = scmp.ne.s32.totalorder %s111, %s113
    %p117 = scmp.eq.s32.totalorder %s14, 0
    %p118 = por %p116, %p117
    %p119 = scmp.ne.s32.totalorder %s111, %s113
    %p120 = scmp.eq.s32.totalorder %s19, 1
    %p121 = por %p119, %p120
    %p122 = scmp.ne.s32.totalorder %s113, %s114
    %p123 = scmp.eq.s32.totalorder %s19, 0
    %p124 = por %p122, %p123
    %p125 = scmp.ne.s32.totalorder %s113, %s114
    %p126 = scmp.eq.s32.totalorder %s20, 1
    %p127 = por %p125, %p126
    %p129 = scmp.ne.s32.totalorder %s114, %s128
    %p130 = scmp.eq.s32.totalorder %s20, 0
    %p131 = por %p129, %p130
    %s133 = sadd.s32 %s132, 1
    %p136 = scmp.eq.s32.totalorder %s14, 1
    %p137 = scmp.ne.s32.totalorder %s132, %s134
    %p138 = scmp.eq.s32.totalorder %s14, 0
    %p139 = por %p137, %p138
    %p140 = scmp.ne.s32.totalorder %s132, %s134
    %p141 = scmp.eq.s32.totalorder %s19, 1
    %p142 = por %p140, %p141
    %p143 = scmp.ne.s32.totalorder %s134, %s135
    %p144 = scmp.eq.s32.totalorder %s19, 0
    %p145 = por %p143, %p144
    %p146 = scmp.ne.s32.totalorder %s134, %s135
    %p147 = scmp.eq.s32.totalorder %s20, 1
    %p148 = por %p146, %p147
    %p150 = scmp.ne.s32.totalorder %s135, %s149
    %p151 = scmp.eq.s32.totalorder %s20, 0
    %p152 = por %p150, %p151
    %s154 = sadd.s32 %s153, 1
    %p157 = scmp.eq.s32.totalorder %s14, 1
    %p158 = scmp.ne.s32.totalorder %s153, %s155
    %p159 = scmp.eq.s32.totalorder %s14, 0
    %p160 = por %p158, %p159
    %p161 = scmp.ne.s32.totalorder %s153, %s155
    %p162 = scmp.eq.s32.totalorder %s19, 1
    %p163 = por %p161, %p162
    %p164 = scmp.ne.s32.totalorder %s155, %s156
    %p165 = scmp.eq.s32.totalorder %s19, 0
    %p166 = por %p164, %p165
    %p167 = scmp.ne.s32.totalorder %s155, %s156
    %p168 = scmp.eq.s32.totalorder %s20, 1
    %p169 = por %p167, %p168
    %p171 = scmp.ne.s32.totalorder %s156, %s170
    %p172 = scmp.eq.s32.totalorder %s20, 0
    %p173 = por %p171, %p172
    %s174 = ssub.s32 %s14, %s21
    %p175 = scmp.eq.s32.totalorder %s174, 0
    %s177 = sadd.s32 %s176, 1
    %s178 = scalar_select %p175, %s176, %s177
    %p181 = pneg %p175
    %p182 = scmp.eq.s32.totalorder %s14, 1
    %p183 = por %p181, %p182
    %p184 = scmp.ne.s32.totalorder %s176, %s179
    %p185 = scmp.eq.s32.totalorder %s14, 0
    %p186 = por %p184, %p185
    %p187 = scmp.ne.s32.totalorder %s176, %s179
    %p188 = scmp.eq.s32.totalorder %s19, 1
    %p189 = por %p187, %p188
    %p190 = scmp.ne.s32.totalorder %s179, %s180
    %p191 = scmp.eq.s32.totalorder %s19, 0
    %p192 = por %p190, %p191
    %p193 = scmp.ne.s32.totalorder %s179, %s180
    %p194 = scmp.eq.s32.totalorder %s20, 1
    %p195 = por %p193, %p194
    %p197 = scmp.ne.s32.totalorder %s180, %s196
    %p198 = scmp.eq.s32.totalorder %s20, 0
    %p199 = por %p197, %p198
    %p200 = scmp.le.s32.totalorder 1, %s14
    %p201 = scmp.lt.s32.totalorder %s14, 3
    %p202 = pnand %p200, %p201
    %p203 = pneg %p202
    // Predicated region
    $region9: #{my_model_forward.2} parent=5 // pred_check
      _
    $region10: #{my_model_forward.2} parent=5 // pred_check_branch
      %205 = sbr.rel (%p202) target = $region12
    $region11: #{my_model_forward.2} parent=5 // pred_region
      %s206 = ssub.s32 %s14, 1
      // Predicated region
      $region13: #{my_model_forward.2} parent=11 // pred_check
        %p207 = pneg %p61
      $region14: #{my_model_forward.2} parent=11 // pred_check_branch
        %209 = sbr.rel (%p207) target = $region16
      $region15: #{my_model_forward.2} parent=11 // pred_region
        _
      $region16: #{my_model_forward.2} parent=11 // pred_fallthru
        _
      // Predicated region
      $region17: #{my_model_forward.2} parent=11 // pred_check
        %p210 = pneg %p82
      $region18: #{my_model_forward.2} parent=11 // pred_check_branch
        %212 = sbr.rel (%p210) target = $region20
      $region19: #{my_model_forward.2} parent=11 // pred_region
        _
      $region20: #{my_model_forward.2} parent=11 // pred_fallthru
        _
      // Predicated region
      $region21: #{my_model_forward.2} parent=11 // pred_check
        %p213 = pneg %p103
      $region22: #{my_model_forward.2} parent=11 // pred_check_branch
        %215 = sbr.rel (%p213) target = $region24
      $region23: #{my_model_forward.2} parent=11 // pred_region
        _
      $region24: #{my_model_forward.2} parent=11 // pred_fallthru
        _
      // Predicated region
      $region25: #{my_model_forward.2} parent=11 // pred_check
        %p216 = pneg %p124
      $region26: #{my_model_forward.2} parent=11 // pred_check_branch
        %218 = sbr.rel (%p216) target = $region28
      $region27: #{my_model_forward.2} parent=11 // pred_region
        _
      $region28: #{my_model_forward.2} parent=11 // pred_fallthru
        _
      // Predicated region
      $region29: #{my_model_forward.2} parent=11 // pred_check
        %p219 = pneg %p145
      $region30: #{my_model_forward.2} parent=11 // pred_check_branch
        %221 = sbr.rel (%p219) target = $region32
      $region31: #{my_model_forward.2} parent=11 // pred_region
        _
      $region32: #{my_model_forward.2} parent=11 // pred_fallthru
        _
      // Predicated region
      $region33: #{my_model_forward.2} parent=11 // pred_check
        %p222 = pneg %p166
      $region34: #{my_model_forward.2} parent=11 // pred_check_branch
        %224 = sbr.rel (%p222) target = $region36
      $region35: #{my_model_forward.2} parent=11 // pred_region
        _
      $region36: #{my_model_forward.2} parent=11 // pred_fallthru
        _
    $region12: #{my_model_forward.2} parent=5 // pred_fallthru
      _
    %p225 = scmp.lt.s32.totalorder %s14, 2
    // Predicated region
    $region37: #{my_model_forward.2} parent=5 // pred_check
      %p226 = pneg %p225
    $region38: #{my_model_forward.2} parent=5 // pred_check_branch
      %228 = sbr.rel (%p226) target = $region40
    $region39: #{my_model_forward.2} parent=5 // pred_region
      // Predicated region
      $region41: #{my_model_forward.2} parent=39 // pred_check
        %p229 = pneg %p34
      $region42: #{my_model_forward.2} parent=39 // pred_check_branch
        %231 = sbr.rel (%p229) target = $region44
      $region43: #{my_model_forward.2} parent=39 // pred_region
        %s232 = smul.u32 64, %s14
        %s233 = ssub.s32 129, %s232
        %p234 = scmp.lt.s32.totalorder %s233, 64
        %s235 = scalar_select %p234, %s233, 64
        %s236 = smul.u32 128, %s235
        %p237 = scmp.lt.s32.totalorder %s232, 128
        %s238 = scalar_select %p237, %s232, 128
        %s239 = smul.addr %s238, 8
        %s240 = scalar_lea.vmem %s0, %s239
        %s241 = smul.u32 64, %s14
        %s242 = ssub.s32 129, %s241
        %p243 = scmp.lt.s32.totalorder %s242, 64
        %s244 = scalar_select %p243, %s242, 64
        %s245 = smul.u32 128, %s244
      $region44: #{my_model_forward.2} parent=39 // pred_fallthru
        _
    $region40: #{my_model_forward.2} parent=5 // pred_fallthru
      _
    %p246 = scmp.le.s32.totalorder 1, %s14
    %p247 = scmp.lt.s32.totalorder %s14, 3
    %p248 = pnand %p246, %p247
    %p249 = pneg %p248
    // Predicated region
    $region45: #{my_model_forward.2} parent=5 // pred_check
      _
    $region46: #{my_model_forward.2} parent=5 // pred_check_branch
      %251 = sbr.rel (%p248) target = $region48
    $region47: #{my_model_forward.2} parent=5 // pred_region
      %s252 = ssub.s32 %s14, 1
      %s253 = smul.u32 64, %s19
      %s254 = ssub.s32 129, %s253
      %p255 = scmp.lt.s32.totalorder %s254, 64
      %s256 = scalar_select %p255, %s254, 64
      %s257 = smul.u32 128, %s256
      %p258 = scmp.lt.s32.totalorder %s253, 128
      %s259 = scalar_select %p258, %s253, 128
      %s260 = smul.addr %s259, 8
      %s261 = scalar_lea.vmem %s0, %s260
      %p262 = pneg %p40
      %p263 = pneg %p37
      %p264 = pneg %p61
      %p265 = pneg %p58
      %p266 = pneg %p82
      %p267 = pneg %p79
      %p268 = pneg %p103
      %p269 = pneg %p100
      %p270 = pneg %p124
      %p271 = pneg %p121
      %p272 = pneg %p145
      %p273 = pneg %p142
      %p274 = pneg %p166
      %p275 = pneg %p163
      %p276 = pneg %p192
      %p277 = pneg %p189
      %p278 = scmp.lt.s32.totalorder %s19, 1
      %s279 = scalar_select %p278, %s19, 1
      %s280 = smul.addr %s279, 4
      %s281 = scalar_lea.vmem %s7, %s280
      %s282 = smul.u32 64, %s19
      %s283 = ssub.s32 129, %s282
      %p284 = scmp.lt.s32.totalorder %s283, 64
      %s285 = scalar_select %p284, %s283, 64
      %s286 = smul.u32 128, %s285
      %p287 = scmp.lt.s32.totalorder %s282, 128
      %s288 = scalar_select %p287, %s282, 128
      %s289 = smul.addr %s288, 8
      %s290 = scalar_lea.vmem %s0, %s289
      %s291 = smul.u32 64, %s19
      %s292 = ssub.s32 129, %s291
      %p293 = scmp.lt.s32.totalorder %s292, 64
      %s294 = scalar_select %p293, %s292, 64
      %s295 = smul.u32 128, %s294
      %p296 = scmp.lt.s32.totalorder %s19, 1
      %s297 = scalar_select %p296, %s19, 1
      %s298 = smul.addr %s297, 4
      %s299 = scalar_lea.vmem %s7, %s298
      %v300 = vld [vmem:[%s290] sm:$0xff]
      %v301 = vld [vmem:[%s290 + $0x8] sm:$0xff]
      %v302 = vld [vmem:[%s290 + $0x10] sm:$0xff]
      %v303 = vld [vmem:[%s290 + $0x18] sm:$0xff]
      %v304 = vld [vmem:[%s290 + $0x20] sm:$0xff]
      %v305 = vld [vmem:[%s290 + $0x28] sm:$0xff]
      %v306 = vld [vmem:[%s290 + $0x30] sm:$0xff]
      %v307 = vld [vmem:[%s290 + $0x38] sm:$0xff]
      %v308 = vld [vmem:[%s290 + $0x40] sm:$0xff]
      %v309 = vld [vmem:[%s290 + $0x48] sm:$0xff]
      %v310 = vld [vmem:[%s290 + $0x50] sm:$0xff]
      %v311 = vld [vmem:[%s290 + $0x58] sm:$0xff]
      %v312 = vld [vmem:[%s290 + $0x60] sm:$0xff]
      %v313 = vld [vmem:[%s290 + $0x68] sm:$0xff]
      %v314 = vld [vmem:[%s290 + $0x70] sm:$0xff]
      %v315 = vld [vmem:[%s290 + $0x78] sm:$0xff]
      %v316 = vld [vmem:[%s290 + $0x80] sm:$0xff]
      %v317 = vld [vmem:[%s290 + $0x88] sm:$0xff]
      %v318 = vld [vmem:[%s290 + $0x90] sm:$0xff]
      %v319 = vld [vmem:[%s290 + $0x98] sm:$0xff]
      %v320 = vld [vmem:[%s290 + $0xa0] sm:$0xff]
      %v321 = vld [vmem:[%s290 + $0xa8] sm:$0xff]
      %v322 = vld [vmem:[%s290 + $0xb0] sm:$0xff]
      %v323 = vld [vmem:[%s290 + $0xb8] sm:$0xff]
      %v324 = vld [vmem:[%s290 + $0xc0] sm:$0xff]
      %v325 = vld [vmem:[%s290 + $0xc8] sm:$0xff]
      %v326 = vld [vmem:[%s290 + $0xd0] sm:$0xff]
      %v327 = vld [vmem:[%s290 + $0xd8] sm:$0xff]
      %v328 = vld [vmem:[%s290 + $0xe0] sm:$0xff]
      %v329 = vld [vmem:[%s290 + $0xe8] sm:$0xff]
      %v330 = vld [vmem:[%s290 + $0xf0] sm:$0xff]
      %v331 = vld [vmem:[%s290 + $0xf8] sm:$0xff]
      %v332 = vld [vmem:[%s290 + $0x100] sm:$0xff]
      %v333 = vld [vmem:[%s290 + $0x108] sm:$0xff]
      %v334 = vld [vmem:[%s290 + $0x110] sm:$0xff]
      %v335 = vld [vmem:[%s290 + $0x118] sm:$0xff]
      %v336 = vld [vmem:[%s290 + $0x120] sm:$0xff]
      %v337 = vld [vmem:[%s290 + $0x128] sm:$0xff]
      %v338 = vld [vmem:[%s290 + $0x130] sm:$0xff]
      %v339 = vld [vmem:[%s290 + $0x138] sm:$0xff]
      %v340 = vld [vmem:[%s290 + $0x140] sm:$0xff]
      %v341 = vld [vmem:[%s290 + $0x148] sm:$0xff]
      %v342 = vld [vmem:[%s290 + $0x150] sm:$0xff]
      %v343 = vld [vmem:[%s290 + $0x158] sm:$0xff]
      %v344 = vld [vmem:[%s290 + $0x160] sm:$0xff]
      %v345 = vld [vmem:[%s290 + $0x168] sm:$0xff]
      %v346 = vld [vmem:[%s290 + $0x170] sm:$0xff]
      %v347 = vld [vmem:[%s290 + $0x178] sm:$0xff]
      %v348 = vld [vmem:[%s290 + $0x180] sm:$0xff]
      %v349 = vld [vmem:[%s290 + $0x188] sm:$0xff]
      %v350 = vld [vmem:[%s290 + $0x190] sm:$0xff]
      %v351 = vld [vmem:[%s290 + $0x198] sm:$0xff]
      %v352 = vld [vmem:[%s290 + $0x1a0] sm:$0xff]
      %v353 = vld [vmem:[%s290 + $0x1a8] sm:$0xff]
      %v354 = vld [vmem:[%s290 + $0x1b0] sm:$0xff]
      %v355 = vld [vmem:[%s290 + $0x1b8] sm:$0xff]
      %v356 = vld [vmem:[%s290 + $0x1c0] sm:$0xff]
      %v357 = vld [vmem:[%s290 + $0x1c8] sm:$0xff]
      %v358 = vld [vmem:[%s290 + $0x1d0] sm:$0xff]
      %v359 = vld [vmem:[%s290 + $0x1d8] sm:$0xff]
      %v360 = vld [vmem:[%s290 + $0x1e0] sm:$0xff]
      %v361 = vld [vmem:[%s290 + $0x1e8] sm:$0xff]
      %v362 = vld [vmem:[%s290 + $0x1f0] sm:$0xff]
      %v363 = vld [vmem:[%s290 + $0x1f8] sm:$0xff]
      %v364 = vld [vmem:[%s1] sm:$0xff]
      %v365 = vld [vmem:[%s1 + $0x8] sm:$0xff]
      %v366 = vld [vmem:[%s1 + $0x10] sm:$0xff]
      %v367 = vld [vmem:[%s1 + $0x18] sm:$0xff]
      %v368 = vld [vmem:[%s1 + $0x20] sm:$0xff]
      %v369 = vld [vmem:[%s1 + $0x28] sm:$0xff]
      %v370 = vld [vmem:[%s1 + $0x30] sm:$0xff]
      %v371 = vld [vmem:[%s1 + $0x38] sm:$0xff]
      %v372 = vld [vmem:[%s1 + $0x40] sm:$0xff]
      %v373 = vld [vmem:[%s1 + $0x48] sm:$0xff]
      %v374 = vld [vmem:[%s1 + $0x50] sm:$0x1]
      %v375 = vld [vmem:[%s2] sm:$0x1]
      %v377 = vlaneseq
      %v378 = vshrl.u32 %v377, 7
      %v379 = vsub.s32 0, %v378
      %v380 = vrot.slane %v375, %v379
      %vm382 = vcmask 662528
      %v384 = vsel %vm382, %v300, 0
      %v387 = vsel %vm382, %v301, 0
      %v390 = vsel %vm382, %v302, 0
      %v393 = vsel %vm382, %v303, 0
      %v396 = vsel %vm382, %v304, 0
      %v399 = vsel %vm382, %v305, 0
      %v402 = vsel %vm382, %v306, 0
      %v405 = vsel %vm382, %v307, 0
      %v408 = vsel %vm382, %v308, 0
      %v411 = vsel %vm382, %v309, 0
      %v414 = vsel %vm382, %v310, 0
      %v417 = vsel %vm382, %v311, 0
      %v420 = vsel %vm382, %v312, 0
      %v423 = vsel %vm382, %v313, 0
      %v426 = vsel %vm382, %v314, 0
      %v429 = vsel %vm382, %v315, 0
      %v432 = vsel %vm382, %v316, 0
      %v435 = vsel %vm382, %v317, 0
      %v438 = vsel %vm382, %v318, 0
      %v441 = vsel %vm382, %v319, 0
      %v444 = vsel %vm382, %v320, 0
      %v447 = vsel %vm382, %v321, 0
      %v450 = vsel %vm382, %v322, 0
      %v453 = vsel %vm382, %v323, 0
      %v456 = vsel %vm382, %v324, 0
      %v459 = vsel %vm382, %v325, 0
      %v462 = vsel %vm382, %v326, 0
      %v465 = vsel %vm382, %v327, 0
      %v468 = vsel %vm382, %v328, 0
      %v471 = vsel %vm382, %v329, 0
      %v474 = vsel %vm382, %v330, 0
      %v477 = vsel %vm382, %v331, 0
      %v480 = vsel %vm382, %v332, 0
      %v483 = vsel %vm382, %v333, 0
      %v486 = vsel %vm382, %v334, 0
      %v489 = vsel %vm382, %v335, 0
      %v492 = vsel %vm382, %v336, 0
      %v495 = vsel %vm382, %v337, 0
      %v498 = vsel %vm382, %v338, 0
      %v501 = vsel %vm382, %v339, 0
      %v504 = vsel %vm382, %v340, 0
      %v507 = vsel %vm382, %v341, 0
      %v510 = vsel %vm382, %v342, 0
      %v513 = vsel %vm382, %v343, 0
      %v516 = vsel %vm382, %v344, 0
      %v519 = vsel %vm382, %v345, 0
      %v522 = vsel %vm382, %v346, 0
      %v525 = vsel %vm382, %v347, 0
      %v528 = vsel %vm382, %v348, 0
      %v531 = vsel %vm382, %v349, 0
      %v534 = vsel %vm382, %v350, 0
      %v537 = vsel %vm382, %v351, 0
      %v540 = vsel %vm382, %v352, 0
      %v543 = vsel %vm382, %v353, 0
      %v546 = vsel %vm382, %v354, 0
      %v549 = vsel %vm382, %v355, 0
      %v552 = vsel %vm382, %v356, 0
      %v555 = vsel %vm382, %v357, 0
      %v558 = vsel %vm382, %v358, 0
      %v561 = vsel %vm382, %v359, 0
      %v564 = vsel %vm382, %v360, 0
      %v567 = vsel %vm382, %v361, 0
      %v570 = vsel %vm382, %v362, 0
      %v573 = vsel %vm382, %v363, 0
      %vm575 = vcmask 1040384
      %v577 = vsel %vm575, %v374, 0
      %579 = vmatprep.subr.mxu0 0.0
      %580 = vmatpush1.msra.mxu0 0.0
      %581 = vmatprep.subr.mxu0 0.0
      %582 = vmatpush1.msra.mxu0 0.0
      %583 = vmatprep.subr.mxu0 0.0
      %584 = vmatpush1.msra.mxu0 0.0
      %585 = vmatprep.subr.mxu0 0.0
      %586 = vmatpush1.msra.mxu0 0.0
      %587 = vmatprep.subr.mxu0 0.0
      %588 = vmatpush1.msra.mxu0 0.0
      %589 = vmatprep.subr.mxu0 0.0
      %v590 = vand.u32 %v577, 4294901760
      %591 = vmatpush1.msra.mxu0 %v590
      %592 = vmatprep.subr.mxu0 0.0
      %v593 = vand.u32 %v373, 4294901760
      %594 = vmatpush1.msra.mxu0 %v593
      %595 = vmatprep.subr.mxu0 0.0
      %v596 = vand.u32 %v372, 4294901760
      %597 = vmatpush1.msra.mxu0 %v596
      %598 = vmatprep.subr.mxu0 0.0
      %v599 = vand.u32 %v371, 4294901760
      %600 = vmatpush1.msra.mxu0 %v599
      %601 = vmatprep.subr.mxu0 0.0
      %v602 = vand.u32 %v370, 4294901760
      %603 = vmatpush1.msra.mxu0 %v602
      %604 = vmatprep.subr.mxu0 0.0
      %v605 = vand.u32 %v369, 4294901760
      %606 = vmatpush1.msra.mxu0 %v605
      %607 = vmatprep.subr.mxu0 0.0
      %v608 = vand.u32 %v368, 4294901760
      %609 = vmatpush1.msra.mxu0 %v608
      %610 = vmatprep.subr.mxu0 0.0
      %v611 = vand.u32 %v367, 4294901760
      %612 = vmatpush1.msra.mxu0 %v611
      %613 = vmatprep.subr.mxu0 0.0
      %v614 = vand.u32 %v366, 4294901760
      %615 = vmatpush1.msra.mxu0 %v614
      %616 = vmatprep.subr.mxu0 0.0
      %v617 = vand.u32 %v365, 4294901760
      %618 = vmatpush1.msra.mxu0 %v617
      %619 = vmatprep.subr.mxu0 0.0
      %v620 = vand.u32 %v364, 4294901760
      %621 = vmatpush1.msra.mxu0 %v620
      %622 = vmatprep.subr.mxu0 0.0
      %623 = vmatpush2.msra.mxu0 0.0
      %624 = vmatprep.subr.mxu0 0.0
      %625 = vmatpush2.msra.mxu0 0.0
      %626 = vmatprep.subr.mxu0 0.0
      %627 = vmatpush2.msra.mxu0 0.0
      %628 = vmatprep.subr.mxu0 0.0
      %629 = vmatpush2.msra.mxu0 0.0
      %630 = vmatprep.subr.mxu0 0.0
      %631 = vmatpush2.msra.mxu0 0.0
      %632 = vmatprep.subr.mxu0 0.0
      %633 = vmatpush2.msra.mxu0 0.0
      %634 = vmatprep.subr.mxu0 0.0
      %635 = vmatpush2.msra.mxu0 0.0
      %636 = vmatprep.subr.mxu0 0.0
      %637 = vmatpush2.msra.mxu0 0.0
      %638 = vmatprep.subr.mxu0 0.0
      %639 = vmatpush2.msra.mxu0 0.0
      %640 = vmatprep.subr.mxu0 0.0
      %641 = vmatpush2.msra.mxu0 0.0
      %642 = vmatprep.subr.mxu0 0.0
      %643 = vmatpush2.msra.mxu0 0.0
      %644 = vmatprep.subr.mxu0 0.0
      %645 = vmatpush2.msra.mxu0 0.0
      %646 = vmatprep.subr.mxu0 0.0
      %647 = vmatpush2.msra.mxu0 0.0
      %648 = vmatprep.subr.mxu0 0.0
      %649 = vmatpush2.msra.mxu0 0.0
      %650 = vmatprep.subr.mxu0 0.0
      %651 = vmatpush2.msra.mxu0 0.0
      %652 = vmatprep.subr.mxu0 0.0
      %653 = vmatpush2.msra.mxu0 0.0
      %654 = vmatprep.mubr.f32.mxu0 0.0
      %v655 = vand.u32 %v384, 4294901760
      %v656 = vsub.f32 %v384, %v655
      %v657 = vand.u32 %v656, 4294901760
      %v658 = vsub.f32 %v656, %v657
      %v659 = vand.u32 %v658, 4294901760
      %660 = vmatmul.mubr.f32.gmra.mxu0 %v659
      %v661 = vpop.f32.mrf.mxu0
      %v662 = vadd.f32 %v380, %v661
      %v663 = vpop.f32.mrf.mxu0
      %664 = vmatprep.mubr.f32.mxu0 0.0
      %v665 = vand.u32 %v387, 4294901760
      %v666 = vsub.f32 %v387, %v665
      %v667 = vand.u32 %v666, 4294901760
      %v668 = vsub.f32 %v666, %v667
      %v669 = vand.u32 %v668, 4294901760
      %670 = vmatmul.mubr.f32.gmra.mxu0 %v669
      %v671 = vpop.f32.mrf.mxu0
      %v672 = vadd.f32 %v380, %v671
      %v673 = vpop.f32.mrf.mxu0
      %674 = vmatprep.mubr.f32.mxu0 0.0
      %v675 = vand.u32 %v390, 4294901760
      %v676 = vsub.f32 %v390, %v675
      %v677 = vand.u32 %v676, 4294901760
      %v678 = vsub.f32 %v676, %v677
      %v679 = vand.u32 %v678, 4294901760
      %680 = vmatmul.mubr.f32.gmra.mxu0 %v679
      %v681 = vpop.f32.mrf.mxu0
      %v682 = vadd.f32 %v380, %v681
      %v683 = vpop.f32.mrf.mxu0
      %684 = vmatprep.mubr.f32.mxu0 0.0
      %v685 = vand.u32 %v393, 4294901760
      %v686 = vsub.f32 %v393, %v685
      %v687 = vand.u32 %v686, 4294901760
      %v688 = vsub.f32 %v686, %v687
      %v689 = vand.u32 %v688, 4294901760
      %690 = vmatmul.mubr.f32.gmra.mxu0 %v689
      %v691 = vpop.f32.mrf.mxu0
      %v692 = vadd.f32 %v380, %v691
      %v693 = vpop.f32.mrf.mxu0
      %694 = vmatprep.mubr.f32.mxu0 0.0
      %v695 = vand.u32 %v396, 4294901760
      %v696 = vsub.f32 %v396, %v695
      %v697 = vand.u32 %v696, 4294901760
      %v698 = vsub.f32 %v696, %v697
      %v699 = vand.u32 %v698, 4294901760
      %700 = vmatmul.mubr.f32.gmra.mxu0 %v699
      %v701 = vpop.f32.mrf.mxu0
      %v702 = vadd.f32 %v380, %v701
      %v703 = vpop.f32.mrf.mxu0
      %704 = vmatprep.mubr.f32.mxu0 0.0
      %v705 = vand.u32 %v399, 4294901760
      %v706 = vsub.f32 %v399, %v705
      %v707 = vand.u32 %v706, 4294901760
      %v708 = vsub.f32 %v706, %v707
      %v709 = vand.u32 %v708, 4294901760
      %710 = vmatmul.mubr.f32.gmra.mxu0 %v709
      %v711 = vpop.f32.mrf.mxu0
      %v712 = vadd.f32 %v380, %v711
      %v713 = vpop.f32.mrf.mxu0
      %714 = vmatprep.mubr.f32.mxu0 0.0
      %v715 = vand.u32 %v402, 4294901760
      %v716 = vsub.f32 %v402, %v715
      %v717 = vand.u32 %v716, 4294901760
      %v718 = vsub.f32 %v716, %v717
      %v719 = vand.u32 %v718, 4294901760
      %720 = vmatmul.mubr.f32.gmra.mxu0 %v719
      %v721 = vpop.f32.mrf.mxu0
      %v722 = vadd.f32 %v380, %v721
      %v723 = vpop.f32.mrf.mxu0
      %724 = vmatprep.mubr.f32.mxu0 0.0
      %v725 = vand.u32 %v405, 4294901760
      %v726 = vsub.f32 %v405, %v725
      %v727 = vand.u32 %v726, 4294901760
      %v728 = vsub.f32 %v726, %v727
      %v729 = vand.u32 %v728, 4294901760
      %730 = vmatmul.mubr.f32.gmra.mxu0 %v729
      %v731 = vpop.f32.mrf.mxu0
      %v732 = vadd.f32 %v380, %v731
      %v733 = vpop.f32.mrf.mxu0
      %734 = vmatprep.mubr.f32.mxu0 0.0
      %v735 = vand.u32 %v408, 4294901760
      %v736 = vsub.f32 %v408, %v735
      %v737 = vand.u32 %v736, 4294901760
      %v738 = vsub.f32 %v736, %v737
      %v739 = vand.u32 %v738, 4294901760
      %740 = vmatmul.mubr.f32.gmra.mxu0 %v739
      %v741 = vpop.f32.mrf.mxu0
      %v742 = vadd.f32 %v380, %v741
      %v743 = vpop.f32.mrf.mxu0
      %744 = vmatprep.mubr.f32.mxu0 0.0
      %v745 = vand.u32 %v411, 4294901760
      %v746 = vsub.f32 %v411, %v745
      %v747 = vand.u32 %v746, 4294901760
      %v748 = vsub.f32 %v746, %v747
      %v749 = vand.u32 %v748, 4294901760
      %750 = vmatmul.mubr.f32.gmra.mxu0 %v749
      %v751 = vpop.f32.mrf.mxu0
      %v752 = vadd.f32 %v380, %v751
      %v753 = vpop.f32.mrf.mxu0
      %754 = vmatprep.mubr.f32.mxu0 0.0
      %v755 = vand.u32 %v414, 4294901760
      %v756 = vsub.f32 %v414, %v755
      %v757 = vand.u32 %v756, 4294901760
      %v758 = vsub.f32 %v756, %v757
      %v759 = vand.u32 %v758, 4294901760
      %760 = vmatmul.mubr.f32.gmra.mxu0 %v759
      %v761 = vpop.f32.mrf.mxu0
      %v762 = vadd.f32 %v380, %v761
      %v763 = vpop.f32.mrf.mxu0
      %764 = vmatprep.mubr.f32.mxu0 0.0
      %v765 = vand.u32 %v417, 4294901760
      %v766 = vsub.f32 %v417, %v765
      %v767 = vand.u32 %v766, 4294901760
      %v768 = vsub.f32 %v766, %v767
      %v769 = vand.u32 %v768, 4294901760
      %770 = vmatmul.mubr.f32.gmra.mxu0 %v769
      %v771 = vpop.f32.mrf.mxu0
      %v772 = vadd.f32 %v380, %v771
      %v773 = vpop.f32.mrf.mxu0
      %774 = vmatprep.mubr.f32.mxu0 0.0
      %v775 = vand.u32 %v420, 4294901760
      %v776 = vsub.f32 %v420, %v775
      %v777 = vand.u32 %v776, 4294901760
      %v778 = vsub.f32 %v776, %v777
      %v779 = vand.u32 %v778, 4294901760
      %780 = vmatmul.mubr.f32.gmra.mxu0 %v779
      %v781 = vpop.f32.mrf.mxu0
      %v782 = vadd.f32 %v380, %v781
      %v783 = vpop.f32.mrf.mxu0
      %784 = vmatprep.mubr.f32.mxu0 0.0
      %v785 = vand.u32 %v423, 4294901760
      %v786 = vsub.f32 %v423, %v785
      %v787 = vand.u32 %v786, 4294901760
      %v788 = vsub.f32 %v786, %v787
      %v789 = vand.u32 %v788, 4294901760
      %790 = vmatmul.mubr.f32.gmra.mxu0 %v789
      %v791 = vpop.f32.mrf.mxu0
      %v792 = vadd.f32 %v380, %v791
      %v793 = vpop.f32.mrf.mxu0
      %794 = vmatprep.mubr.f32.mxu0 0.0
      %v795 = vand.u32 %v426, 4294901760
      %v796 = vsub.f32 %v426, %v795
      %v797 = vand.u32 %v796, 4294901760
      %v798 = vsub.f32 %v796, %v797
      %v799 = vand.u32 %v798, 4294901760
      %800 = vmatmul.mubr.f32.gmra.mxu0 %v799
      %v801 = vpop.f32.mrf.mxu0
      %v802 = vadd.f32 %v380, %v801
      %v803 = vpop.f32.mrf.mxu0
      %804 = vmatprep.mubr.f32.mxu0 0.0
      %v805 = vand.u32 %v429, 4294901760
      %v806 = vsub.f32 %v429, %v805
      %v807 = vand.u32 %v806, 4294901760
      %v808 = vsub.f32 %v806, %v807
      %v809 = vand.u32 %v808, 4294901760
      %810 = vmatmul.mubr.f32.gmra.mxu0 %v809
      %v811 = vpop.f32.mrf.mxu0
      %v812 = vadd.f32 %v380, %v811
      %v813 = vpop.f32.mrf.mxu0
      %814 = vmatprep.mubr.f32.mxu0 0.0
      %v815 = vand.u32 %v432, 4294901760
      %v816 = vsub.f32 %v432, %v815
      %v817 = vand.u32 %v816, 4294901760
      %v818 = vsub.f32 %v816, %v817
      %v819 = vand.u32 %v818, 4294901760
      %820 = vmatmul.mubr.f32.gmra.mxu0 %v819
      %v821 = vpop.f32.mrf.mxu0
      %v822 = vadd.f32 %v380, %v821
      %v823 = vpop.f32.mrf.mxu0
      %824 = vmatprep.mubr.f32.mxu0 0.0
      %v825 = vand.u32 %v435, 4294901760
      %v826 = vsub.f32 %v435, %v825
      %v827 = vand.u32 %v826, 4294901760
      %v828 = vsub.f32 %v826, %v827
      %v829 = vand.u32 %v828, 4294901760
      %830 = vmatmul.mubr.f32.gmra.mxu0 %v829
      %v831 = vpop.f32.mrf.mxu0
      %v832 = vadd.f32 %v380, %v831
      %v833 = vpop.f32.mrf.mxu0
      %834 = vmatprep.mubr.f32.mxu0 0.0
      %v835 = vand.u32 %v438, 4294901760
      %v836 = vsub.f32 %v438, %v835
      %v837 = vand.u32 %v836, 4294901760
      %v838 = vsub.f32 %v836, %v837
      %v839 = vand.u32 %v838, 4294901760
      %840 = vmatmul.mubr.f32.gmra.mxu0 %v839
      %v841 = vpop.f32.mrf.mxu0
      %v842 = vadd.f32 %v380, %v841
      %v843 = vpop.f32.mrf.mxu0
      %844 = vmatprep.mubr.f32.mxu0 0.0
      %v845 = vand.u32 %v441, 4294901760
      %v846 = vsub.f32 %v441, %v845
      %v847 = vand.u32 %v846, 4294901760
      %v848 = vsub.f32 %v846, %v847
      %v849 = vand.u32 %v848, 4294901760
      %850 = vmatmul.mubr.f32.gmra.mxu0 %v849
      %v851 = vpop.f32.mrf.mxu0
      %v852 = vadd.f32 %v380, %v851
      %v853 = vpop.f32.mrf.mxu0
      %854 = vmatprep.mubr.f32.mxu0 0.0
      %v855 = vand.u32 %v444, 4294901760
      %v856 = vsub.f32 %v444, %v855
      %v857 = vand.u32 %v856, 4294901760
      %v858 = vsub.f32 %v856, %v857
      %v859 = vand.u32 %v858, 4294901760
      %860 = vmatmul.mubr.f32.gmra.mxu0 %v859
      %v861 = vpop.f32.mrf.mxu0
      %v862 = vadd.f32 %v380, %v861
      %v863 = vpop.f32.mrf.mxu0
      %864 = vmatprep.mubr.f32.mxu0 0.0
      %v865 = vand.u32 %v447, 4294901760
      %v866 = vsub.f32 %v447, %v865
      %v867 = vand.u32 %v866, 4294901760
      %v868 = vsub.f32 %v866, %v867
      %v869 = vand.u32 %v868, 4294901760
      %870 = vmatmul.mubr.f32.gmra.mxu0 %v869
      %v871 = vpop.f32.mrf.mxu0
      %v872 = vadd.f32 %v380, %v871
      %v873 = vpop.f32.mrf.mxu0
      %874 = vmatprep.mubr.f32.mxu0 0.0
      %v875 = vand.u32 %v450, 4294901760
      %v876 = vsub.f32 %v450, %v875
      %v877 = vand.u32 %v876, 4294901760
      %v878 = vsub.f32 %v876, %v877
      %v879 = vand.u32 %v878, 4294901760
      %880 = vmatmul.mubr.f32.gmra.mxu0 %v879
      %v881 = vpop.f32.mrf.mxu0
      %v882 = vadd.f32 %v380, %v881
      %v883 = vpop.f32.mrf.mxu0
      %884 = vmatprep.mubr.f32.mxu0 0.0
      %v885 = vand.u32 %v453, 4294901760
      %v886 = vsub.f32 %v453, %v885
      %v887 = vand.u32 %v886, 4294901760
      %v888 = vsub.f32 %v886, %v887
      %v889 = vand.u32 %v888, 4294901760
      %890 = vmatmul.mubr.f32.gmra.mxu0 %v889
      %v891 = vpop.f32.mrf.mxu0
      %v892 = vadd.f32 %v380, %v891
      %v893 = vpop.f32.mrf.mxu0
      %894 = vmatprep.mubr.f32.mxu0 0.0
      %v895 = vand.u32 %v456, 4294901760
      %v896 = vsub.f32 %v456, %v895
      %v897 = vand.u32 %v896, 4294901760
      %v898 = vsub.f32 %v896, %v897
      %v899 = vand.u32 %v898, 4294901760
      %900 = vmatmul.mubr.f32.gmra.mxu0 %v899
      %v901 = vpop.f32.mrf.mxu0
      %v902 = vadd.f32 %v380, %v901
      %v903 = vpop.f32.mrf.mxu0
      %904 = vmatprep.mubr.f32.mxu0 0.0
      %v905 = vand.u32 %v459, 4294901760
      %v906 = vsub.f32 %v459, %v905
      %v907 = vand.u32 %v906, 4294901760
      %v908 = vsub.f32 %v906, %v907
      %v909 = vand.u32 %v908, 4294901760
      %910 = vmatmul.mubr.f32.gmra.mxu0 %v909
      %v911 = vpop.f32.mrf.mxu0
      %v912 = vadd.f32 %v380, %v911
      %v913 = vpop.f32.mrf.mxu0
      %914 = vmatprep.mubr.f32.mxu0 0.0
      %v915 = vand.u32 %v462, 4294901760
      %v916 = vsub.f32 %v462, %v915
      %v917 = vand.u32 %v916, 4294901760
      %v918 = vsub.f32 %v916, %v917
      %v919 = vand.u32 %v918, 4294901760
      %920 = vmatmul.mubr.f32.gmra.mxu0 %v919
      %v921 = vpop.f32.mrf.mxu0
      %v922 = vadd.f32 %v380, %v921
      %v923 = vpop.f32.mrf.mxu0
      %924 = vmatprep.mubr.f32.mxu0 0.0
      %v925 = vand.u32 %v465, 4294901760
      %v926 = vsub.f32 %v465, %v925
      %v927 = vand.u32 %v926, 4294901760
      %v928 = vsub.f32 %v926, %v927
      %v929 = vand.u32 %v928, 4294901760
      %930 = vmatmul.mubr.f32.gmra.mxu0 %v929
      %v931 = vpop.f32.mrf.mxu0
      %v932 = vadd.f32 %v380, %v931
      %v933 = vpop.f32.mrf.mxu0
      %934 = vmatprep.mubr.f32.mxu0 0.0
      %v935 = vand.u32 %v468, 4294901760
      %v936 = vsub.f32 %v468, %v935
      %v937 = vand.u32 %v936, 4294901760
      %v938 = vsub.f32 %v936, %v937
      %v939 = vand.u32 %v938, 4294901760
      %940 = vmatmul.mubr.f32.gmra.mxu0 %v939
      %v941 = vpop.f32.mrf.mxu0
      %v942 = vadd.f32 %v380, %v941
      %v943 = vpop.f32.mrf.mxu0
      %944 = vmatprep.mubr.f32.mxu0 0.0
      %v945 = vand.u32 %v471, 4294901760
      %v946 = vsub.f32 %v471, %v945
      %v947 = vand.u32 %v946, 4294901760
      %v948 = vsub.f32 %v946, %v947
      %v949 = vand.u32 %v948, 4294901760
      %950 = vmatmul.mubr.f32.gmra.mxu0 %v949
      %v951 = vpop.f32.mrf.mxu0
      %v952 = vadd.f32 %v380, %v951
      %v953 = vpop.f32.mrf.mxu0
      %954 = vmatprep.mubr.f32.mxu0 0.0
      %v955 = vand.u32 %v474, 4294901760
      %v956 = vsub.f32 %v474, %v955
      %v957 = vand.u32 %v956, 4294901760
      %v958 = vsub.f32 %v956, %v957
      %v959 = vand.u32 %v958, 4294901760
      %960 = vmatmul.mubr.f32.gmra.mxu0 %v959
      %v961 = vpop.f32.mrf.mxu0
      %v962 = vadd.f32 %v380, %v961
      %v963 = vpop.f32.mrf.mxu0
      %964 = vmatprep.mubr.f32.mxu0 0.0
      %v965 = vand.u32 %v477, 4294901760
      %v966 = vsub.f32 %v477, %v965
      %v967 = vand.u32 %v966, 4294901760
      %v968 = vsub.f32 %v966, %v967
      %v969 = vand.u32 %v968, 4294901760
      %970 = vmatmul.mubr.f32.gmra.mxu0 %v969
      %v971 = vpop.f32.mrf.mxu0
      %v972 = vadd.f32 %v380, %v971
      %v973 = vpop.f32.mrf.mxu0
      %974 = vmatprep.mubr.f32.mxu0 0.0
      %v975 = vand.u32 %v480, 4294901760
      %v976 = vsub.f32 %v480, %v975
      %v977 = vand.u32 %v976, 4294901760
      %v978 = vsub.f32 %v976, %v977
      %v979 = vand.u32 %v978, 4294901760
      %980 = vmatmul.mubr.f32.gmra.mxu0 %v979
      %v981 = vpop.f32.mrf.mxu0
      %v982 = vadd.f32 %v380, %v981
      %v983 = vpop.f32.mrf.mxu0
      %984 = vmatprep.mubr.f32.mxu0 0.0
      %v985 = vand.u32 %v483, 4294901760
      %v986 = vsub.f32 %v483, %v985
      %v987 = vand.u32 %v986, 4294901760
      %v988 = vsub.f32 %v986, %v987
      %v989 = vand.u32 %v988, 4294901760
      %990 = vmatmul.mubr.f32.gmra.mxu0 %v989
      %v991 = vpop.f32.mrf.mxu0
      %v992 = vadd.f32 %v380, %v991
      %v993 = vpop.f32.mrf.mxu0
      %994 = vmatprep.mubr.f32.mxu0 0.0
      %v995 = vand.u32 %v486, 4294901760
      %v996 = vsub.f32 %v486, %v995
      %v997 = vand.u32 %v996, 4294901760
      %v998 = vsub.f32 %v996, %v997
      %v999 = vand.u32 %v998, 4294901760
      %1000 = vmatmul.mubr.f32.gmra.mxu0 %v999
      %v1001 = vpop.f32.mrf.mxu0
      %v1002 = vadd.f32 %v380, %v1001
      %v1003 = vpop.f32.mrf.mxu0
      %1004 = vmatprep.mubr.f32.mxu0 0.0
      %v1005 = vand.u32 %v489, 4294901760
      %v1006 = vsub.f32 %v489, %v1005
      %v1007 = vand.u32 %v1006, 4294901760
      %v1008 = vsub.f32 %v1006, %v1007
      %v1009 = vand.u32 %v1008, 4294901760
      %1010 = vmatmul.mubr.f32.gmra.mxu0 %v1009
      %v1011 = vpop.f32.mrf.mxu0
      %v1012 = vadd.f32 %v380, %v1011
      %v1013 = vpop.f32.mrf.mxu0
      %1014 = vmatprep.mubr.f32.mxu0 0.0
      %v1015 = vand.u32 %v492, 4294901760
      %v1016 = vsub.f32 %v492, %v1015
      %v1017 = vand.u32 %v1016, 4294901760
      %v1018 = vsub.f32 %v1016, %v1017
      %v1019 = vand.u32 %v1018, 4294901760
      %1020 = vmatmul.mubr.f32.gmra.mxu0 %v1019
      %v1021 = vpop.f32.mrf.mxu0
      %v1022 = vadd.f32 %v380, %v1021
      %v1023 = vpop.f32.mrf.mxu0
      %1024 = vmatprep.mubr.f32.mxu0 0.0
      %v1025 = vand.u32 %v495, 4294901760
      %v1026 = vsub.f32 %v495, %v1025
      %v1027 = vand.u32 %v1026, 4294901760
      %v1028 = vsub.f32 %v1026, %v1027
      %v1029 = vand.u32 %v1028, 4294901760
      %1030 = vmatmul.mubr.f32.gmra.mxu0 %v1029
      %v1031 = vpop.f32.mrf.mxu0
      %v1032 = vadd.f32 %v380, %v1031
      %v1033 = vpop.f32.mrf.mxu0
      %1034 = vmatprep.mubr.f32.mxu0 0.0
      %v1035 = vand.u32 %v498, 4294901760
      %v1036 = vsub.f32 %v498, %v1035
      %v1037 = vand.u32 %v1036, 4294901760
      %v1038 = vsub.f32 %v1036, %v1037
      %v1039 = vand.u32 %v1038, 4294901760
      %1040 = vmatmul.mubr.f32.gmra.mxu0 %v1039
      %v1041 = vpop.f32.mrf.mxu0
      %v1042 = vadd.f32 %v380, %v1041
      %v1043 = vpop.f32.mrf.mxu0
      %1044 = vmatprep.mubr.f32.mxu0 0.0
      %v1045 = vand.u32 %v501, 4294901760
      %v1046 = vsub.f32 %v501, %v1045
      %v1047 = vand.u32 %v1046, 4294901760
      %v1048 = vsub.f32 %v1046, %v1047
      %v1049 = vand.u32 %v1048, 4294901760
      %1050 = vmatmul.mubr.f32.gmra.mxu0 %v1049
      %v1051 = vpop.f32.mrf.mxu0
      %v1052 = vadd.f32 %v380, %v1051
      %v1053 = vpop.f32.mrf.mxu0
      %1054 = vmatprep.mubr.f32.mxu0 0.0
      %v1055 = vand.u32 %v504, 4294901760
      %v1056 = vsub.f32 %v504, %v1055
      %v1057 = vand.u32 %v1056, 4294901760
      %v1058 = vsub.f32 %v1056, %v1057
      %v1059 = vand.u32 %v1058, 4294901760
      %1060 = vmatmul.mubr.f32.gmra.mxu0 %v1059
      %v1061 = vpop.f32.mrf.mxu0
      %v1062 = vadd.f32 %v380, %v1061
      %v1063 = vpop.f32.mrf.mxu0
      %1064 = vmatprep.mubr.f32.mxu0 0.0
      %v1065 = vand.u32 %v507, 4294901760
      %v1066 = vsub.f32 %v507, %v1065
      %v1067 = vand.u32 %v1066, 4294901760
      %v1068 = vsub.f32 %v1066, %v1067
      %v1069 = vand.u32 %v1068, 4294901760
      %1070 = vmatmul.mubr.f32.gmra.mxu0 %v1069
      %v1071 = vpop.f32.mrf.mxu0
      %v1072 = vadd.f32 %v380, %v1071
      %v1073 = vpop.f32.mrf.mxu0
      %1074 = vmatprep.mubr.f32.mxu0 0.0
      %v1075 = vand.u32 %v510, 4294901760
      %v1076 = vsub.f32 %v510, %v1075
      %v1077 = vand.u32 %v1076, 4294901760
      %v1078 = vsub.f32 %v1076, %v1077
      %v1079 = vand.u32 %v1078, 4294901760
      %1080 = vmatmul.mubr.f32.gmra.mxu0 %v1079
      %v1081 = vpop.f32.mrf.mxu0
      %v1082 = vadd.f32 %v380, %v1081
      %v1083 = vpop.f32.mrf.mxu0
      %1084 = vmatprep.mubr.f32.mxu0 0.0
      %v1085 = vand.u32 %v513, 4294901760
      %v1086 = vsub.f32 %v513, %v1085
      %v1087 = vand.u32 %v1086, 4294901760
      %v1088 = vsub.f32 %v1086, %v1087
      %v1089 = vand.u32 %v1088, 4294901760
      %1090 = vmatmul.mubr.f32.gmra.mxu0 %v1089
      %v1091 = vpop.f32.mrf.mxu0
      %v1092 = vadd.f32 %v380, %v1091
      %v1093 = vpop.f32.mrf.mxu0
      %1094 = vmatprep.mubr.f32.mxu0 0.0
      %v1095 = vand.u32 %v516, 4294901760
      %v1096 = vsub.f32 %v516, %v1095
      %v1097 = vand.u32 %v1096, 4294901760
      %v1098 = vsub.f32 %v1096, %v1097
      %v1099 = vand.u32 %v1098, 4294901760
      %1100 = vmatmul.mubr.f32.gmra.mxu0 %v1099
      %v1101 = vpop.f32.mrf.mxu0
      %v1102 = vadd.f32 %v380, %v1101
      %v1103 = vpop.f32.mrf.mxu0
      %1104 = vmatprep.mubr.f32.mxu0 0.0
      %v1105 = vand.u32 %v519, 4294901760
      %v1106 = vsub.f32 %v519, %v1105
      %v1107 = vand.u32 %v1106, 4294901760
      %v1108 = vsub.f32 %v1106, %v1107
      %v1109 = vand.u32 %v1108, 4294901760
      %1110 = vmatmul.mubr.f32.gmra.mxu0 %v1109
      %v1111 = vpop.f32.mrf.mxu0
      %v1112 = vadd.f32 %v380, %v1111
      %v1113 = vpop.f32.mrf.mxu0
      %1114 = vmatprep.mubr.f32.mxu0 0.0
      %v1115 = vand.u32 %v522, 4294901760
      %v1116 = vsub.f32 %v522, %v1115
      %v1117 = vand.u32 %v1116, 4294901760
      %v1118 = vsub.f32 %v1116, %v1117
      %v1119 = vand.u32 %v1118, 4294901760
      %1120 = vmatmul.mubr.f32.gmra.mxu0 %v1119
      %v1121 = vpop.f32.mrf.mxu0
      %v1122 = vadd.f32 %v380, %v1121
      %v1123 = vpop.f32.mrf.mxu0
      %1124 = vmatprep.mubr.f32.mxu0 0.0
      %v1125 = vand.u32 %v525, 4294901760
      %v1126 = vsub.f32 %v525, %v1125
      %v1127 = vand.u32 %v1126, 4294901760
      %v1128 = vsub.f32 %v1126, %v1127
      %v1129 = vand.u32 %v1128, 4294901760
      %1130 = vmatmul.mubr.f32.gmra.mxu0 %v1129
      %v1131 = vpop.f32.mrf.mxu0
      %v1132 = vadd.f32 %v380, %v1131
      %v1133 = vpop.f32.mrf.mxu0
      %1134 = vmatprep.mubr.f32.mxu0 0.0
      %v1135 = vand.u32 %v528, 4294901760
      %v1136 = vsub.f32 %v528, %v1135
      %v1137 = vand.u32 %v1136, 4294901760
      %v1138 = vsub.f32 %v1136, %v1137
      %v1139 = vand.u32 %v1138, 4294901760
      %1140 = vmatmul.mubr.f32.gmra.mxu0 %v1139
      %v1141 = vpop.f32.mrf.mxu0
      %v1142 = vadd.f32 %v380, %v1141
      %v1143 = vpop.f32.mrf.mxu0
      %1144 = vmatprep.mubr.f32.mxu0 0.0
      %v1145 = vand.u32 %v531, 4294901760
      %v1146 = vsub.f32 %v531, %v1145
      %v1147 = vand.u32 %v1146, 4294901760
      %v1148 = vsub.f32 %v1146, %v1147
      %v1149 = vand.u32 %v1148, 4294901760
      %1150 = vmatmul.mubr.f32.gmra.mxu0 %v1149
      %v1151 = vpop.f32.mrf.mxu0
      %v1152 = vadd.f32 %v380, %v1151
      %v1153 = vpop.f32.mrf.mxu0
      %1154 = vmatprep.mubr.f32.mxu0 0.0
      %v1155 = vand.u32 %v534, 4294901760
      %v1156 = vsub.f32 %v534, %v1155
      %v1157 = vand.u32 %v1156, 4294901760
      %v1158 = vsub.f32 %v1156, %v1157
      %v1159 = vand.u32 %v1158, 4294901760
      %1160 = vmatmul.mubr.f32.gmra.mxu0 %v1159
      %v1161 = vpop.f32.mrf.mxu0
      %v1162 = vadd.f32 %v380, %v1161
      %v1163 = vpop.f32.mrf.mxu0
      %1164 = vmatprep.mubr.f32.mxu0 0.0
      %v1165 = vand.u32 %v537, 4294901760
      %v1166 = vsub.f32 %v537, %v1165
      %v1167 = vand.u32 %v1166, 4294901760
      %v1168 = vsub.f32 %v1166, %v1167
      %v1169 = vand.u32 %v1168, 4294901760
      %1170 = vmatmul.mubr.f32.gmra.mxu0 %v1169
      %v1171 = vpop.f32.mrf.mxu0
      %v1172 = vadd.f32 %v380, %v1171
      %v1173 = vpop.f32.mrf.mxu0
      %1174 = vmatprep.mubr.f32.mxu0 0.0
      %v1175 = vand.u32 %v540, 4294901760
      %v1176 = vsub.f32 %v540, %v1175
      %v1177 = vand.u32 %v1176, 4294901760
      %v1178 = vsub.f32 %v1176, %v1177
      %v1179 = vand.u32 %v1178, 4294901760
      %1180 = vmatmul.mubr.f32.gmra.mxu0 %v1179
      %v1181 = vpop.f32.mrf.mxu0
      %v1182 = vadd.f32 %v380, %v1181
      %v1183 = vpop.f32.mrf.mxu0
      %1184 = vmatprep.mubr.f32.mxu0 0.0
      %v1185 = vand.u32 %v543, 4294901760
      %v1186 = vsub.f32 %v543, %v1185
      %v1187 = vand.u32 %v1186, 4294901760
      %v1188 = vsub.f32 %v1186, %v1187
      %v1189 = vand.u32 %v1188, 4294901760
      %1190 = vmatmul.mubr.f32.gmra.mxu0 %v1189
      %v1191 = vpop.f32.mrf.mxu0
      %v1192 = vadd.f32 %v380, %v1191
      %v1193 = vpop.f32.mrf.mxu0
      %1194 = vmatprep.mubr.f32.mxu0 0.0
      %v1195 = vand.u32 %v546, 4294901760
      %v1196 = vsub.f32 %v546, %v1195
      %v1197 = vand.u32 %v1196, 4294901760
      %v1198 = vsub.f32 %v1196, %v1197
      %v1199 = vand.u32 %v1198, 4294901760
      %1200 = vmatmul.mubr.f32.gmra.mxu0 %v1199
      %v1201 = vpop.f32.mrf.mxu0
      %v1202 = vadd.f32 %v380, %v1201
      %v1203 = vpop.f32.mrf.mxu0
      %1204 = vmatprep.mubr.f32.mxu0 0.0
      %v1205 = vand.u32 %v549, 4294901760
      %v1206 = vsub.f32 %v549, %v1205
      %v1207 = vand.u32 %v1206, 4294901760
      %v1208 = vsub.f32 %v1206, %v1207
      %v1209 = vand.u32 %v1208, 4294901760
      %1210 = vmatmul.mubr.f32.gmra.mxu0 %v1209
      %v1211 = vpop.f32.mrf.mxu0
      %v1212 = vadd.f32 %v380, %v1211
      %v1213 = vpop.f32.mrf.mxu0
      %1214 = vmatprep.mubr.f32.mxu0 0.0
      %v1215 = vand.u32 %v552, 4294901760
      %v1216 = vsub.f32 %v552, %v1215
      %v1217 = vand.u32 %v1216, 4294901760
      %v1218 = vsub.f32 %v1216, %v1217
      %v1219 = vand.u32 %v1218, 4294901760
      %1220 = vmatmul.mubr.f32.gmra.mxu0 %v1219
      %v1221 = vpop.f32.mrf.mxu0
      %v1222 = vadd.f32 %v380, %v1221
      %v1223 = vpop.f32.mrf.mxu0
      %1224 = vmatprep.mubr.f32.mxu0 0.0
      %v1225 = vand.u32 %v555, 4294901760
      %v1226 = vsub.f32 %v555, %v1225
      %v1227 = vand.u32 %v1226, 4294901760
      %v1228 = vsub.f32 %v1226, %v1227
      %v1229 = vand.u32 %v1228, 4294901760
      %1230 = vmatmul.mubr.f32.gmra.mxu0 %v1229
      %v1231 = vpop.f32.mrf.mxu0
      %v1232 = vadd.f32 %v380, %v1231
      %v1233 = vpop.f32.mrf.mxu0
      %1234 = vmatprep.mubr.f32.mxu0 0.0
      %v1235 = vand.u32 %v558, 4294901760
      %v1236 = vsub.f32 %v558, %v1235
      %v1237 = vand.u32 %v1236, 4294901760
      %v1238 = vsub.f32 %v1236, %v1237
      %v1239 = vand.u32 %v1238, 4294901760
      %1240 = vmatmul.mubr.f32.gmra.mxu0 %v1239
      %v1241 = vpop.f32.mrf.mxu0
      %v1242 = vadd.f32 %v380, %v1241
      %v1243 = vpop.f32.mrf.mxu0
      %1244 = vmatprep.mubr.f32.mxu0 0.0
      %v1245 = vand.u32 %v561, 4294901760
      %v1246 = vsub.f32 %v561, %v1245
      %v1247 = vand.u32 %v1246, 4294901760
      %v1248 = vsub.f32 %v1246, %v1247
      %v1249 = vand.u32 %v1248, 4294901760
      %1250 = vmatmul.mubr.f32.gmra.mxu0 %v1249
      %v1251 = vpop.f32.mrf.mxu0
      %v1252 = vadd.f32 %v380, %v1251
      %v1253 = vpop.f32.mrf.mxu0
      %1254 = vmatprep.mubr.f32.mxu0 0.0
      %v1255 = vand.u32 %v564, 4294901760
      %v1256 = vsub.f32 %v564, %v1255
      %v1257 = vand.u32 %v1256, 4294901760
      %v1258 = vsub.f32 %v1256, %v1257
      %v1259 = vand.u32 %v1258, 4294901760
      %1260 = vmatmul.mubr.f32.gmra.mxu0 %v1259
      %v1261 = vpop.f32.mrf.mxu0
      %v1262 = vadd.f32 %v380, %v1261
      %v1263 = vpop.f32.mrf.mxu0
      %1264 = vmatprep.mubr.f32.mxu0 0.0
      %v1265 = vand.u32 %v567, 4294901760
      %v1266 = vsub.f32 %v567, %v1265
      %v1267 = vand.u32 %v1266, 4294901760
      %v1268 = vsub.f32 %v1266, %v1267
      %v1269 = vand.u32 %v1268, 4294901760
      %1270 = vmatmul.mubr.f32.gmra.mxu0 %v1269
      %v1271 = vpop.f32.mrf.mxu0
      %v1272 = vadd.f32 %v380, %v1271
      %v1273 = vpop.f32.mrf.mxu0
      %1274 = vmatprep.mubr.f32.mxu0 0.0
      %v1275 = vand.u32 %v570, 4294901760
      %v1276 = vsub.f32 %v570, %v1275
      %v1277 = vand.u32 %v1276, 4294901760
      %v1278 = vsub.f32 %v1276, %v1277
      %v1279 = vand.u32 %v1278, 4294901760
      %1280 = vmatmul.mubr.f32.gmra.mxu0 %v1279
      %v1281 = vpop.f32.mrf.mxu0
      %v1282 = vadd.f32 %v380, %v1281
      %v1283 = vpop.f32.mrf.mxu0
      %1284 = vmatprep.mubr.f32.mxu0 0.0
      %v1285 = vand.u32 %v573, 4294901760
      %v1286 = vsub.f32 %v573, %v1285
      %v1287 = vand.u32 %v1286, 4294901760
      %v1288 = vsub.f32 %v1286, %v1287
      %v1289 = vand.u32 %v1288, 4294901760
      %1290 = vmatmul.mubr.f32.gmra.mxu0 %v1289
      %v1291 = vpop.f32.mrf.mxu0
      %v1292 = vadd.f32 %v380, %v1291
      %v1293 = vpop.f32.mrf.mxu0
      %1294 = vdwg.mxu0
      %1295 = vmatprep.subr.mxu0 0.0
      %1296 = vmatpush1.msra.mxu0 0.0
      %1297 = vmatprep.subr.mxu0 0.0
      %1298 = vmatpush1.msra.mxu0 0.0
      %1299 = vmatprep.subr.mxu0 0.0
      %1300 = vmatpush1.msra.mxu0 0.0
      %1301 = vmatprep.subr.mxu0 0.0
      %1302 = vmatpush1.msra.mxu0 0.0
      %1303 = vmatprep.subr.mxu0 0.0
      %1304 = vmatpush1.msra.mxu0 0.0
      %1305 = vmatprep.subr.mxu0 0.0
      %v1306 = vand.u32 %v577, 4294901760
      %v1307 = vsub.f32 %v577, %v1306
      %v1308 = vand.u32 %v1307, 4294901760
      %v1309 = vsub.f32 %v1307, %v1308
      %v1310 = vand.u32 %v1309, 4294901760
      %1311 = vmatpush1.msra.mxu0 %v1310
      %1312 = vmatprep.subr.mxu0 0.0
      %v1313 = vand.u32 %v373, 4294901760
      %v1314 = vsub.f32 %v373, %v1313
      %v1315 = vand.u32 %v1314, 4294901760
      %v1316 = vsub.f32 %v1314, %v1315
      %v1317 = vand.u32 %v1316, 4294901760
      %1318 = vmatpush1.msra.mxu0 %v1317
      %1319 = vmatprep.subr.mxu0 0.0
      %v1320 = vand.u32 %v372, 4294901760
      %v1321 = vsub.f32 %v372, %v1320
      %v1322 = vand.u32 %v1321, 4294901760
      %v1323 = vsub.f32 %v1321, %v1322
      %v1324 = vand.u32 %v1323, 4294901760
      %1325 = vmatpush1.msra.mxu0 %v1324
      %1326 = vmatprep.subr.mxu0 0.0
      %v1327 = vand.u32 %v371, 4294901760
      %v1328 = vsub.f32 %v371, %v1327
      %v1329 = vand.u32 %v1328, 4294901760
      %v1330 = vsub.f32 %v1328, %v1329
      %v1331 = vand.u32 %v1330, 4294901760
      %1332 = vmatpush1.msra.mxu0 %v1331
      %1333 = vmatprep.subr.mxu0 0.0
      %v1334 = vand.u32 %v370, 4294901760
      %v1335 = vsub.f32 %v370, %v1334
      %v1336 = vand.u32 %v1335, 4294901760
      %v1337 = vsub.f32 %v1335, %v1336
      %v1338 = vand.u32 %v1337, 4294901760
      %1339 = vmatpush1.msra.mxu0 %v1338
      %1340 = vmatprep.subr.mxu0 0.0
      %v1341 = vand.u32 %v369, 4294901760
      %v1342 = vsub.f32 %v369, %v1341
      %v1343 = vand.u32 %v1342, 4294901760
      %v1344 = vsub.f32 %v1342, %v1343
      %v1345 = vand.u32 %v1344, 4294901760
      %1346 = vmatpush1.msra.mxu0 %v1345
      %1347 = vmatprep.subr.mxu0 0.0
      %v1348 = vand.u32 %v368, 4294901760
      %v1349 = vsub.f32 %v368, %v1348
      %v1350 = vand.u32 %v1349, 4294901760
      %v1351 = vsub.f32 %v1349, %v1350
      %v1352 = vand.u32 %v1351, 4294901760
      %1353 = vmatpush1.msra.mxu0 %v1352
      %1354 = vmatprep.subr.mxu0 0.0
      %v1355 = vand.u32 %v367, 4294901760
      %v1356 = vsub.f32 %v367, %v1355
      %v1357 = vand.u32 %v1356, 4294901760
      %v1358 = vsub.f32 %v1356, %v1357
      %v1359 = vand.u32 %v1358, 4294901760
      %1360 = vmatpush1.msra.mxu0 %v1359
      %1361 = vmatprep.subr.mxu0 0.0
      %v1362 = vand.u32 %v366, 4294901760
      %v1363 = vsub.f32 %v366, %v1362
      %v1364 = vand.u32 %v1363, 4294901760
      %v1365 = vsub.f32 %v1363, %v1364
      %v1366 = vand.u32 %v1365, 4294901760
      %1367 = vmatpush1.msra.mxu0 %v1366
      %1368 = vmatprep.subr.mxu0 0.0
      %v1369 = vand.u32 %v365, 4294901760
      %v1370 = vsub.f32 %v365, %v1369
      %v1371 = vand.u32 %v1370, 4294901760
      %v1372 = vsub.f32 %v1370, %v1371
      %v1373 = vand.u32 %v1372, 4294901760
      %1374 = vmatpush1.msra.mxu0 %v1373
      %1375 = vmatprep.subr.mxu0 0.0
      %v1376 = vand.u32 %v364, 4294901760
      %v1377 = vsub.f32 %v364, %v1376
      %v1378 = vand.u32 %v1377, 4294901760
      %v1379 = vsub.f32 %v1377, %v1378
      %v1380 = vand.u32 %v1379, 4294901760
      %1381 = vmatpush1.msra.mxu0 %v1380
      %1382 = vmatprep.subr.mxu0 0.0
      %1383 = vmatpush2.msra.mxu0 0.0
      %1384 = vmatprep.subr.mxu0 0.0
      %1385 = vmatpush2.msra.mxu0 0.0
      %1386 = vmatprep.subr.mxu0 0.0
      %1387 = vmatpush2.msra.mxu0 0.0
      %1388 = vmatprep.subr.mxu0 0.0
      %1389 = vmatpush2.msra.mxu0 0.0
      %1390 = vmatprep.subr.mxu0 0.0
      %1391 = vmatpush2.msra.mxu0 0.0
      %1392 = vmatprep.subr.mxu0 0.0
      %1393 = vmatpush2.msra.mxu0 0.0
      %1394 = vmatprep.subr.mxu0 0.0
      %1395 = vmatpush2.msra.mxu0 0.0
      %1396 = vmatprep.subr.mxu0 0.0
      %1397 = vmatpush2.msra.mxu0 0.0
      %1398 = vmatprep.subr.mxu0 0.0
      %1399 = vmatpush2.msra.mxu0 0.0
      %1400 = vmatprep.subr.mxu0 0.0
      %1401 = vmatpush2.msra.mxu0 0.0
      %1402 = vmatprep.subr.mxu0 0.0
      %1403 = vmatpush2.msra.mxu0 0.0
      %1404 = vmatprep.subr.mxu0 0.0
      %1405 = vmatpush2.msra.mxu0 0.0
      %1406 = vmatprep.subr.mxu0 0.0
      %1407 = vmatpush2.msra.mxu0 0.0
      %1408 = vmatprep.subr.mxu0 0.0
      %1409 = vmatpush2.msra.mxu0 0.0
      %1410 = vmatprep.subr.mxu0 0.0
      %1411 = vmatpush2.msra.mxu0 0.0
      %1412 = vmatprep.subr.mxu0 0.0
      %1413 = vmatpush2.msra.mxu0 0.0
      %1414 = vmatprep.mubr.f32.mxu0 0.0
      %v1415 = vand.u32 %v384, 4294901760
      %1416 = vmatmul.mubr.f32.gmra.mxu0 %v1415
      %v1417 = vpop.f32.mrf.mxu0
      %v1418 = vadd.f32 %v662, %v1417
      %v1419 = vpop.f32.mrf.mxu0
      %1420 = vmatprep.mubr.f32.mxu0 0.0
      %v1421 = vand.u32 %v387, 4294901760
      %1422 = vmatmul.mubr.f32.gmra.mxu0 %v1421
      %v1423 = vpop.f32.mrf.mxu0
      %v1424 = vadd.f32 %v672, %v1423
      %v1425 = vpop.f32.mrf.mxu0
      %1426 = vmatprep.mubr.f32.mxu0 0.0
      %v1427 = vand.u32 %v390, 4294901760
      %1428 = vmatmul.mubr.f32.gmra.mxu0 %v1427
      %v1429 = vpop.f32.mrf.mxu0
      %v1430 = vadd.f32 %v682, %v1429
      %v1431 = vpop.f32.mrf.mxu0
      %1432 = vmatprep.mubr.f32.mxu0 0.0
      %v1433 = vand.u32 %v393, 4294901760
      %1434 = vmatmul.mubr.f32.gmra.mxu0 %v1433
      %v1435 = vpop.f32.mrf.mxu0
      %v1436 = vadd.f32 %v692, %v1435
      %v1437 = vpop.f32.mrf.mxu0
      %1438 = vmatprep.mubr.f32.mxu0 0.0
      %v1439 = vand.u32 %v396, 4294901760
      %1440 = vmatmul.mubr.f32.gmra.mxu0 %v1439
      %v1441 = vpop.f32.mrf.mxu0
      %v1442 = vadd.f32 %v702, %v1441
      %v1443 = vpop.f32.mrf.mxu0
      %1444 = vmatprep.mubr.f32.mxu0 0.0
      %v1445 = vand.u32 %v399, 4294901760
      %1446 = vmatmul.mubr.f32.gmra.mxu0 %v1445
      %v1447 = vpop.f32.mrf.mxu0
      %v1448 = vadd.f32 %v712, %v1447
      %v1449 = vpop.f32.mrf.mxu0
      %1450 = vmatprep.mubr.f32.mxu0 0.0
      %v1451 = vand.u32 %v402, 4294901760
      %1452 = vmatmul.mubr.f32.gmra.mxu0 %v1451
      %v1453 = vpop.f32.mrf.mxu0
      %v1454 = vadd.f32 %v722, %v1453
      %v1455 = vpop.f32.mrf.mxu0
      %1456 = vmatprep.mubr.f32.mxu0 0.0
      %v1457 = vand.u32 %v405, 4294901760
      %1458 = vmatmul.mubr.f32.gmra.mxu0 %v1457
      %v1459 = vpop.f32.mrf.mxu0
      %v1460 = vadd.f32 %v732, %v1459
      %v1461 = vpop.f32.mrf.mxu0
      %1462 = vmatprep.mubr.f32.mxu0 0.0
      %v1463 = vand.u32 %v408, 4294901760
      %1464 = vmatmul.mubr.f32.gmra.mxu0 %v1463
      %v1465 = vpop.f32.mrf.mxu0
      %v1466 = vadd.f32 %v742, %v1465
      %v1467 = vpop.f32.mrf.mxu0
      %1468 = vmatprep.mubr.f32.mxu0 0.0
      %v1469 = vand.u32 %v411, 4294901760
      %1470 = vmatmul.mubr.f32.gmra.mxu0 %v1469
      %v1471 = vpop.f32.mrf.mxu0
      %v1472 = vadd.f32 %v752, %v1471
      %v1473 = vpop.f32.mrf.mxu0
      %1474 = vmatprep.mubr.f32.mxu0 0.0
      %v1475 = vand.u32 %v414, 4294901760
      %1476 = vmatmul.mubr.f32.gmra.mxu0 %v1475
      %v1477 = vpop.f32.mrf.mxu0
      %v1478 = vadd.f32 %v762, %v1477
      %v1479 = vpop.f32.mrf.mxu0
      %1480 = vmatprep.mubr.f32.mxu0 0.0
      %v1481 = vand.u32 %v417, 4294901760
      %1482 = vmatmul.mubr.f32.gmra.mxu0 %v1481
      %v1483 = vpop.f32.mrf.mxu0
      %v1484 = vadd.f32 %v772, %v1483
      %v1485 = vpop.f32.mrf.mxu0
      %1486 = vmatprep.mubr.f32.mxu0 0.0
      %v1487 = vand.u32 %v420, 4294901760
      %1488 = vmatmul.mubr.f32.gmra.mxu0 %v1487
      %v1489 = vpop.f32.mrf.mxu0
      %v1490 = vadd.f32 %v782, %v1489
      %v1491 = vpop.f32.mrf.mxu0
      %1492 = vmatprep.mubr.f32.mxu0 0.0
      %v1493 = vand.u32 %v423, 4294901760
      %1494 = vmatmul.mubr.f32.gmra.mxu0 %v1493
      %v1495 = vpop.f32.mrf.mxu0
      %v1496 = vadd.f32 %v792, %v1495
      %v1497 = vpop.f32.mrf.mxu0
      %1498 = vmatprep.mubr.f32.mxu0 0.0
      %v1499 = vand.u32 %v426, 4294901760
      %1500 = vmatmul.mubr.f32.gmra.mxu0 %v1499
      %v1501 = vpop.f32.mrf.mxu0
      %v1502 = vadd.f32 %v802, %v1501
      %v1503 = vpop.f32.mrf.mxu0
      %1504 = vmatprep.mubr.f32.mxu0 0.0
      %v1505 = vand.u32 %v429, 4294901760
      %1506 = vmatmul.mubr.f32.gmra.mxu0 %v1505
      %v1507 = vpop.f32.mrf.mxu0
      %v1508 = vadd.f32 %v812, %v1507
      %v1509 = vpop.f32.mrf.mxu0
      %1510 = vmatprep.mubr.f32.mxu0 0.0
      %v1511 = vand.u32 %v432, 4294901760
      %1512 = vmatmul.mubr.f32.gmra.mxu0 %v1511
      %v1513 = vpop.f32.mrf.mxu0
      %v1514 = vadd.f32 %v822, %v1513
      %v1515 = vpop.f32.mrf.mxu0
      %1516 = vmatprep.mubr.f32.mxu0 0.0
      %v1517 = vand.u32 %v435, 4294901760
      %1518 = vmatmul.mubr.f32.gmra.mxu0 %v1517
      %v1519 = vpop.f32.mrf.mxu0
      %v1520 = vadd.f32 %v832, %v1519
      %v1521 = vpop.f32.mrf.mxu0
      %1522 = vmatprep.mubr.f32.mxu0 0.0
      %v1523 = vand.u32 %v438, 4294901760
      %1524 = vmatmul.mubr.f32.gmra.mxu0 %v1523
      %v1525 = vpop.f32.mrf.mxu0
      %v1526 = vadd.f32 %v842, %v1525
      %v1527 = vpop.f32.mrf.mxu0
      %1528 = vmatprep.mubr.f32.mxu0 0.0
      %v1529 = vand.u32 %v441, 4294901760
      %1530 = vmatmul.mubr.f32.gmra.mxu0 %v1529
      %v1531 = vpop.f32.mrf.mxu0
      %v1532 = vadd.f32 %v852, %v1531
      %v1533 = vpop.f32.mrf.mxu0
      %1534 = vmatprep.mubr.f32.mxu0 0.0
      %v1535 = vand.u32 %v444, 4294901760
      %1536 = vmatmul.mubr.f32.gmra.mxu0 %v1535
      %v1537 = vpop.f32.mrf.mxu0
      %v1538 = vadd.f32 %v862, %v1537
      %v1539 = vpop.f32.mrf.mxu0
      %1540 = vmatprep.mubr.f32.mxu0 0.0
      %v1541 = vand.u32 %v447, 4294901760
      %1542 = vmatmul.mubr.f32.gmra.mxu0 %v1541
      %v1543 = vpop.f32.mrf.mxu0
      %v1544 = vadd.f32 %v872, %v1543
      %v1545 = vpop.f32.mrf.mxu0
      %1546 = vmatprep.mubr.f32.mxu0 0.0
      %v1547 = vand.u32 %v450, 4294901760
      %1548 = vmatmul.mubr.f32.gmra.mxu0 %v1547
      %v1549 = vpop.f32.mrf.mxu0
      %v1550 = vadd.f32 %v882, %v1549
      %v1551 = vpop.f32.mrf.mxu0
      %1552 = vmatprep.mubr.f32.mxu0 0.0
      %v1553 = vand.u32 %v453, 4294901760
      %1554 = vmatmul.mubr.f32.gmra.mxu0 %v1553
      %v1555 = vpop.f32.mrf.mxu0
      %v1556 = vadd.f32 %v892, %v1555
      %v1557 = vpop.f32.mrf.mxu0
      %1558 = vmatprep.mubr.f32.mxu0 0.0
      %v1559 = vand.u32 %v456, 4294901760
      %1560 = vmatmul.mubr.f32.gmra.mxu0 %v1559
      %v1561 = vpop.f32.mrf.mxu0
      %v1562 = vadd.f32 %v902, %v1561
      %v1563 = vpop.f32.mrf.mxu0
      %1564 = vmatprep.mubr.f32.mxu0 0.0
      %v1565 = vand.u32 %v459, 4294901760
      %1566 = vmatmul.mubr.f32.gmra.mxu0 %v1565
      %v1567 = vpop.f32.mrf.mxu0
      %v1568 = vadd.f32 %v912, %v1567
      %v1569 = vpop.f32.mrf.mxu0
      %1570 = vmatprep.mubr.f32.mxu0 0.0
      %v1571 = vand.u32 %v462, 4294901760
      %1572 = vmatmul.mubr.f32.gmra.mxu0 %v1571
      %v1573 = vpop.f32.mrf.mxu0
      %v1574 = vadd.f32 %v922, %v1573
      %v1575 = vpop.f32.mrf.mxu0
      %1576 = vmatprep.mubr.f32.mxu0 0.0
      %v1577 = vand.u32 %v465, 4294901760
      %1578 = vmatmul.mubr.f32.gmra.mxu0 %v1577
      %v1579 = vpop.f32.mrf.mxu0
      %v1580 = vadd.f32 %v932, %v1579
      %v1581 = vpop.f32.mrf.mxu0
      %1582 = vmatprep.mubr.f32.mxu0 0.0
      %v1583 = vand.u32 %v468, 4294901760
      %1584 = vmatmul.mubr.f32.gmra.mxu0 %v1583
      %v1585 = vpop.f32.mrf.mxu0
      %v1586 = vadd.f32 %v942, %v1585
      %v1587 = vpop.f32.mrf.mxu0
      %1588 = vmatprep.mubr.f32.mxu0 0.0
      %v1589 = vand.u32 %v471, 4294901760
      %1590 = vmatmul.mubr.f32.gmra.mxu0 %v1589
      %v1591 = vpop.f32.mrf.mxu0
      %v1592 = vadd.f32 %v952, %v1591
      %v1593 = vpop.f32.mrf.mxu0
      %1594 = vmatprep.mubr.f32.mxu0 0.0
      %v1595 = vand.u32 %v474, 4294901760
      %1596 = vmatmul.mubr.f32.gmra.mxu0 %v1595
      %v1597 = vpop.f32.mrf.mxu0
      %v1598 = vadd.f32 %v962, %v1597
      %v1599 = vpop.f32.mrf.mxu0
      %1600 = vmatprep.mubr.f32.mxu0 0.0
      %v1601 = vand.u32 %v477, 4294901760
      %1602 = vmatmul.mubr.f32.gmra.mxu0 %v1601
      %v1603 = vpop.f32.mrf.mxu0
      %v1604 = vadd.f32 %v972, %v1603
      %v1605 = vpop.f32.mrf.mxu0
      %1606 = vmatprep.mubr.f32.mxu0 0.0
      %v1607 = vand.u32 %v480, 4294901760
      %1608 = vmatmul.mubr.f32.gmra.mxu0 %v1607
      %v1609 = vpop.f32.mrf.mxu0
      %v1610 = vadd.f32 %v982, %v1609
      %v1611 = vpop.f32.mrf.mxu0
      %1612 = vmatprep.mubr.f32.mxu0 0.0
      %v1613 = vand.u32 %v483, 4294901760
      %1614 = vmatmul.mubr.f32.gmra.mxu0 %v1613
      %v1615 = vpop.f32.mrf.mxu0
      %v1616 = vadd.f32 %v992, %v1615
      %v1617 = vpop.f32.mrf.mxu0
      %1618 = vmatprep.mubr.f32.mxu0 0.0
      %v1619 = vand.u32 %v486, 4294901760
      %1620 = vmatmul.mubr.f32.gmra.mxu0 %v1619
      %v1621 = vpop.f32.mrf.mxu0
      %v1622 = vadd.f32 %v1002, %v1621
      %v1623 = vpop.f32.mrf.mxu0
      %1624 = vmatprep.mubr.f32.mxu0 0.0
      %v1625 = vand.u32 %v489, 4294901760
      %1626 = vmatmul.mubr.f32.gmra.mxu0 %v1625
      %v1627 = vpop.f32.mrf.mxu0
      %v1628 = vadd.f32 %v1012, %v1627
      %v1629 = vpop.f32.mrf.mxu0
      %1630 = vmatprep.mubr.f32.mxu0 0.0
      %v1631 = vand.u32 %v492, 4294901760
      %1632 = vmatmul.mubr.f32.gmra.mxu0 %v1631
      %v1633 = vpop.f32.mrf.mxu0
      %v1634 = vadd.f32 %v1022, %v1633
      %v1635 = vpop.f32.mrf.mxu0
      %1636 = vmatprep.mubr.f32.mxu0 0.0
      %v1637 = vand.u32 %v495, 4294901760
      %1638 = vmatmul.mubr.f32.gmra.mxu0 %v1637
      %v1639 = vpop.f32.mrf.mxu0
      %v1640 = vadd.f32 %v1032, %v1639
      %v1641 = vpop.f32.mrf.mxu0
      %1642 = vmatprep.mubr.f32.mxu0 0.0
      %v1643 = vand.u32 %v498, 4294901760
      %1644 = vmatmul.mubr.f32.gmra.mxu0 %v1643
      %v1645 = vpop.f32.mrf.mxu0
      %v1646 = vadd.f32 %v1042, %v1645
      %v1647 = vpop.f32.mrf.mxu0
      %1648 = vmatprep.mubr.f32.mxu0 0.0
      %v1649 = vand.u32 %v501, 4294901760
      %1650 = vmatmul.mubr.f32.gmra.mxu0 %v1649
      %v1651 = vpop.f32.mrf.mxu0
      %v1652 = vadd.f32 %v1052, %v1651
      %v1653 = vpop.f32.mrf.mxu0
      %1654 = vmatprep.mubr.f32.mxu0 0.0
      %v1655 = vand.u32 %v504, 4294901760
      %1656 = vmatmul.mubr.f32.gmra.mxu0 %v1655
      %v1657 = vpop.f32.mrf.mxu0
      %v1658 = vadd.f32 %v1062, %v1657
      %v1659 = vpop.f32.mrf.mxu0
      %1660 = vmatprep.mubr.f32.mxu0 0.0
      %v1661 = vand.u32 %v507, 4294901760
      %1662 = vmatmul.mubr.f32.gmra.mxu0 %v1661
      %v1663 = vpop.f32.mrf.mxu0
      %v1664 = vadd.f32 %v1072, %v1663
      %v1665 = vpop.f32.mrf.mxu0
      %1666 = vmatprep.mubr.f32.mxu0 0.0
      %v1667 = vand.u32 %v510, 4294901760
      %1668 = vmatmul.mubr.f32.gmra.mxu0 %v1667
      %v1669 = vpop.f32.mrf.mxu0
      %v1670 = vadd.f32 %v1082, %v1669
      %v1671 = vpop.f32.mrf.mxu0
      %1672 = vmatprep.mubr.f32.mxu0 0.0
      %v1673 = vand.u32 %v513, 4294901760
      %1674 = vmatmul.mubr.f32.gmra.mxu0 %v1673
      %v1675 = vpop.f32.mrf.mxu0
      %v1676 = vadd.f32 %v1092, %v1675
      %v1677 = vpop.f32.mrf.mxu0
      %1678 = vmatprep.mubr.f32.mxu0 0.0
      %v1679 = vand.u32 %v516, 4294901760
      %1680 = vmatmul.mubr.f32.gmra.mxu0 %v1679
      %v1681 = vpop.f32.mrf.mxu0
      %v1682 = vadd.f32 %v1102, %v1681
      %v1683 = vpop.f32.mrf.mxu0
      %1684 = vmatprep.mubr.f32.mxu0 0.0
      %v1685 = vand.u32 %v519, 4294901760
      %1686 = vmatmul.mubr.f32.gmra.mxu0 %v1685
      %v1687 = vpop.f32.mrf.mxu0
      %v1688 = vadd.f32 %v1112, %v1687
      %v1689 = vpop.f32.mrf.mxu0
      %1690 = vmatprep.mubr.f32.mxu0 0.0
      %v1691 = vand.u32 %v522, 4294901760
      %1692 = vmatmul.mubr.f32.gmra.mxu0 %v1691
      %v1693 = vpop.f32.mrf.mxu0
      %v1694 = vadd.f32 %v1122, %v1693
      %v1695 = vpop.f32.mrf.mxu0
      %1696 = vmatprep.mubr.f32.mxu0 0.0
      %v1697 = vand.u32 %v525, 4294901760
      %1698 = vmatmul.mubr.f32.gmra.mxu0 %v1697
      %v1699 = vpop.f32.mrf.mxu0
      %v1700 = vadd.f32 %v1132, %v1699
      %v1701 = vpop.f32.mrf.mxu0
      %1702 = vmatprep.mubr.f32.mxu0 0.0
      %v1703 = vand.u32 %v528, 4294901760
      %1704 = vmatmul.mubr.f32.gmra.mxu0 %v1703
      %v1705 = vpop.f32.mrf.mxu0
      %v1706 = vadd.f32 %v1142, %v1705
      %v1707 = vpop.f32.mrf.mxu0
      %1708 = vmatprep.mubr.f32.mxu0 0.0
      %v1709 = vand.u32 %v531, 4294901760
      %1710 = vmatmul.mubr.f32.gmra.mxu0 %v1709
      %v1711 = vpop.f32.mrf.mxu0
      %v1712 = vadd.f32 %v1152, %v1711
      %v1713 = vpop.f32.mrf.mxu0
      %1714 = vmatprep.mubr.f32.mxu0 0.0
      %v1715 = vand.u32 %v534, 4294901760
      %1716 = vmatmul.mubr.f32.gmra.mxu0 %v1715
      %v1717 = vpop.f32.mrf.mxu0
      %v1718 = vadd.f32 %v1162, %v1717
      %v1719 = vpop.f32.mrf.mxu0
      %1720 = vmatprep.mubr.f32.mxu0 0.0
      %v1721 = vand.u32 %v537, 4294901760
      %1722 = vmatmul.mubr.f32.gmra.mxu0 %v1721
      %v1723 = vpop.f32.mrf.mxu0
      %v1724 = vadd.f32 %v1172, %v1723
      %v1725 = vpop.f32.mrf.mxu0
      %1726 = vmatprep.mubr.f32.mxu0 0.0
      %v1727 = vand.u32 %v540, 4294901760
      %1728 = vmatmul.mubr.f32.gmra.mxu0 %v1727
      %v1729 = vpop.f32.mrf.mxu0
      %v1730 = vadd.f32 %v1182, %v1729
      %v1731 = vpop.f32.mrf.mxu0
      %1732 = vmatprep.mubr.f32.mxu0 0.0
      %v1733 = vand.u32 %v543, 4294901760
      %1734 = vmatmul.mubr.f32.gmra.mxu0 %v1733
      %v1735 = vpop.f32.mrf.mxu0
      %v1736 = vadd.f32 %v1192, %v1735
      %v1737 = vpop.f32.mrf.mxu0
      %1738 = vmatprep.mubr.f32.mxu0 0.0
      %v1739 = vand.u32 %v546, 4294901760
      %1740 = vmatmul.mubr.f32.gmra.mxu0 %v1739
      %v1741 = vpop.f32.mrf.mxu0
      %v1742 = vadd.f32 %v1202, %v1741
      %v1743 = vpop.f32.mrf.mxu0
      %1744 = vmatprep.mubr.f32.mxu0 0.0
      %v1745 = vand.u32 %v549, 4294901760
      %1746 = vmatmul.mubr.f32.gmra.mxu0 %v1745
      %v1747 = vpop.f32.mrf.mxu0
      %v1748 = vadd.f32 %v1212, %v1747
      %v1749 = vpop.f32.mrf.mxu0
      %1750 = vmatprep.mubr.f32.mxu0 0.0
      %v1751 = vand.u32 %v552, 4294901760
      %1752 = vmatmul.mubr.f32.gmra.mxu0 %v1751
      %v1753 = vpop.f32.mrf.mxu0
      %v1754 = vadd.f32 %v1222, %v1753
      %v1755 = vpop.f32.mrf.mxu0
      %1756 = vmatprep.mubr.f32.mxu0 0.0
      %v1757 = vand.u32 %v555, 4294901760
      %1758 = vmatmul.mubr.f32.gmra.mxu0 %v1757
      %v1759 = vpop.f32.mrf.mxu0
      %v1760 = vadd.f32 %v1232, %v1759
      %v1761 = vpop.f32.mrf.mxu0
      %1762 = vmatprep.mubr.f32.mxu0 0.0
      %v1763 = vand.u32 %v558, 4294901760
      %1764 = vmatmul.mubr.f32.gmra.mxu0 %v1763
      %v1765 = vpop.f32.mrf.mxu0
      %v1766 = vadd.f32 %v1242, %v1765
      %v1767 = vpop.f32.mrf.mxu0
      %1768 = vmatprep.mubr.f32.mxu0 0.0
      %v1769 = vand.u32 %v561, 4294901760
      %1770 = vmatmul.mubr.f32.gmra.mxu0 %v1769
      %v1771 = vpop.f32.mrf.mxu0
      %v1772 = vadd.f32 %v1252, %v1771
      %v1773 = vpop.f32.mrf.mxu0
      %1774 = vmatprep.mubr.f32.mxu0 0.0
      %v1775 = vand.u32 %v564, 4294901760
      %1776 = vmatmul.mubr.f32.gmra.mxu0 %v1775
      %v1777 = vpop.f32.mrf.mxu0
      %v1778 = vadd.f32 %v1262, %v1777
      %v1779 = vpop.f32.mrf.mxu0
      %1780 = vmatprep.mubr.f32.mxu0 0.0
      %v1781 = vand.u32 %v567, 4294901760
      %1782 = vmatmul.mubr.f32.gmra.mxu0 %v1781
      %v1783 = vpop.f32.mrf.mxu0
      %v1784 = vadd.f32 %v1272, %v1783
      %v1785 = vpop.f32.mrf.mxu0
      %1786 = vmatprep.mubr.f32.mxu0 0.0
      %v1787 = vand.u32 %v570, 4294901760
      %1788 = vmatmul.mubr.f32.gmra.mxu0 %v1787
      %v1789 = vpop.f32.mrf.mxu0
      %v1790 = vadd.f32 %v1282, %v1789
      %v1791 = vpop.f32.mrf.mxu0
      %1792 = vmatprep.mubr.f32.mxu0 0.0
      %v1793 = vand.u32 %v573, 4294901760
      %1794 = vmatmul.mubr.f32.gmra.mxu0 %v1793
      %v1795 = vpop.f32.mrf.mxu0
      %v1796 = vadd.f32 %v1292, %v1795
      %v1797 = vpop.f32.mrf.mxu0
      %1798 = vdwg.mxu0
      %1799 = vmatprep.subr.mxu0 0.0
      %1800 = vmatpush1.msra.mxu0 0.0
      %1801 = vmatprep.subr.mxu0 0.0
      %1802 = vmatpush1.msra.mxu0 0.0
      %1803 = vmatprep.subr.mxu0 0.0
      %1804 = vmatpush1.msra.mxu0 0.0
      %1805 = vmatprep.subr.mxu0 0.0
      %1806 = vmatpush1.msra.mxu0 0.0
      %1807 = vmatprep.subr.mxu0 0.0
      %1808 = vmatpush1.msra.mxu0 0.0
      %1809 = vmatprep.subr.mxu0 0.0
      %v1810 = vand.u32 %v577, 4294901760
      %v1811 = vsub.f32 %v577, %v1810
      %1812 = vmatpush1.msra.mxu0 %v1811
      %1813 = vmatprep.subr.mxu0 0.0
      %v1814 = vand.u32 %v373, 4294901760
      %v1815 = vsub.f32 %v373, %v1814
      %1816 = vmatpush1.msra.mxu0 %v1815
      %1817 = vmatprep.subr.mxu0 0.0
      %v1818 = vand.u32 %v372, 4294901760
      %v1819 = vsub.f32 %v372, %v1818
      %1820 = vmatpush1.msra.mxu0 %v1819
      %1821 = vmatprep.subr.mxu0 0.0
      %v1822 = vand.u32 %v371, 4294901760
      %v1823 = vsub.f32 %v371, %v1822
      %1824 = vmatpush1.msra.mxu0 %v1823
      %1825 = vmatprep.subr.mxu0 0.0
      %v1826 = vand.u32 %v370, 4294901760
      %v1827 = vsub.f32 %v370, %v1826
      %1828 = vmatpush1.msra.mxu0 %v1827
      %1829 = vmatprep.subr.mxu0 0.0
      %v1830 = vand.u32 %v369, 4294901760
      %v1831 = vsub.f32 %v369, %v1830
      %1832 = vmatpush1.msra.mxu0 %v1831
      %1833 = vmatprep.subr.mxu0 0.0
      %v1834 = vand.u32 %v368, 4294901760
      %v1835 = vsub.f32 %v368, %v1834
      %1836 = vmatpush1.msra.mxu0 %v1835
      %1837 = vmatprep.subr.mxu0 0.0
      %v1838 = vand.u32 %v367, 4294901760
      %v1839 = vsub.f32 %v367, %v1838
      %1840 = vmatpush1.msra.mxu0 %v1839
      %1841 = vmatprep.subr.mxu0 0.0
      %v1842 = vand.u32 %v366, 4294901760
      %v1843 = vsub.f32 %v366, %v1842
      %1844 = vmatpush1.msra.mxu0 %v1843
      %1845 = vmatprep.subr.mxu0 0.0
      %v1846 = vand.u32 %v365, 4294901760
      %v1847 = vsub.f32 %v365, %v1846
      %1848 = vmatpush1.msra.mxu0 %v1847
      %1849 = vmatprep.subr.mxu0 0.0
      %v1850 = vand.u32 %v364, 4294901760
      %v1851 = vsub.f32 %v364, %v1850
      %1852 = vmatpush1.msra.mxu0 %v1851
      %1853 = vmatprep.subr.mxu0 0.0
      %1854 = vmatpush2.msra.mxu0 0.0
      %1855 = vmatprep.subr.mxu0 0.0
      %1856 = vmatpush2.msra.mxu0 0.0
      %1857 = vmatprep.subr.mxu0 0.0
      %1858 = vmatpush2.msra.mxu0 0.0
      %1859 = vmatprep.subr.mxu0 0.0
      %1860 = vmatpush2.msra.mxu0 0.0
      %1861 = vmatprep.subr.mxu0 0.0
      %1862 = vmatpush2.msra.mxu0 0.0
      %1863 = vmatprep.subr.mxu0 0.0
      %1864 = vmatpush2.msra.mxu0 0.0
      %1865 = vmatprep.subr.mxu0 0.0
      %1866 = vmatpush2.msra.mxu0 0.0
      %1867 = vmatprep.subr.mxu0 0.0
      %1868 = vmatpush2.msra.mxu0 0.0
      %1869 = vmatprep.subr.mxu0 0.0
      %1870 = vmatpush2.msra.mxu0 0.0
      %1871 = vmatprep.subr.mxu0 0.0
      %1872 = vmatpush2.msra.mxu0 0.0
      %1873 = vmatprep.subr.mxu0 0.0
      %1874 = vmatpush2.msra.mxu0 0.0
      %1875 = vmatprep.subr.mxu0 0.0
      %1876 = vmatpush2.msra.mxu0 0.0
      %1877 = vmatprep.subr.mxu0 0.0
      %1878 = vmatpush2.msra.mxu0 0.0
      %1879 = vmatprep.subr.mxu0 0.0
      %1880 = vmatpush2.msra.mxu0 0.0
      %1881 = vmatprep.subr.mxu0 0.0
      %1882 = vmatpush2.msra.mxu0 0.0
      %1883 = vmatprep.subr.mxu0 0.0
      %1884 = vmatpush2.msra.mxu0 0.0
      %1885 = vmatprep.mubr.f32.mxu0 0.0
      %v1886 = vand.u32 %v384, 4294901760
      %v1887 = vsub.f32 %v384, %v1886
      %1888 = vmatmul.mubr.f32.gmra.mxu0 %v1887
      %v1889 = vpop.f32.mrf.mxu0
      %v1890 = vadd.f32 %v1418, %v1889
      %v1891 = vpop.f32.mrf.mxu0
      %1892 = vmatprep.mubr.f32.mxu0 0.0
      %v1893 = vand.u32 %v387, 4294901760
      %v1894 = vsub.f32 %v387, %v1893
      %1895 = vmatmul.mubr.f32.gmra.mxu0 %v1894
      %v1896 = vpop.f32.mrf.mxu0
      %v1897 = vadd.f32 %v1424, %v1896
      %v1898 = vpop.f32.mrf.mxu0
      %1899 = vmatprep.mubr.f32.mxu0 0.0
      %v1900 = vand.u32 %v390, 4294901760
      %v1901 = vsub.f32 %v390, %v1900
      %1902 = vmatmul.mubr.f32.gmra.mxu0 %v1901
      %v1903 = vpop.f32.mrf.mxu0
      %v1904 = vadd.f32 %v1430, %v1903
      %v1905 = vpop.f32.mrf.mxu0
      %1906 = vmatprep.mubr.f32.mxu0 0.0
      %v1907 = vand.u32 %v393, 4294901760
      %v1908 = vsub.f32 %v393, %v1907
      %1909 = vmatmul.mubr.f32.gmra.mxu0 %v1908
      %v1910 = vpop.f32.mrf.mxu0
      %v1911 = vadd.f32 %v1436, %v1910
      %v1912 = vpop.f32.mrf.mxu0
      %1913 = vmatprep.mubr.f32.mxu0 0.0
      %v1914 = vand.u32 %v396, 4294901760
      %v1915 = vsub.f32 %v396, %v1914
      %1916 = vmatmul.mubr.f32.gmra.mxu0 %v1915
      %v1917 = vpop.f32.mrf.mxu0
      %v1918 = vadd.f32 %v1442, %v1917
      %v1919 = vpop.f32.mrf.mxu0
      %1920 = vmatprep.mubr.f32.mxu0 0.0
      %v1921 = vand.u32 %v399, 4294901760
      %v1922 = vsub.f32 %v399, %v1921
      %1923 = vmatmul.mubr.f32.gmra.mxu0 %v1922
      %v1924 = vpop.f32.mrf.mxu0
      %v1925 = vadd.f32 %v1448, %v1924
      %v1926 = vpop.f32.mrf.mxu0
      %1927 = vmatprep.mubr.f32.mxu0 0.0
      %v1928 = vand.u32 %v402, 4294901760
      %v1929 = vsub.f32 %v402, %v1928
      %1930 = vmatmul.mubr.f32.gmra.mxu0 %v1929
      %v1931 = vpop.f32.mrf.mxu0
      %v1932 = vadd.f32 %v1454, %v1931
      %v1933 = vpop.f32.mrf.mxu0
      %1934 = vmatprep.mubr.f32.mxu0 0.0
      %v1935 = vand.u32 %v405, 4294901760
      %v1936 = vsub.f32 %v405, %v1935
      %1937 = vmatmul.mubr.f32.gmra.mxu0 %v1936
      %v1938 = vpop.f32.mrf.mxu0
      %v1939 = vadd.f32 %v1460, %v1938
      %v1940 = vpop.f32.mrf.mxu0
      %1941 = vmatprep.mubr.f32.mxu0 0.0
      %v1942 = vand.u32 %v408, 4294901760
      %v1943 = vsub.f32 %v408, %v1942
      %1944 = vmatmul.mubr.f32.gmra.mxu0 %v1943
      %v1945 = vpop.f32.mrf.mxu0
      %v1946 = vadd.f32 %v1466, %v1945
      %v1947 = vpop.f32.mrf.mxu0
      %1948 = vmatprep.mubr.f32.mxu0 0.0
      %v1949 = vand.u32 %v411, 4294901760
      %v1950 = vsub.f32 %v411, %v1949
      %1951 = vmatmul.mubr.f32.gmra.mxu0 %v1950
      %v1952 = vpop.f32.mrf.mxu0
      %v1953 = vadd.f32 %v1472, %v1952
      %v1954 = vpop.f32.mrf.mxu0
      %1955 = vmatprep.mubr.f32.mxu0 0.0
      %v1956 = vand.u32 %v414, 4294901760
      %v1957 = vsub.f32 %v414, %v1956
      %1958 = vmatmul.mubr.f32.gmra.mxu0 %v1957
      %v1959 = vpop.f32.mrf.mxu0
      %v1960 = vadd.f32 %v1478, %v1959
      %v1961 = vpop.f32.mrf.mxu0
      %1962 = vmatprep.mubr.f32.mxu0 0.0
      %v1963 = vand.u32 %v417, 4294901760
      %v1964 = vsub.f32 %v417, %v1963
      %1965 = vmatmul.mubr.f32.gmra.mxu0 %v1964
      %v1966 = vpop.f32.mrf.mxu0
      %v1967 = vadd.f32 %v1484, %v1966
      %v1968 = vpop.f32.mrf.mxu0
      %1969 = vmatprep.mubr.f32.mxu0 0.0
      %v1970 = vand.u32 %v420, 4294901760
      %v1971 = vsub.f32 %v420, %v1970
      %1972 = vmatmul.mubr.f32.gmra.mxu0 %v1971
      %v1973 = vpop.f32.mrf.mxu0
      %v1974 = vadd.f32 %v1490, %v1973
      %v1975 = vpop.f32.mrf.mxu0
      %1976 = vmatprep.mubr.f32.mxu0 0.0
      %v1977 = vand.u32 %v423, 4294901760
      %v1978 = vsub.f32 %v423, %v1977
      %1979 = vmatmul.mubr.f32.gmra.mxu0 %v1978
      %v1980 = vpop.f32.mrf.mxu0
      %v1981 = vadd.f32 %v1496, %v1980
      %v1982 = vpop.f32.mrf.mxu0
      %1983 = vmatprep.mubr.f32.mxu0 0.0
      %v1984 = vand.u32 %v426, 4294901760
      %v1985 = vsub.f32 %v426, %v1984
      %1986 = vmatmul.mubr.f32.gmra.mxu0 %v1985
      %v1987 = vpop.f32.mrf.mxu0
      %v1988 = vadd.f32 %v1502, %v1987
      %v1989 = vpop.f32.mrf.mxu0
      %1990 = vmatprep.mubr.f32.mxu0 0.0
      %v1991 = vand.u32 %v429, 4294901760
      %v1992 = vsub.f32 %v429, %v1991
      %1993 = vmatmul.mubr.f32.gmra.mxu0 %v1992
      %v1994 = vpop.f32.mrf.mxu0
      %v1995 = vadd.f32 %v1508, %v1994
      %v1996 = vpop.f32.mrf.mxu0
      %1997 = vmatprep.mubr.f32.mxu0 0.0
      %v1998 = vand.u32 %v432, 4294901760
      %v1999 = vsub.f32 %v432, %v1998
      %2000 = vmatmul.mubr.f32.gmra.mxu0 %v1999
      %v2001 = vpop.f32.mrf.mxu0
      %v2002 = vadd.f32 %v1514, %v2001
      %v2003 = vpop.f32.mrf.mxu0
      %2004 = vmatprep.mubr.f32.mxu0 0.0
      %v2005 = vand.u32 %v435, 4294901760
      %v2006 = vsub.f32 %v435, %v2005
      %2007 = vmatmul.mubr.f32.gmra.mxu0 %v2006
      %v2008 = vpop.f32.mrf.mxu0
      %v2009 = vadd.f32 %v1520, %v2008
      %v2010 = vpop.f32.mrf.mxu0
      %2011 = vmatprep.mubr.f32.mxu0 0.0
      %v2012 = vand.u32 %v438, 4294901760
      %v2013 = vsub.f32 %v438, %v2012
      %2014 = vmatmul.mubr.f32.gmra.mxu0 %v2013
      %v2015 = vpop.f32.mrf.mxu0
      %v2016 = vadd.f32 %v1526, %v2015
      %v2017 = vpop.f32.mrf.mxu0
      %2018 = vmatprep.mubr.f32.mxu0 0.0
      %v2019 = vand.u32 %v441, 4294901760
      %v2020 = vsub.f32 %v441, %v2019
      %2021 = vmatmul.mubr.f32.gmra.mxu0 %v2020
      %v2022 = vpop.f32.mrf.mxu0
      %v2023 = vadd.f32 %v1532, %v2022
      %v2024 = vpop.f32.mrf.mxu0
      %2025 = vmatprep.mubr.f32.mxu0 0.0
      %v2026 = vand.u32 %v444, 4294901760
      %v2027 = vsub.f32 %v444, %v2026
      %2028 = vmatmul.mubr.f32.gmra.mxu0 %v2027
      %v2029 = vpop.f32.mrf.mxu0
      %v2030 = vadd.f32 %v1538, %v2029
      %v2031 = vpop.f32.mrf.mxu0
      %2032 = vmatprep.mubr.f32.mxu0 0.0
      %v2033 = vand.u32 %v447, 4294901760
      %v2034 = vsub.f32 %v447, %v2033
      %2035 = vmatmul.mubr.f32.gmra.mxu0 %v2034
      %v2036 = vpop.f32.mrf.mxu0
      %v2037 = vadd.f32 %v1544, %v2036
      %v2038 = vpop.f32.mrf.mxu0
      %2039 = vmatprep.mubr.f32.mxu0 0.0
      %v2040 = vand.u32 %v450, 4294901760
      %v2041 = vsub.f32 %v450, %v2040
      %2042 = vmatmul.mubr.f32.gmra.mxu0 %v2041
      %v2043 = vpop.f32.mrf.mxu0
      %v2044 = vadd.f32 %v1550, %v2043
      %v2045 = vpop.f32.mrf.mxu0
      %2046 = vmatprep.mubr.f32.mxu0 0.0
      %v2047 = vand.u32 %v453, 4294901760
      %v2048 = vsub.f32 %v453, %v2047
      %2049 = vmatmul.mubr.f32.gmra.mxu0 %v2048
      %v2050 = vpop.f32.mrf.mxu0
      %v2051 = vadd.f32 %v1556, %v2050
      %v2052 = vpop.f32.mrf.mxu0
      %2053 = vmatprep.mubr.f32.mxu0 0.0
      %v2054 = vand.u32 %v456, 4294901760
      %v2055 = vsub.f32 %v456, %v2054
      %2056 = vmatmul.mubr.f32.gmra.mxu0 %v2055
      %v2057 = vpop.f32.mrf.mxu0
      %v2058 = vadd.f32 %v1562, %v2057
      %v2059 = vpop.f32.mrf.mxu0
      %2060 = vmatprep.mubr.f32.mxu0 0.0
      %v2061 = vand.u32 %v459, 4294901760
      %v2062 = vsub.f32 %v459, %v2061
      %2063 = vmatmul.mubr.f32.gmra.mxu0 %v2062
      %v2064 = vpop.f32.mrf.mxu0
      %v2065 = vadd.f32 %v1568, %v2064
      %v2066 = vpop.f32.mrf.mxu0
      %2067 = vmatprep.mubr.f32.mxu0 0.0
      %v2068 = vand.u32 %v462, 4294901760
      %v2069 = vsub.f32 %v462, %v2068
      %2070 = vmatmul.mubr.f32.gmra.mxu0 %v2069
      %v2071 = vpop.f32.mrf.mxu0
      %v2072 = vadd.f32 %v1574, %v2071
      %v2073 = vpop.f32.mrf.mxu0
      %2074 = vmatprep.mubr.f32.mxu0 0.0
      %v2075 = vand.u32 %v465, 4294901760
      %v2076 = vsub.f32 %v465, %v2075
      %2077 = vmatmul.mubr.f32.gmra.mxu0 %v2076
      %v2078 = vpop.f32.mrf.mxu0
      %v2079 = vadd.f32 %v1580, %v2078
      %v2080 = vpop.f32.mrf.mxu0
      %2081 = vmatprep.mubr.f32.mxu0 0.0
      %v2082 = vand.u32 %v468, 4294901760
      %v2083 = vsub.f32 %v468, %v2082
      %2084 = vmatmul.mubr.f32.gmra.mxu0 %v2083
      %v2085 = vpop.f32.mrf.mxu0
      %v2086 = vadd.f32 %v1586, %v2085
      %v2087 = vpop.f32.mrf.mxu0
      %2088 = vmatprep.mubr.f32.mxu0 0.0
      %v2089 = vand.u32 %v471, 4294901760
      %v2090 = vsub.f32 %v471, %v2089
      %2091 = vmatmul.mubr.f32.gmra.mxu0 %v2090
      %v2092 = vpop.f32.mrf.mxu0
      %v2093 = vadd.f32 %v1592, %v2092
      %v2094 = vpop.f32.mrf.mxu0
      %2095 = vmatprep.mubr.f32.mxu0 0.0
      %v2096 = vand.u32 %v474, 4294901760
      %v2097 = vsub.f32 %v474, %v2096
      %2098 = vmatmul.mubr.f32.gmra.mxu0 %v2097
      %v2099 = vpop.f32.mrf.mxu0
      %v2100 = vadd.f32 %v1598, %v2099
      %v2101 = vpop.f32.mrf.mxu0
      %2102 = vmatprep.mubr.f32.mxu0 0.0
      %v2103 = vand.u32 %v477, 4294901760
      %v2104 = vsub.f32 %v477, %v2103
      %2105 = vmatmul.mubr.f32.gmra.mxu0 %v2104
      %v2106 = vpop.f32.mrf.mxu0
      %v2107 = vadd.f32 %v1604, %v2106
      %v2108 = vpop.f32.mrf.mxu0
      %2109 = vmatprep.mubr.f32.mxu0 0.0
      %v2110 = vand.u32 %v480, 4294901760
      %v2111 = vsub.f32 %v480, %v2110
      %2112 = vmatmul.mubr.f32.gmra.mxu0 %v2111
      %v2113 = vpop.f32.mrf.mxu0
      %v2114 = vadd.f32 %v1610, %v2113
      %v2115 = vpop.f32.mrf.mxu0
      %2116 = vmatprep.mubr.f32.mxu0 0.0
      %v2117 = vand.u32 %v483, 4294901760
      %v2118 = vsub.f32 %v483, %v2117
      %2119 = vmatmul.mubr.f32.gmra.mxu0 %v2118
      %v2120 = vpop.f32.mrf.mxu0
      %v2121 = vadd.f32 %v1616, %v2120
      %v2122 = vpop.f32.mrf.mxu0
      %2123 = vmatprep.mubr.f32.mxu0 0.0
      %v2124 = vand.u32 %v486, 4294901760
      %v2125 = vsub.f32 %v486, %v2124
      %2126 = vmatmul.mubr.f32.gmra.mxu0 %v2125
      %v2127 = vpop.f32.mrf.mxu0
      %v2128 = vadd.f32 %v1622, %v2127
      %v2129 = vpop.f32.mrf.mxu0
      %2130 = vmatprep.mubr.f32.mxu0 0.0
      %v2131 = vand.u32 %v489, 4294901760
      %v2132 = vsub.f32 %v489, %v2131
      %2133 = vmatmul.mubr.f32.gmra.mxu0 %v2132
      %v2134 = vpop.f32.mrf.mxu0
      %v2135 = vadd.f32 %v1628, %v2134
      %v2136 = vpop.f32.mrf.mxu0
      %2137 = vmatprep.mubr.f32.mxu0 0.0
      %v2138 = vand.u32 %v492, 4294901760
      %v2139 = vsub.f32 %v492, %v2138
      %2140 = vmatmul.mubr.f32.gmra.mxu0 %v2139
      %v2141 = vpop.f32.mrf.mxu0
      %v2142 = vadd.f32 %v1634, %v2141
      %v2143 = vpop.f32.mrf.mxu0
      %2144 = vmatprep.mubr.f32.mxu0 0.0
      %v2145 = vand.u32 %v495, 4294901760
      %v2146 = vsub.f32 %v495, %v2145
      %2147 = vmatmul.mubr.f32.gmra.mxu0 %v2146
      %v2148 = vpop.f32.mrf.mxu0
      %v2149 = vadd.f32 %v1640, %v2148
      %v2150 = vpop.f32.mrf.mxu0
      %2151 = vmatprep.mubr.f32.mxu0 0.0
      %v2152 = vand.u32 %v498, 4294901760
      %v2153 = vsub.f32 %v498, %v2152
      %2154 = vmatmul.mubr.f32.gmra.mxu0 %v2153
      %v2155 = vpop.f32.mrf.mxu0
      %v2156 = vadd.f32 %v1646, %v2155
      %v2157 = vpop.f32.mrf.mxu0
      %2158 = vmatprep.mubr.f32.mxu0 0.0
      %v2159 = vand.u32 %v501, 4294901760
      %v2160 = vsub.f32 %v501, %v2159
      %2161 = vmatmul.mubr.f32.gmra.mxu0 %v2160
      %v2162 = vpop.f32.mrf.mxu0
      %v2163 = vadd.f32 %v1652, %v2162
      %v2164 = vpop.f32.mrf.mxu0
      %2165 = vmatprep.mubr.f32.mxu0 0.0
      %v2166 = vand.u32 %v504, 4294901760
      %v2167 = vsub.f32 %v504, %v2166
      %2168 = vmatmul.mubr.f32.gmra.mxu0 %v2167
      %v2169 = vpop.f32.mrf.mxu0
      %v2170 = vadd.f32 %v1658, %v2169
      %v2171 = vpop.f32.mrf.mxu0
      %2172 = vmatprep.mubr.f32.mxu0 0.0
      %v2173 = vand.u32 %v507, 4294901760
      %v2174 = vsub.f32 %v507, %v2173
      %2175 = vmatmul.mubr.f32.gmra.mxu0 %v2174
      %v2176 = vpop.f32.mrf.mxu0
      %v2177 = vadd.f32 %v1664, %v2176
      %v2178 = vpop.f32.mrf.mxu0
      %2179 = vmatprep.mubr.f32.mxu0 0.0
      %v2180 = vand.u32 %v510, 4294901760
      %v2181 = vsub.f32 %v510, %v2180
      %2182 = vmatmul.mubr.f32.gmra.mxu0 %v2181
      %v2183 = vpop.f32.mrf.mxu0
      %v2184 = vadd.f32 %v1670, %v2183
      %v2185 = vpop.f32.mrf.mxu0
      %2186 = vmatprep.mubr.f32.mxu0 0.0
      %v2187 = vand.u32 %v513, 4294901760
      %v2188 = vsub.f32 %v513, %v2187
      %2189 = vmatmul.mubr.f32.gmra.mxu0 %v2188
      %v2190 = vpop.f32.mrf.mxu0
      %v2191 = vadd.f32 %v1676, %v2190
      %v2192 = vpop.f32.mrf.mxu0
      %2193 = vmatprep.mubr.f32.mxu0 0.0
      %v2194 = vand.u32 %v516, 4294901760
      %v2195 = vsub.f32 %v516, %v2194
      %2196 = vmatmul.mubr.f32.gmra.mxu0 %v2195
      %v2197 = vpop.f32.mrf.mxu0
      %v2198 = vadd.f32 %v1682, %v2197
      %v2199 = vpop.f32.mrf.mxu0
      %2200 = vmatprep.mubr.f32.mxu0 0.0
      %v2201 = vand.u32 %v519, 4294901760
      %v2202 = vsub.f32 %v519, %v2201
      %2203 = vmatmul.mubr.f32.gmra.mxu0 %v2202
      %v2204 = vpop.f32.mrf.mxu0
      %v2205 = vadd.f32 %v1688, %v2204
      %v2206 = vpop.f32.mrf.mxu0
      %2207 = vmatprep.mubr.f32.mxu0 0.0
      %v2208 = vand.u32 %v522, 4294901760
      %v2209 = vsub.f32 %v522, %v2208
      %2210 = vmatmul.mubr.f32.gmra.mxu0 %v2209
      %v2211 = vpop.f32.mrf.mxu0
      %v2212 = vadd.f32 %v1694, %v2211
      %v2213 = vpop.f32.mrf.mxu0
      %2214 = vmatprep.mubr.f32.mxu0 0.0
      %v2215 = vand.u32 %v525, 4294901760
      %v2216 = vsub.f32 %v525, %v2215
      %2217 = vmatmul.mubr.f32.gmra.mxu0 %v2216
      %v2218 = vpop.f32.mrf.mxu0
      %v2219 = vadd.f32 %v1700, %v2218
      %v2220 = vpop.f32.mrf.mxu0
      %2221 = vmatprep.mubr.f32.mxu0 0.0
      %v2222 = vand.u32 %v528, 4294901760
      %v2223 = vsub.f32 %v528, %v2222
      %2224 = vmatmul.mubr.f32.gmra.mxu0 %v2223
      %v2225 = vpop.f32.mrf.mxu0
      %v2226 = vadd.f32 %v1706, %v2225
      %v2227 = vpop.f32.mrf.mxu0
      %2228 = vmatprep.mubr.f32.mxu0 0.0
      %v2229 = vand.u32 %v531, 4294901760
      %v2230 = vsub.f32 %v531, %v2229
      %2231 = vmatmul.mubr.f32.gmra.mxu0 %v2230
      %v2232 = vpop.f32.mrf.mxu0
      %v2233 = vadd.f32 %v1712, %v2232
      %v2234 = vpop.f32.mrf.mxu0
      %2235 = vmatprep.mubr.f32.mxu0 0.0
      %v2236 = vand.u32 %v534, 4294901760
      %v2237 = vsub.f32 %v534, %v2236
      %2238 = vmatmul.mubr.f32.gmra.mxu0 %v2237
      %v2239 = vpop.f32.mrf.mxu0
      %v2240 = vadd.f32 %v1718, %v2239
      %v2241 = vpop.f32.mrf.mxu0
      %2242 = vmatprep.mubr.f32.mxu0 0.0
      %v2243 = vand.u32 %v537, 4294901760
      %v2244 = vsub.f32 %v537, %v2243
      %2245 = vmatmul.mubr.f32.gmra.mxu0 %v2244
      %v2246 = vpop.f32.mrf.mxu0
      %v2247 = vadd.f32 %v1724, %v2246
      %v2248 = vpop.f32.mrf.mxu0
      %2249 = vmatprep.mubr.f32.mxu0 0.0
      %v2250 = vand.u32 %v540, 4294901760
      %v2251 = vsub.f32 %v540, %v2250
      %2252 = vmatmul.mubr.f32.gmra.mxu0 %v2251
      %v2253 = vpop.f32.mrf.mxu0
      %v2254 = vadd.f32 %v1730, %v2253
      %v2255 = vpop.f32.mrf.mxu0
      %2256 = vmatprep.mubr.f32.mxu0 0.0
      %v2257 = vand.u32 %v543, 4294901760
      %v2258 = vsub.f32 %v543, %v2257
      %2259 = vmatmul.mubr.f32.gmra.mxu0 %v2258
      %v2260 = vpop.f32.mrf.mxu0
      %v2261 = vadd.f32 %v1736, %v2260
      %v2262 = vpop.f32.mrf.mxu0
      %2263 = vmatprep.mubr.f32.mxu0 0.0
      %v2264 = vand.u32 %v546, 4294901760
      %v2265 = vsub.f32 %v546, %v2264
      %2266 = vmatmul.mubr.f32.gmra.mxu0 %v2265
      %v2267 = vpop.f32.mrf.mxu0
      %v2268 = vadd.f32 %v1742, %v2267
      %v2269 = vpop.f32.mrf.mxu0
      %2270 = vmatprep.mubr.f32.mxu0 0.0
      %v2271 = vand.u32 %v549, 4294901760
      %v2272 = vsub.f32 %v549, %v2271
      %2273 = vmatmul.mubr.f32.gmra.mxu0 %v2272
      %v2274 = vpop.f32.mrf.mxu0
      %v2275 = vadd.f32 %v1748, %v2274
      %v2276 = vpop.f32.mrf.mxu0
      %2277 = vmatprep.mubr.f32.mxu0 0.0
      %v2278 = vand.u32 %v552, 4294901760
      %v2279 = vsub.f32 %v552, %v2278
      %2280 = vmatmul.mubr.f32.gmra.mxu0 %v2279
      %v2281 = vpop.f32.mrf.mxu0
      %v2282 = vadd.f32 %v1754, %v2281
      %v2283 = vpop.f32.mrf.mxu0
      %2284 = vmatprep.mubr.f32.mxu0 0.0
      %v2285 = vand.u32 %v555, 4294901760
      %v2286 = vsub.f32 %v555, %v2285
      %2287 = vmatmul.mubr.f32.gmra.mxu0 %v2286
      %v2288 = vpop.f32.mrf.mxu0
      %v2289 = vadd.f32 %v1760, %v2288
      %v2290 = vpop.f32.mrf.mxu0
      %2291 = vmatprep.mubr.f32.mxu0 0.0
      %v2292 = vand.u32 %v558, 4294901760
      %v2293 = vsub.f32 %v558, %v2292
      %2294 = vmatmul.mubr.f32.gmra.mxu0 %v2293
      %v2295 = vpop.f32.mrf.mxu0
      %v2296 = vadd.f32 %v1766, %v2295
      %v2297 = vpop.f32.mrf.mxu0
      %2298 = vmatprep.mubr.f32.mxu0 0.0
      %v2299 = vand.u32 %v561, 4294901760
      %v2300 = vsub.f32 %v561, %v2299
      %2301 = vmatmul.mubr.f32.gmra.mxu0 %v2300
      %v2302 = vpop.f32.mrf.mxu0
      %v2303 = vadd.f32 %v1772, %v2302
      %v2304 = vpop.f32.mrf.mxu0
      %2305 = vmatprep.mubr.f32.mxu0 0.0
      %v2306 = vand.u32 %v564, 4294901760
      %v2307 = vsub.f32 %v564, %v2306
      %2308 = vmatmul.mubr.f32.gmra.mxu0 %v2307
      %v2309 = vpop.f32.mrf.mxu0
      %v2310 = vadd.f32 %v1778, %v2309
      %v2311 = vpop.f32.mrf.mxu0
      %2312 = vmatprep.mubr.f32.mxu0 0.0
      %v2313 = vand.u32 %v567, 4294901760
      %v2314 = vsub.f32 %v567, %v2313
      %2315 = vmatmul.mubr.f32.gmra.mxu0 %v2314
      %v2316 = vpop.f32.mrf.mxu0
      %v2317 = vadd.f32 %v1784, %v2316
      %v2318 = vpop.f32.mrf.mxu0
      %2319 = vmatprep.mubr.f32.mxu0 0.0
      %v2320 = vand.u32 %v570, 4294901760
      %v2321 = vsub.f32 %v570, %v2320
      %2322 = vmatmul.mubr.f32.gmra.mxu0 %v2321
      %v2323 = vpop.f32.mrf.mxu0
      %v2324 = vadd.f32 %v1790, %v2323
      %v2325 = vpop.f32.mrf.mxu0
      %2326 = vmatprep.mubr.f32.mxu0 0.0
      %v2327 = vand.u32 %v573, 4294901760
      %v2328 = vsub.f32 %v573, %v2327
      %2329 = vmatmul.mubr.f32.gmra.mxu0 %v2328
      %v2330 = vpop.f32.mrf.mxu0
      %v2331 = vadd.f32 %v1796, %v2330
      %v2332 = vpop.f32.mrf.mxu0
      %2333 = vdwg.mxu0
      %2334 = vmatprep.subr.mxu0 0.0
      %2335 = vmatpush1.msra.mxu0 0.0
      %2336 = vmatprep.subr.mxu0 0.0
      %2337 = vmatpush1.msra.mxu0 0.0
      %2338 = vmatprep.subr.mxu0 0.0
      %2339 = vmatpush1.msra.mxu0 0.0
      %2340 = vmatprep.subr.mxu0 0.0
      %2341 = vmatpush1.msra.mxu0 0.0
      %2342 = vmatprep.subr.mxu0 0.0
      %2343 = vmatpush1.msra.mxu0 0.0
      %2344 = vmatprep.subr.mxu0 0.0
      %v2345 = vand.u32 %v577, 4294901760
      %2346 = vmatpush1.msra.mxu0 %v2345
      %2347 = vmatprep.subr.mxu0 0.0
      %v2348 = vand.u32 %v373, 4294901760
      %2349 = vmatpush1.msra.mxu0 %v2348
      %2350 = vmatprep.subr.mxu0 0.0
      %v2351 = vand.u32 %v372, 4294901760
      %2352 = vmatpush1.msra.mxu0 %v2351
      %2353 = vmatprep.subr.mxu0 0.0
      %v2354 = vand.u32 %v371, 4294901760
      %2355 = vmatpush1.msra.mxu0 %v2354
      %2356 = vmatprep.subr.mxu0 0.0
      %v2357 = vand.u32 %v370, 4294901760
      %2358 = vmatpush1.msra.mxu0 %v2357
      %2359 = vmatprep.subr.mxu0 0.0
      %v2360 = vand.u32 %v369, 4294901760
      %2361 = vmatpush1.msra.mxu0 %v2360
      %2362 = vmatprep.subr.mxu0 0.0
      %v2363 = vand.u32 %v368, 4294901760
      %2364 = vmatpush1.msra.mxu0 %v2363
      %2365 = vmatprep.subr.mxu0 0.0
      %v2366 = vand.u32 %v367, 4294901760
      %2367 = vmatpush1.msra.mxu0 %v2366
      %2368 = vmatprep.subr.mxu0 0.0
      %v2369 = vand.u32 %v366, 4294901760
      %2370 = vmatpush1.msra.mxu0 %v2369
      %2371 = vmatprep.subr.mxu0 0.0
      %v2372 = vand.u32 %v365, 4294901760
      %2373 = vmatpush1.msra.mxu0 %v2372
      %2374 = vmatprep.subr.mxu0 0.0
      %v2375 = vand.u32 %v364, 4294901760
      %2376 = vmatpush1.msra.mxu0 %v2375
      %2377 = vmatprep.subr.mxu0 0.0
      %2378 = vmatpush2.msra.mxu0 0.0
      %2379 = vmatprep.subr.mxu0 0.0
      %2380 = vmatpush2.msra.mxu0 0.0
      %2381 = vmatprep.subr.mxu0 0.0
      %2382 = vmatpush2.msra.mxu0 0.0
      %2383 = vmatprep.subr.mxu0 0.0
      %2384 = vmatpush2.msra.mxu0 0.0
      %2385 = vmatprep.subr.mxu0 0.0
      %2386 = vmatpush2.msra.mxu0 0.0
      %2387 = vmatprep.subr.mxu0 0.0
      %2388 = vmatpush2.msra.mxu0 0.0
      %2389 = vmatprep.subr.mxu0 0.0
      %2390 = vmatpush2.msra.mxu0 0.0
      %2391 = vmatprep.subr.mxu0 0.0
      %2392 = vmatpush2.msra.mxu0 0.0
      %2393 = vmatprep.subr.mxu0 0.0
      %2394 = vmatpush2.msra.mxu0 0.0
      %2395 = vmatprep.subr.mxu0 0.0
      %2396 = vmatpush2.msra.mxu0 0.0
      %2397 = vmatprep.subr.mxu0 0.0
      %2398 = vmatpush2.msra.mxu0 0.0
      %2399 = vmatprep.subr.mxu0 0.0
      %2400 = vmatpush2.msra.mxu0 0.0
      %2401 = vmatprep.subr.mxu0 0.0
      %2402 = vmatpush2.msra.mxu0 0.0
      %2403 = vmatprep.subr.mxu0 0.0
      %2404 = vmatpush2.msra.mxu0 0.0
      %2405 = vmatprep.subr.mxu0 0.0
      %2406 = vmatpush2.msra.mxu0 0.0
      %2407 = vmatprep.subr.mxu0 0.0
      %2408 = vmatpush2.msra.mxu0 0.0
      %2409 = vmatprep.mubr.f32.mxu0 0.0
      %v2410 = vand.u32 %v384, 4294901760
      %v2411 = vsub.f32 %v384, %v2410
      %v2412 = vand.u32 %v2411, 4294901760
      %2413 = vmatmul.mubr.f32.gmra.mxu0 %v2412
      %v2414 = vpop.f32.mrf.mxu0
      %v2415 = vadd.f32 %v1890, %v2414
      %v2416 = vpop.f32.mrf.mxu0
      %2417 = vmatprep.mubr.f32.mxu0 0.0
      %v2418 = vand.u32 %v387, 4294901760
      %v2419 = vsub.f32 %v387, %v2418
      %v2420 = vand.u32 %v2419, 4294901760
      %2421 = vmatmul.mubr.f32.gmra.mxu0 %v2420
      %v2422 = vpop.f32.mrf.mxu0
      %v2423 = vadd.f32 %v1897, %v2422
      %v2424 = vpop.f32.mrf.mxu0
      %2425 = vmatprep.mubr.f32.mxu0 0.0
      %v2426 = vand.u32 %v390, 4294901760
      %v2427 = vsub.f32 %v390, %v2426
      %v2428 = vand.u32 %v2427, 4294901760
      %2429 = vmatmul.mubr.f32.gmra.mxu0 %v2428
      %v2430 = vpop.f32.mrf.mxu0
      %v2431 = vadd.f32 %v1904, %v2430
      %v2432 = vpop.f32.mrf.mxu0
      %2433 = vmatprep.mubr.f32.mxu0 0.0
      %v2434 = vand.u32 %v393, 4294901760
      %v2435 = vsub.f32 %v393, %v2434
      %v2436 = vand.u32 %v2435, 4294901760
      %2437 = vmatmul.mubr.f32.gmra.mxu0 %v2436
      %v2438 = vpop.f32.mrf.mxu0
      %v2439 = vadd.f32 %v1911, %v2438
      %v2440 = vpop.f32.mrf.mxu0
      %2441 = vmatprep.mubr.f32.mxu0 0.0
      %v2442 = vand.u32 %v396, 4294901760
      %v2443 = vsub.f32 %v396, %v2442
      %v2444 = vand.u32 %v2443, 4294901760
      %2445 = vmatmul.mubr.f32.gmra.mxu0 %v2444
      %v2446 = vpop.f32.mrf.mxu0
      %v2447 = vadd.f32 %v1918, %v2446
      %v2448 = vpop.f32.mrf.mxu0
      %2449 = vmatprep.mubr.f32.mxu0 0.0
      %v2450 = vand.u32 %v399, 4294901760
      %v2451 = vsub.f32 %v399, %v2450
      %v2452 = vand.u32 %v2451, 4294901760
      %2453 = vmatmul.mubr.f32.gmra.mxu0 %v2452
      %v2454 = vpop.f32.mrf.mxu0
      %v2455 = vadd.f32 %v1925, %v2454
      %v2456 = vpop.f32.mrf.mxu0
      %2457 = vmatprep.mubr.f32.mxu0 0.0
      %v2458 = vand.u32 %v402, 4294901760
      %v2459 = vsub.f32 %v402, %v2458
      %v2460 = vand.u32 %v2459, 4294901760
      %2461 = vmatmul.mubr.f32.gmra.mxu0 %v2460
      %v2462 = vpop.f32.mrf.mxu0
      %v2463 = vadd.f32 %v1932, %v2462
      %v2464 = vpop.f32.mrf.mxu0
      %2465 = vmatprep.mubr.f32.mxu0 0.0
      %v2466 = vand.u32 %v405, 4294901760
      %v2467 = vsub.f32 %v405, %v2466
      %v2468 = vand.u32 %v2467, 4294901760
      %2469 = vmatmul.mubr.f32.gmra.mxu0 %v2468
      %v2470 = vpop.f32.mrf.mxu0
      %v2471 = vadd.f32 %v1939, %v2470
      %v2472 = vpop.f32.mrf.mxu0
      %2473 = vmatprep.mubr.f32.mxu0 0.0
      %v2474 = vand.u32 %v408, 4294901760
      %v2475 = vsub.f32 %v408, %v2474
      %v2476 = vand.u32 %v2475, 4294901760
      %2477 = vmatmul.mubr.f32.gmra.mxu0 %v2476
      %v2478 = vpop.f32.mrf.mxu0
      %v2479 = vadd.f32 %v1946, %v2478
      %v2480 = vpop.f32.mrf.mxu0
      %2481 = vmatprep.mubr.f32.mxu0 0.0
      %v2482 = vand.u32 %v411, 4294901760
      %v2483 = vsub.f32 %v411, %v2482
      %v2484 = vand.u32 %v2483, 4294901760
      %2485 = vmatmul.mubr.f32.gmra.mxu0 %v2484
      %v2486 = vpop.f32.mrf.mxu0
      %v2487 = vadd.f32 %v1953, %v2486
      %v2488 = vpop.f32.mrf.mxu0
      %2489 = vmatprep.mubr.f32.mxu0 0.0
      %v2490 = vand.u32 %v414, 4294901760
      %v2491 = vsub.f32 %v414, %v2490
      %v2492 = vand.u32 %v2491, 4294901760
      %2493 = vmatmul.mubr.f32.gmra.mxu0 %v2492
      %v2494 = vpop.f32.mrf.mxu0
      %v2495 = vadd.f32 %v1960, %v2494
      %v2496 = vpop.f32.mrf.mxu0
      %2497 = vmatprep.mubr.f32.mxu0 0.0
      %v2498 = vand.u32 %v417, 4294901760
      %v2499 = vsub.f32 %v417, %v2498
      %v2500 = vand.u32 %v2499, 4294901760
      %2501 = vmatmul.mubr.f32.gmra.mxu0 %v2500
      %v2502 = vpop.f32.mrf.mxu0
      %v2503 = vadd.f32 %v1967, %v2502
      %v2504 = vpop.f32.mrf.mxu0
      %2505 = vmatprep.mubr.f32.mxu0 0.0
      %v2506 = vand.u32 %v420, 4294901760
      %v2507 = vsub.f32 %v420, %v2506
      %v2508 = vand.u32 %v2507, 4294901760
      %2509 = vmatmul.mubr.f32.gmra.mxu0 %v2508
      %v2510 = vpop.f32.mrf.mxu0
      %v2511 = vadd.f32 %v1974, %v2510
      %v2512 = vpop.f32.mrf.mxu0
      %2513 = vmatprep.mubr.f32.mxu0 0.0
      %v2514 = vand.u32 %v423, 4294901760
      %v2515 = vsub.f32 %v423, %v2514
      %v2516 = vand.u32 %v2515, 4294901760
      %2517 = vmatmul.mubr.f32.gmra.mxu0 %v2516
      %v2518 = vpop.f32.mrf.mxu0
      %v2519 = vadd.f32 %v1981, %v2518
      %v2520 = vpop.f32.mrf.mxu0
      %2521 = vmatprep.mubr.f32.mxu0 0.0
      %v2522 = vand.u32 %v426, 4294901760
      %v2523 = vsub.f32 %v426, %v2522
      %v2524 = vand.u32 %v2523, 4294901760
      %2525 = vmatmul.mubr.f32.gmra.mxu0 %v2524
      %v2526 = vpop.f32.mrf.mxu0
      %v2527 = vadd.f32 %v1988, %v2526
      %v2528 = vpop.f32.mrf.mxu0
      %2529 = vmatprep.mubr.f32.mxu0 0.0
      %v2530 = vand.u32 %v429, 4294901760
      %v2531 = vsub.f32 %v429, %v2530
      %v2532 = vand.u32 %v2531, 4294901760
      %2533 = vmatmul.mubr.f32.gmra.mxu0 %v2532
      %v2534 = vpop.f32.mrf.mxu0
      %v2535 = vadd.f32 %v1995, %v2534
      %v2536 = vpop.f32.mrf.mxu0
      %2537 = vmatprep.mubr.f32.mxu0 0.0
      %v2538 = vand.u32 %v432, 4294901760
      %v2539 = vsub.f32 %v432, %v2538
      %v2540 = vand.u32 %v2539, 4294901760
      %2541 = vmatmul.mubr.f32.gmra.mxu0 %v2540
      %v2542 = vpop.f32.mrf.mxu0
      %v2543 = vadd.f32 %v2002, %v2542
      %v2544 = vpop.f32.mrf.mxu0
      %2545 = vmatprep.mubr.f32.mxu0 0.0
      %v2546 = vand.u32 %v435, 4294901760
      %v2547 = vsub.f32 %v435, %v2546
      %v2548 = vand.u32 %v2547, 4294901760
      %2549 = vmatmul.mubr.f32.gmra.mxu0 %v2548
      %v2550 = vpop.f32.mrf.mxu0
      %v2551 = vadd.f32 %v2009, %v2550
      %v2552 = vpop.f32.mrf.mxu0
      %2553 = vmatprep.mubr.f32.mxu0 0.0
      %v2554 = vand.u32 %v438, 4294901760
      %v2555 = vsub.f32 %v438, %v2554
      %v2556 = vand.u32 %v2555, 4294901760
      %2557 = vmatmul.mubr.f32.gmra.mxu0 %v2556
      %v2558 = vpop.f32.mrf.mxu0
      %v2559 = vadd.f32 %v2016, %v2558
      %v2560 = vpop.f32.mrf.mxu0
      %2561 = vmatprep.mubr.f32.mxu0 0.0
      %v2562 = vand.u32 %v441, 4294901760
      %v2563 = vsub.f32 %v441, %v2562
      %v2564 = vand.u32 %v2563, 4294901760
      %2565 = vmatmul.mubr.f32.gmra.mxu0 %v2564
      %v2566 = vpop.f32.mrf.mxu0
      %v2567 = vadd.f32 %v2023, %v2566
      %v2568 = vpop.f32.mrf.mxu0
      %2569 = vmatprep.mubr.f32.mxu0 0.0
      %v2570 = vand.u32 %v444, 4294901760
      %v2571 = vsub.f32 %v444, %v2570
      %v2572 = vand.u32 %v2571, 4294901760
      %2573 = vmatmul.mubr.f32.gmra.mxu0 %v2572
      %v2574 = vpop.f32.mrf.mxu0
      %v2575 = vadd.f32 %v2030, %v2574
      %v2576 = vpop.f32.mrf.mxu0
      %2577 = vmatprep.mubr.f32.mxu0 0.0
      %v2578 = vand.u32 %v447, 4294901760
      %v2579 = vsub.f32 %v447, %v2578
      %v2580 = vand.u32 %v2579, 4294901760
      %2581 = vmatmul.mubr.f32.gmra.mxu0 %v2580
      %v2582 = vpop.f32.mrf.mxu0
      %v2583 = vadd.f32 %v2037, %v2582
      %v2584 = vpop.f32.mrf.mxu0
      %2585 = vmatprep.mubr.f32.mxu0 0.0
      %v2586 = vand.u32 %v450, 4294901760
      %v2587 = vsub.f32 %v450, %v2586
      %v2588 = vand.u32 %v2587, 4294901760
      %2589 = vmatmul.mubr.f32.gmra.mxu0 %v2588
      %v2590 = vpop.f32.mrf.mxu0
      %v2591 = vadd.f32 %v2044, %v2590
      %v2592 = vpop.f32.mrf.mxu0
      %2593 = vmatprep.mubr.f32.mxu0 0.0
      %v2594 = vand.u32 %v453, 4294901760
      %v2595 = vsub.f32 %v453, %v2594
      %v2596 = vand.u32 %v2595, 4294901760
      %2597 = vmatmul.mubr.f32.gmra.mxu0 %v2596
      %v2598 = vpop.f32.mrf.mxu0
      %v2599 = vadd.f32 %v2051, %v2598
      %v2600 = vpop.f32.mrf.mxu0
      %2601 = vmatprep.mubr.f32.mxu0 0.0
      %v2602 = vand.u32 %v456, 4294901760
      %v2603 = vsub.f32 %v456, %v2602
      %v2604 = vand.u32 %v2603, 4294901760
      %2605 = vmatmul.mubr.f32.gmra.mxu0 %v2604
      %v2606 = vpop.f32.mrf.mxu0
      %v2607 = vadd.f32 %v2058, %v2606
      %v2608 = vpop.f32.mrf.mxu0
      %2609 = vmatprep.mubr.f32.mxu0 0.0
      %v2610 = vand.u32 %v459, 4294901760
      %v2611 = vsub.f32 %v459, %v2610
      %v2612 = vand.u32 %v2611, 4294901760
      %2613 = vmatmul.mubr.f32.gmra.mxu0 %v2612
      %v2614 = vpop.f32.mrf.mxu0
      %v2615 = vadd.f32 %v2065, %v2614
      %v2616 = vpop.f32.mrf.mxu0
      %2617 = vmatprep.mubr.f32.mxu0 0.0
      %v2618 = vand.u32 %v462, 4294901760
      %v2619 = vsub.f32 %v462, %v2618
      %v2620 = vand.u32 %v2619, 4294901760
      %2621 = vmatmul.mubr.f32.gmra.mxu0 %v2620
      %v2622 = vpop.f32.mrf.mxu0
      %v2623 = vadd.f32 %v2072, %v2622
      %v2624 = vpop.f32.mrf.mxu0
      %2625 = vmatprep.mubr.f32.mxu0 0.0
      %v2626 = vand.u32 %v465, 4294901760
      %v2627 = vsub.f32 %v465, %v2626
      %v2628 = vand.u32 %v2627, 4294901760
      %2629 = vmatmul.mubr.f32.gmra.mxu0 %v2628
      %v2630 = vpop.f32.mrf.mxu0
      %v2631 = vadd.f32 %v2079, %v2630
      %v2632 = vpop.f32.mrf.mxu0
      %2633 = vmatprep.mubr.f32.mxu0 0.0
      %v2634 = vand.u32 %v468, 4294901760
      %v2635 = vsub.f32 %v468, %v2634
      %v2636 = vand.u32 %v2635, 4294901760
      %2637 = vmatmul.mubr.f32.gmra.mxu0 %v2636
      %v2638 = vpop.f32.mrf.mxu0
      %v2639 = vadd.f32 %v2086, %v2638
      %v2640 = vpop.f32.mrf.mxu0
      %2641 = vmatprep.mubr.f32.mxu0 0.0
      %v2642 = vand.u32 %v471, 4294901760
      %v2643 = vsub.f32 %v471, %v2642
      %v2644 = vand.u32 %v2643, 4294901760
      %2645 = vmatmul.mubr.f32.gmra.mxu0 %v2644
      %v2646 = vpop.f32.mrf.mxu0
      %v2647 = vadd.f32 %v2093, %v2646
      %v2648 = vpop.f32.mrf.mxu0
      %2649 = vmatprep.mubr.f32.mxu0 0.0
      %v2650 = vand.u32 %v474, 4294901760
      %v2651 = vsub.f32 %v474, %v2650
      %v2652 = vand.u32 %v2651, 4294901760
      %2653 = vmatmul.mubr.f32.gmra.mxu0 %v2652
      %v2654 = vpop.f32.mrf.mxu0
      %v2655 = vadd.f32 %v2100, %v2654
      %v2656 = vpop.f32.mrf.mxu0
      %2657 = vmatprep.mubr.f32.mxu0 0.0
      %v2658 = vand.u32 %v477, 4294901760
      %v2659 = vsub.f32 %v477, %v2658
      %v2660 = vand.u32 %v2659, 4294901760
      %2661 = vmatmul.mubr.f32.gmra.mxu0 %v2660
      %v2662 = vpop.f32.mrf.mxu0
      %v2663 = vadd.f32 %v2107, %v2662
      %v2664 = vpop.f32.mrf.mxu0
      %2665 = vmatprep.mubr.f32.mxu0 0.0
      %v2666 = vand.u32 %v480, 4294901760
      %v2667 = vsub.f32 %v480, %v2666
      %v2668 = vand.u32 %v2667, 4294901760
      %2669 = vmatmul.mubr.f32.gmra.mxu0 %v2668
      %v2670 = vpop.f32.mrf.mxu0
      %v2671 = vadd.f32 %v2114, %v2670
      %v2672 = vpop.f32.mrf.mxu0
      %2673 = vmatprep.mubr.f32.mxu0 0.0
      %v2674 = vand.u32 %v483, 4294901760
      %v2675 = vsub.f32 %v483, %v2674
      %v2676 = vand.u32 %v2675, 4294901760
      %2677 = vmatmul.mubr.f32.gmra.mxu0 %v2676
      %v2678 = vpop.f32.mrf.mxu0
      %v2679 = vadd.f32 %v2121, %v2678
      %v2680 = vpop.f32.mrf.mxu0
      %2681 = vmatprep.mubr.f32.mxu0 0.0
      %v2682 = vand.u32 %v486, 4294901760
      %v2683 = vsub.f32 %v486, %v2682
      %v2684 = vand.u32 %v2683, 4294901760
      %2685 = vmatmul.mubr.f32.gmra.mxu0 %v2684
      %v2686 = vpop.f32.mrf.mxu0
      %v2687 = vadd.f32 %v2128, %v2686
      %v2688 = vpop.f32.mrf.mxu0
      %2689 = vmatprep.mubr.f32.mxu0 0.0
      %v2690 = vand.u32 %v489, 4294901760
      %v2691 = vsub.f32 %v489, %v2690
      %v2692 = vand.u32 %v2691, 4294901760
      %2693 = vmatmul.mubr.f32.gmra.mxu0 %v2692
      %v2694 = vpop.f32.mrf.mxu0
      %v2695 = vadd.f32 %v2135, %v2694
      %v2696 = vpop.f32.mrf.mxu0
      %2697 = vmatprep.mubr.f32.mxu0 0.0
      %v2698 = vand.u32 %v492, 4294901760
      %v2699 = vsub.f32 %v492, %v2698
      %v2700 = vand.u32 %v2699, 4294901760
      %2701 = vmatmul.mubr.f32.gmra.mxu0 %v2700
      %v2702 = vpop.f32.mrf.mxu0
      %v2703 = vadd.f32 %v2142, %v2702
      %v2704 = vpop.f32.mrf.mxu0
      %2705 = vmatprep.mubr.f32.mxu0 0.0
      %v2706 = vand.u32 %v495, 4294901760
      %v2707 = vsub.f32 %v495, %v2706
      %v2708 = vand.u32 %v2707, 4294901760
      %2709 = vmatmul.mubr.f32.gmra.mxu0 %v2708
      %v2710 = vpop.f32.mrf.mxu0
      %v2711 = vadd.f32 %v2149, %v2710
      %v2712 = vpop.f32.mrf.mxu0
      %2713 = vmatprep.mubr.f32.mxu0 0.0
      %v2714 = vand.u32 %v498, 4294901760
      %v2715 = vsub.f32 %v498, %v2714
      %v2716 = vand.u32 %v2715, 4294901760
      %2717 = vmatmul.mubr.f32.gmra.mxu0 %v2716
      %v2718 = vpop.f32.mrf.mxu0
      %v2719 = vadd.f32 %v2156, %v2718
      %v2720 = vpop.f32.mrf.mxu0
      %2721 = vmatprep.mubr.f32.mxu0 0.0
      %v2722 = vand.u32 %v501, 4294901760
      %v2723 = vsub.f32 %v501, %v2722
      %v2724 = vand.u32 %v2723, 4294901760
      %2725 = vmatmul.mubr.f32.gmra.mxu0 %v2724
      %v2726 = vpop.f32.mrf.mxu0
      %v2727 = vadd.f32 %v2163, %v2726
      %v2728 = vpop.f32.mrf.mxu0
      %2729 = vmatprep.mubr.f32.mxu0 0.0
      %v2730 = vand.u32 %v504, 4294901760
      %v2731 = vsub.f32 %v504, %v2730
      %v2732 = vand.u32 %v2731, 4294901760
      %2733 = vmatmul.mubr.f32.gmra.mxu0 %v2732
      %v2734 = vpop.f32.mrf.mxu0
      %v2735 = vadd.f32 %v2170, %v2734
      %v2736 = vpop.f32.mrf.mxu0
      %2737 = vmatprep.mubr.f32.mxu0 0.0
      %v2738 = vand.u32 %v507, 4294901760
      %v2739 = vsub.f32 %v507, %v2738
      %v2740 = vand.u32 %v2739, 4294901760
      %2741 = vmatmul.mubr.f32.gmra.mxu0 %v2740
      %v2742 = vpop.f32.mrf.mxu0
      %v2743 = vadd.f32 %v2177, %v2742
      %v2744 = vpop.f32.mrf.mxu0
      %2745 = vmatprep.mubr.f32.mxu0 0.0
      %v2746 = vand.u32 %v510, 4294901760
      %v2747 = vsub.f32 %v510, %v2746
      %v2748 = vand.u32 %v2747, 4294901760
      %2749 = vmatmul.mubr.f32.gmra.mxu0 %v2748
      %v2750 = vpop.f32.mrf.mxu0
      %v2751 = vadd.f32 %v2184, %v2750
      %v2752 = vpop.f32.mrf.mxu0
      %2753 = vmatprep.mubr.f32.mxu0 0.0
      %v2754 = vand.u32 %v513, 4294901760
      %v2755 = vsub.f32 %v513, %v2754
      %v2756 = vand.u32 %v2755, 4294901760
      %2757 = vmatmul.mubr.f32.gmra.mxu0 %v2756
      %v2758 = vpop.f32.mrf.mxu0
      %v2759 = vadd.f32 %v2191, %v2758
      %v2760 = vpop.f32.mrf.mxu0
      %2761 = vmatprep.mubr.f32.mxu0 0.0
      %v2762 = vand.u32 %v516, 4294901760
      %v2763 = vsub.f32 %v516, %v2762
      %v2764 = vand.u32 %v2763, 4294901760
      %2765 = vmatmul.mubr.f32.gmra.mxu0 %v2764
      %v2766 = vpop.f32.mrf.mxu0
      %v2767 = vadd.f32 %v2198, %v2766
      %v2768 = vpop.f32.mrf.mxu0
      %2769 = vmatprep.mubr.f32.mxu0 0.0
      %v2770 = vand.u32 %v519, 4294901760
      %v2771 = vsub.f32 %v519, %v2770
      %v2772 = vand.u32 %v2771, 4294901760
      %2773 = vmatmul.mubr.f32.gmra.mxu0 %v2772
      %v2774 = vpop.f32.mrf.mxu0
      %v2775 = vadd.f32 %v2205, %v2774
      %v2776 = vpop.f32.mrf.mxu0
      %2777 = vmatprep.mubr.f32.mxu0 0.0
      %v2778 = vand.u32 %v522, 4294901760
      %v2779 = vsub.f32 %v522, %v2778
      %v2780 = vand.u32 %v2779, 4294901760
      %2781 = vmatmul.mubr.f32.gmra.mxu0 %v2780
      %v2782 = vpop.f32.mrf.mxu0
      %v2783 = vadd.f32 %v2212, %v2782
      %v2784 = vpop.f32.mrf.mxu0
      %2785 = vmatprep.mubr.f32.mxu0 0.0
      %v2786 = vand.u32 %v525, 4294901760
      %v2787 = vsub.f32 %v525, %v2786
      %v2788 = vand.u32 %v2787, 4294901760
      %2789 = vmatmul.mubr.f32.gmra.mxu0 %v2788
      %v2790 = vpop.f32.mrf.mxu0
      %v2791 = vadd.f32 %v2219, %v2790
      %v2792 = vpop.f32.mrf.mxu0
      %2793 = vmatprep.mubr.f32.mxu0 0.0
      %v2794 = vand.u32 %v528, 4294901760
      %v2795 = vsub.f32 %v528, %v2794
      %v2796 = vand.u32 %v2795, 4294901760
      %2797 = vmatmul.mubr.f32.gmra.mxu0 %v2796
      %v2798 = vpop.f32.mrf.mxu0
      %v2799 = vadd.f32 %v2226, %v2798
      %v2800 = vpop.f32.mrf.mxu0
      %2801 = vmatprep.mubr.f32.mxu0 0.0
      %v2802 = vand.u32 %v531, 4294901760
      %v2803 = vsub.f32 %v531, %v2802
      %v2804 = vand.u32 %v2803, 4294901760
      %2805 = vmatmul.mubr.f32.gmra.mxu0 %v2804
      %v2806 = vpop.f32.mrf.mxu0
      %v2807 = vadd.f32 %v2233, %v2806
      %v2808 = vpop.f32.mrf.mxu0
      %2809 = vmatprep.mubr.f32.mxu0 0.0
      %v2810 = vand.u32 %v534, 4294901760
      %v2811 = vsub.f32 %v534, %v2810
      %v2812 = vand.u32 %v2811, 4294901760
      %2813 = vmatmul.mubr.f32.gmra.mxu0 %v2812
      %v2814 = vpop.f32.mrf.mxu0
      %v2815 = vadd.f32 %v2240, %v2814
      %v2816 = vpop.f32.mrf.mxu0
      %2817 = vmatprep.mubr.f32.mxu0 0.0
      %v2818 = vand.u32 %v537, 4294901760
      %v2819 = vsub.f32 %v537, %v2818
      %v2820 = vand.u32 %v2819, 4294901760
      %2821 = vmatmul.mubr.f32.gmra.mxu0 %v2820
      %v2822 = vpop.f32.mrf.mxu0
      %v2823 = vadd.f32 %v2247, %v2822
      %v2824 = vpop.f32.mrf.mxu0
      %2825 = vmatprep.mubr.f32.mxu0 0.0
      %v2826 = vand.u32 %v540, 4294901760
      %v2827 = vsub.f32 %v540, %v2826
      %v2828 = vand.u32 %v2827, 4294901760
      %2829 = vmatmul.mubr.f32.gmra.mxu0 %v2828
      %v2830 = vpop.f32.mrf.mxu0
      %v2831 = vadd.f32 %v2254, %v2830
      %v2832 = vpop.f32.mrf.mxu0
      %2833 = vmatprep.mubr.f32.mxu0 0.0
      %v2834 = vand.u32 %v543, 4294901760
      %v2835 = vsub.f32 %v543, %v2834
      %v2836 = vand.u32 %v2835, 4294901760
      %2837 = vmatmul.mubr.f32.gmra.mxu0 %v2836
      %v2838 = vpop.f32.mrf.mxu0
      %v2839 = vadd.f32 %v2261, %v2838
      %v2840 = vpop.f32.mrf.mxu0
      %2841 = vmatprep.mubr.f32.mxu0 0.0
      %v2842 = vand.u32 %v546, 4294901760
      %v2843 = vsub.f32 %v546, %v2842
      %v2844 = vand.u32 %v2843, 4294901760
      %2845 = vmatmul.mubr.f32.gmra.mxu0 %v2844
      %v2846 = vpop.f32.mrf.mxu0
      %v2847 = vadd.f32 %v2268, %v2846
      %v2848 = vpop.f32.mrf.mxu0
      %2849 = vmatprep.mubr.f32.mxu0 0.0
      %v2850 = vand.u32 %v549, 4294901760
      %v2851 = vsub.f32 %v549, %v2850
      %v2852 = vand.u32 %v2851, 4294901760
      %2853 = vmatmul.mubr.f32.gmra.mxu0 %v2852
      %v2854 = vpop.f32.mrf.mxu0
      %v2855 = vadd.f32 %v2275, %v2854
      %v2856 = vpop.f32.mrf.mxu0
      %2857 = vmatprep.mubr.f32.mxu0 0.0
      %v2858 = vand.u32 %v552, 4294901760
      %v2859 = vsub.f32 %v552, %v2858
      %v2860 = vand.u32 %v2859, 4294901760
      %2861 = vmatmul.mubr.f32.gmra.mxu0 %v2860
      %v2862 = vpop.f32.mrf.mxu0
      %v2863 = vadd.f32 %v2282, %v2862
      %v2864 = vpop.f32.mrf.mxu0
      %2865 = vmatprep.mubr.f32.mxu0 0.0
      %v2866 = vand.u32 %v555, 4294901760
      %v2867 = vsub.f32 %v555, %v2866
      %v2868 = vand.u32 %v2867, 4294901760
      %2869 = vmatmul.mubr.f32.gmra.mxu0 %v2868
      %v2870 = vpop.f32.mrf.mxu0
      %v2871 = vadd.f32 %v2289, %v2870
      %v2872 = vpop.f32.mrf.mxu0
      %2873 = vmatprep.mubr.f32.mxu0 0.0
      %v2874 = vand.u32 %v558, 4294901760
      %v2875 = vsub.f32 %v558, %v2874
      %v2876 = vand.u32 %v2875, 4294901760
      %2877 = vmatmul.mubr.f32.gmra.mxu0 %v2876
      %v2878 = vpop.f32.mrf.mxu0
      %v2879 = vadd.f32 %v2296, %v2878
      %v2880 = vpop.f32.mrf.mxu0
      %2881 = vmatprep.mubr.f32.mxu0 0.0
      %v2882 = vand.u32 %v561, 4294901760
      %v2883 = vsub.f32 %v561, %v2882
      %v2884 = vand.u32 %v2883, 4294901760
      %2885 = vmatmul.mubr.f32.gmra.mxu0 %v2884
      %v2886 = vpop.f32.mrf.mxu0
      %v2887 = vadd.f32 %v2303, %v2886
      %v2888 = vpop.f32.mrf.mxu0
      %2889 = vmatprep.mubr.f32.mxu0 0.0
      %v2890 = vand.u32 %v564, 4294901760
      %v2891 = vsub.f32 %v564, %v2890
      %v2892 = vand.u32 %v2891, 4294901760
      %2893 = vmatmul.mubr.f32.gmra.mxu0 %v2892
      %v2894 = vpop.f32.mrf.mxu0
      %v2895 = vadd.f32 %v2310, %v2894
      %v2896 = vpop.f32.mrf.mxu0
      %2897 = vmatprep.mubr.f32.mxu0 0.0
      %v2898 = vand.u32 %v567, 4294901760
      %v2899 = vsub.f32 %v567, %v2898
      %v2900 = vand.u32 %v2899, 4294901760
      %2901 = vmatmul.mubr.f32.gmra.mxu0 %v2900
      %v2902 = vpop.f32.mrf.mxu0
      %v2903 = vadd.f32 %v2317, %v2902
      %v2904 = vpop.f32.mrf.mxu0
      %2905 = vmatprep.mubr.f32.mxu0 0.0
      %v2906 = vand.u32 %v570, 4294901760
      %v2907 = vsub.f32 %v570, %v2906
      %v2908 = vand.u32 %v2907, 4294901760
      %2909 = vmatmul.mubr.f32.gmra.mxu0 %v2908
      %v2910 = vpop.f32.mrf.mxu0
      %v2911 = vadd.f32 %v2324, %v2910
      %v2912 = vpop.f32.mrf.mxu0
      %2913 = vmatprep.mubr.f32.mxu0 0.0
      %v2914 = vand.u32 %v573, 4294901760
      %v2915 = vsub.f32 %v573, %v2914
      %v2916 = vand.u32 %v2915, 4294901760
      %2917 = vmatmul.mubr.f32.gmra.mxu0 %v2916
      %v2918 = vpop.f32.mrf.mxu0
      %v2919 = vadd.f32 %v2331, %v2918
      %v2920 = vpop.f32.mrf.mxu0
      %2921 = vdwg.mxu0
      %2922 = vmatprep.subr.mxu0 0.0
      %2923 = vmatpush1.msra.mxu0 0.0
      %2924 = vmatprep.subr.mxu0 0.0
      %2925 = vmatpush1.msra.mxu0 0.0
      %2926 = vmatprep.subr.mxu0 0.0
      %2927 = vmatpush1.msra.mxu0 0.0
      %2928 = vmatprep.subr.mxu0 0.0
      %2929 = vmatpush1.msra.mxu0 0.0
      %2930 = vmatprep.subr.mxu0 0.0
      %2931 = vmatpush1.msra.mxu0 0.0
      %2932 = vmatprep.subr.mxu0 0.0
      %v2933 = vand.u32 %v577, 4294901760
      %v2934 = vsub.f32 %v577, %v2933
      %v2935 = vand.u32 %v2934, 4294901760
      %2936 = vmatpush1.msra.mxu0 %v2935
      %2937 = vmatprep.subr.mxu0 0.0
      %v2938 = vand.u32 %v373, 4294901760
      %v2939 = vsub.f32 %v373, %v2938
      %v2940 = vand.u32 %v2939, 4294901760
      %2941 = vmatpush1.msra.mxu0 %v2940
      %2942 = vmatprep.subr.mxu0 0.0
      %v2943 = vand.u32 %v372, 4294901760
      %v2944 = vsub.f32 %v372, %v2943
      %v2945 = vand.u32 %v2944, 4294901760
      %2946 = vmatpush1.msra.mxu0 %v2945
      %2947 = vmatprep.subr.mxu0 0.0
      %v2948 = vand.u32 %v371, 4294901760
      %v2949 = vsub.f32 %v371, %v2948
      %v2950 = vand.u32 %v2949, 4294901760
      %2951 = vmatpush1.msra.mxu0 %v2950
      %2952 = vmatprep.subr.mxu0 0.0
      %v2953 = vand.u32 %v370, 4294901760
      %v2954 = vsub.f32 %v370, %v2953
      %v2955 = vand.u32 %v2954, 4294901760
      %2956 = vmatpush1.msra.mxu0 %v2955
      %2957 = vmatprep.subr.mxu0 0.0
      %v2958 = vand.u32 %v369, 4294901760
      %v2959 = vsub.f32 %v369, %v2958
      %v2960 = vand.u32 %v2959, 4294901760
      %2961 = vmatpush1.msra.mxu0 %v2960
      %2962 = vmatprep.subr.mxu0 0.0
      %v2963 = vand.u32 %v368, 4294901760
      %v2964 = vsub.f32 %v368, %v2963
      %v2965 = vand.u32 %v2964, 4294901760
      %2966 = vmatpush1.msra.mxu0 %v2965
      %2967 = vmatprep.subr.mxu0 0.0
      %v2968 = vand.u32 %v367, 4294901760
      %v2969 = vsub.f32 %v367, %v2968
      %v2970 = vand.u32 %v2969, 4294901760
      %2971 = vmatpush1.msra.mxu0 %v2970
      %2972 = vmatprep.subr.mxu0 0.0
      %v2973 = vand.u32 %v366, 4294901760
      %v2974 = vsub.f32 %v366, %v2973
      %v2975 = vand.u32 %v2974, 4294901760
      %2976 = vmatpush1.msra.mxu0 %v2975
      %2977 = vmatprep.subr.mxu0 0.0
      %v2978 = vand.u32 %v365, 4294901760
      %v2979 = vsub.f32 %v365, %v2978
      %v2980 = vand.u32 %v2979, 4294901760
      %2981 = vmatpush1.msra.mxu0 %v2980
      %2982 = vmatprep.subr.mxu0 0.0
      %v2983 = vand.u32 %v364, 4294901760
      %v2984 = vsub.f32 %v364, %v2983
      %v2985 = vand.u32 %v2984, 4294901760
      %2986 = vmatpush1.msra.mxu0 %v2985
      %2987 = vmatprep.subr.mxu0 0.0
      %2988 = vmatpush2.msra.mxu0 0.0
      %2989 = vmatprep.subr.mxu0 0.0
      %2990 = vmatpush2.msra.mxu0 0.0
      %2991 = vmatprep.subr.mxu0 0.0
      %2992 = vmatpush2.msra.mxu0 0.0
      %2993 = vmatprep.subr.mxu0 0.0
      %2994 = vmatpush2.msra.mxu0 0.0
      %2995 = vmatprep.subr.mxu0 0.0
      %2996 = vmatpush2.msra.mxu0 0.0
      %2997 = vmatprep.subr.mxu0 0.0
      %2998 = vmatpush2.msra.mxu0 0.0
      %2999 = vmatprep.subr.mxu0 0.0
      %3000 = vmatpush2.msra.mxu0 0.0
      %3001 = vmatprep.subr.mxu0 0.0
      %3002 = vmatpush2.msra.mxu0 0.0
      %3003 = vmatprep.subr.mxu0 0.0
      %3004 = vmatpush2.msra.mxu0 0.0
      %3005 = vmatprep.subr.mxu0 0.0
      %3006 = vmatpush2.msra.mxu0 0.0
      %3007 = vmatprep.subr.mxu0 0.0
      %3008 = vmatpush2.msra.mxu0 0.0
      %3009 = vmatprep.subr.mxu0 0.0
      %3010 = vmatpush2.msra.mxu0 0.0
      %3011 = vmatprep.subr.mxu0 0.0
      %3012 = vmatpush2.msra.mxu0 0.0
      %3013 = vmatprep.subr.mxu0 0.0
      %3014 = vmatpush2.msra.mxu0 0.0
      %3015 = vmatprep.subr.mxu0 0.0
      %3016 = vmatpush2.msra.mxu0 0.0
      %3017 = vmatprep.subr.mxu0 0.0
      %3018 = vmatpush2.msra.mxu0 0.0
      %3019 = vmatprep.mubr.f32.mxu0 0.0
      %v3020 = vand.u32 %v384, 4294901760
      %3021 = vmatmul.mubr.f32.gmra.mxu0 %v3020
      %v3022 = vpop.f32.mrf.mxu0
      %v3023 = vadd.f32 %v2415, %v3022
      %v3024 = vpop.f32.mrf.mxu0
      %3025 = vmatprep.mubr.f32.mxu0 0.0
      %v3026 = vand.u32 %v387, 4294901760
      %3027 = vmatmul.mubr.f32.gmra.mxu0 %v3026
      %v3028 = vpop.f32.mrf.mxu0
      %v3029 = vadd.f32 %v2423, %v3028
      %v3030 = vpop.f32.mrf.mxu0
      %3031 = vmatprep.mubr.f32.mxu0 0.0
      %v3032 = vand.u32 %v390, 4294901760
      %3033 = vmatmul.mubr.f32.gmra.mxu0 %v3032
      %v3034 = vpop.f32.mrf.mxu0
      %v3035 = vadd.f32 %v2431, %v3034
      %v3036 = vpop.f32.mrf.mxu0
      %3037 = vmatprep.mubr.f32.mxu0 0.0
      %v3038 = vand.u32 %v393, 4294901760
      %3039 = vmatmul.mubr.f32.gmra.mxu0 %v3038
      %v3040 = vpop.f32.mrf.mxu0
      %v3041 = vadd.f32 %v2439, %v3040
      %v3042 = vpop.f32.mrf.mxu0
      %3043 = vmatprep.mubr.f32.mxu0 0.0
      %v3044 = vand.u32 %v396, 4294901760
      %3045 = vmatmul.mubr.f32.gmra.mxu0 %v3044
      %v3046 = vpop.f32.mrf.mxu0
      %v3047 = vadd.f32 %v2447, %v3046
      %v3048 = vpop.f32.mrf.mxu0
      %3049 = vmatprep.mubr.f32.mxu0 0.0
      %v3050 = vand.u32 %v399, 4294901760
      %3051 = vmatmul.mubr.f32.gmra.mxu0 %v3050
      %v3052 = vpop.f32.mrf.mxu0
      %v3053 = vadd.f32 %v2455, %v3052
      %v3054 = vpop.f32.mrf.mxu0
      %3055 = vmatprep.mubr.f32.mxu0 0.0
      %v3056 = vand.u32 %v402, 4294901760
      %3057 = vmatmul.mubr.f32.gmra.mxu0 %v3056
      %v3058 = vpop.f32.mrf.mxu0
      %v3059 = vadd.f32 %v2463, %v3058
      %v3060 = vpop.f32.mrf.mxu0
      %3061 = vmatprep.mubr.f32.mxu0 0.0
      %v3062 = vand.u32 %v405, 4294901760
      %3063 = vmatmul.mubr.f32.gmra.mxu0 %v3062
      %v3064 = vpop.f32.mrf.mxu0
      %v3065 = vadd.f32 %v2471, %v3064
      %v3066 = vpop.f32.mrf.mxu0
      %3067 = vmatprep.mubr.f32.mxu0 0.0
      %v3068 = vand.u32 %v408, 4294901760
      %3069 = vmatmul.mubr.f32.gmra.mxu0 %v3068
      %v3070 = vpop.f32.mrf.mxu0
      %v3071 = vadd.f32 %v2479, %v3070
      %v3072 = vpop.f32.mrf.mxu0
      %3073 = vmatprep.mubr.f32.mxu0 0.0
      %v3074 = vand.u32 %v411, 4294901760
      %3075 = vmatmul.mubr.f32.gmra.mxu0 %v3074
      %v3076 = vpop.f32.mrf.mxu0
      %v3077 = vadd.f32 %v2487, %v3076
      %v3078 = vpop.f32.mrf.mxu0
      %3079 = vmatprep.mubr.f32.mxu0 0.0
      %v3080 = vand.u32 %v414, 4294901760
      %3081 = vmatmul.mubr.f32.gmra.mxu0 %v3080
      %v3082 = vpop.f32.mrf.mxu0
      %v3083 = vadd.f32 %v2495, %v3082
      %v3084 = vpop.f32.mrf.mxu0
      %3085 = vmatprep.mubr.f32.mxu0 0.0
      %v3086 = vand.u32 %v417, 4294901760
      %3087 = vmatmul.mubr.f32.gmra.mxu0 %v3086
      %v3088 = vpop.f32.mrf.mxu0
      %v3089 = vadd.f32 %v2503, %v3088
      %v3090 = vpop.f32.mrf.mxu0
      %3091 = vmatprep.mubr.f32.mxu0 0.0
      %v3092 = vand.u32 %v420, 4294901760
      %3093 = vmatmul.mubr.f32.gmra.mxu0 %v3092
      %v3094 = vpop.f32.mrf.mxu0
      %v3095 = vadd.f32 %v2511, %v3094
      %v3096 = vpop.f32.mrf.mxu0
      %3097 = vmatprep.mubr.f32.mxu0 0.0
      %v3098 = vand.u32 %v423, 4294901760
      %3099 = vmatmul.mubr.f32.gmra.mxu0 %v3098
      %v3100 = vpop.f32.mrf.mxu0
      %v3101 = vadd.f32 %v2519, %v3100
      %v3102 = vpop.f32.mrf.mxu0
      %3103 = vmatprep.mubr.f32.mxu0 0.0
      %v3104 = vand.u32 %v426, 4294901760
      %3105 = vmatmul.mubr.f32.gmra.mxu0 %v3104
      %v3106 = vpop.f32.mrf.mxu0
      %v3107 = vadd.f32 %v2527, %v3106
      %v3108 = vpop.f32.mrf.mxu0
      %3109 = vmatprep.mubr.f32.mxu0 0.0
      %v3110 = vand.u32 %v429, 4294901760
      %3111 = vmatmul.mubr.f32.gmra.mxu0 %v3110
      %v3112 = vpop.f32.mrf.mxu0
      %v3113 = vadd.f32 %v2535, %v3112
      %v3114 = vpop.f32.mrf.mxu0
      %3115 = vmatprep.mubr.f32.mxu0 0.0
      %v3116 = vand.u32 %v432, 4294901760
      %3117 = vmatmul.mubr.f32.gmra.mxu0 %v3116
      %v3118 = vpop.f32.mrf.mxu0
      %v3119 = vadd.f32 %v2543, %v3118
      %v3120 = vpop.f32.mrf.mxu0
      %3121 = vmatprep.mubr.f32.mxu0 0.0
      %v3122 = vand.u32 %v435, 4294901760
      %3123 = vmatmul.mubr.f32.gmra.mxu0 %v3122
      %v3124 = vpop.f32.mrf.mxu0
      %v3125 = vadd.f32 %v2551, %v3124
      %v3126 = vpop.f32.mrf.mxu0
      %3127 = vmatprep.mubr.f32.mxu0 0.0
      %v3128 = vand.u32 %v438, 4294901760
      %3129 = vmatmul.mubr.f32.gmra.mxu0 %v3128
      %v3130 = vpop.f32.mrf.mxu0
      %v3131 = vadd.f32 %v2559, %v3130
      %v3132 = vpop.f32.mrf.mxu0
      %3133 = vmatprep.mubr.f32.mxu0 0.0
      %v3134 = vand.u32 %v441, 4294901760
      %3135 = vmatmul.mubr.f32.gmra.mxu0 %v3134
      %v3136 = vpop.f32.mrf.mxu0
      %v3137 = vadd.f32 %v2567, %v3136
      %v3138 = vpop.f32.mrf.mxu0
      %3139 = vmatprep.mubr.f32.mxu0 0.0
      %v3140 = vand.u32 %v444, 4294901760
      %3141 = vmatmul.mubr.f32.gmra.mxu0 %v3140
      %v3142 = vpop.f32.mrf.mxu0
      %v3143 = vadd.f32 %v2575, %v3142
      %v3144 = vpop.f32.mrf.mxu0
      %3145 = vmatprep.mubr.f32.mxu0 0.0
      %v3146 = vand.u32 %v447, 4294901760
      %3147 = vmatmul.mubr.f32.gmra.mxu0 %v3146
      %v3148 = vpop.f32.mrf.mxu0
      %v3149 = vadd.f32 %v2583, %v3148
      %v3150 = vpop.f32.mrf.mxu0
      %3151 = vmatprep.mubr.f32.mxu0 0.0
      %v3152 = vand.u32 %v450, 4294901760
      %3153 = vmatmul.mubr.f32.gmra.mxu0 %v3152
      %v3154 = vpop.f32.mrf.mxu0
      %v3155 = vadd.f32 %v2591, %v3154
      %v3156 = vpop.f32.mrf.mxu0
      %3157 = vmatprep.mubr.f32.mxu0 0.0
      %v3158 = vand.u32 %v453, 4294901760
      %3159 = vmatmul.mubr.f32.gmra.mxu0 %v3158
      %v3160 = vpop.f32.mrf.mxu0
      %v3161 = vadd.f32 %v2599, %v3160
      %v3162 = vpop.f32.mrf.mxu0
      %3163 = vmatprep.mubr.f32.mxu0 0.0
      %v3164 = vand.u32 %v456, 4294901760
      %3165 = vmatmul.mubr.f32.gmra.mxu0 %v3164
      %v3166 = vpop.f32.mrf.mxu0
      %v3167 = vadd.f32 %v2607, %v3166
      %v3168 = vpop.f32.mrf.mxu0
      %3169 = vmatprep.mubr.f32.mxu0 0.0
      %v3170 = vand.u32 %v459, 4294901760
      %3171 = vmatmul.mubr.f32.gmra.mxu0 %v3170
      %v3172 = vpop.f32.mrf.mxu0
      %v3173 = vadd.f32 %v2615, %v3172
      %v3174 = vpop.f32.mrf.mxu0
      %3175 = vmatprep.mubr.f32.mxu0 0.0
      %v3176 = vand.u32 %v462, 4294901760
      %3177 = vmatmul.mubr.f32.gmra.mxu0 %v3176
      %v3178 = vpop.f32.mrf.mxu0
      %v3179 = vadd.f32 %v2623, %v3178
      %v3180 = vpop.f32.mrf.mxu0
      %3181 = vmatprep.mubr.f32.mxu0 0.0
      %v3182 = vand.u32 %v465, 4294901760
      %3183 = vmatmul.mubr.f32.gmra.mxu0 %v3182
      %v3184 = vpop.f32.mrf.mxu0
      %v3185 = vadd.f32 %v2631, %v3184
      %v3186 = vpop.f32.mrf.mxu0
      %3187 = vmatprep.mubr.f32.mxu0 0.0
      %v3188 = vand.u32 %v468, 4294901760
      %3189 = vmatmul.mubr.f32.gmra.mxu0 %v3188
      %v3190 = vpop.f32.mrf.mxu0
      %v3191 = vadd.f32 %v2639, %v3190
      %v3192 = vpop.f32.mrf.mxu0
      %3193 = vmatprep.mubr.f32.mxu0 0.0
      %v3194 = vand.u32 %v471, 4294901760
      %3195 = vmatmul.mubr.f32.gmra.mxu0 %v3194
      %v3196 = vpop.f32.mrf.mxu0
      %v3197 = vadd.f32 %v2647, %v3196
      %v3198 = vpop.f32.mrf.mxu0
      %3199 = vmatprep.mubr.f32.mxu0 0.0
      %v3200 = vand.u32 %v474, 4294901760
      %3201 = vmatmul.mubr.f32.gmra.mxu0 %v3200
      %v3202 = vpop.f32.mrf.mxu0
      %v3203 = vadd.f32 %v2655, %v3202
      %v3204 = vpop.f32.mrf.mxu0
      %3205 = vmatprep.mubr.f32.mxu0 0.0
      %v3206 = vand.u32 %v477, 4294901760
      %3207 = vmatmul.mubr.f32.gmra.mxu0 %v3206
      %v3208 = vpop.f32.mrf.mxu0
      %v3209 = vadd.f32 %v2663, %v3208
      %v3210 = vpop.f32.mrf.mxu0
      %3211 = vmatprep.mubr.f32.mxu0 0.0
      %v3212 = vand.u32 %v480, 4294901760
      %3213 = vmatmul.mubr.f32.gmra.mxu0 %v3212
      %v3214 = vpop.f32.mrf.mxu0
      %v3215 = vadd.f32 %v2671, %v3214
      %v3216 = vpop.f32.mrf.mxu0
      %3217 = vmatprep.mubr.f32.mxu0 0.0
      %v3218 = vand.u32 %v483, 4294901760
      %3219 = vmatmul.mubr.f32.gmra.mxu0 %v3218
      %v3220 = vpop.f32.mrf.mxu0
      %v3221 = vadd.f32 %v2679, %v3220
      %v3222 = vpop.f32.mrf.mxu0
      %3223 = vmatprep.mubr.f32.mxu0 0.0
      %v3224 = vand.u32 %v486, 4294901760
      %3225 = vmatmul.mubr.f32.gmra.mxu0 %v3224
      %v3226 = vpop.f32.mrf.mxu0
      %v3227 = vadd.f32 %v2687, %v3226
      %v3228 = vpop.f32.mrf.mxu0
      %3229 = vmatprep.mubr.f32.mxu0 0.0
      %v3230 = vand.u32 %v489, 4294901760
      %3231 = vmatmul.mubr.f32.gmra.mxu0 %v3230
      %v3232 = vpop.f32.mrf.mxu0
      %v3233 = vadd.f32 %v2695, %v3232
      %v3234 = vpop.f32.mrf.mxu0
      %3235 = vmatprep.mubr.f32.mxu0 0.0
      %v3236 = vand.u32 %v492, 4294901760
      %3237 = vmatmul.mubr.f32.gmra.mxu0 %v3236
      %v3238 = vpop.f32.mrf.mxu0
      %v3239 = vadd.f32 %v2703, %v3238
      %v3240 = vpop.f32.mrf.mxu0
      %3241 = vmatprep.mubr.f32.mxu0 0.0
      %v3242 = vand.u32 %v495, 4294901760
      %3243 = vmatmul.mubr.f32.gmra.mxu0 %v3242
      %v3244 = vpop.f32.mrf.mxu0
      %v3245 = vadd.f32 %v2711, %v3244
      %v3246 = vpop.f32.mrf.mxu0
      %3247 = vmatprep.mubr.f32.mxu0 0.0
      %v3248 = vand.u32 %v498, 4294901760
      %3249 = vmatmul.mubr.f32.gmra.mxu0 %v3248
      %v3250 = vpop.f32.mrf.mxu0
      %v3251 = vadd.f32 %v2719, %v3250
      %v3252 = vpop.f32.mrf.mxu0
      %3253 = vmatprep.mubr.f32.mxu0 0.0
      %v3254 = vand.u32 %v501, 4294901760
      %3255 = vmatmul.mubr.f32.gmra.mxu0 %v3254
      %v3256 = vpop.f32.mrf.mxu0
      %v3257 = vadd.f32 %v2727, %v3256
      %v3258 = vpop.f32.mrf.mxu0
      %3259 = vmatprep.mubr.f32.mxu0 0.0
      %v3260 = vand.u32 %v504, 4294901760
      %3261 = vmatmul.mubr.f32.gmra.mxu0 %v3260
      %v3262 = vpop.f32.mrf.mxu0
      %v3263 = vadd.f32 %v2735, %v3262
      %v3264 = vpop.f32.mrf.mxu0
      %3265 = vmatprep.mubr.f32.mxu0 0.0
      %v3266 = vand.u32 %v507, 4294901760
      %3267 = vmatmul.mubr.f32.gmra.mxu0 %v3266
      %v3268 = vpop.f32.mrf.mxu0
      %v3269 = vadd.f32 %v2743, %v3268
      %v3270 = vpop.f32.mrf.mxu0
      %3271 = vmatprep.mubr.f32.mxu0 0.0
      %v3272 = vand.u32 %v510, 4294901760
      %3273 = vmatmul.mubr.f32.gmra.mxu0 %v3272
      %v3274 = vpop.f32.mrf.mxu0
      %v3275 = vadd.f32 %v2751, %v3274
      %v3276 = vpop.f32.mrf.mxu0
      %3277 = vmatprep.mubr.f32.mxu0 0.0
      %v3278 = vand.u32 %v513, 4294901760
      %3279 = vmatmul.mubr.f32.gmra.mxu0 %v3278
      %v3280 = vpop.f32.mrf.mxu0
      %v3281 = vadd.f32 %v2759, %v3280
      %v3282 = vpop.f32.mrf.mxu0
      %3283 = vmatprep.mubr.f32.mxu0 0.0
      %v3284 = vand.u32 %v516, 4294901760
      %3285 = vmatmul.mubr.f32.gmra.mxu0 %v3284
      %v3286 = vpop.f32.mrf.mxu0
      %v3287 = vadd.f32 %v2767, %v3286
      %v3288 = vpop.f32.mrf.mxu0
      %3289 = vmatprep.mubr.f32.mxu0 0.0
      %v3290 = vand.u32 %v519, 4294901760
      %3291 = vmatmul.mubr.f32.gmra.mxu0 %v3290
      %v3292 = vpop.f32.mrf.mxu0
      %v3293 = vadd.f32 %v2775, %v3292
      %v3294 = vpop.f32.mrf.mxu0
      %3295 = vmatprep.mubr.f32.mxu0 0.0
      %v3296 = vand.u32 %v522, 4294901760
      %3297 = vmatmul.mubr.f32.gmra.mxu0 %v3296
      %v3298 = vpop.f32.mrf.mxu0
      %v3299 = vadd.f32 %v2783, %v3298
      %v3300 = vpop.f32.mrf.mxu0
      %3301 = vmatprep.mubr.f32.mxu0 0.0
      %v3302 = vand.u32 %v525, 4294901760
      %3303 = vmatmul.mubr.f32.gmra.mxu0 %v3302
      %v3304 = vpop.f32.mrf.mxu0
      %v3305 = vadd.f32 %v2791, %v3304
      %v3306 = vpop.f32.mrf.mxu0
      %3307 = vmatprep.mubr.f32.mxu0 0.0
      %v3308 = vand.u32 %v528, 4294901760
      %3309 = vmatmul.mubr.f32.gmra.mxu0 %v3308
      %v3310 = vpop.f32.mrf.mxu0
      %v3311 = vadd.f32 %v2799, %v3310
      %v3312 = vpop.f32.mrf.mxu0
      %3313 = vmatprep.mubr.f32.mxu0 0.0
      %v3314 = vand.u32 %v531, 4294901760
      %3315 = vmatmul.mubr.f32.gmra.mxu0 %v3314
      %v3316 = vpop.f32.mrf.mxu0
      %v3317 = vadd.f32 %v2807, %v3316
      %v3318 = vpop.f32.mrf.mxu0
      %3319 = vmatprep.mubr.f32.mxu0 0.0
      %v3320 = vand.u32 %v534, 4294901760
      %3321 = vmatmul.mubr.f32.gmra.mxu0 %v3320
      %v3322 = vpop.f32.mrf.mxu0
      %v3323 = vadd.f32 %v2815, %v3322
      %v3324 = vpop.f32.mrf.mxu0
      %3325 = vmatprep.mubr.f32.mxu0 0.0
      %v3326 = vand.u32 %v537, 4294901760
      %3327 = vmatmul.mubr.f32.gmra.mxu0 %v3326
      %v3328 = vpop.f32.mrf.mxu0
      %v3329 = vadd.f32 %v2823, %v3328
      %v3330 = vpop.f32.mrf.mxu0
      %3331 = vmatprep.mubr.f32.mxu0 0.0
      %v3332 = vand.u32 %v540, 4294901760
      %3333 = vmatmul.mubr.f32.gmra.mxu0 %v3332
      %v3334 = vpop.f32.mrf.mxu0
      %v3335 = vadd.f32 %v2831, %v3334
      %v3336 = vpop.f32.mrf.mxu0
      %3337 = vmatprep.mubr.f32.mxu0 0.0
      %v3338 = vand.u32 %v543, 4294901760
      %3339 = vmatmul.mubr.f32.gmra.mxu0 %v3338
      %v3340 = vpop.f32.mrf.mxu0
      %v3341 = vadd.f32 %v2839, %v3340
      %v3342 = vpop.f32.mrf.mxu0
      %3343 = vmatprep.mubr.f32.mxu0 0.0
      %v3344 = vand.u32 %v546, 4294901760
      %3345 = vmatmul.mubr.f32.gmra.mxu0 %v3344
      %v3346 = vpop.f32.mrf.mxu0
      %v3347 = vadd.f32 %v2847, %v3346
      %v3348 = vpop.f32.mrf.mxu0
      %3349 = vmatprep.mubr.f32.mxu0 0.0
      %v3350 = vand.u32 %v549, 4294901760
      %3351 = vmatmul.mubr.f32.gmra.mxu0 %v3350
      %v3352 = vpop.f32.mrf.mxu0
      %v3353 = vadd.f32 %v2855, %v3352
      %v3354 = vpop.f32.mrf.mxu0
      %3355 = vmatprep.mubr.f32.mxu0 0.0
      %v3356 = vand.u32 %v552, 4294901760
      %3357 = vmatmul.mubr.f32.gmra.mxu0 %v3356
      %v3358 = vpop.f32.mrf.mxu0
      %v3359 = vadd.f32 %v2863, %v3358
      %v3360 = vpop.f32.mrf.mxu0
      %3361 = vmatprep.mubr.f32.mxu0 0.0
      %v3362 = vand.u32 %v555, 4294901760
      %3363 = vmatmul.mubr.f32.gmra.mxu0 %v3362
      %v3364 = vpop.f32.mrf.mxu0
      %v3365 = vadd.f32 %v2871, %v3364
      %v3366 = vpop.f32.mrf.mxu0
      %3367 = vmatprep.mubr.f32.mxu0 0.0
      %v3368 = vand.u32 %v558, 4294901760
      %3369 = vmatmul.mubr.f32.gmra.mxu0 %v3368
      %v3370 = vpop.f32.mrf.mxu0
      %v3371 = vadd.f32 %v2879, %v3370
      %v3372 = vpop.f32.mrf.mxu0
      %3373 = vmatprep.mubr.f32.mxu0 0.0
      %v3374 = vand.u32 %v561, 4294901760
      %3375 = vmatmul.mubr.f32.gmra.mxu0 %v3374
      %v3376 = vpop.f32.mrf.mxu0
      %v3377 = vadd.f32 %v2887, %v3376
      %v3378 = vpop.f32.mrf.mxu0
      %3379 = vmatprep.mubr.f32.mxu0 0.0
      %v3380 = vand.u32 %v564, 4294901760
      %3381 = vmatmul.mubr.f32.gmra.mxu0 %v3380
      %v3382 = vpop.f32.mrf.mxu0
      %v3383 = vadd.f32 %v2895, %v3382
      %v3384 = vpop.f32.mrf.mxu0
      %3385 = vmatprep.mubr.f32.mxu0 0.0
      %v3386 = vand.u32 %v567, 4294901760
      %3387 = vmatmul.mubr.f32.gmra.mxu0 %v3386
      %v3388 = vpop.f32.mrf.mxu0
      %v3389 = vadd.f32 %v2903, %v3388
      %v3390 = vpop.f32.mrf.mxu0
      %3391 = vmatprep.mubr.f32.mxu0 0.0
      %v3392 = vand.u32 %v570, 4294901760
      %3393 = vmatmul.mubr.f32.gmra.mxu0 %v3392
      %v3394 = vpop.f32.mrf.mxu0
      %v3395 = vadd.f32 %v2911, %v3394
      %v3396 = vpop.f32.mrf.mxu0
      %3397 = vmatprep.mubr.f32.mxu0 0.0
      %v3398 = vand.u32 %v573, 4294901760
      %3399 = vmatmul.mubr.f32.gmra.mxu0 %v3398
      %v3400 = vpop.f32.mrf.mxu0
      %v3401 = vadd.f32 %v2919, %v3400
      %v3402 = vpop.f32.mrf.mxu0
      %3403 = vdwg.mxu0
      %3404 = vmatprep.subr.mxu0 0.0
      %3405 = vmatpush1.msra.mxu0 0.0
      %3406 = vmatprep.subr.mxu0 0.0
      %3407 = vmatpush1.msra.mxu0 0.0
      %3408 = vmatprep.subr.mxu0 0.0
      %3409 = vmatpush1.msra.mxu0 0.0
      %3410 = vmatprep.subr.mxu0 0.0
      %3411 = vmatpush1.msra.mxu0 0.0
      %3412 = vmatprep.subr.mxu0 0.0
      %3413 = vmatpush1.msra.mxu0 0.0
      %3414 = vmatprep.subr.mxu0 0.0
      %v3415 = vand.u32 %v577, 4294901760
      %3416 = vmatpush1.msra.mxu0 %v3415
      %3417 = vmatprep.subr.mxu0 0.0
      %v3418 = vand.u32 %v373, 4294901760
      %3419 = vmatpush1.msra.mxu0 %v3418
      %3420 = vmatprep.subr.mxu0 0.0
      %v3421 = vand.u32 %v372, 4294901760
      %3422 = vmatpush1.msra.mxu0 %v3421
      %3423 = vmatprep.subr.mxu0 0.0
      %v3424 = vand.u32 %v371, 4294901760
      %3425 = vmatpush1.msra.mxu0 %v3424
      %3426 = vmatprep.subr.mxu0 0.0
      %v3427 = vand.u32 %v370, 4294901760
      %3428 = vmatpush1.msra.mxu0 %v3427
      %3429 = vmatprep.subr.mxu0 0.0
      %v3430 = vand.u32 %v369, 4294901760
      %3431 = vmatpush1.msra.mxu0 %v3430
      %3432 = vmatprep.subr.mxu0 0.0
      %v3433 = vand.u32 %v368, 4294901760
      %3434 = vmatpush1.msra.mxu0 %v3433
      %3435 = vmatprep.subr.mxu0 0.0
      %v3436 = vand.u32 %v367, 4294901760
      %3437 = vmatpush1.msra.mxu0 %v3436
      %3438 = vmatprep.subr.mxu0 0.0
      %v3439 = vand.u32 %v366, 4294901760
      %3440 = vmatpush1.msra.mxu0 %v3439
      %3441 = vmatprep.subr.mxu0 0.0
      %v3442 = vand.u32 %v365, 4294901760
      %3443 = vmatpush1.msra.mxu0 %v3442
      %3444 = vmatprep.subr.mxu0 0.0
      %v3445 = vand.u32 %v364, 4294901760
      %3446 = vmatpush1.msra.mxu0 %v3445
      %3447 = vmatprep.subr.mxu0 0.0
      %3448 = vmatpush2.msra.mxu0 0.0
      %3449 = vmatprep.subr.mxu0 0.0
      %3450 = vmatpush2.msra.mxu0 0.0
      %3451 = vmatprep.subr.mxu0 0.0
      %3452 = vmatpush2.msra.mxu0 0.0
      %3453 = vmatprep.subr.mxu0 0.0
      %3454 = vmatpush2.msra.mxu0 0.0
      %3455 = vmatprep.subr.mxu0 0.0
      %3456 = vmatpush2.msra.mxu0 0.0
      %3457 = vmatprep.subr.mxu0 0.0
      %3458 = vmatpush2.msra.mxu0 0.0
      %3459 = vmatprep.subr.mxu0 0.0
      %3460 = vmatpush2.msra.mxu0 0.0
      %3461 = vmatprep.subr.mxu0 0.0
      %3462 = vmatpush2.msra.mxu0 0.0
      %3463 = vmatprep.subr.mxu0 0.0
      %3464 = vmatpush2.msra.mxu0 0.0
      %3465 = vmatprep.subr.mxu0 0.0
      %3466 = vmatpush2.msra.mxu0 0.0
      %3467 = vmatprep.subr.mxu0 0.0
      %3468 = vmatpush2.msra.mxu0 0.0
      %3469 = vmatprep.subr.mxu0 0.0
      %3470 = vmatpush2.msra.mxu0 0.0
      %3471 = vmatprep.subr.mxu0 0.0
      %3472 = vmatpush2.msra.mxu0 0.0
      %3473 = vmatprep.subr.mxu0 0.0
      %3474 = vmatpush2.msra.mxu0 0.0
      %3475 = vmatprep.subr.mxu0 0.0
      %3476 = vmatpush2.msra.mxu0 0.0
      %3477 = vmatprep.subr.mxu0 0.0
      %3478 = vmatpush2.msra.mxu0 0.0
      %3479 = vmatprep.mubr.f32.mxu0 0.0
      %v3480 = vand.u32 %v384, 4294901760
      %3481 = vmatmul.mubr.f32.gmra.mxu0 %v3480
      %v3482 = vpop.f32.mrf.mxu0
      %v3483 = vadd.f32 %v3023, %v3482
      %v3484 = vpop.f32.mrf.mxu0
      %3485 = vmatprep.mubr.f32.mxu0 0.0
      %v3486 = vand.u32 %v387, 4294901760
      %3487 = vmatmul.mubr.f32.gmra.mxu0 %v3486
      %v3488 = vpop.f32.mrf.mxu0
      %v3489 = vadd.f32 %v3029, %v3488
      %v3490 = vpop.f32.mrf.mxu0
      %3491 = vmatprep.mubr.f32.mxu0 0.0
      %v3492 = vand.u32 %v390, 4294901760
      %3493 = vmatmul.mubr.f32.gmra.mxu0 %v3492
      %v3494 = vpop.f32.mrf.mxu0
      %v3495 = vadd.f32 %v3035, %v3494
      %v3496 = vpop.f32.mrf.mxu0
      %3497 = vmatprep.mubr.f32.mxu0 0.0
      %v3498 = vand.u32 %v393, 4294901760
      %3499 = vmatmul.mubr.f32.gmra.mxu0 %v3498
      %v3500 = vpop.f32.mrf.mxu0
      %v3501 = vadd.f32 %v3041, %v3500
      %v3502 = vpop.f32.mrf.mxu0
      %3503 = vmatprep.mubr.f32.mxu0 0.0
      %v3504 = vand.u32 %v396, 4294901760
      %3505 = vmatmul.mubr.f32.gmra.mxu0 %v3504
      %v3506 = vpop.f32.mrf.mxu0
      %v3507 = vadd.f32 %v3047, %v3506
      %v3508 = vpop.f32.mrf.mxu0
      %3509 = vmatprep.mubr.f32.mxu0 0.0
      %v3510 = vand.u32 %v399, 4294901760
      %3511 = vmatmul.mubr.f32.gmra.mxu0 %v3510
      %v3512 = vpop.f32.mrf.mxu0
      %v3513 = vadd.f32 %v3053, %v3512
      %v3514 = vpop.f32.mrf.mxu0
      %3515 = vmatprep.mubr.f32.mxu0 0.0
      %v3516 = vand.u32 %v402, 4294901760
      %3517 = vmatmul.mubr.f32.gmra.mxu0 %v3516
      %v3518 = vpop.f32.mrf.mxu0
      %v3519 = vadd.f32 %v3059, %v3518
      %v3520 = vpop.f32.mrf.mxu0
      %3521 = vmatprep.mubr.f32.mxu0 0.0
      %v3522 = vand.u32 %v405, 4294901760
      %3523 = vmatmul.mubr.f32.gmra.mxu0 %v3522
      %v3524 = vpop.f32.mrf.mxu0
      %v3525 = vadd.f32 %v3065, %v3524
      %v3526 = vpop.f32.mrf.mxu0
      %3527 = vmatprep.mubr.f32.mxu0 0.0
      %v3528 = vand.u32 %v408, 4294901760
      %3529 = vmatmul.mubr.f32.gmra.mxu0 %v3528
      %v3530 = vpop.f32.mrf.mxu0
      %v3531 = vadd.f32 %v3071, %v3530
      %v3532 = vpop.f32.mrf.mxu0
      %3533 = vmatprep.mubr.f32.mxu0 0.0
      %v3534 = vand.u32 %v411, 4294901760
      %3535 = vmatmul.mubr.f32.gmra.mxu0 %v3534
      %v3536 = vpop.f32.mrf.mxu0
      %v3537 = vadd.f32 %v3077, %v3536
      %v3538 = vpop.f32.mrf.mxu0
      %3539 = vmatprep.mubr.f32.mxu0 0.0
      %v3540 = vand.u32 %v414, 4294901760
      %3541 = vmatmul.mubr.f32.gmra.mxu0 %v3540
      %v3542 = vpop.f32.mrf.mxu0
      %v3543 = vadd.f32 %v3083, %v3542
      %v3544 = vpop.f32.mrf.mxu0
      %3545 = vmatprep.mubr.f32.mxu0 0.0
      %v3546 = vand.u32 %v417, 4294901760
      %3547 = vmatmul.mubr.f32.gmra.mxu0 %v3546
      %v3548 = vpop.f32.mrf.mxu0
      %v3549 = vadd.f32 %v3089, %v3548
      %v3550 = vpop.f32.mrf.mxu0
      %3551 = vmatprep.mubr.f32.mxu0 0.0
      %v3552 = vand.u32 %v420, 4294901760
      %3553 = vmatmul.mubr.f32.gmra.mxu0 %v3552
      %v3554 = vpop.f32.mrf.mxu0
      %v3555 = vadd.f32 %v3095, %v3554
      %v3556 = vpop.f32.mrf.mxu0
      %3557 = vmatprep.mubr.f32.mxu0 0.0
      %v3558 = vand.u32 %v423, 4294901760
      %3559 = vmatmul.mubr.f32.gmra.mxu0 %v3558
      %v3560 = vpop.f32.mrf.mxu0
      %v3561 = vadd.f32 %v3101, %v3560
      %v3562 = vpop.f32.mrf.mxu0
      %3563 = vmatprep.mubr.f32.mxu0 0.0
      %v3564 = vand.u32 %v426, 4294901760
      %3565 = vmatmul.mubr.f32.gmra.mxu0 %v3564
      %v3566 = vpop.f32.mrf.mxu0
      %v3567 = vadd.f32 %v3107, %v3566
      %v3568 = vpop.f32.mrf.mxu0
      %3569 = vmatprep.mubr.f32.mxu0 0.0
      %v3570 = vand.u32 %v429, 4294901760
      %3571 = vmatmul.mubr.f32.gmra.mxu0 %v3570
      %v3572 = vpop.f32.mrf.mxu0
      %v3573 = vadd.f32 %v3113, %v3572
      %v3574 = vpop.f32.mrf.mxu0
      %3575 = vmatprep.mubr.f32.mxu0 0.0
      %v3576 = vand.u32 %v432, 4294901760
      %3577 = vmatmul.mubr.f32.gmra.mxu0 %v3576
      %v3578 = vpop.f32.mrf.mxu0
      %v3579 = vadd.f32 %v3119, %v3578
      %v3580 = vpop.f32.mrf.mxu0
      %3581 = vmatprep.mubr.f32.mxu0 0.0
      %v3582 = vand.u32 %v435, 4294901760
      %3583 = vmatmul.mubr.f32.gmra.mxu0 %v3582
      %v3584 = vpop.f32.mrf.mxu0
      %v3585 = vadd.f32 %v3125, %v3584
      %v3586 = vpop.f32.mrf.mxu0
      %3587 = vmatprep.mubr.f32.mxu0 0.0
      %v3588 = vand.u32 %v438, 4294901760
      %3589 = vmatmul.mubr.f32.gmra.mxu0 %v3588
      %v3590 = vpop.f32.mrf.mxu0
      %v3591 = vadd.f32 %v3131, %v3590
      %v3592 = vpop.f32.mrf.mxu0
      %3593 = vmatprep.mubr.f32.mxu0 0.0
      %v3594 = vand.u32 %v441, 4294901760
      %3595 = vmatmul.mubr.f32.gmra.mxu0 %v3594
      %v3596 = vpop.f32.mrf.mxu0
      %v3597 = vadd.f32 %v3137, %v3596
      %v3598 = vpop.f32.mrf.mxu0
      %3599 = vmatprep.mubr.f32.mxu0 0.0
      %v3600 = vand.u32 %v444, 4294901760
      %3601 = vmatmul.mubr.f32.gmra.mxu0 %v3600
      %v3602 = vpop.f32.mrf.mxu0
      %v3603 = vadd.f32 %v3143, %v3602
      %v3604 = vpop.f32.mrf.mxu0
      %3605 = vmatprep.mubr.f32.mxu0 0.0
      %v3606 = vand.u32 %v447, 4294901760
      %3607 = vmatmul.mubr.f32.gmra.mxu0 %v3606
      %v3608 = vpop.f32.mrf.mxu0
      %v3609 = vadd.f32 %v3149, %v3608
      %v3610 = vpop.f32.mrf.mxu0
      %3611 = vmatprep.mubr.f32.mxu0 0.0
      %v3612 = vand.u32 %v450, 4294901760
      %3613 = vmatmul.mubr.f32.gmra.mxu0 %v3612
      %v3614 = vpop.f32.mrf.mxu0
      %v3615 = vadd.f32 %v3155, %v3614
      %v3616 = vpop.f32.mrf.mxu0
      %3617 = vmatprep.mubr.f32.mxu0 0.0
      %v3618 = vand.u32 %v453, 4294901760
      %3619 = vmatmul.mubr.f32.gmra.mxu0 %v3618
      %v3620 = vpop.f32.mrf.mxu0
      %v3621 = vadd.f32 %v3161, %v3620
      %v3622 = vpop.f32.mrf.mxu0
      %3623 = vmatprep.mubr.f32.mxu0 0.0
      %v3624 = vand.u32 %v456, 4294901760
      %3625 = vmatmul.mubr.f32.gmra.mxu0 %v3624
      %v3626 = vpop.f32.mrf.mxu0
      %v3627 = vadd.f32 %v3167, %v3626
      %v3628 = vpop.f32.mrf.mxu0
      %3629 = vmatprep.mubr.f32.mxu0 0.0
      %v3630 = vand.u32 %v459, 4294901760
      %3631 = vmatmul.mubr.f32.gmra.mxu0 %v3630
      %v3632 = vpop.f32.mrf.mxu0
      %v3633 = vadd.f32 %v3173, %v3632
      %v3634 = vpop.f32.mrf.mxu0
      %3635 = vmatprep.mubr.f32.mxu0 0.0
      %v3636 = vand.u32 %v462, 4294901760
      %3637 = vmatmul.mubr.f32.gmra.mxu0 %v3636
      %v3638 = vpop.f32.mrf.mxu0
      %v3639 = vadd.f32 %v3179, %v3638
      %v3640 = vpop.f32.mrf.mxu0
      %3641 = vmatprep.mubr.f32.mxu0 0.0
      %v3642 = vand.u32 %v465, 4294901760
      %3643 = vmatmul.mubr.f32.gmra.mxu0 %v3642
      %v3644 = vpop.f32.mrf.mxu0
      %v3645 = vadd.f32 %v3185, %v3644
      %v3646 = vpop.f32.mrf.mxu0
      %3647 = vmatprep.mubr.f32.mxu0 0.0
      %v3648 = vand.u32 %v468, 4294901760
      %3649 = vmatmul.mubr.f32.gmra.mxu0 %v3648
      %v3650 = vpop.f32.mrf.mxu0
      %v3651 = vadd.f32 %v3191, %v3650
      %v3652 = vpop.f32.mrf.mxu0
      %3653 = vmatprep.mubr.f32.mxu0 0.0
      %v3654 = vand.u32 %v471, 4294901760
      %3655 = vmatmul.mubr.f32.gmra.mxu0 %v3654
      %v3656 = vpop.f32.mrf.mxu0
      %v3657 = vadd.f32 %v3197, %v3656
      %v3658 = vpop.f32.mrf.mxu0
      %3659 = vmatprep.mubr.f32.mxu0 0.0
      %v3660 = vand.u32 %v474, 4294901760
      %3661 = vmatmul.mubr.f32.gmra.mxu0 %v3660
      %v3662 = vpop.f32.mrf.mxu0
      %v3663 = vadd.f32 %v3203, %v3662
      %v3664 = vpop.f32.mrf.mxu0
      %3665 = vmatprep.mubr.f32.mxu0 0.0
      %v3666 = vand.u32 %v477, 4294901760
      %3667 = vmatmul.mubr.f32.gmra.mxu0 %v3666
      %v3668 = vpop.f32.mrf.mxu0
      %v3669 = vadd.f32 %v3209, %v3668
      %v3670 = vpop.f32.mrf.mxu0
      %3671 = vmatprep.mubr.f32.mxu0 0.0
      %v3672 = vand.u32 %v480, 4294901760
      %3673 = vmatmul.mubr.f32.gmra.mxu0 %v3672
      %v3674 = vpop.f32.mrf.mxu0
      %v3675 = vadd.f32 %v3215, %v3674
      %v3676 = vpop.f32.mrf.mxu0
      %3677 = vmatprep.mubr.f32.mxu0 0.0
      %v3678 = vand.u32 %v483, 4294901760
      %3679 = vmatmul.mubr.f32.gmra.mxu0 %v3678
      %v3680 = vpop.f32.mrf.mxu0
      %v3681 = vadd.f32 %v3221, %v3680
      %v3682 = vpop.f32.mrf.mxu0
      %3683 = vmatprep.mubr.f32.mxu0 0.0
      %v3684 = vand.u32 %v486, 4294901760
      %3685 = vmatmul.mubr.f32.gmra.mxu0 %v3684
      %v3686 = vpop.f32.mrf.mxu0
      %v3687 = vadd.f32 %v3227, %v3686
      %v3688 = vpop.f32.mrf.mxu0
      %3689 = vmatprep.mubr.f32.mxu0 0.0
      %v3690 = vand.u32 %v489, 4294901760
      %3691 = vmatmul.mubr.f32.gmra.mxu0 %v3690
      %v3692 = vpop.f32.mrf.mxu0
      %v3693 = vadd.f32 %v3233, %v3692
      %v3694 = vpop.f32.mrf.mxu0
      %3695 = vmatprep.mubr.f32.mxu0 0.0
      %v3696 = vand.u32 %v492, 4294901760
      %3697 = vmatmul.mubr.f32.gmra.mxu0 %v3696
      %v3698 = vpop.f32.mrf.mxu0
      %v3699 = vadd.f32 %v3239, %v3698
      %v3700 = vpop.f32.mrf.mxu0
      %3701 = vmatprep.mubr.f32.mxu0 0.0
      %v3702 = vand.u32 %v495, 4294901760
      %3703 = vmatmul.mubr.f32.gmra.mxu0 %v3702
      %v3704 = vpop.f32.mrf.mxu0
      %v3705 = vadd.f32 %v3245, %v3704
      %v3706 = vpop.f32.mrf.mxu0
      %3707 = vmatprep.mubr.f32.mxu0 0.0
      %v3708 = vand.u32 %v498, 4294901760
      %3709 = vmatmul.mubr.f32.gmra.mxu0 %v3708
      %v3710 = vpop.f32.mrf.mxu0
      %v3711 = vadd.f32 %v3251, %v3710
      %v3712 = vpop.f32.mrf.mxu0
      %3713 = vmatprep.mubr.f32.mxu0 0.0
      %v3714 = vand.u32 %v501, 4294901760
      %3715 = vmatmul.mubr.f32.gmra.mxu0 %v3714
      %v3716 = vpop.f32.mrf.mxu0
      %v3717 = vadd.f32 %v3257, %v3716
      %v3718 = vpop.f32.mrf.mxu0
      %3719 = vmatprep.mubr.f32.mxu0 0.0
      %v3720 = vand.u32 %v504, 4294901760
      %3721 = vmatmul.mubr.f32.gmra.mxu0 %v3720
      %v3722 = vpop.f32.mrf.mxu0
      %v3723 = vadd.f32 %v3263, %v3722
      %v3724 = vpop.f32.mrf.mxu0
      %3725 = vmatprep.mubr.f32.mxu0 0.0
      %v3726 = vand.u32 %v507, 4294901760
      %3727 = vmatmul.mubr.f32.gmra.mxu0 %v3726
      %v3728 = vpop.f32.mrf.mxu0
      %v3729 = vadd.f32 %v3269, %v3728
      %v3730 = vpop.f32.mrf.mxu0
      %3731 = vmatprep.mubr.f32.mxu0 0.0
      %v3732 = vand.u32 %v510, 4294901760
      %3733 = vmatmul.mubr.f32.gmra.mxu0 %v3732
      %v3734 = vpop.f32.mrf.mxu0
      %v3735 = vadd.f32 %v3275, %v3734
      %v3736 = vpop.f32.mrf.mxu0
      %3737 = vmatprep.mubr.f32.mxu0 0.0
      %v3738 = vand.u32 %v513, 4294901760
      %3739 = vmatmul.mubr.f32.gmra.mxu0 %v3738
      %v3740 = vpop.f32.mrf.mxu0
      %v3741 = vadd.f32 %v3281, %v3740
      %v3742 = vpop.f32.mrf.mxu0
      %3743 = vmatprep.mubr.f32.mxu0 0.0
      %v3744 = vand.u32 %v516, 4294901760
      %3745 = vmatmul.mubr.f32.gmra.mxu0 %v3744
      %v3746 = vpop.f32.mrf.mxu0
      %v3747 = vadd.f32 %v3287, %v3746
      %v3748 = vpop.f32.mrf.mxu0
      %3749 = vmatprep.mubr.f32.mxu0 0.0
      %v3750 = vand.u32 %v519, 4294901760
      %3751 = vmatmul.mubr.f32.gmra.mxu0 %v3750
      %v3752 = vpop.f32.mrf.mxu0
      %v3753 = vadd.f32 %v3293, %v3752
      %v3754 = vpop.f32.mrf.mxu0
      %3755 = vmatprep.mubr.f32.mxu0 0.0
      %v3756 = vand.u32 %v522, 4294901760
      %3757 = vmatmul.mubr.f32.gmra.mxu0 %v3756
      %v3758 = vpop.f32.mrf.mxu0
      %v3759 = vadd.f32 %v3299, %v3758
      %v3760 = vpop.f32.mrf.mxu0
      %3761 = vmatprep.mubr.f32.mxu0 0.0
      %v3762 = vand.u32 %v525, 4294901760
      %3763 = vmatmul.mubr.f32.gmra.mxu0 %v3762
      %v3764 = vpop.f32.mrf.mxu0
      %v3765 = vadd.f32 %v3305, %v3764
      %v3766 = vpop.f32.mrf.mxu0
      %3767 = vmatprep.mubr.f32.mxu0 0.0
      %v3768 = vand.u32 %v528, 4294901760
      %3769 = vmatmul.mubr.f32.gmra.mxu0 %v3768
      %v3770 = vpop.f32.mrf.mxu0
      %v3771 = vadd.f32 %v3311, %v3770
      %v3772 = vpop.f32.mrf.mxu0
      %3773 = vmatprep.mubr.f32.mxu0 0.0
      %v3774 = vand.u32 %v531, 4294901760
      %3775 = vmatmul.mubr.f32.gmra.mxu0 %v3774
      %v3776 = vpop.f32.mrf.mxu0
      %v3777 = vadd.f32 %v3317, %v3776
      %v3778 = vpop.f32.mrf.mxu0
      %3779 = vmatprep.mubr.f32.mxu0 0.0
      %v3780 = vand.u32 %v534, 4294901760
      %3781 = vmatmul.mubr.f32.gmra.mxu0 %v3780
      %v3782 = vpop.f32.mrf.mxu0
      %v3783 = vadd.f32 %v3323, %v3782
      %v3784 = vpop.f32.mrf.mxu0
      %3785 = vmatprep.mubr.f32.mxu0 0.0
      %v3786 = vand.u32 %v537, 4294901760
      %3787 = vmatmul.mubr.f32.gmra.mxu0 %v3786
      %v3788 = vpop.f32.mrf.mxu0
      %v3789 = vadd.f32 %v3329, %v3788
      %v3790 = vpop.f32.mrf.mxu0
      %3791 = vmatprep.mubr.f32.mxu0 0.0
      %v3792 = vand.u32 %v540, 4294901760
      %3793 = vmatmul.mubr.f32.gmra.mxu0 %v3792
      %v3794 = vpop.f32.mrf.mxu0
      %v3795 = vadd.f32 %v3335, %v3794
      %v3796 = vpop.f32.mrf.mxu0
      %3797 = vmatprep.mubr.f32.mxu0 0.0
      %v3798 = vand.u32 %v543, 4294901760
      %3799 = vmatmul.mubr.f32.gmra.mxu0 %v3798
      %v3800 = vpop.f32.mrf.mxu0
      %v3801 = vadd.f32 %v3341, %v3800
      %v3802 = vpop.f32.mrf.mxu0
      %3803 = vmatprep.mubr.f32.mxu0 0.0
      %v3804 = vand.u32 %v546, 4294901760
      %3805 = vmatmul.mubr.f32.gmra.mxu0 %v3804
      %v3806 = vpop.f32.mrf.mxu0
      %v3807 = vadd.f32 %v3347, %v3806
      %v3808 = vpop.f32.mrf.mxu0
      %3809 = vmatprep.mubr.f32.mxu0 0.0
      %v3810 = vand.u32 %v549, 4294901760
      %3811 = vmatmul.mubr.f32.gmra.mxu0 %v3810
      %v3812 = vpop.f32.mrf.mxu0
      %v3813 = vadd.f32 %v3353, %v3812
      %v3814 = vpop.f32.mrf.mxu0
      %3815 = vmatprep.mubr.f32.mxu0 0.0
      %v3816 = vand.u32 %v552, 4294901760
      %3817 = vmatmul.mubr.f32.gmra.mxu0 %v3816
      %v3818 = vpop.f32.mrf.mxu0
      %v3819 = vadd.f32 %v3359, %v3818
      %v3820 = vpop.f32.mrf.mxu0
      %3821 = vmatprep.mubr.f32.mxu0 0.0
      %v3822 = vand.u32 %v555, 4294901760
      %3823 = vmatmul.mubr.f32.gmra.mxu0 %v3822
      %v3824 = vpop.f32.mrf.mxu0
      %v3825 = vadd.f32 %v3365, %v3824
      %v3826 = vpop.f32.mrf.mxu0
      %3827 = vmatprep.mubr.f32.mxu0 0.0
      %v3828 = vand.u32 %v558, 4294901760
      %3829 = vmatmul.mubr.f32.gmra.mxu0 %v3828
      %v3830 = vpop.f32.mrf.mxu0
      %v3831 = vadd.f32 %v3371, %v3830
      %v3832 = vpop.f32.mrf.mxu0
      %3833 = vmatprep.mubr.f32.mxu0 0.0
      %v3834 = vand.u32 %v561, 4294901760
      %3835 = vmatmul.mubr.f32.gmra.mxu0 %v3834
      %v3836 = vpop.f32.mrf.mxu0
      %v3837 = vadd.f32 %v3377, %v3836
      %v3838 = vpop.f32.mrf.mxu0
      %3839 = vmatprep.mubr.f32.mxu0 0.0
      %v3840 = vand.u32 %v564, 4294901760
      %3841 = vmatmul.mubr.f32.gmra.mxu0 %v3840
      %v3842 = vpop.f32.mrf.mxu0
      %v3843 = vadd.f32 %v3383, %v3842
      %v3844 = vpop.f32.mrf.mxu0
      %3845 = vmatprep.mubr.f32.mxu0 0.0
      %v3846 = vand.u32 %v567, 4294901760
      %3847 = vmatmul.mubr.f32.gmra.mxu0 %v3846
      %v3848 = vpop.f32.mrf.mxu0
      %v3849 = vadd.f32 %v3389, %v3848
      %v3850 = vpop.f32.mrf.mxu0
      %3851 = vmatprep.mubr.f32.mxu0 0.0
      %v3852 = vand.u32 %v570, 4294901760
      %3853 = vmatmul.mubr.f32.gmra.mxu0 %v3852
      %v3854 = vpop.f32.mrf.mxu0
      %v3855 = vadd.f32 %v3395, %v3854
      %v3856 = vpop.f32.mrf.mxu0
      %3857 = vmatprep.mubr.f32.mxu0 0.0
      %v3858 = vand.u32 %v573, 4294901760
      %3859 = vmatmul.mubr.f32.gmra.mxu0 %v3858
      %v3860 = vpop.f32.mrf.mxu0
      %v3861 = vadd.f32 %v3401, %v3860
      %v3862 = vpop.f32.mrf.mxu0
      %3863 = vdwg.mxu0
      %v3864 = vmax.f32 %v3483, 0.0
      %v3865 = vmax.f32 %v3489, 0.0
      %v3866 = vmax.f32 %v3495, 0.0
      %v3867 = vmax.f32 %v3501, 0.0
      %v3868 = vmax.f32 %v3507, 0.0
      %v3869 = vmax.f32 %v3513, 0.0
      %v3870 = vmax.f32 %v3519, 0.0
      %v3871 = vmax.f32 %v3525, 0.0
      %v3872 = vmax.f32 %v3531, 0.0
      %v3873 = vmax.f32 %v3537, 0.0
      %v3874 = vmax.f32 %v3543, 0.0
      %v3875 = vmax.f32 %v3549, 0.0
      %v3876 = vmax.f32 %v3555, 0.0
      %v3877 = vmax.f32 %v3561, 0.0
      %v3878 = vmax.f32 %v3567, 0.0
      %v3879 = vmax.f32 %v3573, 0.0
      %v3880 = vmax.f32 %v3579, 0.0
      %v3881 = vmax.f32 %v3585, 0.0
      %v3882 = vmax.f32 %v3591, 0.0
      %v3883 = vmax.f32 %v3597, 0.0
      %v3884 = vmax.f32 %v3603, 0.0
      %v3885 = vmax.f32 %v3609, 0.0
      %v3886 = vmax.f32 %v3615, 0.0
      %v3887 = vmax.f32 %v3621, 0.0
      %v3888 = vmax.f32 %v3627, 0.0
      %v3889 = vmax.f32 %v3633, 0.0
      %v3890 = vmax.f32 %v3639, 0.0
      %v3891 = vmax.f32 %v3645, 0.0
      %v3892 = vmax.f32 %v3651, 0.0
      %v3893 = vmax.f32 %v3657, 0.0
      %v3894 = vmax.f32 %v3663, 0.0
      %v3895 = vmax.f32 %v3669, 0.0
      %v3896 = vmax.f32 %v3675, 0.0
      %v3897 = vmax.f32 %v3681, 0.0
      %v3898 = vmax.f32 %v3687, 0.0
      %v3899 = vmax.f32 %v3693, 0.0
      %v3900 = vmax.f32 %v3699, 0.0
      %v3901 = vmax.f32 %v3705, 0.0
      %v3902 = vmax.f32 %v3711, 0.0
      %v3903 = vmax.f32 %v3717, 0.0
      %v3904 = vmax.f32 %v3723, 0.0
      %v3905 = vmax.f32 %v3729, 0.0
      %v3906 = vmax.f32 %v3735, 0.0
      %v3907 = vmax.f32 %v3741, 0.0
      %v3908 = vmax.f32 %v3747, 0.0
      %v3909 = vmax.f32 %v3753, 0.0
      %v3910 = vmax.f32 %v3759, 0.0
      %v3911 = vmax.f32 %v3765, 0.0
      %v3912 = vmax.f32 %v3771, 0.0
      %v3913 = vmax.f32 %v3777, 0.0
      %v3914 = vmax.f32 %v3783, 0.0
      %v3915 = vmax.f32 %v3789, 0.0
      %v3916 = vmax.f32 %v3795, 0.0
      %v3917 = vmax.f32 %v3801, 0.0
      %v3918 = vmax.f32 %v3807, 0.0
      %v3919 = vmax.f32 %v3813, 0.0
      %v3920 = vmax.f32 %v3819, 0.0
      %v3921 = vmax.f32 %v3825, 0.0
      %v3922 = vmax.f32 %v3831, 0.0
      %v3923 = vmax.f32 %v3837, 0.0
      %v3924 = vmax.f32 %v3843, 0.0
      %v3925 = vmax.f32 %v3849, 0.0
      %v3926 = vmax.f32 %v3855, 0.0
      %v3927 = vmax.f32 %v3861, 0.0
      %v3928 = vand.u32 2147483647, %v3483
      %v3929 = vand.u32 2147483647, %v3489
      %v3930 = vand.u32 2147483647, %v3495
      %v3931 = vand.u32 2147483647, %v3501
      %v3932 = vand.u32 2147483647, %v3507
      %v3933 = vand.u32 2147483647, %v3513
      %v3934 = vand.u32 2147483647, %v3519
      %v3935 = vand.u32 2147483647, %v3525
      %v3936 = vand.u32 2147483647, %v3531
      %v3937 = vand.u32 2147483647, %v3537
      %v3938 = vand.u32 2147483647, %v3543
      %v3939 = vand.u32 2147483647, %v3549
      %v3940 = vand.u32 2147483647, %v3555
      %v3941 = vand.u32 2147483647, %v3561
      %v3942 = vand.u32 2147483647, %v3567
      %v3943 = vand.u32 2147483647, %v3573
      %v3944 = vand.u32 2147483647, %v3579
      %v3945 = vand.u32 2147483647, %v3585
      %v3946 = vand.u32 2147483647, %v3591
      %v3947 = vand.u32 2147483647, %v3597
      %v3948 = vand.u32 2147483647, %v3603
      %v3949 = vand.u32 2147483647, %v3609
      %v3950 = vand.u32 2147483647, %v3615
      %v3951 = vand.u32 2147483647, %v3621
      %v3952 = vand.u32 2147483647, %v3627
      %v3953 = vand.u32 2147483647, %v3633
      %v3954 = vand.u32 2147483647, %v3639
      %v3955 = vand.u32 2147483647, %v3645
      %v3956 = vand.u32 2147483647, %v3651
      %v3957 = vand.u32 2147483647, %v3657
      %v3958 = vand.u32 2147483647, %v3663
      %v3959 = vand.u32 2147483647, %v3669
      %v3960 = vand.u32 2147483647, %v3675
      %v3961 = vand.u32 2147483647, %v3681
      %v3962 = vand.u32 2147483647, %v3687
      %v3963 = vand.u32 2147483647, %v3693
      %v3964 = vand.u32 2147483647, %v3699
      %v3965 = vand.u32 2147483647, %v3705
      %v3966 = vand.u32 2147483647, %v3711
      %v3967 = vand.u32 2147483647, %v3717
      %v3968 = vand.u32 2147483647, %v3723
      %v3969 = vand.u32 2147483647, %v3729
      %v3970 = vand.u32 2147483647, %v3735
      %v3971 = vand.u32 2147483647, %v3741
      %v3972 = vand.u32 2147483647, %v3747
      %v3973 = vand.u32 2147483647, %v3753
      %v3974 = vand.u32 2147483647, %v3759
      %v3975 = vand.u32 2147483647, %v3765
      %v3976 = vand.u32 2147483647, %v3771
      %v3977 = vand.u32 2147483647, %v3777
      %v3978 = vand.u32 2147483647, %v3783
      %v3979 = vand.u32 2147483647, %v3789
      %v3980 = vand.u32 2147483647, %v3795
      %v3981 = vand.u32 2147483647, %v3801
      %v3982 = vand.u32 2147483647, %v3807
      %v3983 = vand.u32 2147483647, %v3813
      %v3984 = vand.u32 2147483647, %v3819
      %v3985 = vand.u32 2147483647, %v3825
      %v3986 = vand.u32 2147483647, %v3831
      %v3987 = vand.u32 2147483647, %v3837
      %v3988 = vand.u32 2147483647, %v3843
      %v3989 = vand.u32 2147483647, %v3849
      %v3990 = vand.u32 2147483647, %v3855
      %v3991 = vand.u32 2147483647, %v3861
      %v3992 = vsub.f32 0.0, %v3928
      %v3993 = vsub.f32 0.0, %v3929
      %v3994 = vsub.f32 0.0, %v3930
      %v3995 = vsub.f32 0.0, %v3931
      %v3996 = vsub.f32 0.0, %v3932
      %v3997 = vsub.f32 0.0, %v3933
      %v3998 = vsub.f32 0.0, %v3934
      %v3999 = vsub.f32 0.0, %v3935
      %v4000 = vsub.f32 0.0, %v3936
      %v4001 = vsub.f32 0.0, %v3937
      %v4002 = vsub.f32 0.0, %v3938
      %v4003 = vsub.f32 0.0, %v3939
      %v4004 = vsub.f32 0.0, %v3940
      %v4005 = vsub.f32 0.0, %v3941
      %v4006 = vsub.f32 0.0, %v3942
      %v4007 = vsub.f32 0.0, %v3943
      %v4008 = vsub.f32 0.0, %v3944
      %v4009 = vsub.f32 0.0, %v3945
      %v4010 = vsub.f32 0.0, %v3946
      %v4011 = vsub.f32 0.0, %v3947
      %v4012 = vsub.f32 0.0, %v3948
      %v4013 = vsub.f32 0.0, %v3949
      %v4014 = vsub.f32 0.0, %v3950
      %v4015 = vsub.f32 0.0, %v3951
      %v4016 = vsub.f32 0.0, %v3952
      %v4017 = vsub.f32 0.0, %v3953
      %v4018 = vsub.f32 0.0, %v3954
      %v4019 = vsub.f32 0.0, %v3955
      %v4020 = vsub.f32 0.0, %v3956
      %v4021 = vsub.f32 0.0, %v3957
      %v4022 = vsub.f32 0.0, %v3958
      %v4023 = vsub.f32 0.0, %v3959
      %v4024 = vsub.f32 0.0, %v3960
      %v4025 = vsub.f32 0.0, %v3961
      %v4026 = vsub.f32 0.0, %v3962
      %v4027 = vsub.f32 0.0, %v3963
      %v4028 = vsub.f32 0.0, %v3964
      %v4029 = vsub.f32 0.0, %v3965
      %v4030 = vsub.f32 0.0, %v3966
      %v4031 = vsub.f32 0.0, %v3967
      %v4032 = vsub.f32 0.0, %v3968
      %v4033 = vsub.f32 0.0, %v3969
      %v4034 = vsub.f32 0.0, %v3970
      %v4035 = vsub.f32 0.0, %v3971
      %v4036 = vsub.f32 0.0, %v3972
      %v4037 = vsub.f32 0.0, %v3973
      %v4038 = vsub.f32 0.0, %v3974
      %v4039 = vsub.f32 0.0, %v3975
      %v4040 = vsub.f32 0.0, %v3976
      %v4041 = vsub.f32 0.0, %v3977
      %v4042 = vsub.f32 0.0, %v3978
      %v4043 = vsub.f32 0.0, %v3979
      %v4044 = vsub.f32 0.0, %v3980
      %v4045 = vsub.f32 0.0, %v3981
      %v4046 = vsub.f32 0.0, %v3982
      %v4047 = vsub.f32 0.0, %v3983
      %v4048 = vsub.f32 0.0, %v3984
      %v4049 = vsub.f32 0.0, %v3985
      %v4050 = vsub.f32 0.0, %v3986
      %v4051 = vsub.f32 0.0, %v3987
      %v4052 = vsub.f32 0.0, %v3988
      %v4053 = vsub.f32 0.0, %v3989
      %v4054 = vsub.f32 0.0, %v3990
      %v4055 = vsub.f32 0.0, %v3991
      %v4056 = vmul.f32 %v3992, 1.442695
      %v4057 = vpow.pop %v4056
      %v4058 = vmul.f32 %v3993, 1.442695
      %v4059 = vpow.pop %v4058
      %v4060 = vmul.f32 %v3994, 1.442695
      %v4061 = vpow.pop %v4060
      %v4062 = vmul.f32 %v3995, 1.442695
      %v4063 = vpow.pop %v4062
      %v4064 = vmul.f32 %v3996, 1.442695
      %v4065 = vpow.pop %v4064
      %v4066 = vmul.f32 %v3997, 1.442695
      %v4067 = vpow.pop %v4066
      %v4068 = vmul.f32 %v3998, 1.442695
      %v4069 = vpow.pop %v4068
      %v4070 = vmul.f32 %v3999, 1.442695
      %v4071 = vpow.pop %v4070
      %v4072 = vmul.f32 %v4000, 1.442695
      %v4073 = vpow.pop %v4072
      %v4074 = vmul.f32 %v4001, 1.442695
      %v4075 = vpow.pop %v4074
      %v4076 = vmul.f32 %v4002, 1.442695
      %v4077 = vpow.pop %v4076
      %v4078 = vmul.f32 %v4003, 1.442695
      %v4079 = vpow.pop %v4078
      %v4080 = vmul.f32 %v4004, 1.442695
      %v4081 = vpow.pop %v4080
      %v4082 = vmul.f32 %v4005, 1.442695
      %v4083 = vpow.pop %v4082
      %v4084 = vmul.f32 %v4006, 1.442695
      %v4085 = vpow.pop %v4084
      %v4086 = vmul.f32 %v4007, 1.442695
      %v4087 = vpow.pop %v4086
      %v4088 = vmul.f32 %v4008, 1.442695
      %v4089 = vpow.pop %v4088
      %v4090 = vmul.f32 %v4009, 1.442695
      %v4091 = vpow.pop %v4090
      %v4092 = vmul.f32 %v4010, 1.442695
      %v4093 = vpow.pop %v4092
      %v4094 = vmul.f32 %v4011, 1.442695
      %v4095 = vpow.pop %v4094
      %v4096 = vmul.f32 %v4012, 1.442695
      %v4097 = vpow.pop %v4096
      %v4098 = vmul.f32 %v4013, 1.442695
      %v4099 = vpow.pop %v4098
      %v4100 = vmul.f32 %v4014, 1.442695
      %v4101 = vpow.pop %v4100
      %v4102 = vmul.f32 %v4015, 1.442695
      %v4103 = vpow.pop %v4102
      %v4104 = vmul.f32 %v4016, 1.442695
      %v4105 = vpow.pop %v4104
      %v4106 = vmul.f32 %v4017, 1.442695
      %v4107 = vpow.pop %v4106
      %v4108 = vmul.f32 %v4018, 1.442695
      %v4109 = vpow.pop %v4108
      %v4110 = vmul.f32 %v4019, 1.442695
      %v4111 = vpow.pop %v4110
      %v4112 = vmul.f32 %v4020, 1.442695
      %v4113 = vpow.pop %v4112
      %v4114 = vmul.f32 %v4021, 1.442695
      %v4115 = vpow.pop %v4114
      %v4116 = vmul.f32 %v4022, 1.442695
      %v4117 = vpow.pop %v4116
      %v4118 = vmul.f32 %v4023, 1.442695
      %v4119 = vpow.pop %v4118
      %v4120 = vmul.f32 %v4024, 1.442695
      %v4121 = vpow.pop %v4120
      %v4122 = vmul.f32 %v4025, 1.442695
      %v4123 = vpow.pop %v4122
      %v4124 = vmul.f32 %v4026, 1.442695
      %v4125 = vpow.pop %v4124
      %v4126 = vmul.f32 %v4027, 1.442695
      %v4127 = vpow.pop %v4126
      %v4128 = vmul.f32 %v4028, 1.442695
      %v4129 = vpow.pop %v4128
      %v4130 = vmul.f32 %v4029, 1.442695
      %v4131 = vpow.pop %v4130
      %v4132 = vmul.f32 %v4030, 1.442695
      %v4133 = vpow.pop %v4132
      %v4134 = vmul.f32 %v4031, 1.442695
      %v4135 = vpow.pop %v4134
      %v4136 = vmul.f32 %v4032, 1.442695
      %v4137 = vpow.pop %v4136
      %v4138 = vmul.f32 %v4033, 1.442695
      %v4139 = vpow.pop %v4138
      %v4140 = vmul.f32 %v4034, 1.442695
      %v4141 = vpow.pop %v4140
      %v4142 = vmul.f32 %v4035, 1.442695
      %v4143 = vpow.pop %v4142
      %v4144 = vmul.f32 %v4036, 1.442695
      %v4145 = vpow.pop %v4144
      %v4146 = vmul.f32 %v4037, 1.442695
      %v4147 = vpow.pop %v4146
      %v4148 = vmul.f32 %v4038, 1.442695
      %v4149 = vpow.pop %v4148
      %v4150 = vmul.f32 %v4039, 1.442695
      %v4151 = vpow.pop %v4150
      %v4152 = vmul.f32 %v4040, 1.442695
      %v4153 = vpow.pop %v4152
      %v4154 = vmul.f32 %v4041, 1.442695
      %v4155 = vpow.pop %v4154
      %v4156 = vmul.f32 %v4042, 1.442695
      %v4157 = vpow.pop %v4156
      %v4158 = vmul.f32 %v4043, 1.442695
      %v4159 = vpow.pop %v4158
      %v4160 = vmul.f32 %v4044, 1.442695
      %v4161 = vpow.pop %v4160
      %v4162 = vmul.f32 %v4045, 1.442695
      %v4163 = vpow.pop %v4162
      %v4164 = vmul.f32 %v4046, 1.442695
      %v4165 = vpow.pop %v4164
      %v4166 = vmul.f32 %v4047, 1.442695
      %v4167 = vpow.pop %v4166
      %v4168 = vmul.f32 %v4048, 1.442695
      %v4169 = vpow.pop %v4168
      %v4170 = vmul.f32 %v4049, 1.442695
      %v4171 = vpow.pop %v4170
      %v4172 = vmul.f32 %v4050, 1.442695
      %v4173 = vpow.pop %v4172
      %v4174 = vmul.f32 %v4051, 1.442695
      %v4175 = vpow.pop %v4174
      %v4176 = vmul.f32 %v4052, 1.442695
      %v4177 = vpow.pop %v4176
      %v4178 = vmul.f32 %v4053, 1.442695
      %v4179 = vpow.pop %v4178
      %v4180 = vmul.f32 %v4054, 1.442695
      %v4181 = vpow.pop %v4180
      %v4182 = vmul.f32 %v4055, 1.442695
      %v4183 = vpow.pop %v4182
      %v4184 = vadd.f32 %v4057, 1.0
      %v4185 = vadd.f32 %v4059, 1.0
      %v4186 = vadd.f32 %v4061, 1.0
      %v4187 = vadd.f32 %v4063, 1.0
      %v4188 = vadd.f32 %v4065, 1.0
      %v4189 = vadd.f32 %v4067, 1.0
      %v4190 = vadd.f32 %v4069, 1.0
      %v4191 = vadd.f32 %v4071, 1.0
      %v4192 = vadd.f32 %v4073, 1.0
      %v4193 = vadd.f32 %v4075, 1.0
      %v4194 = vadd.f32 %v4077, 1.0
      %v4195 = vadd.f32 %v4079, 1.0
      %v4196 = vadd.f32 %v4081, 1.0
      %v4197 = vadd.f32 %v4083, 1.0
      %v4198 = vadd.f32 %v4085, 1.0
      %v4199 = vadd.f32 %v4087, 1.0
      %v4200 = vadd.f32 %v4089, 1.0
      %v4201 = vadd.f32 %v4091, 1.0
      %v4202 = vadd.f32 %v4093, 1.0
      %v4203 = vadd.f32 %v4095, 1.0
      %v4204 = vadd.f32 %v4097, 1.0
      %v4205 = vadd.f32 %v4099, 1.0
      %v4206 = vadd.f32 %v4101, 1.0
      %v4207 = vadd.f32 %v4103, 1.0
      %v4208 = vadd.f32 %v4105, 1.0
      %v4209 = vadd.f32 %v4107, 1.0
      %v4210 = vadd.f32 %v4109, 1.0
      %v4211 = vadd.f32 %v4111, 1.0
      %v4212 = vadd.f32 %v4113, 1.0
      %v4213 = vadd.f32 %v4115, 1.0
      %v4214 = vadd.f32 %v4117, 1.0
      %v4215 = vadd.f32 %v4119, 1.0
      %v4216 = vadd.f32 %v4121, 1.0
      %v4217 = vadd.f32 %v4123, 1.0
      %v4218 = vadd.f32 %v4125, 1.0
      %v4219 = vadd.f32 %v4127, 1.0
      %v4220 = vadd.f32 %v4129, 1.0
      %v4221 = vadd.f32 %v4131, 1.0
      %v4222 = vadd.f32 %v4133, 1.0
      %v4223 = vadd.f32 %v4135, 1.0
      %v4224 = vadd.f32 %v4137, 1.0
      %v4225 = vadd.f32 %v4139, 1.0
      %v4226 = vadd.f32 %v4141, 1.0
      %v4227 = vadd.f32 %v4143, 1.0
      %v4228 = vadd.f32 %v4145, 1.0
      %v4229 = vadd.f32 %v4147, 1.0
      %v4230 = vadd.f32 %v4149, 1.0
      %v4231 = vadd.f32 %v4151, 1.0
      %v4232 = vadd.f32 %v4153, 1.0
      %v4233 = vadd.f32 %v4155, 1.0
      %v4234 = vadd.f32 %v4157, 1.0
      %v4235 = vadd.f32 %v4159, 1.0
      %v4236 = vadd.f32 %v4161, 1.0
      %v4237 = vadd.f32 %v4163, 1.0
      %v4238 = vadd.f32 %v4165, 1.0
      %v4239 = vadd.f32 %v4167, 1.0
      %v4240 = vadd.f32 %v4169, 1.0
      %v4241 = vadd.f32 %v4171, 1.0
      %v4242 = vadd.f32 %v4173, 1.0
      %v4243 = vadd.f32 %v4175, 1.0
      %v4244 = vadd.f32 %v4177, 1.0
      %v4245 = vadd.f32 %v4179, 1.0
      %v4246 = vadd.f32 %v4181, 1.0
      %v4247 = vadd.f32 %v4183, 1.0
      %v4248 = vlog2.pop %v4184
      %v4249 = vmul.f32 %v4248, 0.6931472
      %v4250 = vlog2.pop %v4185
      %v4251 = vmul.f32 %v4250, 0.6931472
      %v4252 = vlog2.pop %v4186
      %v4253 = vmul.f32 %v4252, 0.6931472
      %v4254 = vlog2.pop %v4187
      %v4255 = vmul.f32 %v4254, 0.6931472
      %v4256 = vlog2.pop %v4188
      %v4257 = vmul.f32 %v4256, 0.6931472
      %v4258 = vlog2.pop %v4189
      %v4259 = vmul.f32 %v4258, 0.6931472
      %v4260 = vlog2.pop %v4190
      %v4261 = vmul.f32 %v4260, 0.6931472
      %v4262 = vlog2.pop %v4191
      %v4263 = vmul.f32 %v4262, 0.6931472
      %v4264 = vlog2.pop %v4192
      %v4265 = vmul.f32 %v4264, 0.6931472
      %v4266 = vlog2.pop %v4193
      %v4267 = vmul.f32 %v4266, 0.6931472
      %v4268 = vlog2.pop %v4194
      %v4269 = vmul.f32 %v4268, 0.6931472
      %v4270 = vlog2.pop %v4195
      %v4271 = vmul.f32 %v4270, 0.6931472
      %v4272 = vlog2.pop %v4196
      %v4273 = vmul.f32 %v4272, 0.6931472
      %v4274 = vlog2.pop %v4197
      %v4275 = vmul.f32 %v4274, 0.6931472
      %v4276 = vlog2.pop %v4198
      %v4277 = vmul.f32 %v4276, 0.6931472
      %v4278 = vlog2.pop %v4199
      %v4279 = vmul.f32 %v4278, 0.6931472
      %v4280 = vlog2.pop %v4200
      %v4281 = vmul.f32 %v4280, 0.6931472
      %v4282 = vlog2.pop %v4201
      %v4283 = vmul.f32 %v4282, 0.6931472
      %v4284 = vlog2.pop %v4202
      %v4285 = vmul.f32 %v4284, 0.6931472
      %v4286 = vlog2.pop %v4203
      %v4287 = vmul.f32 %v4286, 0.6931472
      %v4288 = vlog2.pop %v4204
      %v4289 = vmul.f32 %v4288, 0.6931472
      %v4290 = vlog2.pop %v4205
      %v4291 = vmul.f32 %v4290, 0.6931472
      %v4292 = vlog2.pop %v4206
      %v4293 = vmul.f32 %v4292, 0.6931472
      %v4294 = vlog2.pop %v4207
      %v4295 = vmul.f32 %v4294, 0.6931472
      %v4296 = vlog2.pop %v4208
      %v4297 = vmul.f32 %v4296, 0.6931472
      %v4298 = vlog2.pop %v4209
      %v4299 = vmul.f32 %v4298, 0.6931472
      %v4300 = vlog2.pop %v4210
      %v4301 = vmul.f32 %v4300, 0.6931472
      %v4302 = vlog2.pop %v4211
      %v4303 = vmul.f32 %v4302, 0.6931472
      %v4304 = vlog2.pop %v4212
      %v4305 = vmul.f32 %v4304, 0.6931472
      %v4306 = vlog2.pop %v4213
      %v4307 = vmul.f32 %v4306, 0.6931472
      %v4308 = vlog2.pop %v4214
      %v4309 = vmul.f32 %v4308, 0.6931472
      %v4310 = vlog2.pop %v4215
      %v4311 = vmul.f32 %v4310, 0.6931472
      %v4312 = vlog2.pop %v4216
      %v4313 = vmul.f32 %v4312, 0.6931472
      %v4314 = vlog2.pop %v4217
      %v4315 = vmul.f32 %v4314, 0.6931472
      %v4316 = vlog2.pop %v4218
      %v4317 = vmul.f32 %v4316, 0.6931472
      %v4318 = vlog2.pop %v4219
      %v4319 = vmul.f32 %v4318, 0.6931472
      %v4320 = vlog2.pop %v4220
      %v4321 = vmul.f32 %v4320, 0.6931472
      %v4322 = vlog2.pop %v4221
      %v4323 = vmul.f32 %v4322, 0.6931472
      %v4324 = vlog2.pop %v4222
      %v4325 = vmul.f32 %v4324, 0.6931472
      %v4326 = vlog2.pop %v4223
      %v4327 = vmul.f32 %v4326, 0.6931472
      %v4328 = vlog2.pop %v4224
      %v4329 = vmul.f32 %v4328, 0.6931472
      %v4330 = vlog2.pop %v4225
      %v4331 = vmul.f32 %v4330, 0.6931472
      %v4332 = vlog2.pop %v4226
      %v4333 = vmul.f32 %v4332, 0.6931472
      %v4334 = vlog2.pop %v4227
      %v4335 = vmul.f32 %v4334, 0.6931472
      %v4336 = vlog2.pop %v4228
      %v4337 = vmul.f32 %v4336, 0.6931472
      %v4338 = vlog2.pop %v4229
      %v4339 = vmul.f32 %v4338, 0.6931472
      %v4340 = vlog2.pop %v4230
      %v4341 = vmul.f32 %v4340, 0.6931472
      %v4342 = vlog2.pop %v4231
      %v4343 = vmul.f32 %v4342, 0.6931472
      %v4344 = vlog2.pop %v4232
      %v4345 = vmul.f32 %v4344, 0.6931472
      %v4346 = vlog2.pop %v4233
      %v4347 = vmul.f32 %v4346, 0.6931472
      %v4348 = vlog2.pop %v4234
      %v4349 = vmul.f32 %v4348, 0.6931472
      %v4350 = vlog2.pop %v4235
      %v4351 = vmul.f32 %v4350, 0.6931472
      %v4352 = vlog2.pop %v4236
      %v4353 = vmul.f32 %v4352, 0.6931472
      %v4354 = vlog2.pop %v4237
      %v4355 = vmul.f32 %v4354, 0.6931472
      %v4356 = vlog2.pop %v4238
      %v4357 = vmul.f32 %v4356, 0.6931472
      %v4358 = vlog2.pop %v4239
      %v4359 = vmul.f32 %v4358, 0.6931472
      %v4360 = vlog2.pop %v4240
      %v4361 = vmul.f32 %v4360, 0.6931472
      %v4362 = vlog2.pop %v4241
      %v4363 = vmul.f32 %v4362, 0.6931472
      %v4364 = vlog2.pop %v4242
      %v4365 = vmul.f32 %v4364, 0.6931472
      %v4366 = vlog2.pop %v4243
      %v4367 = vmul.f32 %v4366, 0.6931472
      %v4368 = vlog2.pop %v4244
      %v4369 = vmul.f32 %v4368, 0.6931472
      %v4370 = vlog2.pop %v4245
      %v4371 = vmul.f32 %v4370, 0.6931472
      %v4372 = vlog2.pop %v4246
      %v4373 = vmul.f32 %v4372, 0.6931472
      %v4374 = vlog2.pop %v4247
      %v4375 = vmul.f32 %v4374, 0.6931472
      %v4376 = vadd.f32 %v3864, %v4249
      %v4377 = vadd.f32 %v3865, %v4251
      %v4378 = vadd.f32 %v3866, %v4253
      %v4379 = vadd.f32 %v3867, %v4255
      %v4380 = vadd.f32 %v3868, %v4257
      %v4381 = vadd.f32 %v3869, %v4259
      %v4382 = vadd.f32 %v3870, %v4261
      %v4383 = vadd.f32 %v3871, %v4263
      %v4384 = vadd.f32 %v3872, %v4265
      %v4385 = vadd.f32 %v3873, %v4267
      %v4386 = vadd.f32 %v3874, %v4269
      %v4387 = vadd.f32 %v3875, %v4271
      %v4388 = vadd.f32 %v3876, %v4273
      %v4389 = vadd.f32 %v3877, %v4275
      %v4390 = vadd.f32 %v3878, %v4277
      %v4391 = vadd.f32 %v3879, %v4279
      %v4392 = vadd.f32 %v3880, %v4281
      %v4393 = vadd.f32 %v3881, %v4283
      %v4394 = vadd.f32 %v3882, %v4285
      %v4395 = vadd.f32 %v3883, %v4287
      %v4396 = vadd.f32 %v3884, %v4289
      %v4397 = vadd.f32 %v3885, %v4291
      %v4398 = vadd.f32 %v3886, %v4293
      %v4399 = vadd.f32 %v3887, %v4295
      %v4400 = vadd.f32 %v3888, %v4297
      %v4401 = vadd.f32 %v3889, %v4299
      %v4402 = vadd.f32 %v3890, %v4301
      %v4403 = vadd.f32 %v3891, %v4303
      %v4404 = vadd.f32 %v3892, %v4305
      %v4405 = vadd.f32 %v3893, %v4307
      %v4406 = vadd.f32 %v3894, %v4309
      %v4407 = vadd.f32 %v3895, %v4311
      %v4408 = vadd.f32 %v3896, %v4313
      %v4409 = vadd.f32 %v3897, %v4315
      %v4410 = vadd.f32 %v3898, %v4317
      %v4411 = vadd.f32 %v3899, %v4319
      %v4412 = vadd.f32 %v3900, %v4321
      %v4413 = vadd.f32 %v3901, %v4323
      %v4414 = vadd.f32 %v3902, %v4325
      %v4415 = vadd.f32 %v3903, %v4327
      %v4416 = vadd.f32 %v3904, %v4329
      %v4417 = vadd.f32 %v3905, %v4331
      %v4418 = vadd.f32 %v3906, %v4333
      %v4419 = vadd.f32 %v3907, %v4335
      %v4420 = vadd.f32 %v3908, %v4337
      %v4421 = vadd.f32 %v3909, %v4339
      %v4422 = vadd.f32 %v3910, %v4341
      %v4423 = vadd.f32 %v3911, %v4343
      %v4424 = vadd.f32 %v3912, %v4345
      %v4425 = vadd.f32 %v3913, %v4347
      %v4426 = vadd.f32 %v3914, %v4349
      %v4427 = vadd.f32 %v3915, %v4351
      %v4428 = vadd.f32 %v3916, %v4353
      %v4429 = vadd.f32 %v3917, %v4355
      %v4430 = vadd.f32 %v3918, %v4357
      %v4431 = vadd.f32 %v3919, %v4359
      %v4432 = vadd.f32 %v3920, %v4361
      %v4433 = vadd.f32 %v3921, %v4363
      %v4434 = vadd.f32 %v3922, %v4365
      %v4435 = vadd.f32 %v3923, %v4367
      %v4436 = vadd.f32 %v3924, %v4369
      %v4437 = vadd.f32 %v3925, %v4371
      %v4438 = vadd.f32 %v3926, %v4373
      %v4439 = vadd.f32 %v3927, %v4375
      %v4440 = vld [vmem:[%s3] sm:$0xff]
      %v4441 = vld [vmem:[%s3 + $0x8] sm:$0xff]
      %v4442 = vld [vmem:[%s3 + $0x10] sm:$0xff]
      %v4443 = vld [vmem:[%s3 + $0x18] sm:$0xff]
      %v4444 = vld [vmem:[%s3 + $0x20] sm:$0xff]
      %v4445 = vld [vmem:[%s3 + $0x28] sm:$0xff]
      %v4446 = vld [vmem:[%s3 + $0x30] sm:$0xff]
      %v4447 = vld [vmem:[%s3 + $0x38] sm:$0xff]
      %v4448 = vld [vmem:[%s4] sm:$0x1]
      %v4450 = vlaneseq
      %v4451 = vshrl.u32 %v4450, 7
      %v4452 = vsub.s32 0, %v4451
      %v4453 = vrot.slane %v4448, %v4452
      %vm4455 = vcmask 523264
      %v4457 = vsel %vm4455, %v4376, 0
      %v4460 = vsel %vm4455, %v4377, 0
      %v4463 = vsel %vm4455, %v4378, 0
      %v4466 = vsel %vm4455, %v4379, 0
      %v4469 = vsel %vm4455, %v4380, 0
      %v4472 = vsel %vm4455, %v4381, 0
      %v4475 = vsel %vm4455, %v4382, 0
      %v4478 = vsel %vm4455, %v4383, 0
      %v4481 = vsel %vm4455, %v4384, 0
      %v4484 = vsel %vm4455, %v4385, 0
      %v4487 = vsel %vm4455, %v4386, 0
      %v4490 = vsel %vm4455, %v4387, 0
      %v4493 = vsel %vm4455, %v4388, 0
      %v4496 = vsel %vm4455, %v4389, 0
      %v4499 = vsel %vm4455, %v4390, 0
      %v4502 = vsel %vm4455, %v4391, 0
      %v4505 = vsel %vm4455, %v4392, 0
      %v4508 = vsel %vm4455, %v4393, 0
      %v4511 = vsel %vm4455, %v4394, 0
      %v4514 = vsel %vm4455, %v4395, 0
      %v4517 = vsel %vm4455, %v4396, 0
      %v4520 = vsel %vm4455, %v4397, 0
      %v4523 = vsel %vm4455, %v4398, 0
      %v4526 = vsel %vm4455, %v4399, 0
      %v4529 = vsel %vm4455, %v4400, 0
      %v4532 = vsel %vm4455, %v4401, 0
      %v4535 = vsel %vm4455, %v4402, 0
      %v4538 = vsel %vm4455, %v4403, 0
      %v4541 = vsel %vm4455, %v4404, 0
      %v4544 = vsel %vm4455, %v4405, 0
      %v4547 = vsel %vm4455, %v4406, 0
      %v4550 = vsel %vm4455, %v4407, 0
      %v4553 = vsel %vm4455, %v4408, 0
      %v4556 = vsel %vm4455, %v4409, 0
      %v4559 = vsel %vm4455, %v4410, 0
      %v4562 = vsel %vm4455, %v4411, 0
      %v4565 = vsel %vm4455, %v4412, 0
      %v4568 = vsel %vm4455, %v4413, 0
      %v4571 = vsel %vm4455, %v4414, 0
      %v4574 = vsel %vm4455, %v4415, 0
      %v4577 = vsel %vm4455, %v4416, 0
      %v4580 = vsel %vm4455, %v4417, 0
      %v4583 = vsel %vm4455, %v4418, 0
      %v4586 = vsel %vm4455, %v4419, 0
      %v4589 = vsel %vm4455, %v4420, 0
      %v4592 = vsel %vm4455, %v4421, 0
      %v4595 = vsel %vm4455, %v4422, 0
      %v4598 = vsel %vm4455, %v4423, 0
      %v4601 = vsel %vm4455, %v4424, 0
      %v4604 = vsel %vm4455, %v4425, 0
      %v4607 = vsel %vm4455, %v4426, 0
      %v4610 = vsel %vm4455, %v4427, 0
      %v4613 = vsel %vm4455, %v4428, 0
      %v4616 = vsel %vm4455, %v4429, 0
      %v4619 = vsel %vm4455, %v4430, 0
      %v4622 = vsel %vm4455, %v4431, 0
      %v4625 = vsel %vm4455, %v4432, 0
      %v4628 = vsel %vm4455, %v4433, 0
      %v4631 = vsel %vm4455, %v4434, 0
      %v4634 = vsel %vm4455, %v4435, 0
      %v4637 = vsel %vm4455, %v4436, 0
      %v4640 = vsel %vm4455, %v4437, 0
      %v4643 = vsel %vm4455, %v4438, 0
      %v4646 = vsel %vm4455, %v4439, 0
      %4648 = vmatprep.subr.mxu0 0.0
      %4649 = vmatpush1.msra.mxu0 0.0
      %4650 = vmatprep.subr.mxu0 0.0
      %4651 = vmatpush1.msra.mxu0 0.0
      %4652 = vmatprep.subr.mxu0 0.0
      %4653 = vmatpush1.msra.mxu0 0.0
      %4654 = vmatprep.subr.mxu0 0.0
      %4655 = vmatpush1.msra.mxu0 0.0
      %4656 = vmatprep.subr.mxu0 0.0
      %4657 = vmatpush1.msra.mxu0 0.0
      %4658 = vmatprep.subr.mxu0 0.0
      %4659 = vmatpush1.msra.mxu0 0.0
      %4660 = vmatprep.subr.mxu0 0.0
      %4661 = vmatpush1.msra.mxu0 0.0
      %4662 = vmatprep.subr.mxu0 0.0
      %4663 = vmatpush1.msra.mxu0 0.0
      %4664 = vmatprep.subr.mxu0 0.0
      %v4665 = vand.u32 %v4447, 4294901760
      %4666 = vmatpush1.msra.mxu0 %v4665
      %4667 = vmatprep.subr.mxu0 0.0
      %v4668 = vand.u32 %v4446, 4294901760
      %4669 = vmatpush1.msra.mxu0 %v4668
      %4670 = vmatprep.subr.mxu0 0.0
      %v4671 = vand.u32 %v4445, 4294901760
      %4672 = vmatpush1.msra.mxu0 %v4671
      %4673 = vmatprep.subr.mxu0 0.0
      %v4674 = vand.u32 %v4444, 4294901760
      %4675 = vmatpush1.msra.mxu0 %v4674
      %4676 = vmatprep.subr.mxu0 0.0
      %v4677 = vand.u32 %v4443, 4294901760
      %4678 = vmatpush1.msra.mxu0 %v4677
      %4679 = vmatprep.subr.mxu0 0.0
      %v4680 = vand.u32 %v4442, 4294901760
      %4681 = vmatpush1.msra.mxu0 %v4680
      %4682 = vmatprep.subr.mxu0 0.0
      %v4683 = vand.u32 %v4441, 4294901760
      %4684 = vmatpush1.msra.mxu0 %v4683
      %4685 = vmatprep.subr.mxu0 0.0
      %v4686 = vand.u32 %v4440, 4294901760
      %4687 = vmatpush1.msra.mxu0 %v4686
      %4688 = vmatprep.subr.mxu0 0.0
      %4689 = vmatpush2.msra.mxu0 0.0
      %4690 = vmatprep.subr.mxu0 0.0
      %4691 = vmatpush2.msra.mxu0 0.0
      %4692 = vmatprep.subr.mxu0 0.0
      %4693 = vmatpush2.msra.mxu0 0.0
      %4694 = vmatprep.subr.mxu0 0.0
      %4695 = vmatpush2.msra.mxu0 0.0
      %4696 = vmatprep.subr.mxu0 0.0
      %4697 = vmatpush2.msra.mxu0 0.0
      %4698 = vmatprep.subr.mxu0 0.0
      %4699 = vmatpush2.msra.mxu0 0.0
      %4700 = vmatprep.subr.mxu0 0.0
      %4701 = vmatpush2.msra.mxu0 0.0
      %4702 = vmatprep.subr.mxu0 0.0
      %4703 = vmatpush2.msra.mxu0 0.0
      %4704 = vmatprep.subr.mxu0 0.0
      %4705 = vmatpush2.msra.mxu0 0.0
      %4706 = vmatprep.subr.mxu0 0.0
      %4707 = vmatpush2.msra.mxu0 0.0
      %4708 = vmatprep.subr.mxu0 0.0
      %4709 = vmatpush2.msra.mxu0 0.0
      %4710 = vmatprep.subr.mxu0 0.0
      %4711 = vmatpush2.msra.mxu0 0.0
      %4712 = vmatprep.subr.mxu0 0.0
      %4713 = vmatpush2.msra.mxu0 0.0
      %4714 = vmatprep.subr.mxu0 0.0
      %4715 = vmatpush2.msra.mxu0 0.0
      %4716 = vmatprep.subr.mxu0 0.0
      %4717 = vmatpush2.msra.mxu0 0.0
      %4718 = vmatprep.subr.mxu0 0.0
      %4719 = vmatpush2.msra.mxu0 0.0
      %4720 = vmatprep.mubr.f32.mxu0 0.0
      %v4721 = vand.u32 %v4457, 4294901760
      %v4722 = vsub.f32 %v4457, %v4721
      %v4723 = vand.u32 %v4722, 4294901760
      %v4724 = vsub.f32 %v4722, %v4723
      %v4725 = vand.u32 %v4724, 4294901760
      %4726 = vmatmul.mubr.f32.gmra.mxu0 %v4725
      %v4727 = vpop.f32.mrf.mxu0
      %v4728 = vadd.f32 %v4453, %v4727
      %v4729 = vpop.f32.mrf.mxu0
      %4730 = vmatprep.mubr.f32.mxu0 0.0
      %v4731 = vand.u32 %v4460, 4294901760
      %v4732 = vsub.f32 %v4460, %v4731
      %v4733 = vand.u32 %v4732, 4294901760
      %v4734 = vsub.f32 %v4732, %v4733
      %v4735 = vand.u32 %v4734, 4294901760
      %4736 = vmatmul.mubr.f32.gmra.mxu0 %v4735
      %v4737 = vpop.f32.mrf.mxu0
      %v4738 = vadd.f32 %v4453, %v4737
      %v4739 = vpop.f32.mrf.mxu0
      %4740 = vmatprep.mubr.f32.mxu0 0.0
      %v4741 = vand.u32 %v4463, 4294901760
      %v4742 = vsub.f32 %v4463, %v4741
      %v4743 = vand.u32 %v4742, 4294901760
      %v4744 = vsub.f32 %v4742, %v4743
      %v4745 = vand.u32 %v4744, 4294901760
      %4746 = vmatmul.mubr.f32.gmra.mxu0 %v4745
      %v4747 = vpop.f32.mrf.mxu0
      %v4748 = vadd.f32 %v4453, %v4747
      %v4749 = vpop.f32.mrf.mxu0
      %4750 = vmatprep.mubr.f32.mxu0 0.0
      %v4751 = vand.u32 %v4466, 4294901760
      %v4752 = vsub.f32 %v4466, %v4751
      %v4753 = vand.u32 %v4752, 4294901760
      %v4754 = vsub.f32 %v4752, %v4753
      %v4755 = vand.u32 %v4754, 4294901760
      %4756 = vmatmul.mubr.f32.gmra.mxu0 %v4755
      %v4757 = vpop.f32.mrf.mxu0
      %v4758 = vadd.f32 %v4453, %v4757
      %v4759 = vpop.f32.mrf.mxu0
      %4760 = vmatprep.mubr.f32.mxu0 0.0
      %v4761 = vand.u32 %v4469, 4294901760
      %v4762 = vsub.f32 %v4469, %v4761
      %v4763 = vand.u32 %v4762, 4294901760
      %v4764 = vsub.f32 %v4762, %v4763
      %v4765 = vand.u32 %v4764, 4294901760
      %4766 = vmatmul.mubr.f32.gmra.mxu0 %v4765
      %v4767 = vpop.f32.mrf.mxu0
      %v4768 = vadd.f32 %v4453, %v4767
      %v4769 = vpop.f32.mrf.mxu0
      %4770 = vmatprep.mubr.f32.mxu0 0.0
      %v4771 = vand.u32 %v4472, 4294901760
      %v4772 = vsub.f32 %v4472, %v4771
      %v4773 = vand.u32 %v4772, 4294901760
      %v4774 = vsub.f32 %v4772, %v4773
      %v4775 = vand.u32 %v4774, 4294901760
      %4776 = vmatmul.mubr.f32.gmra.mxu0 %v4775
      %v4777 = vpop.f32.mrf.mxu0
      %v4778 = vadd.f32 %v4453, %v4777
      %v4779 = vpop.f32.mrf.mxu0
      %4780 = vmatprep.mubr.f32.mxu0 0.0
      %v4781 = vand.u32 %v4475, 4294901760
      %v4782 = vsub.f32 %v4475, %v4781
      %v4783 = vand.u32 %v4782, 4294901760
      %v4784 = vsub.f32 %v4782, %v4783
      %v4785 = vand.u32 %v4784, 4294901760
      %4786 = vmatmul.mubr.f32.gmra.mxu0 %v4785
      %v4787 = vpop.f32.mrf.mxu0
      %v4788 = vadd.f32 %v4453, %v4787
      %v4789 = vpop.f32.mrf.mxu0
      %4790 = vmatprep.mubr.f32.mxu0 0.0
      %v4791 = vand.u32 %v4478, 4294901760
      %v4792 = vsub.f32 %v4478, %v4791
      %v4793 = vand.u32 %v4792, 4294901760
      %v4794 = vsub.f32 %v4792, %v4793
      %v4795 = vand.u32 %v4794, 4294901760
      %4796 = vmatmul.mubr.f32.gmra.mxu0 %v4795
      %v4797 = vpop.f32.mrf.mxu0
      %v4798 = vadd.f32 %v4453, %v4797
      %v4799 = vpop.f32.mrf.mxu0
      %4800 = vmatprep.mubr.f32.mxu0 0.0
      %v4801 = vand.u32 %v4481, 4294901760
      %v4802 = vsub.f32 %v4481, %v4801
      %v4803 = vand.u32 %v4802, 4294901760
      %v4804 = vsub.f32 %v4802, %v4803
      %v4805 = vand.u32 %v4804, 4294901760
      %4806 = vmatmul.mubr.f32.gmra.mxu0 %v4805
      %v4807 = vpop.f32.mrf.mxu0
      %v4808 = vadd.f32 %v4453, %v4807
      %v4809 = vpop.f32.mrf.mxu0
      %4810 = vmatprep.mubr.f32.mxu0 0.0
      %v4811 = vand.u32 %v4484, 4294901760
      %v4812 = vsub.f32 %v4484, %v4811
      %v4813 = vand.u32 %v4812, 4294901760
      %v4814 = vsub.f32 %v4812, %v4813
      %v4815 = vand.u32 %v4814, 4294901760
      %4816 = vmatmul.mubr.f32.gmra.mxu0 %v4815
      %v4817 = vpop.f32.mrf.mxu0
      %v4818 = vadd.f32 %v4453, %v4817
      %v4819 = vpop.f32.mrf.mxu0
      %4820 = vmatprep.mubr.f32.mxu0 0.0
      %v4821 = vand.u32 %v4487, 4294901760
      %v4822 = vsub.f32 %v4487, %v4821
      %v4823 = vand.u32 %v4822, 4294901760
      %v4824 = vsub.f32 %v4822, %v4823
      %v4825 = vand.u32 %v4824, 4294901760
      %4826 = vmatmul.mubr.f32.gmra.mxu0 %v4825
      %v4827 = vpop.f32.mrf.mxu0
      %v4828 = vadd.f32 %v4453, %v4827
      %v4829 = vpop.f32.mrf.mxu0
      %4830 = vmatprep.mubr.f32.mxu0 0.0
      %v4831 = vand.u32 %v4490, 4294901760
      %v4832 = vsub.f32 %v4490, %v4831
      %v4833 = vand.u32 %v4832, 4294901760
      %v4834 = vsub.f32 %v4832, %v4833
      %v4835 = vand.u32 %v4834, 4294901760
      %4836 = vmatmul.mubr.f32.gmra.mxu0 %v4835
      %v4837 = vpop.f32.mrf.mxu0
      %v4838 = vadd.f32 %v4453, %v4837
      %v4839 = vpop.f32.mrf.mxu0
      %4840 = vmatprep.mubr.f32.mxu0 0.0
      %v4841 = vand.u32 %v4493, 4294901760
      %v4842 = vsub.f32 %v4493, %v4841
      %v4843 = vand.u32 %v4842, 4294901760
      %v4844 = vsub.f32 %v4842, %v4843
      %v4845 = vand.u32 %v4844, 4294901760
      %4846 = vmatmul.mubr.f32.gmra.mxu0 %v4845
      %v4847 = vpop.f32.mrf.mxu0
      %v4848 = vadd.f32 %v4453, %v4847
      %v4849 = vpop.f32.mrf.mxu0
      %4850 = vmatprep.mubr.f32.mxu0 0.0
      %v4851 = vand.u32 %v4496, 4294901760
      %v4852 = vsub.f32 %v4496, %v4851
      %v4853 = vand.u32 %v4852, 4294901760
      %v4854 = vsub.f32 %v4852, %v4853
      %v4855 = vand.u32 %v4854, 4294901760
      %4856 = vmatmul.mubr.f32.gmra.mxu0 %v4855
      %v4857 = vpop.f32.mrf.mxu0
      %v4858 = vadd.f32 %v4453, %v4857
      %v4859 = vpop.f32.mrf.mxu0
      %4860 = vmatprep.mubr.f32.mxu0 0.0
      %v4861 = vand.u32 %v4499, 4294901760
      %v4862 = vsub.f32 %v4499, %v4861
      %v4863 = vand.u32 %v4862, 4294901760
      %v4864 = vsub.f32 %v4862, %v4863
      %v4865 = vand.u32 %v4864, 4294901760
      %4866 = vmatmul.mubr.f32.gmra.mxu0 %v4865
      %v4867 = vpop.f32.mrf.mxu0
      %v4868 = vadd.f32 %v4453, %v4867
      %v4869 = vpop.f32.mrf.mxu0
      %4870 = vmatprep.mubr.f32.mxu0 0.0
      %v4871 = vand.u32 %v4502, 4294901760
      %v4872 = vsub.f32 %v4502, %v4871
      %v4873 = vand.u32 %v4872, 4294901760
      %v4874 = vsub.f32 %v4872, %v4873
      %v4875 = vand.u32 %v4874, 4294901760
      %4876 = vmatmul.mubr.f32.gmra.mxu0 %v4875
      %v4877 = vpop.f32.mrf.mxu0
      %v4878 = vadd.f32 %v4453, %v4877
      %v4879 = vpop.f32.mrf.mxu0
      %4880 = vmatprep.mubr.f32.mxu0 0.0
      %v4881 = vand.u32 %v4505, 4294901760
      %v4882 = vsub.f32 %v4505, %v4881
      %v4883 = vand.u32 %v4882, 4294901760
      %v4884 = vsub.f32 %v4882, %v4883
      %v4885 = vand.u32 %v4884, 4294901760
      %4886 = vmatmul.mubr.f32.gmra.mxu0 %v4885
      %v4887 = vpop.f32.mrf.mxu0
      %v4888 = vadd.f32 %v4453, %v4887
      %v4889 = vpop.f32.mrf.mxu0
      %4890 = vmatprep.mubr.f32.mxu0 0.0
      %v4891 = vand.u32 %v4508, 4294901760
      %v4892 = vsub.f32 %v4508, %v4891
      %v4893 = vand.u32 %v4892, 4294901760
      %v4894 = vsub.f32 %v4892, %v4893
      %v4895 = vand.u32 %v4894, 4294901760
      %4896 = vmatmul.mubr.f32.gmra.mxu0 %v4895
      %v4897 = vpop.f32.mrf.mxu0
      %v4898 = vadd.f32 %v4453, %v4897
      %v4899 = vpop.f32.mrf.mxu0
      %4900 = vmatprep.mubr.f32.mxu0 0.0
      %v4901 = vand.u32 %v4511, 4294901760
      %v4902 = vsub.f32 %v4511, %v4901
      %v4903 = vand.u32 %v4902, 4294901760
      %v4904 = vsub.f32 %v4902, %v4903
      %v4905 = vand.u32 %v4904, 4294901760
      %4906 = vmatmul.mubr.f32.gmra.mxu0 %v4905
      %v4907 = vpop.f32.mrf.mxu0
      %v4908 = vadd.f32 %v4453, %v4907
      %v4909 = vpop.f32.mrf.mxu0
      %4910 = vmatprep.mubr.f32.mxu0 0.0
      %v4911 = vand.u32 %v4514, 4294901760
      %v4912 = vsub.f32 %v4514, %v4911
      %v4913 = vand.u32 %v4912, 4294901760
      %v4914 = vsub.f32 %v4912, %v4913
      %v4915 = vand.u32 %v4914, 4294901760
      %4916 = vmatmul.mubr.f32.gmra.mxu0 %v4915
      %v4917 = vpop.f32.mrf.mxu0
      %v4918 = vadd.f32 %v4453, %v4917
      %v4919 = vpop.f32.mrf.mxu0
      %4920 = vmatprep.mubr.f32.mxu0 0.0
      %v4921 = vand.u32 %v4517, 4294901760
      %v4922 = vsub.f32 %v4517, %v4921
      %v4923 = vand.u32 %v4922, 4294901760
      %v4924 = vsub.f32 %v4922, %v4923
      %v4925 = vand.u32 %v4924, 4294901760
      %4926 = vmatmul.mubr.f32.gmra.mxu0 %v4925
      %v4927 = vpop.f32.mrf.mxu0
      %v4928 = vadd.f32 %v4453, %v4927
      %v4929 = vpop.f32.mrf.mxu0
      %4930 = vmatprep.mubr.f32.mxu0 0.0
      %v4931 = vand.u32 %v4520, 4294901760
      %v4932 = vsub.f32 %v4520, %v4931
      %v4933 = vand.u32 %v4932, 4294901760
      %v4934 = vsub.f32 %v4932, %v4933
      %v4935 = vand.u32 %v4934, 4294901760
      %4936 = vmatmul.mubr.f32.gmra.mxu0 %v4935
      %v4937 = vpop.f32.mrf.mxu0
      %v4938 = vadd.f32 %v4453, %v4937
      %v4939 = vpop.f32.mrf.mxu0
      %4940 = vmatprep.mubr.f32.mxu0 0.0
      %v4941 = vand.u32 %v4523, 4294901760
      %v4942 = vsub.f32 %v4523, %v4941
      %v4943 = vand.u32 %v4942, 4294901760
      %v4944 = vsub.f32 %v4942, %v4943
      %v4945 = vand.u32 %v4944, 4294901760
      %4946 = vmatmul.mubr.f32.gmra.mxu0 %v4945
      %v4947 = vpop.f32.mrf.mxu0
      %v4948 = vadd.f32 %v4453, %v4947
      %v4949 = vpop.f32.mrf.mxu0
      %4950 = vmatprep.mubr.f32.mxu0 0.0
      %v4951 = vand.u32 %v4526, 4294901760
      %v4952 = vsub.f32 %v4526, %v4951
      %v4953 = vand.u32 %v4952, 4294901760
      %v4954 = vsub.f32 %v4952, %v4953
      %v4955 = vand.u32 %v4954, 4294901760
      %4956 = vmatmul.mubr.f32.gmra.mxu0 %v4955
      %v4957 = vpop.f32.mrf.mxu0
      %v4958 = vadd.f32 %v4453, %v4957
      %v4959 = vpop.f32.mrf.mxu0
      %4960 = vmatprep.mubr.f32.mxu0 0.0
      %v4961 = vand.u32 %v4529, 4294901760
      %v4962 = vsub.f32 %v4529, %v4961
      %v4963 = vand.u32 %v4962, 4294901760
      %v4964 = vsub.f32 %v4962, %v4963
      %v4965 = vand.u32 %v4964, 4294901760
      %4966 = vmatmul.mubr.f32.gmra.mxu0 %v4965
      %v4967 = vpop.f32.mrf.mxu0
      %v4968 = vadd.f32 %v4453, %v4967
      %v4969 = vpop.f32.mrf.mxu0
      %4970 = vmatprep.mubr.f32.mxu0 0.0
      %v4971 = vand.u32 %v4532, 4294901760
      %v4972 = vsub.f32 %v4532, %v4971
      %v4973 = vand.u32 %v4972, 4294901760
      %v4974 = vsub.f32 %v4972, %v4973
      %v4975 = vand.u32 %v4974, 4294901760
      %4976 = vmatmul.mubr.f32.gmra.mxu0 %v4975
      %v4977 = vpop.f32.mrf.mxu0
      %v4978 = vadd.f32 %v4453, %v4977
      %v4979 = vpop.f32.mrf.mxu0
      %4980 = vmatprep.mubr.f32.mxu0 0.0
      %v4981 = vand.u32 %v4535, 4294901760
      %v4982 = vsub.f32 %v4535, %v4981
      %v4983 = vand.u32 %v4982, 4294901760
      %v4984 = vsub.f32 %v4982, %v4983
      %v4985 = vand.u32 %v4984, 4294901760
      %4986 = vmatmul.mubr.f32.gmra.mxu0 %v4985
      %v4987 = vpop.f32.mrf.mxu0
      %v4988 = vadd.f32 %v4453, %v4987
      %v4989 = vpop.f32.mrf.mxu0
      %4990 = vmatprep.mubr.f32.mxu0 0.0
      %v4991 = vand.u32 %v4538, 4294901760
      %v4992 = vsub.f32 %v4538, %v4991
      %v4993 = vand.u32 %v4992, 4294901760
      %v4994 = vsub.f32 %v4992, %v4993
      %v4995 = vand.u32 %v4994, 4294901760
      %4996 = vmatmul.mubr.f32.gmra.mxu0 %v4995
      %v4997 = vpop.f32.mrf.mxu0
      %v4998 = vadd.f32 %v4453, %v4997
      %v4999 = vpop.f32.mrf.mxu0
      %5000 = vmatprep.mubr.f32.mxu0 0.0
      %v5001 = vand.u32 %v4541, 4294901760
      %v5002 = vsub.f32 %v4541, %v5001
      %v5003 = vand.u32 %v5002, 4294901760
      %v5004 = vsub.f32 %v5002, %v5003
      %v5005 = vand.u32 %v5004, 4294901760
      %5006 = vmatmul.mubr.f32.gmra.mxu0 %v5005
      %v5007 = vpop.f32.mrf.mxu0
      %v5008 = vadd.f32 %v4453, %v5007
      %v5009 = vpop.f32.mrf.mxu0
      %5010 = vmatprep.mubr.f32.mxu0 0.0
      %v5011 = vand.u32 %v4544, 4294901760
      %v5012 = vsub.f32 %v4544, %v5011
      %v5013 = vand.u32 %v5012, 4294901760
      %v5014 = vsub.f32 %v5012, %v5013
      %v5015 = vand.u32 %v5014, 4294901760
      %5016 = vmatmul.mubr.f32.gmra.mxu0 %v5015
      %v5017 = vpop.f32.mrf.mxu0
      %v5018 = vadd.f32 %v4453, %v5017
      %v5019 = vpop.f32.mrf.mxu0
      %5020 = vmatprep.mubr.f32.mxu0 0.0
      %v5021 = vand.u32 %v4547, 4294901760
      %v5022 = vsub.f32 %v4547, %v5021
      %v5023 = vand.u32 %v5022, 4294901760
      %v5024 = vsub.f32 %v5022, %v5023
      %v5025 = vand.u32 %v5024, 4294901760
      %5026 = vmatmul.mubr.f32.gmra.mxu0 %v5025
      %v5027 = vpop.f32.mrf.mxu0
      %v5028 = vadd.f32 %v4453, %v5027
      %v5029 = vpop.f32.mrf.mxu0
      %5030 = vmatprep.mubr.f32.mxu0 0.0
      %v5031 = vand.u32 %v4550, 4294901760
      %v5032 = vsub.f32 %v4550, %v5031
      %v5033 = vand.u32 %v5032, 4294901760
      %v5034 = vsub.f32 %v5032, %v5033
      %v5035 = vand.u32 %v5034, 4294901760
      %5036 = vmatmul.mubr.f32.gmra.mxu0 %v5035
      %v5037 = vpop.f32.mrf.mxu0
      %v5038 = vadd.f32 %v4453, %v5037
      %v5039 = vpop.f32.mrf.mxu0
      %5040 = vmatprep.mubr.f32.mxu0 0.0
      %v5041 = vand.u32 %v4553, 4294901760
      %v5042 = vsub.f32 %v4553, %v5041
      %v5043 = vand.u32 %v5042, 4294901760
      %v5044 = vsub.f32 %v5042, %v5043
      %v5045 = vand.u32 %v5044, 4294901760
      %5046 = vmatmul.mubr.f32.gmra.mxu0 %v5045
      %v5047 = vpop.f32.mrf.mxu0
      %v5048 = vadd.f32 %v4453, %v5047
      %v5049 = vpop.f32.mrf.mxu0
      %5050 = vmatprep.mubr.f32.mxu0 0.0
      %v5051 = vand.u32 %v4556, 4294901760
      %v5052 = vsub.f32 %v4556, %v5051
      %v5053 = vand.u32 %v5052, 4294901760
      %v5054 = vsub.f32 %v5052, %v5053
      %v5055 = vand.u32 %v5054, 4294901760
      %5056 = vmatmul.mubr.f32.gmra.mxu0 %v5055
      %v5057 = vpop.f32.mrf.mxu0
      %v5058 = vadd.f32 %v4453, %v5057
      %v5059 = vpop.f32.mrf.mxu0
      %5060 = vmatprep.mubr.f32.mxu0 0.0
      %v5061 = vand.u32 %v4559, 4294901760
      %v5062 = vsub.f32 %v4559, %v5061
      %v5063 = vand.u32 %v5062, 4294901760
      %v5064 = vsub.f32 %v5062, %v5063
      %v5065 = vand.u32 %v5064, 4294901760
      %5066 = vmatmul.mubr.f32.gmra.mxu0 %v5065
      %v5067 = vpop.f32.mrf.mxu0
      %v5068 = vadd.f32 %v4453, %v5067
      %v5069 = vpop.f32.mrf.mxu0
      %5070 = vmatprep.mubr.f32.mxu0 0.0
      %v5071 = vand.u32 %v4562, 4294901760
      %v5072 = vsub.f32 %v4562, %v5071
      %v5073 = vand.u32 %v5072, 4294901760
      %v5074 = vsub.f32 %v5072, %v5073
      %v5075 = vand.u32 %v5074, 4294901760
      %5076 = vmatmul.mubr.f32.gmra.mxu0 %v5075
      %v5077 = vpop.f32.mrf.mxu0
      %v5078 = vadd.f32 %v4453, %v5077
      %v5079 = vpop.f32.mrf.mxu0
      %5080 = vmatprep.mubr.f32.mxu0 0.0
      %v5081 = vand.u32 %v4565, 4294901760
      %v5082 = vsub.f32 %v4565, %v5081
      %v5083 = vand.u32 %v5082, 4294901760
      %v5084 = vsub.f32 %v5082, %v5083
      %v5085 = vand.u32 %v5084, 4294901760
      %5086 = vmatmul.mubr.f32.gmra.mxu0 %v5085
      %v5087 = vpop.f32.mrf.mxu0
      %v5088 = vadd.f32 %v4453, %v5087
      %v5089 = vpop.f32.mrf.mxu0
      %5090 = vmatprep.mubr.f32.mxu0 0.0
      %v5091 = vand.u32 %v4568, 4294901760
      %v5092 = vsub.f32 %v4568, %v5091
      %v5093 = vand.u32 %v5092, 4294901760
      %v5094 = vsub.f32 %v5092, %v5093
      %v5095 = vand.u32 %v5094, 4294901760
      %5096 = vmatmul.mubr.f32.gmra.mxu0 %v5095
      %v5097 = vpop.f32.mrf.mxu0
      %v5098 = vadd.f32 %v4453, %v5097
      %v5099 = vpop.f32.mrf.mxu0
      %5100 = vmatprep.mubr.f32.mxu0 0.0
      %v5101 = vand.u32 %v4571, 4294901760
      %v5102 = vsub.f32 %v4571, %v5101
      %v5103 = vand.u32 %v5102, 4294901760
      %v5104 = vsub.f32 %v5102, %v5103
      %v5105 = vand.u32 %v5104, 4294901760
      %5106 = vmatmul.mubr.f32.gmra.mxu0 %v5105
      %v5107 = vpop.f32.mrf.mxu0
      %v5108 = vadd.f32 %v4453, %v5107
      %v5109 = vpop.f32.mrf.mxu0
      %5110 = vmatprep.mubr.f32.mxu0 0.0
      %v5111 = vand.u32 %v4574, 4294901760
      %v5112 = vsub.f32 %v4574, %v5111
      %v5113 = vand.u32 %v5112, 4294901760
      %v5114 = vsub.f32 %v5112, %v5113
      %v5115 = vand.u32 %v5114, 4294901760
      %5116 = vmatmul.mubr.f32.gmra.mxu0 %v5115
      %v5117 = vpop.f32.mrf.mxu0
      %v5118 = vadd.f32 %v4453, %v5117
      %v5119 = vpop.f32.mrf.mxu0
      %5120 = vmatprep.mubr.f32.mxu0 0.0
      %v5121 = vand.u32 %v4577, 4294901760
      %v5122 = vsub.f32 %v4577, %v5121
      %v5123 = vand.u32 %v5122, 4294901760
      %v5124 = vsub.f32 %v5122, %v5123
      %v5125 = vand.u32 %v5124, 4294901760
      %5126 = vmatmul.mubr.f32.gmra.mxu0 %v5125
      %v5127 = vpop.f32.mrf.mxu0
      %v5128 = vadd.f32 %v4453, %v5127
      %v5129 = vpop.f32.mrf.mxu0
      %5130 = vmatprep.mubr.f32.mxu0 0.0
      %v5131 = vand.u32 %v4580, 4294901760
      %v5132 = vsub.f32 %v4580, %v5131
      %v5133 = vand.u32 %v5132, 4294901760
      %v5134 = vsub.f32 %v5132, %v5133
      %v5135 = vand.u32 %v5134, 4294901760
      %5136 = vmatmul.mubr.f32.gmra.mxu0 %v5135
      %v5137 = vpop.f32.mrf.mxu0
      %v5138 = vadd.f32 %v4453, %v5137
      %v5139 = vpop.f32.mrf.mxu0
      %5140 = vmatprep.mubr.f32.mxu0 0.0
      %v5141 = vand.u32 %v4583, 4294901760
      %v5142 = vsub.f32 %v4583, %v5141
      %v5143 = vand.u32 %v5142, 4294901760
      %v5144 = vsub.f32 %v5142, %v5143
      %v5145 = vand.u32 %v5144, 4294901760
      %5146 = vmatmul.mubr.f32.gmra.mxu0 %v5145
      %v5147 = vpop.f32.mrf.mxu0
      %v5148 = vadd.f32 %v4453, %v5147
      %v5149 = vpop.f32.mrf.mxu0
      %5150 = vmatprep.mubr.f32.mxu0 0.0
      %v5151 = vand.u32 %v4586, 4294901760
      %v5152 = vsub.f32 %v4586, %v5151
      %v5153 = vand.u32 %v5152, 4294901760
      %v5154 = vsub.f32 %v5152, %v5153
      %v5155 = vand.u32 %v5154, 4294901760
      %5156 = vmatmul.mubr.f32.gmra.mxu0 %v5155
      %v5157 = vpop.f32.mrf.mxu0
      %v5158 = vadd.f32 %v4453, %v5157
      %v5159 = vpop.f32.mrf.mxu0
      %5160 = vmatprep.mubr.f32.mxu0 0.0
      %v5161 = vand.u32 %v4589, 4294901760
      %v5162 = vsub.f32 %v4589, %v5161
      %v5163 = vand.u32 %v5162, 4294901760
      %v5164 = vsub.f32 %v5162, %v5163
      %v5165 = vand.u32 %v5164, 4294901760
      %5166 = vmatmul.mubr.f32.gmra.mxu0 %v5165
      %v5167 = vpop.f32.mrf.mxu0
      %v5168 = vadd.f32 %v4453, %v5167
      %v5169 = vpop.f32.mrf.mxu0
      %5170 = vmatprep.mubr.f32.mxu0 0.0
      %v5171 = vand.u32 %v4592, 4294901760
      %v5172 = vsub.f32 %v4592, %v5171
      %v5173 = vand.u32 %v5172, 4294901760
      %v5174 = vsub.f32 %v5172, %v5173
      %v5175 = vand.u32 %v5174, 4294901760
      %5176 = vmatmul.mubr.f32.gmra.mxu0 %v5175
      %v5177 = vpop.f32.mrf.mxu0
      %v5178 = vadd.f32 %v4453, %v5177
      %v5179 = vpop.f32.mrf.mxu0
      %5180 = vmatprep.mubr.f32.mxu0 0.0
      %v5181 = vand.u32 %v4595, 4294901760
      %v5182 = vsub.f32 %v4595, %v5181
      %v5183 = vand.u32 %v5182, 4294901760
      %v5184 = vsub.f32 %v5182, %v5183
      %v5185 = vand.u32 %v5184, 4294901760
      %5186 = vmatmul.mubr.f32.gmra.mxu0 %v5185
      %v5187 = vpop.f32.mrf.mxu0
      %v5188 = vadd.f32 %v4453, %v5187
      %v5189 = vpop.f32.mrf.mxu0
      %5190 = vmatprep.mubr.f32.mxu0 0.0
      %v5191 = vand.u32 %v4598, 4294901760
      %v5192 = vsub.f32 %v4598, %v5191
      %v5193 = vand.u32 %v5192, 4294901760
      %v5194 = vsub.f32 %v5192, %v5193
      %v5195 = vand.u32 %v5194, 4294901760
      %5196 = vmatmul.mubr.f32.gmra.mxu0 %v5195
      %v5197 = vpop.f32.mrf.mxu0
      %v5198 = vadd.f32 %v4453, %v5197
      %v5199 = vpop.f32.mrf.mxu0
      %5200 = vmatprep.mubr.f32.mxu0 0.0
      %v5201 = vand.u32 %v4601, 4294901760
      %v5202 = vsub.f32 %v4601, %v5201
      %v5203 = vand.u32 %v5202, 4294901760
      %v5204 = vsub.f32 %v5202, %v5203
      %v5205 = vand.u32 %v5204, 4294901760
      %5206 = vmatmul.mubr.f32.gmra.mxu0 %v5205
      %v5207 = vpop.f32.mrf.mxu0
      %v5208 = vadd.f32 %v4453, %v5207
      %v5209 = vpop.f32.mrf.mxu0
      %5210 = vmatprep.mubr.f32.mxu0 0.0
      %v5211 = vand.u32 %v4604, 4294901760
      %v5212 = vsub.f32 %v4604, %v5211
      %v5213 = vand.u32 %v5212, 4294901760
      %v5214 = vsub.f32 %v5212, %v5213
      %v5215 = vand.u32 %v5214, 4294901760
      %5216 = vmatmul.mubr.f32.gmra.mxu0 %v5215
      %v5217 = vpop.f32.mrf.mxu0
      %v5218 = vadd.f32 %v4453, %v5217
      %v5219 = vpop.f32.mrf.mxu0
      %5220 = vmatprep.mubr.f32.mxu0 0.0
      %v5221 = vand.u32 %v4607, 4294901760
      %v5222 = vsub.f32 %v4607, %v5221
      %v5223 = vand.u32 %v5222, 4294901760
      %v5224 = vsub.f32 %v5222, %v5223
      %v5225 = vand.u32 %v5224, 4294901760
      %5226 = vmatmul.mubr.f32.gmra.mxu0 %v5225
      %v5227 = vpop.f32.mrf.mxu0
      %v5228 = vadd.f32 %v4453, %v5227
      %v5229 = vpop.f32.mrf.mxu0
      %5230 = vmatprep.mubr.f32.mxu0 0.0
      %v5231 = vand.u32 %v4610, 4294901760
      %v5232 = vsub.f32 %v4610, %v5231
      %v5233 = vand.u32 %v5232, 4294901760
      %v5234 = vsub.f32 %v5232, %v5233
      %v5235 = vand.u32 %v5234, 4294901760
      %5236 = vmatmul.mubr.f32.gmra.mxu0 %v5235
      %v5237 = vpop.f32.mrf.mxu0
      %v5238 = vadd.f32 %v4453, %v5237
      %v5239 = vpop.f32.mrf.mxu0
      %5240 = vmatprep.mubr.f32.mxu0 0.0
      %v5241 = vand.u32 %v4613, 4294901760
      %v5242 = vsub.f32 %v4613, %v5241
      %v5243 = vand.u32 %v5242, 4294901760
      %v5244 = vsub.f32 %v5242, %v5243
      %v5245 = vand.u32 %v5244, 4294901760
      %5246 = vmatmul.mubr.f32.gmra.mxu0 %v5245
      %v5247 = vpop.f32.mrf.mxu0
      %v5248 = vadd.f32 %v4453, %v5247
      %v5249 = vpop.f32.mrf.mxu0
      %5250 = vmatprep.mubr.f32.mxu0 0.0
      %v5251 = vand.u32 %v4616, 4294901760
      %v5252 = vsub.f32 %v4616, %v5251
      %v5253 = vand.u32 %v5252, 4294901760
      %v5254 = vsub.f32 %v5252, %v5253
      %v5255 = vand.u32 %v5254, 4294901760
      %5256 = vmatmul.mubr.f32.gmra.mxu0 %v5255
      %v5257 = vpop.f32.mrf.mxu0
      %v5258 = vadd.f32 %v4453, %v5257
      %v5259 = vpop.f32.mrf.mxu0
      %5260 = vmatprep.mubr.f32.mxu0 0.0
      %v5261 = vand.u32 %v4619, 4294901760
      %v5262 = vsub.f32 %v4619, %v5261
      %v5263 = vand.u32 %v5262, 4294901760
      %v5264 = vsub.f32 %v5262, %v5263
      %v5265 = vand.u32 %v5264, 4294901760
      %5266 = vmatmul.mubr.f32.gmra.mxu0 %v5265
      %v5267 = vpop.f32.mrf.mxu0
      %v5268 = vadd.f32 %v4453, %v5267
      %v5269 = vpop.f32.mrf.mxu0
      %5270 = vmatprep.mubr.f32.mxu0 0.0
      %v5271 = vand.u32 %v4622, 4294901760
      %v5272 = vsub.f32 %v4622, %v5271
      %v5273 = vand.u32 %v5272, 4294901760
      %v5274 = vsub.f32 %v5272, %v5273
      %v5275 = vand.u32 %v5274, 4294901760
      %5276 = vmatmul.mubr.f32.gmra.mxu0 %v5275
      %v5277 = vpop.f32.mrf.mxu0
      %v5278 = vadd.f32 %v4453, %v5277
      %v5279 = vpop.f32.mrf.mxu0
      %5280 = vmatprep.mubr.f32.mxu0 0.0
      %v5281 = vand.u32 %v4625, 4294901760
      %v5282 = vsub.f32 %v4625, %v5281
      %v5283 = vand.u32 %v5282, 4294901760
      %v5284 = vsub.f32 %v5282, %v5283
      %v5285 = vand.u32 %v5284, 4294901760
      %5286 = vmatmul.mubr.f32.gmra.mxu0 %v5285
      %v5287 = vpop.f32.mrf.mxu0
      %v5288 = vadd.f32 %v4453, %v5287
      %v5289 = vpop.f32.mrf.mxu0
      %5290 = vmatprep.mubr.f32.mxu0 0.0
      %v5291 = vand.u32 %v4628, 4294901760
      %v5292 = vsub.f32 %v4628, %v5291
      %v5293 = vand.u32 %v5292, 4294901760
      %v5294 = vsub.f32 %v5292, %v5293
      %v5295 = vand.u32 %v5294, 4294901760
      %5296 = vmatmul.mubr.f32.gmra.mxu0 %v5295
      %v5297 = vpop.f32.mrf.mxu0
      %v5298 = vadd.f32 %v4453, %v5297
      %v5299 = vpop.f32.mrf.mxu0
      %5300 = vmatprep.mubr.f32.mxu0 0.0
      %v5301 = vand.u32 %v4631, 4294901760
      %v5302 = vsub.f32 %v4631, %v5301
      %v5303 = vand.u32 %v5302, 4294901760
      %v5304 = vsub.f32 %v5302, %v5303
      %v5305 = vand.u32 %v5304, 4294901760
      %5306 = vmatmul.mubr.f32.gmra.mxu0 %v5305
      %v5307 = vpop.f32.mrf.mxu0
      %v5308 = vadd.f32 %v4453, %v5307
      %v5309 = vpop.f32.mrf.mxu0
      %5310 = vmatprep.mubr.f32.mxu0 0.0
      %v5311 = vand.u32 %v4634, 4294901760
      %v5312 = vsub.f32 %v4634, %v5311
      %v5313 = vand.u32 %v5312, 4294901760
      %v5314 = vsub.f32 %v5312, %v5313
      %v5315 = vand.u32 %v5314, 4294901760
      %5316 = vmatmul.mubr.f32.gmra.mxu0 %v5315
      %v5317 = vpop.f32.mrf.mxu0
      %v5318 = vadd.f32 %v4453, %v5317
      %v5319 = vpop.f32.mrf.mxu0
      %5320 = vmatprep.mubr.f32.mxu0 0.0
      %v5321 = vand.u32 %v4637, 4294901760
      %v5322 = vsub.f32 %v4637, %v5321
      %v5323 = vand.u32 %v5322, 4294901760
      %v5324 = vsub.f32 %v5322, %v5323
      %v5325 = vand.u32 %v5324, 4294901760
      %5326 = vmatmul.mubr.f32.gmra.mxu0 %v5325
      %v5327 = vpop.f32.mrf.mxu0
      %v5328 = vadd.f32 %v4453, %v5327
      %v5329 = vpop.f32.mrf.mxu0
      %5330 = vmatprep.mubr.f32.mxu0 0.0
      %v5331 = vand.u32 %v4640, 4294901760
      %v5332 = vsub.f32 %v4640, %v5331
      %v5333 = vand.u32 %v5332, 4294901760
      %v5334 = vsub.f32 %v5332, %v5333
      %v5335 = vand.u32 %v5334, 4294901760
      %5336 = vmatmul.mubr.f32.gmra.mxu0 %v5335
      %v5337 = vpop.f32.mrf.mxu0
      %v5338 = vadd.f32 %v4453, %v5337
      %v5339 = vpop.f32.mrf.mxu0
      %5340 = vmatprep.mubr.f32.mxu0 0.0
      %v5341 = vand.u32 %v4643, 4294901760
      %v5342 = vsub.f32 %v4643, %v5341
      %v5343 = vand.u32 %v5342, 4294901760
      %v5344 = vsub.f32 %v5342, %v5343
      %v5345 = vand.u32 %v5344, 4294901760
      %5346 = vmatmul.mubr.f32.gmra.mxu0 %v5345
      %v5347 = vpop.f32.mrf.mxu0
      %v5348 = vadd.f32 %v4453, %v5347
      %v5349 = vpop.f32.mrf.mxu0
      %5350 = vmatprep.mubr.f32.mxu0 0.0
      %v5351 = vand.u32 %v4646, 4294901760
      %v5352 = vsub.f32 %v4646, %v5351
      %v5353 = vand.u32 %v5352, 4294901760
      %v5354 = vsub.f32 %v5352, %v5353
      %v5355 = vand.u32 %v5354, 4294901760
      %5356 = vmatmul.mubr.f32.gmra.mxu0 %v5355
      %v5357 = vpop.f32.mrf.mxu0
      %v5358 = vadd.f32 %v4453, %v5357
      %v5359 = vpop.f32.mrf.mxu0
      %5360 = vdwg.mxu0
      %5361 = vmatprep.subr.mxu0 0.0
      %5362 = vmatpush1.msra.mxu0 0.0
      %5363 = vmatprep.subr.mxu0 0.0
      %5364 = vmatpush1.msra.mxu0 0.0
      %5365 = vmatprep.subr.mxu0 0.0
      %5366 = vmatpush1.msra.mxu0 0.0
      %5367 = vmatprep.subr.mxu0 0.0
      %5368 = vmatpush1.msra.mxu0 0.0
      %5369 = vmatprep.subr.mxu0 0.0
      %5370 = vmatpush1.msra.mxu0 0.0
      %5371 = vmatprep.subr.mxu0 0.0
      %5372 = vmatpush1.msra.mxu0 0.0
      %5373 = vmatprep.subr.mxu0 0.0
      %5374 = vmatpush1.msra.mxu0 0.0
      %5375 = vmatprep.subr.mxu0 0.0
      %5376 = vmatpush1.msra.mxu0 0.0
      %5377 = vmatprep.subr.mxu0 0.0
      %v5378 = vand.u32 %v4447, 4294901760
      %v5379 = vsub.f32 %v4447, %v5378
      %v5380 = vand.u32 %v5379, 4294901760
      %v5381 = vsub.f32 %v5379, %v5380
      %v5382 = vand.u32 %v5381, 4294901760
      %5383 = vmatpush1.msra.mxu0 %v5382
      %5384 = vmatprep.subr.mxu0 0.0
      %v5385 = vand.u32 %v4446, 4294901760
      %v5386 = vsub.f32 %v4446, %v5385
      %v5387 = vand.u32 %v5386, 4294901760
      %v5388 = vsub.f32 %v5386, %v5387
      %v5389 = vand.u32 %v5388, 4294901760
      %5390 = vmatpush1.msra.mxu0 %v5389
      %5391 = vmatprep.subr.mxu0 0.0
      %v5392 = vand.u32 %v4445, 4294901760
      %v5393 = vsub.f32 %v4445, %v5392
      %v5394 = vand.u32 %v5393, 4294901760
      %v5395 = vsub.f32 %v5393, %v5394
      %v5396 = vand.u32 %v5395, 4294901760
      %5397 = vmatpush1.msra.mxu0 %v5396
      %5398 = vmatprep.subr.mxu0 0.0
      %v5399 = vand.u32 %v4444, 4294901760
      %v5400 = vsub.f32 %v4444, %v5399
      %v5401 = vand.u32 %v5400, 4294901760
      %v5402 = vsub.f32 %v5400, %v5401
      %v5403 = vand.u32 %v5402, 4294901760
      %5404 = vmatpush1.msra.mxu0 %v5403
      %5405 = vmatprep.subr.mxu0 0.0
      %v5406 = vand.u32 %v4443, 4294901760
      %v5407 = vsub.f32 %v4443, %v5406
      %v5408 = vand.u32 %v5407, 4294901760
      %v5409 = vsub.f32 %v5407, %v5408
      %v5410 = vand.u32 %v5409, 4294901760
      %5411 = vmatpush1.msra.mxu0 %v5410
      %5412 = vmatprep.subr.mxu0 0.0
      %v5413 = vand.u32 %v4442, 4294901760
      %v5414 = vsub.f32 %v4442, %v5413
      %v5415 = vand.u32 %v5414, 4294901760
      %v5416 = vsub.f32 %v5414, %v5415
      %v5417 = vand.u32 %v5416, 4294901760
      %5418 = vmatpush1.msra.mxu0 %v5417
      %5419 = vmatprep.subr.mxu0 0.0
      %v5420 = vand.u32 %v4441, 4294901760
      %v5421 = vsub.f32 %v4441, %v5420
      %v5422 = vand.u32 %v5421, 4294901760
      %v5423 = vsub.f32 %v5421, %v5422
      %v5424 = vand.u32 %v5423, 4294901760
      %5425 = vmatpush1.msra.mxu0 %v5424
      %5426 = vmatprep.subr.mxu0 0.0
      %v5427 = vand.u32 %v4440, 4294901760
      %v5428 = vsub.f32 %v4440, %v5427
      %v5429 = vand.u32 %v5428, 4294901760
      %v5430 = vsub.f32 %v5428, %v5429
      %v5431 = vand.u32 %v5430, 4294901760
      %5432 = vmatpush1.msra.mxu0 %v5431
      %5433 = vmatprep.subr.mxu0 0.0
      %5434 = vmatpush2.msra.mxu0 0.0
      %5435 = vmatprep.subr.mxu0 0.0
      %5436 = vmatpush2.msra.mxu0 0.0
      %5437 = vmatprep.subr.mxu0 0.0
      %5438 = vmatpush2.msra.mxu0 0.0
      %5439 = vmatprep.subr.mxu0 0.0
      %5440 = vmatpush2.msra.mxu0 0.0
      %5441 = vmatprep.subr.mxu0 0.0
      %5442 = vmatpush2.msra.mxu0 0.0
      %5443 = vmatprep.subr.mxu0 0.0
      %5444 = vmatpush2.msra.mxu0 0.0
      %5445 = vmatprep.subr.mxu0 0.0
      %5446 = vmatpush2.msra.mxu0 0.0
      %5447 = vmatprep.subr.mxu0 0.0
      %5448 = vmatpush2.msra.mxu0 0.0
      %5449 = vmatprep.subr.mxu0 0.0
      %5450 = vmatpush2.msra.mxu0 0.0
      %5451 = vmatprep.subr.mxu0 0.0
      %5452 = vmatpush2.msra.mxu0 0.0
      %5453 = vmatprep.subr.mxu0 0.0
      %5454 = vmatpush2.msra.mxu0 0.0
      %5455 = vmatprep.subr.mxu0 0.0
      %5456 = vmatpush2.msra.mxu0 0.0
      %5457 = vmatprep.subr.mxu0 0.0
      %5458 = vmatpush2.msra.mxu0 0.0
      %5459 = vmatprep.subr.mxu0 0.0
      %5460 = vmatpush2.msra.mxu0 0.0
      %5461 = vmatprep.subr.mxu0 0.0
      %5462 = vmatpush2.msra.mxu0 0.0
      %5463 = vmatprep.subr.mxu0 0.0
      %5464 = vmatpush2.msra.mxu0 0.0
      %5465 = vmatprep.mubr.f32.mxu0 0.0
      %v5466 = vand.u32 %v4457, 4294901760
      %5467 = vmatmul.mubr.f32.gmra.mxu0 %v5466
      %v5468 = vpop.f32.mrf.mxu0
      %v5469 = vadd.f32 %v4728, %v5468
      %v5470 = vpop.f32.mrf.mxu0
      %5471 = vmatprep.mubr.f32.mxu0 0.0
      %v5472 = vand.u32 %v4460, 4294901760
      %5473 = vmatmul.mubr.f32.gmra.mxu0 %v5472
      %v5474 = vpop.f32.mrf.mxu0
      %v5475 = vadd.f32 %v4738, %v5474
      %v5476 = vpop.f32.mrf.mxu0
      %5477 = vmatprep.mubr.f32.mxu0 0.0
      %v5478 = vand.u32 %v4463, 4294901760
      %5479 = vmatmul.mubr.f32.gmra.mxu0 %v5478
      %v5480 = vpop.f32.mrf.mxu0
      %v5481 = vadd.f32 %v4748, %v5480
      %v5482 = vpop.f32.mrf.mxu0
      %5483 = vmatprep.mubr.f32.mxu0 0.0
      %v5484 = vand.u32 %v4466, 4294901760
      %5485 = vmatmul.mubr.f32.gmra.mxu0 %v5484
      %v5486 = vpop.f32.mrf.mxu0
      %v5487 = vadd.f32 %v4758, %v5486
      %v5488 = vpop.f32.mrf.mxu0
      %5489 = vmatprep.mubr.f32.mxu0 0.0
      %v5490 = vand.u32 %v4469, 4294901760
      %5491 = vmatmul.mubr.f32.gmra.mxu0 %v5490
      %v5492 = vpop.f32.mrf.mxu0
      %v5493 = vadd.f32 %v4768, %v5492
      %v5494 = vpop.f32.mrf.mxu0
      %5495 = vmatprep.mubr.f32.mxu0 0.0
      %v5496 = vand.u32 %v4472, 4294901760
      %5497 = vmatmul.mubr.f32.gmra.mxu0 %v5496
      %v5498 = vpop.f32.mrf.mxu0
      %v5499 = vadd.f32 %v4778, %v5498
      %v5500 = vpop.f32.mrf.mxu0
      %5501 = vmatprep.mubr.f32.mxu0 0.0
      %v5502 = vand.u32 %v4475, 4294901760
      %5503 = vmatmul.mubr.f32.gmra.mxu0 %v5502
      %v5504 = vpop.f32.mrf.mxu0
      %v5505 = vadd.f32 %v4788, %v5504
      %v5506 = vpop.f32.mrf.mxu0
      %5507 = vmatprep.mubr.f32.mxu0 0.0
      %v5508 = vand.u32 %v4478, 4294901760
      %5509 = vmatmul.mubr.f32.gmra.mxu0 %v5508
      %v5510 = vpop.f32.mrf.mxu0
      %v5511 = vadd.f32 %v4798, %v5510
      %v5512 = vpop.f32.mrf.mxu0
      %5513 = vmatprep.mubr.f32.mxu0 0.0
      %v5514 = vand.u32 %v4481, 4294901760
      %5515 = vmatmul.mubr.f32.gmra.mxu0 %v5514
      %v5516 = vpop.f32.mrf.mxu0
      %v5517 = vadd.f32 %v4808, %v5516
      %v5518 = vpop.f32.mrf.mxu0
      %5519 = vmatprep.mubr.f32.mxu0 0.0
      %v5520 = vand.u32 %v4484, 4294901760
      %5521 = vmatmul.mubr.f32.gmra.mxu0 %v5520
      %v5522 = vpop.f32.mrf.mxu0
      %v5523 = vadd.f32 %v4818, %v5522
      %v5524 = vpop.f32.mrf.mxu0
      %5525 = vmatprep.mubr.f32.mxu0 0.0
      %v5526 = vand.u32 %v4487, 4294901760
      %5527 = vmatmul.mubr.f32.gmra.mxu0 %v5526
      %v5528 = vpop.f32.mrf.mxu0
      %v5529 = vadd.f32 %v4828, %v5528
      %v5530 = vpop.f32.mrf.mxu0
      %5531 = vmatprep.mubr.f32.mxu0 0.0
      %v5532 = vand.u32 %v4490, 4294901760
      %5533 = vmatmul.mubr.f32.gmra.mxu0 %v5532
      %v5534 = vpop.f32.mrf.mxu0
      %v5535 = vadd.f32 %v4838, %v5534
      %v5536 = vpop.f32.mrf.mxu0
      %5537 = vmatprep.mubr.f32.mxu0 0.0
      %v5538 = vand.u32 %v4493, 4294901760
      %5539 = vmatmul.mubr.f32.gmra.mxu0 %v5538
      %v5540 = vpop.f32.mrf.mxu0
      %v5541 = vadd.f32 %v4848, %v5540
      %v5542 = vpop.f32.mrf.mxu0
      %5543 = vmatprep.mubr.f32.mxu0 0.0
      %v5544 = vand.u32 %v4496, 4294901760
      %5545 = vmatmul.mubr.f32.gmra.mxu0 %v5544
      %v5546 = vpop.f32.mrf.mxu0
      %v5547 = vadd.f32 %v4858, %v5546
      %v5548 = vpop.f32.mrf.mxu0
      %5549 = vmatprep.mubr.f32.mxu0 0.0
      %v5550 = vand.u32 %v4499, 4294901760
      %5551 = vmatmul.mubr.f32.gmra.mxu0 %v5550
      %v5552 = vpop.f32.mrf.mxu0
      %v5553 = vadd.f32 %v4868, %v5552
      %v5554 = vpop.f32.mrf.mxu0
      %5555 = vmatprep.mubr.f32.mxu0 0.0
      %v5556 = vand.u32 %v4502, 4294901760
      %5557 = vmatmul.mubr.f32.gmra.mxu0 %v5556
      %v5558 = vpop.f32.mrf.mxu0
      %v5559 = vadd.f32 %v4878, %v5558
      %v5560 = vpop.f32.mrf.mxu0
      %5561 = vmatprep.mubr.f32.mxu0 0.0
      %v5562 = vand.u32 %v4505, 4294901760
      %5563 = vmatmul.mubr.f32.gmra.mxu0 %v5562
      %v5564 = vpop.f32.mrf.mxu0
      %v5565 = vadd.f32 %v4888, %v5564
      %v5566 = vpop.f32.mrf.mxu0
      %5567 = vmatprep.mubr.f32.mxu0 0.0
      %v5568 = vand.u32 %v4508, 4294901760
      %5569 = vmatmul.mubr.f32.gmra.mxu0 %v5568
      %v5570 = vpop.f32.mrf.mxu0
      %v5571 = vadd.f32 %v4898, %v5570
      %v5572 = vpop.f32.mrf.mxu0
      %5573 = vmatprep.mubr.f32.mxu0 0.0
      %v5574 = vand.u32 %v4511, 4294901760
      %5575 = vmatmul.mubr.f32.gmra.mxu0 %v5574
      %v5576 = vpop.f32.mrf.mxu0
      %v5577 = vadd.f32 %v4908, %v5576
      %v5578 = vpop.f32.mrf.mxu0
      %5579 = vmatprep.mubr.f32.mxu0 0.0
      %v5580 = vand.u32 %v4514, 4294901760
      %5581 = vmatmul.mubr.f32.gmra.mxu0 %v5580
      %v5582 = vpop.f32.mrf.mxu0
      %v5583 = vadd.f32 %v4918, %v5582
      %v5584 = vpop.f32.mrf.mxu0
      %5585 = vmatprep.mubr.f32.mxu0 0.0
      %v5586 = vand.u32 %v4517, 4294901760
      %5587 = vmatmul.mubr.f32.gmra.mxu0 %v5586
      %v5588 = vpop.f32.mrf.mxu0
      %v5589 = vadd.f32 %v4928, %v5588
      %v5590 = vpop.f32.mrf.mxu0
      %5591 = vmatprep.mubr.f32.mxu0 0.0
      %v5592 = vand.u32 %v4520, 4294901760
      %5593 = vmatmul.mubr.f32.gmra.mxu0 %v5592
      %v5594 = vpop.f32.mrf.mxu0
      %v5595 = vadd.f32 %v4938, %v5594
      %v5596 = vpop.f32.mrf.mxu0
      %5597 = vmatprep.mubr.f32.mxu0 0.0
      %v5598 = vand.u32 %v4523, 4294901760
      %5599 = vmatmul.mubr.f32.gmra.mxu0 %v5598
      %v5600 = vpop.f32.mrf.mxu0
      %v5601 = vadd.f32 %v4948, %v5600
      %v5602 = vpop.f32.mrf.mxu0
      %5603 = vmatprep.mubr.f32.mxu0 0.0
      %v5604 = vand.u32 %v4526, 4294901760
      %5605 = vmatmul.mubr.f32.gmra.mxu0 %v5604
      %v5606 = vpop.f32.mrf.mxu0
      %v5607 = vadd.f32 %v4958, %v5606
      %v5608 = vpop.f32.mrf.mxu0
      %5609 = vmatprep.mubr.f32.mxu0 0.0
      %v5610 = vand.u32 %v4529, 4294901760
      %5611 = vmatmul.mubr.f32.gmra.mxu0 %v5610
      %v5612 = vpop.f32.mrf.mxu0
      %v5613 = vadd.f32 %v4968, %v5612
      %v5614 = vpop.f32.mrf.mxu0
      %5615 = vmatprep.mubr.f32.mxu0 0.0
      %v5616 = vand.u32 %v4532, 4294901760
      %5617 = vmatmul.mubr.f32.gmra.mxu0 %v5616
      %v5618 = vpop.f32.mrf.mxu0
      %v5619 = vadd.f32 %v4978, %v5618
      %v5620 = vpop.f32.mrf.mxu0
      %5621 = vmatprep.mubr.f32.mxu0 0.0
      %v5622 = vand.u32 %v4535, 4294901760
      %5623 = vmatmul.mubr.f32.gmra.mxu0 %v5622
      %v5624 = vpop.f32.mrf.mxu0
      %v5625 = vadd.f32 %v4988, %v5624
      %v5626 = vpop.f32.mrf.mxu0
      %5627 = vmatprep.mubr.f32.mxu0 0.0
      %v5628 = vand.u32 %v4538, 4294901760
      %5629 = vmatmul.mubr.f32.gmra.mxu0 %v5628
      %v5630 = vpop.f32.mrf.mxu0
      %v5631 = vadd.f32 %v4998, %v5630
      %v5632 = vpop.f32.mrf.mxu0
      %5633 = vmatprep.mubr.f32.mxu0 0.0
      %v5634 = vand.u32 %v4541, 4294901760
      %5635 = vmatmul.mubr.f32.gmra.mxu0 %v5634
      %v5636 = vpop.f32.mrf.mxu0
      %v5637 = vadd.f32 %v5008, %v5636
      %v5638 = vpop.f32.mrf.mxu0
      %5639 = vmatprep.mubr.f32.mxu0 0.0
      %v5640 = vand.u32 %v4544, 4294901760
      %5641 = vmatmul.mubr.f32.gmra.mxu0 %v5640
      %v5642 = vpop.f32.mrf.mxu0
      %v5643 = vadd.f32 %v5018, %v5642
      %v5644 = vpop.f32.mrf.mxu0
      %5645 = vmatprep.mubr.f32.mxu0 0.0
      %v5646 = vand.u32 %v4547, 4294901760
      %5647 = vmatmul.mubr.f32.gmra.mxu0 %v5646
      %v5648 = vpop.f32.mrf.mxu0
      %v5649 = vadd.f32 %v5028, %v5648
      %v5650 = vpop.f32.mrf.mxu0
      %5651 = vmatprep.mubr.f32.mxu0 0.0
      %v5652 = vand.u32 %v4550, 4294901760
      %5653 = vmatmul.mubr.f32.gmra.mxu0 %v5652
      %v5654 = vpop.f32.mrf.mxu0
      %v5655 = vadd.f32 %v5038, %v5654
      %v5656 = vpop.f32.mrf.mxu0
      %5657 = vmatprep.mubr.f32.mxu0 0.0
      %v5658 = vand.u32 %v4553, 4294901760
      %5659 = vmatmul.mubr.f32.gmra.mxu0 %v5658
      %v5660 = vpop.f32.mrf.mxu0
      %v5661 = vadd.f32 %v5048, %v5660
      %v5662 = vpop.f32.mrf.mxu0
      %5663 = vmatprep.mubr.f32.mxu0 0.0
      %v5664 = vand.u32 %v4556, 4294901760
      %5665 = vmatmul.mubr.f32.gmra.mxu0 %v5664
      %v5666 = vpop.f32.mrf.mxu0
      %v5667 = vadd.f32 %v5058, %v5666
      %v5668 = vpop.f32.mrf.mxu0
      %5669 = vmatprep.mubr.f32.mxu0 0.0
      %v5670 = vand.u32 %v4559, 4294901760
      %5671 = vmatmul.mubr.f32.gmra.mxu0 %v5670
      %v5672 = vpop.f32.mrf.mxu0
      %v5673 = vadd.f32 %v5068, %v5672
      %v5674 = vpop.f32.mrf.mxu0
      %5675 = vmatprep.mubr.f32.mxu0 0.0
      %v5676 = vand.u32 %v4562, 4294901760
      %5677 = vmatmul.mubr.f32.gmra.mxu0 %v5676
      %v5678 = vpop.f32.mrf.mxu0
      %v5679 = vadd.f32 %v5078, %v5678
      %v5680 = vpop.f32.mrf.mxu0
      %5681 = vmatprep.mubr.f32.mxu0 0.0
      %v5682 = vand.u32 %v4565, 4294901760
      %5683 = vmatmul.mubr.f32.gmra.mxu0 %v5682
      %v5684 = vpop.f32.mrf.mxu0
      %v5685 = vadd.f32 %v5088, %v5684
      %v5686 = vpop.f32.mrf.mxu0
      %5687 = vmatprep.mubr.f32.mxu0 0.0
      %v5688 = vand.u32 %v4568, 4294901760
      %5689 = vmatmul.mubr.f32.gmra.mxu0 %v5688
      %v5690 = vpop.f32.mrf.mxu0
      %v5691 = vadd.f32 %v5098, %v5690
      %v5692 = vpop.f32.mrf.mxu0
      %5693 = vmatprep.mubr.f32.mxu0 0.0
      %v5694 = vand.u32 %v4571, 4294901760
      %5695 = vmatmul.mubr.f32.gmra.mxu0 %v5694
      %v5696 = vpop.f32.mrf.mxu0
      %v5697 = vadd.f32 %v5108, %v5696
      %v5698 = vpop.f32.mrf.mxu0
      %5699 = vmatprep.mubr.f32.mxu0 0.0
      %v5700 = vand.u32 %v4574, 4294901760
      %5701 = vmatmul.mubr.f32.gmra.mxu0 %v5700
      %v5702 = vpop.f32.mrf.mxu0
      %v5703 = vadd.f32 %v5118, %v5702
      %v5704 = vpop.f32.mrf.mxu0
      %5705 = vmatprep.mubr.f32.mxu0 0.0
      %v5706 = vand.u32 %v4577, 4294901760
      %5707 = vmatmul.mubr.f32.gmra.mxu0 %v5706
      %v5708 = vpop.f32.mrf.mxu0
      %v5709 = vadd.f32 %v5128, %v5708
      %v5710 = vpop.f32.mrf.mxu0
      %5711 = vmatprep.mubr.f32.mxu0 0.0
      %v5712 = vand.u32 %v4580, 4294901760
      %5713 = vmatmul.mubr.f32.gmra.mxu0 %v5712
      %v5714 = vpop.f32.mrf.mxu0
      %v5715 = vadd.f32 %v5138, %v5714
      %v5716 = vpop.f32.mrf.mxu0
      %5717 = vmatprep.mubr.f32.mxu0 0.0
      %v5718 = vand.u32 %v4583, 4294901760
      %5719 = vmatmul.mubr.f32.gmra.mxu0 %v5718
      %v5720 = vpop.f32.mrf.mxu0
      %v5721 = vadd.f32 %v5148, %v5720
      %v5722 = vpop.f32.mrf.mxu0
      %5723 = vmatprep.mubr.f32.mxu0 0.0
      %v5724 = vand.u32 %v4586, 4294901760
      %5725 = vmatmul.mubr.f32.gmra.mxu0 %v5724
      %v5726 = vpop.f32.mrf.mxu0
      %v5727 = vadd.f32 %v5158, %v5726
      %v5728 = vpop.f32.mrf.mxu0
      %5729 = vmatprep.mubr.f32.mxu0 0.0
      %v5730 = vand.u32 %v4589, 4294901760
      %5731 = vmatmul.mubr.f32.gmra.mxu0 %v5730
      %v5732 = vpop.f32.mrf.mxu0
      %v5733 = vadd.f32 %v5168, %v5732
      %v5734 = vpop.f32.mrf.mxu0
      %5735 = vmatprep.mubr.f32.mxu0 0.0
      %v5736 = vand.u32 %v4592, 4294901760
      %5737 = vmatmul.mubr.f32.gmra.mxu0 %v5736
      %v5738 = vpop.f32.mrf.mxu0
      %v5739 = vadd.f32 %v5178, %v5738
      %v5740 = vpop.f32.mrf.mxu0
      %5741 = vmatprep.mubr.f32.mxu0 0.0
      %v5742 = vand.u32 %v4595, 4294901760
      %5743 = vmatmul.mubr.f32.gmra.mxu0 %v5742
      %v5744 = vpop.f32.mrf.mxu0
      %v5745 = vadd.f32 %v5188, %v5744
      %v5746 = vpop.f32.mrf.mxu0
      %5747 = vmatprep.mubr.f32.mxu0 0.0
      %v5748 = vand.u32 %v4598, 4294901760
      %5749 = vmatmul.mubr.f32.gmra.mxu0 %v5748
      %v5750 = vpop.f32.mrf.mxu0
      %v5751 = vadd.f32 %v5198, %v5750
      %v5752 = vpop.f32.mrf.mxu0
      %5753 = vmatprep.mubr.f32.mxu0 0.0
      %v5754 = vand.u32 %v4601, 4294901760
      %5755 = vmatmul.mubr.f32.gmra.mxu0 %v5754
      %v5756 = vpop.f32.mrf.mxu0
      %v5757 = vadd.f32 %v5208, %v5756
      %v5758 = vpop.f32.mrf.mxu0
      %5759 = vmatprep.mubr.f32.mxu0 0.0
      %v5760 = vand.u32 %v4604, 4294901760
      %5761 = vmatmul.mubr.f32.gmra.mxu0 %v5760
      %v5762 = vpop.f32.mrf.mxu0
      %v5763 = vadd.f32 %v5218, %v5762
      %v5764 = vpop.f32.mrf.mxu0
      %5765 = vmatprep.mubr.f32.mxu0 0.0
      %v5766 = vand.u32 %v4607, 4294901760
      %5767 = vmatmul.mubr.f32.gmra.mxu0 %v5766
      %v5768 = vpop.f32.mrf.mxu0
      %v5769 = vadd.f32 %v5228, %v5768
      %v5770 = vpop.f32.mrf.mxu0
      %5771 = vmatprep.mubr.f32.mxu0 0.0
      %v5772 = vand.u32 %v4610, 4294901760
      %5773 = vmatmul.mubr.f32.gmra.mxu0 %v5772
      %v5774 = vpop.f32.mrf.mxu0
      %v5775 = vadd.f32 %v5238, %v5774
      %v5776 = vpop.f32.mrf.mxu0
      %5777 = vmatprep.mubr.f32.mxu0 0.0
      %v5778 = vand.u32 %v4613, 4294901760
      %5779 = vmatmul.mubr.f32.gmra.mxu0 %v5778
      %v5780 = vpop.f32.mrf.mxu0
      %v5781 = vadd.f32 %v5248, %v5780
      %v5782 = vpop.f32.mrf.mxu0
      %5783 = vmatprep.mubr.f32.mxu0 0.0
      %v5784 = vand.u32 %v4616, 4294901760
      %5785 = vmatmul.mubr.f32.gmra.mxu0 %v5784
      %v5786 = vpop.f32.mrf.mxu0
      %v5787 = vadd.f32 %v5258, %v5786
      %v5788 = vpop.f32.mrf.mxu0
      %5789 = vmatprep.mubr.f32.mxu0 0.0
      %v5790 = vand.u32 %v4619, 4294901760
      %5791 = vmatmul.mubr.f32.gmra.mxu0 %v5790
      %v5792 = vpop.f32.mrf.mxu0
      %v5793 = vadd.f32 %v5268, %v5792
      %v5794 = vpop.f32.mrf.mxu0
      %5795 = vmatprep.mubr.f32.mxu0 0.0
      %v5796 = vand.u32 %v4622, 4294901760
      %5797 = vmatmul.mubr.f32.gmra.mxu0 %v5796
      %v5798 = vpop.f32.mrf.mxu0
      %v5799 = vadd.f32 %v5278, %v5798
      %v5800 = vpop.f32.mrf.mxu0
      %5801 = vmatprep.mubr.f32.mxu0 0.0
      %v5802 = vand.u32 %v4625, 4294901760
      %5803 = vmatmul.mubr.f32.gmra.mxu0 %v5802
      %v5804 = vpop.f32.mrf.mxu0
      %v5805 = vadd.f32 %v5288, %v5804
      %v5806 = vpop.f32.mrf.mxu0
      %5807 = vmatprep.mubr.f32.mxu0 0.0
      %v5808 = vand.u32 %v4628, 4294901760
      %5809 = vmatmul.mubr.f32.gmra.mxu0 %v5808
      %v5810 = vpop.f32.mrf.mxu0
      %v5811 = vadd.f32 %v5298, %v5810
      %v5812 = vpop.f32.mrf.mxu0
      %5813 = vmatprep.mubr.f32.mxu0 0.0
      %v5814 = vand.u32 %v4631, 4294901760
      %5815 = vmatmul.mubr.f32.gmra.mxu0 %v5814
      %v5816 = vpop.f32.mrf.mxu0
      %v5817 = vadd.f32 %v5308, %v5816
      %v5818 = vpop.f32.mrf.mxu0
      %5819 = vmatprep.mubr.f32.mxu0 0.0
      %v5820 = vand.u32 %v4634, 4294901760
      %5821 = vmatmul.mubr.f32.gmra.mxu0 %v5820
      %v5822 = vpop.f32.mrf.mxu0
      %v5823 = vadd.f32 %v5318, %v5822
      %v5824 = vpop.f32.mrf.mxu0
      %5825 = vmatprep.mubr.f32.mxu0 0.0
      %v5826 = vand.u32 %v4637, 4294901760
      %5827 = vmatmul.mubr.f32.gmra.mxu0 %v5826
      %v5828 = vpop.f32.mrf.mxu0
      %v5829 = vadd.f32 %v5328, %v5828
      %v5830 = vpop.f32.mrf.mxu0
      %5831 = vmatprep.mubr.f32.mxu0 0.0
      %v5832 = vand.u32 %v4640, 4294901760
      %5833 = vmatmul.mubr.f32.gmra.mxu0 %v5832
      %v5834 = vpop.f32.mrf.mxu0
      %v5835 = vadd.f32 %v5338, %v5834
      %v5836 = vpop.f32.mrf.mxu0
      %5837 = vmatprep.mubr.f32.mxu0 0.0
      %v5838 = vand.u32 %v4643, 4294901760
      %5839 = vmatmul.mubr.f32.gmra.mxu0 %v5838
      %v5840 = vpop.f32.mrf.mxu0
      %v5841 = vadd.f32 %v5348, %v5840
      %v5842 = vpop.f32.mrf.mxu0
      %5843 = vmatprep.mubr.f32.mxu0 0.0
      %v5844 = vand.u32 %v4646, 4294901760
      %5845 = vmatmul.mubr.f32.gmra.mxu0 %v5844
      %v5846 = vpop.f32.mrf.mxu0
      %v5847 = vadd.f32 %v5358, %v5846
      %v5848 = vpop.f32.mrf.mxu0
      %5849 = vdwg.mxu0
      %5850 = vmatprep.subr.mxu0 0.0
      %5851 = vmatpush1.msra.mxu0 0.0
      %5852 = vmatprep.subr.mxu0 0.0
      %5853 = vmatpush1.msra.mxu0 0.0
      %5854 = vmatprep.subr.mxu0 0.0
      %5855 = vmatpush1.msra.mxu0 0.0
      %5856 = vmatprep.subr.mxu0 0.0
      %5857 = vmatpush1.msra.mxu0 0.0
      %5858 = vmatprep.subr.mxu0 0.0
      %5859 = vmatpush1.msra.mxu0 0.0
      %5860 = vmatprep.subr.mxu0 0.0
      %5861 = vmatpush1.msra.mxu0 0.0
      %5862 = vmatprep.subr.mxu0 0.0
      %5863 = vmatpush1.msra.mxu0 0.0
      %5864 = vmatprep.subr.mxu0 0.0
      %5865 = vmatpush1.msra.mxu0 0.0
      %5866 = vmatprep.subr.mxu0 0.0
      %v5867 = vand.u32 %v4447, 4294901760
      %v5868 = vsub.f32 %v4447, %v5867
      %5869 = vmatpush1.msra.mxu0 %v5868
      %5870 = vmatprep.subr.mxu0 0.0
      %v5871 = vand.u32 %v4446, 4294901760
      %v5872 = vsub.f32 %v4446, %v5871
      %5873 = vmatpush1.msra.mxu0 %v5872
      %5874 = vmatprep.subr.mxu0 0.0
      %v5875 = vand.u32 %v4445, 4294901760
      %v5876 = vsub.f32 %v4445, %v5875
      %5877 = vmatpush1.msra.mxu0 %v5876
      %5878 = vmatprep.subr.mxu0 0.0
      %v5879 = vand.u32 %v4444, 4294901760
      %v5880 = vsub.f32 %v4444, %v5879
      %5881 = vmatpush1.msra.mxu0 %v5880
      %5882 = vmatprep.subr.mxu0 0.0
      %v5883 = vand.u32 %v4443, 4294901760
      %v5884 = vsub.f32 %v4443, %v5883
      %5885 = vmatpush1.msra.mxu0 %v5884
      %5886 = vmatprep.subr.mxu0 0.0
      %v5887 = vand.u32 %v4442, 4294901760
      %v5888 = vsub.f32 %v4442, %v5887
      %5889 = vmatpush1.msra.mxu0 %v5888
      %5890 = vmatprep.subr.mxu0 0.0
      %v5891 = vand.u32 %v4441, 4294901760
      %v5892 = vsub.f32 %v4441, %v5891
      %5893 = vmatpush1.msra.mxu0 %v5892
      %5894 = vmatprep.subr.mxu0 0.0
      %v5895 = vand.u32 %v4440, 4294901760
      %v5896 = vsub.f32 %v4440, %v5895
      %5897 = vmatpush1.msra.mxu0 %v5896
      %5898 = vmatprep.subr.mxu0 0.0
      %5899 = vmatpush2.msra.mxu0 0.0
      %5900 = vmatprep.subr.mxu0 0.0
      %5901 = vmatpush2.msra.mxu0 0.0
      %5902 = vmatprep.subr.mxu0 0.0
      %5903 = vmatpush2.msra.mxu0 0.0
      %5904 = vmatprep.subr.mxu0 0.0
      %5905 = vmatpush2.msra.mxu0 0.0
      %5906 = vmatprep.subr.mxu0 0.0
      %5907 = vmatpush2.msra.mxu0 0.0
      %5908 = vmatprep.subr.mxu0 0.0
      %5909 = vmatpush2.msra.mxu0 0.0
      %5910 = vmatprep.subr.mxu0 0.0
      %5911 = vmatpush2.msra.mxu0 0.0
      %5912 = vmatprep.subr.mxu0 0.0
      %5913 = vmatpush2.msra.mxu0 0.0
      %5914 = vmatprep.subr.mxu0 0.0
      %5915 = vmatpush2.msra.mxu0 0.0
      %5916 = vmatprep.subr.mxu0 0.0
      %5917 = vmatpush2.msra.mxu0 0.0
      %5918 = vmatprep.subr.mxu0 0.0
      %5919 = vmatpush2.msra.mxu0 0.0
      %5920 = vmatprep.subr.mxu0 0.0
      %5921 = vmatpush2.msra.mxu0 0.0
      %5922 = vmatprep.subr.mxu0 0.0
      %5923 = vmatpush2.msra.mxu0 0.0
      %5924 = vmatprep.subr.mxu0 0.0
      %5925 = vmatpush2.msra.mxu0 0.0
      %5926 = vmatprep.subr.mxu0 0.0
      %5927 = vmatpush2.msra.mxu0 0.0
      %5928 = vmatprep.subr.mxu0 0.0
      %5929 = vmatpush2.msra.mxu0 0.0
      %5930 = vmatprep.mubr.f32.mxu0 0.0
      %v5931 = vand.u32 %v4457, 4294901760
      %v5932 = vsub.f32 %v4457, %v5931
      %5933 = vmatmul.mubr.f32.gmra.mxu0 %v5932
      %v5934 = vpop.f32.mrf.mxu0
      %v5935 = vadd.f32 %v5469, %v5934
      %v5936 = vpop.f32.mrf.mxu0
      %5937 = vmatprep.mubr.f32.mxu0 0.0
      %v5938 = vand.u32 %v4460, 4294901760
      %v5939 = vsub.f32 %v4460, %v5938
      %5940 = vmatmul.mubr.f32.gmra.mxu0 %v5939
      %v5941 = vpop.f32.mrf.mxu0
      %v5942 = vadd.f32 %v5475, %v5941
      %v5943 = vpop.f32.mrf.mxu0
      %5944 = vmatprep.mubr.f32.mxu0 0.0
      %v5945 = vand.u32 %v4463, 4294901760
      %v5946 = vsub.f32 %v4463, %v5945
      %5947 = vmatmul.mubr.f32.gmra.mxu0 %v5946
      %v5948 = vpop.f32.mrf.mxu0
      %v5949 = vadd.f32 %v5481, %v5948
      %v5950 = vpop.f32.mrf.mxu0
      %5951 = vmatprep.mubr.f32.mxu0 0.0
      %v5952 = vand.u32 %v4466, 4294901760
      %v5953 = vsub.f32 %v4466, %v5952
      %5954 = vmatmul.mubr.f32.gmra.mxu0 %v5953
      %v5955 = vpop.f32.mrf.mxu0
      %v5956 = vadd.f32 %v5487, %v5955
      %v5957 = vpop.f32.mrf.mxu0
      %5958 = vmatprep.mubr.f32.mxu0 0.0
      %v5959 = vand.u32 %v4469, 4294901760
      %v5960 = vsub.f32 %v4469, %v5959
      %5961 = vmatmul.mubr.f32.gmra.mxu0 %v5960
      %v5962 = vpop.f32.mrf.mxu0
      %v5963 = vadd.f32 %v5493, %v5962
      %v5964 = vpop.f32.mrf.mxu0
      %5965 = vmatprep.mubr.f32.mxu0 0.0
      %v5966 = vand.u32 %v4472, 4294901760
      %v5967 = vsub.f32 %v4472, %v5966
      %5968 = vmatmul.mubr.f32.gmra.mxu0 %v5967
      %v5969 = vpop.f32.mrf.mxu0
      %v5970 = vadd.f32 %v5499, %v5969
      %v5971 = vpop.f32.mrf.mxu0
      %5972 = vmatprep.mubr.f32.mxu0 0.0
      %v5973 = vand.u32 %v4475, 4294901760
      %v5974 = vsub.f32 %v4475, %v5973
      %5975 = vmatmul.mubr.f32.gmra.mxu0 %v5974
      %v5976 = vpop.f32.mrf.mxu0
      %v5977 = vadd.f32 %v5505, %v5976
      %v5978 = vpop.f32.mrf.mxu0
      %5979 = vmatprep.mubr.f32.mxu0 0.0
      %v5980 = vand.u32 %v4478, 4294901760
      %v5981 = vsub.f32 %v4478, %v5980
      %5982 = vmatmul.mubr.f32.gmra.mxu0 %v5981
      %v5983 = vpop.f32.mrf.mxu0
      %v5984 = vadd.f32 %v5511, %v5983
      %v5985 = vpop.f32.mrf.mxu0
      %5986 = vmatprep.mubr.f32.mxu0 0.0
      %v5987 = vand.u32 %v4481, 4294901760
      %v5988 = vsub.f32 %v4481, %v5987
      %5989 = vmatmul.mubr.f32.gmra.mxu0 %v5988
      %v5990 = vpop.f32.mrf.mxu0
      %v5991 = vadd.f32 %v5517, %v5990
      %v5992 = vpop.f32.mrf.mxu0
      %5993 = vmatprep.mubr.f32.mxu0 0.0
      %v5994 = vand.u32 %v4484, 4294901760
      %v5995 = vsub.f32 %v4484, %v5994
      %5996 = vmatmul.mubr.f32.gmra.mxu0 %v5995
      %v5997 = vpop.f32.mrf.mxu0
      %v5998 = vadd.f32 %v5523, %v5997
      %v5999 = vpop.f32.mrf.mxu0
      %6000 = vmatprep.mubr.f32.mxu0 0.0
      %v6001 = vand.u32 %v4487, 4294901760
      %v6002 = vsub.f32 %v4487, %v6001
      %6003 = vmatmul.mubr.f32.gmra.mxu0 %v6002
      %v6004 = vpop.f32.mrf.mxu0
      %v6005 = vadd.f32 %v5529, %v6004
      %v6006 = vpop.f32.mrf.mxu0
      %6007 = vmatprep.mubr.f32.mxu0 0.0
      %v6008 = vand.u32 %v4490, 4294901760
      %v6009 = vsub.f32 %v4490, %v6008
      %6010 = vmatmul.mubr.f32.gmra.mxu0 %v6009
      %v6011 = vpop.f32.mrf.mxu0
      %v6012 = vadd.f32 %v5535, %v6011
      %v6013 = vpop.f32.mrf.mxu0
      %6014 = vmatprep.mubr.f32.mxu0 0.0
      %v6015 = vand.u32 %v4493, 4294901760
      %v6016 = vsub.f32 %v4493, %v6015
      %6017 = vmatmul.mubr.f32.gmra.mxu0 %v6016
      %v6018 = vpop.f32.mrf.mxu0
      %v6019 = vadd.f32 %v5541, %v6018
      %v6020 = vpop.f32.mrf.mxu0
      %6021 = vmatprep.mubr.f32.mxu0 0.0
      %v6022 = vand.u32 %v4496, 4294901760
      %v6023 = vsub.f32 %v4496, %v6022
      %6024 = vmatmul.mubr.f32.gmra.mxu0 %v6023
      %v6025 = vpop.f32.mrf.mxu0
      %v6026 = vadd.f32 %v5547, %v6025
      %v6027 = vpop.f32.mrf.mxu0
      %6028 = vmatprep.mubr.f32.mxu0 0.0
      %v6029 = vand.u32 %v4499, 4294901760
      %v6030 = vsub.f32 %v4499, %v6029
      %6031 = vmatmul.mubr.f32.gmra.mxu0 %v6030
      %v6032 = vpop.f32.mrf.mxu0
      %v6033 = vadd.f32 %v5553, %v6032
      %v6034 = vpop.f32.mrf.mxu0
      %6035 = vmatprep.mubr.f32.mxu0 0.0
      %v6036 = vand.u32 %v4502, 4294901760
      %v6037 = vsub.f32 %v4502, %v6036
      %6038 = vmatmul.mubr.f32.gmra.mxu0 %v6037
      %v6039 = vpop.f32.mrf.mxu0
      %v6040 = vadd.f32 %v5559, %v6039
      %v6041 = vpop.f32.mrf.mxu0
      %6042 = vmatprep.mubr.f32.mxu0 0.0
      %v6043 = vand.u32 %v4505, 4294901760
      %v6044 = vsub.f32 %v4505, %v6043
      %6045 = vmatmul.mubr.f32.gmra.mxu0 %v6044
      %v6046 = vpop.f32.mrf.mxu0
      %v6047 = vadd.f32 %v5565, %v6046
      %v6048 = vpop.f32.mrf.mxu0
      %6049 = vmatprep.mubr.f32.mxu0 0.0
      %v6050 = vand.u32 %v4508, 4294901760
      %v6051 = vsub.f32 %v4508, %v6050
      %6052 = vmatmul.mubr.f32.gmra.mxu0 %v6051
      %v6053 = vpop.f32.mrf.mxu0
      %v6054 = vadd.f32 %v5571, %v6053
      %v6055 = vpop.f32.mrf.mxu0
      %6056 = vmatprep.mubr.f32.mxu0 0.0
      %v6057 = vand.u32 %v4511, 4294901760
      %v6058 = vsub.f32 %v4511, %v6057
      %6059 = vmatmul.mubr.f32.gmra.mxu0 %v6058
      %v6060 = vpop.f32.mrf.mxu0
      %v6061 = vadd.f32 %v5577, %v6060
      %v6062 = vpop.f32.mrf.mxu0
      %6063 = vmatprep.mubr.f32.mxu0 0.0
      %v6064 = vand.u32 %v4514, 4294901760
      %v6065 = vsub.f32 %v4514, %v6064
      %6066 = vmatmul.mubr.f32.gmra.mxu0 %v6065
      %v6067 = vpop.f32.mrf.mxu0
      %v6068 = vadd.f32 %v5583, %v6067
      %v6069 = vpop.f32.mrf.mxu0
      %6070 = vmatprep.mubr.f32.mxu0 0.0
      %v6071 = vand.u32 %v4517, 4294901760
      %v6072 = vsub.f32 %v4517, %v6071
      %6073 = vmatmul.mubr.f32.gmra.mxu0 %v6072
      %v6074 = vpop.f32.mrf.mxu0
      %v6075 = vadd.f32 %v5589, %v6074
      %v6076 = vpop.f32.mrf.mxu0
      %6077 = vmatprep.mubr.f32.mxu0 0.0
      %v6078 = vand.u32 %v4520, 4294901760
      %v6079 = vsub.f32 %v4520, %v6078
      %6080 = vmatmul.mubr.f32.gmra.mxu0 %v6079
      %v6081 = vpop.f32.mrf.mxu0
      %v6082 = vadd.f32 %v5595, %v6081
      %v6083 = vpop.f32.mrf.mxu0
      %6084 = vmatprep.mubr.f32.mxu0 0.0
      %v6085 = vand.u32 %v4523, 4294901760
      %v6086 = vsub.f32 %v4523, %v6085
      %6087 = vmatmul.mubr.f32.gmra.mxu0 %v6086
      %v6088 = vpop.f32.mrf.mxu0
      %v6089 = vadd.f32 %v5601, %v6088
      %v6090 = vpop.f32.mrf.mxu0
      %6091 = vmatprep.mubr.f32.mxu0 0.0
      %v6092 = vand.u32 %v4526, 4294901760
      %v6093 = vsub.f32 %v4526, %v6092
      %6094 = vmatmul.mubr.f32.gmra.mxu0 %v6093
      %v6095 = vpop.f32.mrf.mxu0
      %v6096 = vadd.f32 %v5607, %v6095
      %v6097 = vpop.f32.mrf.mxu0
      %6098 = vmatprep.mubr.f32.mxu0 0.0
      %v6099 = vand.u32 %v4529, 4294901760
      %v6100 = vsub.f32 %v4529, %v6099
      %6101 = vmatmul.mubr.f32.gmra.mxu0 %v6100
      %v6102 = vpop.f32.mrf.mxu0
      %v6103 = vadd.f32 %v5613, %v6102
      %v6104 = vpop.f32.mrf.mxu0
      %6105 = vmatprep.mubr.f32.mxu0 0.0
      %v6106 = vand.u32 %v4532, 4294901760
      %v6107 = vsub.f32 %v4532, %v6106
      %6108 = vmatmul.mubr.f32.gmra.mxu0 %v6107
      %v6109 = vpop.f32.mrf.mxu0
      %v6110 = vadd.f32 %v5619, %v6109
      %v6111 = vpop.f32.mrf.mxu0
      %6112 = vmatprep.mubr.f32.mxu0 0.0
      %v6113 = vand.u32 %v4535, 4294901760
      %v6114 = vsub.f32 %v4535, %v6113
      %6115 = vmatmul.mubr.f32.gmra.mxu0 %v6114
      %v6116 = vpop.f32.mrf.mxu0
      %v6117 = vadd.f32 %v5625, %v6116
      %v6118 = vpop.f32.mrf.mxu0
      %6119 = vmatprep.mubr.f32.mxu0 0.0
      %v6120 = vand.u32 %v4538, 4294901760
      %v6121 = vsub.f32 %v4538, %v6120
      %6122 = vmatmul.mubr.f32.gmra.mxu0 %v6121
      %v6123 = vpop.f32.mrf.mxu0
      %v6124 = vadd.f32 %v5631, %v6123
      %v6125 = vpop.f32.mrf.mxu0
      %6126 = vmatprep.mubr.f32.mxu0 0.0
      %v6127 = vand.u32 %v4541, 4294901760
      %v6128 = vsub.f32 %v4541, %v6127
      %6129 = vmatmul.mubr.f32.gmra.mxu0 %v6128
      %v6130 = vpop.f32.mrf.mxu0
      %v6131 = vadd.f32 %v5637, %v6130
      %v6132 = vpop.f32.mrf.mxu0
      %6133 = vmatprep.mubr.f32.mxu0 0.0
      %v6134 = vand.u32 %v4544, 4294901760
      %v6135 = vsub.f32 %v4544, %v6134
      %6136 = vmatmul.mubr.f32.gmra.mxu0 %v6135
      %v6137 = vpop.f32.mrf.mxu0
      %v6138 = vadd.f32 %v5643, %v6137
      %v6139 = vpop.f32.mrf.mxu0
      %6140 = vmatprep.mubr.f32.mxu0 0.0
      %v6141 = vand.u32 %v4547, 4294901760
      %v6142 = vsub.f32 %v4547, %v6141
      %6143 = vmatmul.mubr.f32.gmra.mxu0 %v6142
      %v6144 = vpop.f32.mrf.mxu0
      %v6145 = vadd.f32 %v5649, %v6144
      %v6146 = vpop.f32.mrf.mxu0
      %6147 = vmatprep.mubr.f32.mxu0 0.0
      %v6148 = vand.u32 %v4550, 4294901760
      %v6149 = vsub.f32 %v4550, %v6148
      %6150 = vmatmul.mubr.f32.gmra.mxu0 %v6149
      %v6151 = vpop.f32.mrf.mxu0
      %v6152 = vadd.f32 %v5655, %v6151
      %v6153 = vpop.f32.mrf.mxu0
      %6154 = vmatprep.mubr.f32.mxu0 0.0
      %v6155 = vand.u32 %v4553, 4294901760
      %v6156 = vsub.f32 %v4553, %v6155
      %6157 = vmatmul.mubr.f32.gmra.mxu0 %v6156
      %v6158 = vpop.f32.mrf.mxu0
      %v6159 = vadd.f32 %v5661, %v6158
      %v6160 = vpop.f32.mrf.mxu0
      %6161 = vmatprep.mubr.f32.mxu0 0.0
      %v6162 = vand.u32 %v4556, 4294901760
      %v6163 = vsub.f32 %v4556, %v6162
      %6164 = vmatmul.mubr.f32.gmra.mxu0 %v6163
      %v6165 = vpop.f32.mrf.mxu0
      %v6166 = vadd.f32 %v5667, %v6165
      %v6167 = vpop.f32.mrf.mxu0
      %6168 = vmatprep.mubr.f32.mxu0 0.0
      %v6169 = vand.u32 %v4559, 4294901760
      %v6170 = vsub.f32 %v4559, %v6169
      %6171 = vmatmul.mubr.f32.gmra.mxu0 %v6170
      %v6172 = vpop.f32.mrf.mxu0
      %v6173 = vadd.f32 %v5673, %v6172
      %v6174 = vpop.f32.mrf.mxu0
      %6175 = vmatprep.mubr.f32.mxu0 0.0
      %v6176 = vand.u32 %v4562, 4294901760
      %v6177 = vsub.f32 %v4562, %v6176
      %6178 = vmatmul.mubr.f32.gmra.mxu0 %v6177
      %v6179 = vpop.f32.mrf.mxu0
      %v6180 = vadd.f32 %v5679, %v6179
      %v6181 = vpop.f32.mrf.mxu0
      %6182 = vmatprep.mubr.f32.mxu0 0.0
      %v6183 = vand.u32 %v4565, 4294901760
      %v6184 = vsub.f32 %v4565, %v6183
      %6185 = vmatmul.mubr.f32.gmra.mxu0 %v6184
      %v6186 = vpop.f32.mrf.mxu0
      %v6187 = vadd.f32 %v5685, %v6186
      %v6188 = vpop.f32.mrf.mxu0
      %6189 = vmatprep.mubr.f32.mxu0 0.0
      %v6190 = vand.u32 %v4568, 4294901760
      %v6191 = vsub.f32 %v4568, %v6190
      %6192 = vmatmul.mubr.f32.gmra.mxu0 %v6191
      %v6193 = vpop.f32.mrf.mxu0
      %v6194 = vadd.f32 %v5691, %v6193
      %v6195 = vpop.f32.mrf.mxu0
      %6196 = vmatprep.mubr.f32.mxu0 0.0
      %v6197 = vand.u32 %v4571, 4294901760
      %v6198 = vsub.f32 %v4571, %v6197
      %6199 = vmatmul.mubr.f32.gmra.mxu0 %v6198
      %v6200 = vpop.f32.mrf.mxu0
      %v6201 = vadd.f32 %v5697, %v6200
      %v6202 = vpop.f32.mrf.mxu0
      %6203 = vmatprep.mubr.f32.mxu0 0.0
      %v6204 = vand.u32 %v4574, 4294901760
      %v6205 = vsub.f32 %v4574, %v6204
      %6206 = vmatmul.mubr.f32.gmra.mxu0 %v6205
      %v6207 = vpop.f32.mrf.mxu0
      %v6208 = vadd.f32 %v5703, %v6207
      %v6209 = vpop.f32.mrf.mxu0
      %6210 = vmatprep.mubr.f32.mxu0 0.0
      %v6211 = vand.u32 %v4577, 4294901760
      %v6212 = vsub.f32 %v4577, %v6211
      %6213 = vmatmul.mubr.f32.gmra.mxu0 %v6212
      %v6214 = vpop.f32.mrf.mxu0
      %v6215 = vadd.f32 %v5709, %v6214
      %v6216 = vpop.f32.mrf.mxu0
      %6217 = vmatprep.mubr.f32.mxu0 0.0
      %v6218 = vand.u32 %v4580, 4294901760
      %v6219 = vsub.f32 %v4580, %v6218
      %6220 = vmatmul.mubr.f32.gmra.mxu0 %v6219
      %v6221 = vpop.f32.mrf.mxu0
      %v6222 = vadd.f32 %v5715, %v6221
      %v6223 = vpop.f32.mrf.mxu0
      %6224 = vmatprep.mubr.f32.mxu0 0.0
      %v6225 = vand.u32 %v4583, 4294901760
      %v6226 = vsub.f32 %v4583, %v6225
      %6227 = vmatmul.mubr.f32.gmra.mxu0 %v6226
      %v6228 = vpop.f32.mrf.mxu0
      %v6229 = vadd.f32 %v5721, %v6228
      %v6230 = vpop.f32.mrf.mxu0
      %6231 = vmatprep.mubr.f32.mxu0 0.0
      %v6232 = vand.u32 %v4586, 4294901760
      %v6233 = vsub.f32 %v4586, %v6232
      %6234 = vmatmul.mubr.f32.gmra.mxu0 %v6233
      %v6235 = vpop.f32.mrf.mxu0
      %v6236 = vadd.f32 %v5727, %v6235
      %v6237 = vpop.f32.mrf.mxu0
      %6238 = vmatprep.mubr.f32.mxu0 0.0
      %v6239 = vand.u32 %v4589, 4294901760
      %v6240 = vsub.f32 %v4589, %v6239
      %6241 = vmatmul.mubr.f32.gmra.mxu0 %v6240
      %v6242 = vpop.f32.mrf.mxu0
      %v6243 = vadd.f32 %v5733, %v6242
      %v6244 = vpop.f32.mrf.mxu0
      %6245 = vmatprep.mubr.f32.mxu0 0.0
      %v6246 = vand.u32 %v4592, 4294901760
      %v6247 = vsub.f32 %v4592, %v6246
      %6248 = vmatmul.mubr.f32.gmra.mxu0 %v6247
      %v6249 = vpop.f32.mrf.mxu0
      %v6250 = vadd.f32 %v5739, %v6249
      %v6251 = vpop.f32.mrf.mxu0
      %6252 = vmatprep.mubr.f32.mxu0 0.0
      %v6253 = vand.u32 %v4595, 4294901760
      %v6254 = vsub.f32 %v4595, %v6253
      %6255 = vmatmul.mubr.f32.gmra.mxu0 %v6254
      %v6256 = vpop.f32.mrf.mxu0
      %v6257 = vadd.f32 %v5745, %v6256
      %v6258 = vpop.f32.mrf.mxu0
      %6259 = vmatprep.mubr.f32.mxu0 0.0
      %v6260 = vand.u32 %v4598, 4294901760
      %v6261 = vsub.f32 %v4598, %v6260
      %6262 = vmatmul.mubr.f32.gmra.mxu0 %v6261
      %v6263 = vpop.f32.mrf.mxu0
      %v6264 = vadd.f32 %v5751, %v6263
      %v6265 = vpop.f32.mrf.mxu0
      %6266 = vmatprep.mubr.f32.mxu0 0.0
      %v6267 = vand.u32 %v4601, 4294901760
      %v6268 = vsub.f32 %v4601, %v6267
      %6269 = vmatmul.mubr.f32.gmra.mxu0 %v6268
      %v6270 = vpop.f32.mrf.mxu0
      %v6271 = vadd.f32 %v5757, %v6270
      %v6272 = vpop.f32.mrf.mxu0
      %6273 = vmatprep.mubr.f32.mxu0 0.0
      %v6274 = vand.u32 %v4604, 4294901760
      %v6275 = vsub.f32 %v4604, %v6274
      %6276 = vmatmul.mubr.f32.gmra.mxu0 %v6275
      %v6277 = vpop.f32.mrf.mxu0
      %v6278 = vadd.f32 %v5763, %v6277
      %v6279 = vpop.f32.mrf.mxu0
      %6280 = vmatprep.mubr.f32.mxu0 0.0
      %v6281 = vand.u32 %v4607, 4294901760
      %v6282 = vsub.f32 %v4607, %v6281
      %6283 = vmatmul.mubr.f32.gmra.mxu0 %v6282
      %v6284 = vpop.f32.mrf.mxu0
      %v6285 = vadd.f32 %v5769, %v6284
      %v6286 = vpop.f32.mrf.mxu0
      %6287 = vmatprep.mubr.f32.mxu0 0.0
      %v6288 = vand.u32 %v4610, 4294901760
      %v6289 = vsub.f32 %v4610, %v6288
      %6290 = vmatmul.mubr.f32.gmra.mxu0 %v6289
      %v6291 = vpop.f32.mrf.mxu0
      %v6292 = vadd.f32 %v5775, %v6291
      %v6293 = vpop.f32.mrf.mxu0
      %6294 = vmatprep.mubr.f32.mxu0 0.0
      %v6295 = vand.u32 %v4613, 4294901760
      %v6296 = vsub.f32 %v4613, %v6295
      %6297 = vmatmul.mubr.f32.gmra.mxu0 %v6296
      %v6298 = vpop.f32.mrf.mxu0
      %v6299 = vadd.f32 %v5781, %v6298
      %v6300 = vpop.f32.mrf.mxu0
      %6301 = vmatprep.mubr.f32.mxu0 0.0
      %v6302 = vand.u32 %v4616, 4294901760
      %v6303 = vsub.f32 %v4616, %v6302
      %6304 = vmatmul.mubr.f32.gmra.mxu0 %v6303
      %v6305 = vpop.f32.mrf.mxu0
      %v6306 = vadd.f32 %v5787, %v6305
      %v6307 = vpop.f32.mrf.mxu0
      %6308 = vmatprep.mubr.f32.mxu0 0.0
      %v6309 = vand.u32 %v4619, 4294901760
      %v6310 = vsub.f32 %v4619, %v6309
      %6311 = vmatmul.mubr.f32.gmra.mxu0 %v6310
      %v6312 = vpop.f32.mrf.mxu0
      %v6313 = vadd.f32 %v5793, %v6312
      %v6314 = vpop.f32.mrf.mxu0
      %6315 = vmatprep.mubr.f32.mxu0 0.0
      %v6316 = vand.u32 %v4622, 4294901760
      %v6317 = vsub.f32 %v4622, %v6316
      %6318 = vmatmul.mubr.f32.gmra.mxu0 %v6317
      %v6319 = vpop.f32.mrf.mxu0
      %v6320 = vadd.f32 %v5799, %v6319
      %v6321 = vpop.f32.mrf.mxu0
      %6322 = vmatprep.mubr.f32.mxu0 0.0
      %v6323 = vand.u32 %v4625, 4294901760
      %v6324 = vsub.f32 %v4625, %v6323
      %6325 = vmatmul.mubr.f32.gmra.mxu0 %v6324
      %v6326 = vpop.f32.mrf.mxu0
      %v6327 = vadd.f32 %v5805, %v6326
      %v6328 = vpop.f32.mrf.mxu0
      %6329 = vmatprep.mubr.f32.mxu0 0.0
      %v6330 = vand.u32 %v4628, 4294901760
      %v6331 = vsub.f32 %v4628, %v6330
      %6332 = vmatmul.mubr.f32.gmra.mxu0 %v6331
      %v6333 = vpop.f32.mrf.mxu0
      %v6334 = vadd.f32 %v5811, %v6333
      %v6335 = vpop.f32.mrf.mxu0
      %6336 = vmatprep.mubr.f32.mxu0 0.0
      %v6337 = vand.u32 %v4631, 4294901760
      %v6338 = vsub.f32 %v4631, %v6337
      %6339 = vmatmul.mubr.f32.gmra.mxu0 %v6338
      %v6340 = vpop.f32.mrf.mxu0
      %v6341 = vadd.f32 %v5817, %v6340
      %v6342 = vpop.f32.mrf.mxu0
      %6343 = vmatprep.mubr.f32.mxu0 0.0
      %v6344 = vand.u32 %v4634, 4294901760
      %v6345 = vsub.f32 %v4634, %v6344
      %6346 = vmatmul.mubr.f32.gmra.mxu0 %v6345
      %v6347 = vpop.f32.mrf.mxu0
      %v6348 = vadd.f32 %v5823, %v6347
      %v6349 = vpop.f32.mrf.mxu0
      %6350 = vmatprep.mubr.f32.mxu0 0.0
      %v6351 = vand.u32 %v4637, 4294901760
      %v6352 = vsub.f32 %v4637, %v6351
      %6353 = vmatmul.mubr.f32.gmra.mxu0 %v6352
      %v6354 = vpop.f32.mrf.mxu0
      %v6355 = vadd.f32 %v5829, %v6354
      %v6356 = vpop.f32.mrf.mxu0
      %6357 = vmatprep.mubr.f32.mxu0 0.0
      %v6358 = vand.u32 %v4640, 4294901760
      %v6359 = vsub.f32 %v4640, %v6358
      %6360 = vmatmul.mubr.f32.gmra.mxu0 %v6359
      %v6361 = vpop.f32.mrf.mxu0
      %v6362 = vadd.f32 %v5835, %v6361
      %v6363 = vpop.f32.mrf.mxu0
      %6364 = vmatprep.mubr.f32.mxu0 0.0
      %v6365 = vand.u32 %v4643, 4294901760
      %v6366 = vsub.f32 %v4643, %v6365
      %6367 = vmatmul.mubr.f32.gmra.mxu0 %v6366
      %v6368 = vpop.f32.mrf.mxu0
      %v6369 = vadd.f32 %v5841, %v6368
      %v6370 = vpop.f32.mrf.mxu0
      %6371 = vmatprep.mubr.f32.mxu0 0.0
      %v6372 = vand.u32 %v4646, 4294901760
      %v6373 = vsub.f32 %v4646, %v6372
      %6374 = vmatmul.mubr.f32.gmra.mxu0 %v6373
      %v6375 = vpop.f32.mrf.mxu0
      %v6376 = vadd.f32 %v5847, %v6375
      %v6377 = vpop.f32.mrf.mxu0
      %6378 = vdwg.mxu0
      %6379 = vmatprep.subr.mxu0 0.0
      %6380 = vmatpush1.msra.mxu0 0.0
      %6381 = vmatprep.subr.mxu0 0.0
      %6382 = vmatpush1.msra.mxu0 0.0
      %6383 = vmatprep.subr.mxu0 0.0
      %6384 = vmatpush1.msra.mxu0 0.0
      %6385 = vmatprep.subr.mxu0 0.0
      %6386 = vmatpush1.msra.mxu0 0.0
      %6387 = vmatprep.subr.mxu0 0.0
      %6388 = vmatpush1.msra.mxu0 0.0
      %6389 = vmatprep.subr.mxu0 0.0
      %6390 = vmatpush1.msra.mxu0 0.0
      %6391 = vmatprep.subr.mxu0 0.0
      %6392 = vmatpush1.msra.mxu0 0.0
      %6393 = vmatprep.subr.mxu0 0.0
      %6394 = vmatpush1.msra.mxu0 0.0
      %6395 = vmatprep.subr.mxu0 0.0
      %v6396 = vand.u32 %v4447, 4294901760
      %6397 = vmatpush1.msra.mxu0 %v6396
      %6398 = vmatprep.subr.mxu0 0.0
      %v6399 = vand.u32 %v4446, 4294901760
      %6400 = vmatpush1.msra.mxu0 %v6399
      %6401 = vmatprep.subr.mxu0 0.0
      %v6402 = vand.u32 %v4445, 4294901760
      %6403 = vmatpush1.msra.mxu0 %v6402
      %6404 = vmatprep.subr.mxu0 0.0
      %v6405 = vand.u32 %v4444, 4294901760
      %6406 = vmatpush1.msra.mxu0 %v6405
      %6407 = vmatprep.subr.mxu0 0.0
      %v6408 = vand.u32 %v4443, 4294901760
      %6409 = vmatpush1.msra.mxu0 %v6408
      %6410 = vmatprep.subr.mxu0 0.0
      %v6411 = vand.u32 %v4442, 4294901760
      %6412 = vmatpush1.msra.mxu0 %v6411
      %6413 = vmatprep.subr.mxu0 0.0
      %v6414 = vand.u32 %v4441, 4294901760
      %6415 = vmatpush1.msra.mxu0 %v6414
      %6416 = vmatprep.subr.mxu0 0.0
      %v6417 = vand.u32 %v4440, 4294901760
      %6418 = vmatpush1.msra.mxu0 %v6417
      %6419 = vmatprep.subr.mxu0 0.0
      %6420 = vmatpush2.msra.mxu0 0.0
      %6421 = vmatprep.subr.mxu0 0.0
      %6422 = vmatpush2.msra.mxu0 0.0
      %6423 = vmatprep.subr.mxu0 0.0
      %6424 = vmatpush2.msra.mxu0 0.0
      %6425 = vmatprep.subr.mxu0 0.0
      %6426 = vmatpush2.msra.mxu0 0.0
      %6427 = vmatprep.subr.mxu0 0.0
      %6428 = vmatpush2.msra.mxu0 0.0
      %6429 = vmatprep.subr.mxu0 0.0
      %6430 = vmatpush2.msra.mxu0 0.0
      %6431 = vmatprep.subr.mxu0 0.0
      %6432 = vmatpush2.msra.mxu0 0.0
      %6433 = vmatprep.subr.mxu0 0.0
      %6434 = vmatpush2.msra.mxu0 0.0
      %6435 = vmatprep.subr.mxu0 0.0
      %6436 = vmatpush2.msra.mxu0 0.0
      %6437 = vmatprep.subr.mxu0 0.0
      %6438 = vmatpush2.msra.mxu0 0.0
      %6439 = vmatprep.subr.mxu0 0.0
      %6440 = vmatpush2.msra.mxu0 0.0
      %6441 = vmatprep.subr.mxu0 0.0
      %6442 = vmatpush2.msra.mxu0 0.0
      %6443 = vmatprep.subr.mxu0 0.0
      %6444 = vmatpush2.msra.mxu0 0.0
      %6445 = vmatprep.subr.mxu0 0.0
      %6446 = vmatpush2.msra.mxu0 0.0
      %6447 = vmatprep.subr.mxu0 0.0
      %6448 = vmatpush2.msra.mxu0 0.0
      %6449 = vmatprep.subr.mxu0 0.0
      %6450 = vmatpush2.msra.mxu0 0.0
      %6451 = vmatprep.mubr.f32.mxu0 0.0
      %v6452 = vand.u32 %v4457, 4294901760
      %v6453 = vsub.f32 %v4457, %v6452
      %v6454 = vand.u32 %v6453, 4294901760
      %6455 = vmatmul.mubr.f32.gmra.mxu0 %v6454
      %v6456 = vpop.f32.mrf.mxu0
      %v6457 = vadd.f32 %v5935, %v6456
      %v6458 = vpop.f32.mrf.mxu0
      %6459 = vmatprep.mubr.f32.mxu0 0.0
      %v6460 = vand.u32 %v4460, 4294901760
      %v6461 = vsub.f32 %v4460, %v6460
      %v6462 = vand.u32 %v6461, 4294901760
      %6463 = vmatmul.mubr.f32.gmra.mxu0 %v6462
      %v6464 = vpop.f32.mrf.mxu0
      %v6465 = vadd.f32 %v5942, %v6464
      %v6466 = vpop.f32.mrf.mxu0
      %6467 = vmatprep.mubr.f32.mxu0 0.0
      %v6468 = vand.u32 %v4463, 4294901760
      %v6469 = vsub.f32 %v4463, %v6468
      %v6470 = vand.u32 %v6469, 4294901760
      %6471 = vmatmul.mubr.f32.gmra.mxu0 %v6470
      %v6472 = vpop.f32.mrf.mxu0
      %v6473 = vadd.f32 %v5949, %v6472
      %v6474 = vpop.f32.mrf.mxu0
      %6475 = vmatprep.mubr.f32.mxu0 0.0
      %v6476 = vand.u32 %v4466, 4294901760
      %v6477 = vsub.f32 %v4466, %v6476
      %v6478 = vand.u32 %v6477, 4294901760
      %6479 = vmatmul.mubr.f32.gmra.mxu0 %v6478
      %v6480 = vpop.f32.mrf.mxu0
      %v6481 = vadd.f32 %v5956, %v6480
      %v6482 = vpop.f32.mrf.mxu0
      %6483 = vmatprep.mubr.f32.mxu0 0.0
      %v6484 = vand.u32 %v4469, 4294901760
      %v6485 = vsub.f32 %v4469, %v6484
      %v6486 = vand.u32 %v6485, 4294901760
      %6487 = vmatmul.mubr.f32.gmra.mxu0 %v6486
      %v6488 = vpop.f32.mrf.mxu0
      %v6489 = vadd.f32 %v5963, %v6488
      %v6490 = vpop.f32.mrf.mxu0
      %6491 = vmatprep.mubr.f32.mxu0 0.0
      %v6492 = vand.u32 %v4472, 4294901760
      %v6493 = vsub.f32 %v4472, %v6492
      %v6494 = vand.u32 %v6493, 4294901760
      %6495 = vmatmul.mubr.f32.gmra.mxu0 %v6494
      %v6496 = vpop.f32.mrf.mxu0
      %v6497 = vadd.f32 %v5970, %v6496
      %v6498 = vpop.f32.mrf.mxu0
      %6499 = vmatprep.mubr.f32.mxu0 0.0
      %v6500 = vand.u32 %v4475, 4294901760
      %v6501 = vsub.f32 %v4475, %v6500
      %v6502 = vand.u32 %v6501, 4294901760
      %6503 = vmatmul.mubr.f32.gmra.mxu0 %v6502
      %v6504 = vpop.f32.mrf.mxu0
      %v6505 = vadd.f32 %v5977, %v6504
      %v6506 = vpop.f32.mrf.mxu0
      %6507 = vmatprep.mubr.f32.mxu0 0.0
      %v6508 = vand.u32 %v4478, 4294901760
      %v6509 = vsub.f32 %v4478, %v6508
      %v6510 = vand.u32 %v6509, 4294901760
      %6511 = vmatmul.mubr.f32.gmra.mxu0 %v6510
      %v6512 = vpop.f32.mrf.mxu0
      %v6513 = vadd.f32 %v5984, %v6512
      %v6514 = vpop.f32.mrf.mxu0
      %6515 = vmatprep.mubr.f32.mxu0 0.0
      %v6516 = vand.u32 %v4481, 4294901760
      %v6517 = vsub.f32 %v4481, %v6516
      %v6518 = vand.u32 %v6517, 4294901760
      %6519 = vmatmul.mubr.f32.gmra.mxu0 %v6518
      %v6520 = vpop.f32.mrf.mxu0
      %v6521 = vadd.f32 %v5991, %v6520
      %v6522 = vpop.f32.mrf.mxu0
      %6523 = vmatprep.mubr.f32.mxu0 0.0
      %v6524 = vand.u32 %v4484, 4294901760
      %v6525 = vsub.f32 %v4484, %v6524
      %v6526 = vand.u32 %v6525, 4294901760
      %6527 = vmatmul.mubr.f32.gmra.mxu0 %v6526
      %v6528 = vpop.f32.mrf.mxu0
      %v6529 = vadd.f32 %v5998, %v6528
      %v6530 = vpop.f32.mrf.mxu0
      %6531 = vmatprep.mubr.f32.mxu0 0.0
      %v6532 = vand.u32 %v4487, 4294901760
      %v6533 = vsub.f32 %v4487, %v6532
      %v6534 = vand.u32 %v6533, 4294901760
      %6535 = vmatmul.mubr.f32.gmra.mxu0 %v6534
      %v6536 = vpop.f32.mrf.mxu0
      %v6537 = vadd.f32 %v6005, %v6536
      %v6538 = vpop.f32.mrf.mxu0
      %6539 = vmatprep.mubr.f32.mxu0 0.0
      %v6540 = vand.u32 %v4490, 4294901760
      %v6541 = vsub.f32 %v4490, %v6540
      %v6542 = vand.u32 %v6541, 4294901760
      %6543 = vmatmul.mubr.f32.gmra.mxu0 %v6542
      %v6544 = vpop.f32.mrf.mxu0
      %v6545 = vadd.f32 %v6012, %v6544
      %v6546 = vpop.f32.mrf.mxu0
      %6547 = vmatprep.mubr.f32.mxu0 0.0
      %v6548 = vand.u32 %v4493, 4294901760
      %v6549 = vsub.f32 %v4493, %v6548
      %v6550 = vand.u32 %v6549, 4294901760
      %6551 = vmatmul.mubr.f32.gmra.mxu0 %v6550
      %v6552 = vpop.f32.mrf.mxu0
      %v6553 = vadd.f32 %v6019, %v6552
      %v6554 = vpop.f32.mrf.mxu0
      %6555 = vmatprep.mubr.f32.mxu0 0.0
      %v6556 = vand.u32 %v4496, 4294901760
      %v6557 = vsub.f32 %v4496, %v6556
      %v6558 = vand.u32 %v6557, 4294901760
      %6559 = vmatmul.mubr.f32.gmra.mxu0 %v6558
      %v6560 = vpop.f32.mrf.mxu0
      %v6561 = vadd.f32 %v6026, %v6560
      %v6562 = vpop.f32.mrf.mxu0
      %6563 = vmatprep.mubr.f32.mxu0 0.0
      %v6564 = vand.u32 %v4499, 4294901760
      %v6565 = vsub.f32 %v4499, %v6564
      %v6566 = vand.u32 %v6565, 4294901760
      %6567 = vmatmul.mubr.f32.gmra.mxu0 %v6566
      %v6568 = vpop.f32.mrf.mxu0
      %v6569 = vadd.f32 %v6033, %v6568
      %v6570 = vpop.f32.mrf.mxu0
      %6571 = vmatprep.mubr.f32.mxu0 0.0
      %v6572 = vand.u32 %v4502, 4294901760
      %v6573 = vsub.f32 %v4502, %v6572
      %v6574 = vand.u32 %v6573, 4294901760
      %6575 = vmatmul.mubr.f32.gmra.mxu0 %v6574
      %v6576 = vpop.f32.mrf.mxu0
      %v6577 = vadd.f32 %v6040, %v6576
      %v6578 = vpop.f32.mrf.mxu0
      %6579 = vmatprep.mubr.f32.mxu0 0.0
      %v6580 = vand.u32 %v4505, 4294901760
      %v6581 = vsub.f32 %v4505, %v6580
      %v6582 = vand.u32 %v6581, 4294901760
      %6583 = vmatmul.mubr.f32.gmra.mxu0 %v6582
      %v6584 = vpop.f32.mrf.mxu0
      %v6585 = vadd.f32 %v6047, %v6584
      %v6586 = vpop.f32.mrf.mxu0
      %6587 = vmatprep.mubr.f32.mxu0 0.0
      %v6588 = vand.u32 %v4508, 4294901760
      %v6589 = vsub.f32 %v4508, %v6588
      %v6590 = vand.u32 %v6589, 4294901760
      %6591 = vmatmul.mubr.f32.gmra.mxu0 %v6590
      %v6592 = vpop.f32.mrf.mxu0
      %v6593 = vadd.f32 %v6054, %v6592
      %v6594 = vpop.f32.mrf.mxu0
      %6595 = vmatprep.mubr.f32.mxu0 0.0
      %v6596 = vand.u32 %v4511, 4294901760
      %v6597 = vsub.f32 %v4511, %v6596
      %v6598 = vand.u32 %v6597, 4294901760
      %6599 = vmatmul.mubr.f32.gmra.mxu0 %v6598
      %v6600 = vpop.f32.mrf.mxu0
      %v6601 = vadd.f32 %v6061, %v6600
      %v6602 = vpop.f32.mrf.mxu0
      %6603 = vmatprep.mubr.f32.mxu0 0.0
      %v6604 = vand.u32 %v4514, 4294901760
      %v6605 = vsub.f32 %v4514, %v6604
      %v6606 = vand.u32 %v6605, 4294901760
      %6607 = vmatmul.mubr.f32.gmra.mxu0 %v6606
      %v6608 = vpop.f32.mrf.mxu0
      %v6609 = vadd.f32 %v6068, %v6608
      %v6610 = vpop.f32.mrf.mxu0
      %6611 = vmatprep.mubr.f32.mxu0 0.0
      %v6612 = vand.u32 %v4517, 4294901760
      %v6613 = vsub.f32 %v4517, %v6612
      %v6614 = vand.u32 %v6613, 4294901760
      %6615 = vmatmul.mubr.f32.gmra.mxu0 %v6614
      %v6616 = vpop.f32.mrf.mxu0
      %v6617 = vadd.f32 %v6075, %v6616
      %v6618 = vpop.f32.mrf.mxu0
      %6619 = vmatprep.mubr.f32.mxu0 0.0
      %v6620 = vand.u32 %v4520, 4294901760
      %v6621 = vsub.f32 %v4520, %v6620
      %v6622 = vand.u32 %v6621, 4294901760
      %6623 = vmatmul.mubr.f32.gmra.mxu0 %v6622
      %v6624 = vpop.f32.mrf.mxu0
      %v6625 = vadd.f32 %v6082, %v6624
      %v6626 = vpop.f32.mrf.mxu0
      %6627 = vmatprep.mubr.f32.mxu0 0.0
      %v6628 = vand.u32 %v4523, 4294901760
      %v6629 = vsub.f32 %v4523, %v6628
      %v6630 = vand.u32 %v6629, 4294901760
      %6631 = vmatmul.mubr.f32.gmra.mxu0 %v6630
      %v6632 = vpop.f32.mrf.mxu0
      %v6633 = vadd.f32 %v6089, %v6632
      %v6634 = vpop.f32.mrf.mxu0
      %6635 = vmatprep.mubr.f32.mxu0 0.0
      %v6636 = vand.u32 %v4526, 4294901760
      %v6637 = vsub.f32 %v4526, %v6636
      %v6638 = vand.u32 %v6637, 4294901760
      %6639 = vmatmul.mubr.f32.gmra.mxu0 %v6638
      %v6640 = vpop.f32.mrf.mxu0
      %v6641 = vadd.f32 %v6096, %v6640
      %v6642 = vpop.f32.mrf.mxu0
      %6643 = vmatprep.mubr.f32.mxu0 0.0
      %v6644 = vand.u32 %v4529, 4294901760
      %v6645 = vsub.f32 %v4529, %v6644
      %v6646 = vand.u32 %v6645, 4294901760
      %6647 = vmatmul.mubr.f32.gmra.mxu0 %v6646
      %v6648 = vpop.f32.mrf.mxu0
      %v6649 = vadd.f32 %v6103, %v6648
      %v6650 = vpop.f32.mrf.mxu0
      %6651 = vmatprep.mubr.f32.mxu0 0.0
      %v6652 = vand.u32 %v4532, 4294901760
      %v6653 = vsub.f32 %v4532, %v6652
      %v6654 = vand.u32 %v6653, 4294901760
      %6655 = vmatmul.mubr.f32.gmra.mxu0 %v6654
      %v6656 = vpop.f32.mrf.mxu0
      %v6657 = vadd.f32 %v6110, %v6656
      %v6658 = vpop.f32.mrf.mxu0
      %6659 = vmatprep.mubr.f32.mxu0 0.0
      %v6660 = vand.u32 %v4535, 4294901760
      %v6661 = vsub.f32 %v4535, %v6660
      %v6662 = vand.u32 %v6661, 4294901760
      %6663 = vmatmul.mubr.f32.gmra.mxu0 %v6662
      %v6664 = vpop.f32.mrf.mxu0
      %v6665 = vadd.f32 %v6117, %v6664
      %v6666 = vpop.f32.mrf.mxu0
      %6667 = vmatprep.mubr.f32.mxu0 0.0
      %v6668 = vand.u32 %v4538, 4294901760
      %v6669 = vsub.f32 %v4538, %v6668
      %v6670 = vand.u32 %v6669, 4294901760
      %6671 = vmatmul.mubr.f32.gmra.mxu0 %v6670
      %v6672 = vpop.f32.mrf.mxu0
      %v6673 = vadd.f32 %v6124, %v6672
      %v6674 = vpop.f32.mrf.mxu0
      %6675 = vmatprep.mubr.f32.mxu0 0.0
      %v6676 = vand.u32 %v4541, 4294901760
      %v6677 = vsub.f32 %v4541, %v6676
      %v6678 = vand.u32 %v6677, 4294901760
      %6679 = vmatmul.mubr.f32.gmra.mxu0 %v6678
      %v6680 = vpop.f32.mrf.mxu0
      %v6681 = vadd.f32 %v6131, %v6680
      %v6682 = vpop.f32.mrf.mxu0
      %6683 = vmatprep.mubr.f32.mxu0 0.0
      %v6684 = vand.u32 %v4544, 4294901760
      %v6685 = vsub.f32 %v4544, %v6684
      %v6686 = vand.u32 %v6685, 4294901760
      %6687 = vmatmul.mubr.f32.gmra.mxu0 %v6686
      %v6688 = vpop.f32.mrf.mxu0
      %v6689 = vadd.f32 %v6138, %v6688
      %v6690 = vpop.f32.mrf.mxu0
      %6691 = vmatprep.mubr.f32.mxu0 0.0
      %v6692 = vand.u32 %v4547, 4294901760
      %v6693 = vsub.f32 %v4547, %v6692
      %v6694 = vand.u32 %v6693, 4294901760
      %6695 = vmatmul.mubr.f32.gmra.mxu0 %v6694
      %v6696 = vpop.f32.mrf.mxu0
      %v6697 = vadd.f32 %v6145, %v6696
      %v6698 = vpop.f32.mrf.mxu0
      %6699 = vmatprep.mubr.f32.mxu0 0.0
      %v6700 = vand.u32 %v4550, 4294901760
      %v6701 = vsub.f32 %v4550, %v6700
      %v6702 = vand.u32 %v6701, 4294901760
      %6703 = vmatmul.mubr.f32.gmra.mxu0 %v6702
      %v6704 = vpop.f32.mrf.mxu0
      %v6705 = vadd.f32 %v6152, %v6704
      %v6706 = vpop.f32.mrf.mxu0
      %6707 = vmatprep.mubr.f32.mxu0 0.0
      %v6708 = vand.u32 %v4553, 4294901760
      %v6709 = vsub.f32 %v4553, %v6708
      %v6710 = vand.u32 %v6709, 4294901760
      %6711 = vmatmul.mubr.f32.gmra.mxu0 %v6710
      %v6712 = vpop.f32.mrf.mxu0
      %v6713 = vadd.f32 %v6159, %v6712
      %v6714 = vpop.f32.mrf.mxu0
      %6715 = vmatprep.mubr.f32.mxu0 0.0
      %v6716 = vand.u32 %v4556, 4294901760
      %v6717 = vsub.f32 %v4556, %v6716
      %v6718 = vand.u32 %v6717, 4294901760
      %6719 = vmatmul.mubr.f32.gmra.mxu0 %v6718
      %v6720 = vpop.f32.mrf.mxu0
      %v6721 = vadd.f32 %v6166, %v6720
      %v6722 = vpop.f32.mrf.mxu0
      %6723 = vmatprep.mubr.f32.mxu0 0.0
      %v6724 = vand.u32 %v4559, 4294901760
      %v6725 = vsub.f32 %v4559, %v6724
      %v6726 = vand.u32 %v6725, 4294901760
      %6727 = vmatmul.mubr.f32.gmra.mxu0 %v6726
      %v6728 = vpop.f32.mrf.mxu0
      %v6729 = vadd.f32 %v6173, %v6728
      %v6730 = vpop.f32.mrf.mxu0
      %6731 = vmatprep.mubr.f32.mxu0 0.0
      %v6732 = vand.u32 %v4562, 4294901760
      %v6733 = vsub.f32 %v4562, %v6732
      %v6734 = vand.u32 %v6733, 4294901760
      %6735 = vmatmul.mubr.f32.gmra.mxu0 %v6734
      %v6736 = vpop.f32.mrf.mxu0
      %v6737 = vadd.f32 %v6180, %v6736
      %v6738 = vpop.f32.mrf.mxu0
      %6739 = vmatprep.mubr.f32.mxu0 0.0
      %v6740 = vand.u32 %v4565, 4294901760
      %v6741 = vsub.f32 %v4565, %v6740
      %v6742 = vand.u32 %v6741, 4294901760
      %6743 = vmatmul.mubr.f32.gmra.mxu0 %v6742
      %v6744 = vpop.f32.mrf.mxu0
      %v6745 = vadd.f32 %v6187, %v6744
      %v6746 = vpop.f32.mrf.mxu0
      %6747 = vmatprep.mubr.f32.mxu0 0.0
      %v6748 = vand.u32 %v4568, 4294901760
      %v6749 = vsub.f32 %v4568, %v6748
      %v6750 = vand.u32 %v6749, 4294901760
      %6751 = vmatmul.mubr.f32.gmra.mxu0 %v6750
      %v6752 = vpop.f32.mrf.mxu0
      %v6753 = vadd.f32 %v6194, %v6752
      %v6754 = vpop.f32.mrf.mxu0
      %6755 = vmatprep.mubr.f32.mxu0 0.0
      %v6756 = vand.u32 %v4571, 4294901760
      %v6757 = vsub.f32 %v4571, %v6756
      %v6758 = vand.u32 %v6757, 4294901760
      %6759 = vmatmul.mubr.f32.gmra.mxu0 %v6758
      %v6760 = vpop.f32.mrf.mxu0
      %v6761 = vadd.f32 %v6201, %v6760
      %v6762 = vpop.f32.mrf.mxu0
      %6763 = vmatprep.mubr.f32.mxu0 0.0
      %v6764 = vand.u32 %v4574, 4294901760
      %v6765 = vsub.f32 %v4574, %v6764
      %v6766 = vand.u32 %v6765, 4294901760
      %6767 = vmatmul.mubr.f32.gmra.mxu0 %v6766
      %v6768 = vpop.f32.mrf.mxu0
      %v6769 = vadd.f32 %v6208, %v6768
      %v6770 = vpop.f32.mrf.mxu0
      %6771 = vmatprep.mubr.f32.mxu0 0.0
      %v6772 = vand.u32 %v4577, 4294901760
      %v6773 = vsub.f32 %v4577, %v6772
      %v6774 = vand.u32 %v6773, 4294901760
      %6775 = vmatmul.mubr.f32.gmra.mxu0 %v6774
      %v6776 = vpop.f32.mrf.mxu0
      %v6777 = vadd.f32 %v6215, %v6776
      %v6778 = vpop.f32.mrf.mxu0
      %6779 = vmatprep.mubr.f32.mxu0 0.0
      %v6780 = vand.u32 %v4580, 4294901760
      %v6781 = vsub.f32 %v4580, %v6780
      %v6782 = vand.u32 %v6781, 4294901760
      %6783 = vmatmul.mubr.f32.gmra.mxu0 %v6782
      %v6784 = vpop.f32.mrf.mxu0
      %v6785 = vadd.f32 %v6222, %v6784
      %v6786 = vpop.f32.mrf.mxu0
      %6787 = vmatprep.mubr.f32.mxu0 0.0
      %v6788 = vand.u32 %v4583, 4294901760
      %v6789 = vsub.f32 %v4583, %v6788
      %v6790 = vand.u32 %v6789, 4294901760
      %6791 = vmatmul.mubr.f32.gmra.mxu0 %v6790
      %v6792 = vpop.f32.mrf.mxu0
      %v6793 = vadd.f32 %v6229, %v6792
      %v6794 = vpop.f32.mrf.mxu0
      %6795 = vmatprep.mubr.f32.mxu0 0.0
      %v6796 = vand.u32 %v4586, 4294901760
      %v6797 = vsub.f32 %v4586, %v6796
      %v6798 = vand.u32 %v6797, 4294901760
      %6799 = vmatmul.mubr.f32.gmra.mxu0 %v6798
      %v6800 = vpop.f32.mrf.mxu0
      %v6801 = vadd.f32 %v6236, %v6800
      %v6802 = vpop.f32.mrf.mxu0
      %6803 = vmatprep.mubr.f32.mxu0 0.0
      %v6804 = vand.u32 %v4589, 4294901760
      %v6805 = vsub.f32 %v4589, %v6804
      %v6806 = vand.u32 %v6805, 4294901760
      %6807 = vmatmul.mubr.f32.gmra.mxu0 %v6806
      %v6808 = vpop.f32.mrf.mxu0
      %v6809 = vadd.f32 %v6243, %v6808
      %v6810 = vpop.f32.mrf.mxu0
      %6811 = vmatprep.mubr.f32.mxu0 0.0
      %v6812 = vand.u32 %v4592, 4294901760
      %v6813 = vsub.f32 %v4592, %v6812
      %v6814 = vand.u32 %v6813, 4294901760
      %6815 = vmatmul.mubr.f32.gmra.mxu0 %v6814
      %v6816 = vpop.f32.mrf.mxu0
      %v6817 = vadd.f32 %v6250, %v6816
      %v6818 = vpop.f32.mrf.mxu0
      %6819 = vmatprep.mubr.f32.mxu0 0.0
      %v6820 = vand.u32 %v4595, 4294901760
      %v6821 = vsub.f32 %v4595, %v6820
      %v6822 = vand.u32 %v6821, 4294901760
      %6823 = vmatmul.mubr.f32.gmra.mxu0 %v6822
      %v6824 = vpop.f32.mrf.mxu0
      %v6825 = vadd.f32 %v6257, %v6824
      %v6826 = vpop.f32.mrf.mxu0
      %6827 = vmatprep.mubr.f32.mxu0 0.0
      %v6828 = vand.u32 %v4598, 4294901760
      %v6829 = vsub.f32 %v4598, %v6828
      %v6830 = vand.u32 %v6829, 4294901760
      %6831 = vmatmul.mubr.f32.gmra.mxu0 %v6830
      %v6832 = vpop.f32.mrf.mxu0
      %v6833 = vadd.f32 %v6264, %v6832
      %v6834 = vpop.f32.mrf.mxu0
      %6835 = vmatprep.mubr.f32.mxu0 0.0
      %v6836 = vand.u32 %v4601, 4294901760
      %v6837 = vsub.f32 %v4601, %v6836
      %v6838 = vand.u32 %v6837, 4294901760
      %6839 = vmatmul.mubr.f32.gmra.mxu0 %v6838
      %v6840 = vpop.f32.mrf.mxu0
      %v6841 = vadd.f32 %v6271, %v6840
      %v6842 = vpop.f32.mrf.mxu0
      %6843 = vmatprep.mubr.f32.mxu0 0.0
      %v6844 = vand.u32 %v4604, 4294901760
      %v6845 = vsub.f32 %v4604, %v6844
      %v6846 = vand.u32 %v6845, 4294901760
      %6847 = vmatmul.mubr.f32.gmra.mxu0 %v6846
      %v6848 = vpop.f32.mrf.mxu0
      %v6849 = vadd.f32 %v6278, %v6848
      %v6850 = vpop.f32.mrf.mxu0
      %6851 = vmatprep.mubr.f32.mxu0 0.0
      %v6852 = vand.u32 %v4607, 4294901760
      %v6853 = vsub.f32 %v4607, %v6852
      %v6854 = vand.u32 %v6853, 4294901760
      %6855 = vmatmul.mubr.f32.gmra.mxu0 %v6854
      %v6856 = vpop.f32.mrf.mxu0
      %v6857 = vadd.f32 %v6285, %v6856
      %v6858 = vpop.f32.mrf.mxu0
      %6859 = vmatprep.mubr.f32.mxu0 0.0
      %v6860 = vand.u32 %v4610, 4294901760
      %v6861 = vsub.f32 %v4610, %v6860
      %v6862 = vand.u32 %v6861, 4294901760
      %6863 = vmatmul.mubr.f32.gmra.mxu0 %v6862
      %v6864 = vpop.f32.mrf.mxu0
      %v6865 = vadd.f32 %v6292, %v6864
      %v6866 = vpop.f32.mrf.mxu0
      %6867 = vmatprep.mubr.f32.mxu0 0.0
      %v6868 = vand.u32 %v4613, 4294901760
      %v6869 = vsub.f32 %v4613, %v6868
      %v6870 = vand.u32 %v6869, 4294901760
      %6871 = vmatmul.mubr.f32.gmra.mxu0 %v6870
      %v6872 = vpop.f32.mrf.mxu0
      %v6873 = vadd.f32 %v6299, %v6872
      %v6874 = vpop.f32.mrf.mxu0
      %6875 = vmatprep.mubr.f32.mxu0 0.0
      %v6876 = vand.u32 %v4616, 4294901760
      %v6877 = vsub.f32 %v4616, %v6876
      %v6878 = vand.u32 %v6877, 4294901760
      %6879 = vmatmul.mubr.f32.gmra.mxu0 %v6878
      %v6880 = vpop.f32.mrf.mxu0
      %v6881 = vadd.f32 %v6306, %v6880
      %v6882 = vpop.f32.mrf.mxu0
      %6883 = vmatprep.mubr.f32.mxu0 0.0
      %v6884 = vand.u32 %v4619, 4294901760
      %v6885 = vsub.f32 %v4619, %v6884
      %v6886 = vand.u32 %v6885, 4294901760
      %6887 = vmatmul.mubr.f32.gmra.mxu0 %v6886
      %v6888 = vpop.f32.mrf.mxu0
      %v6889 = vadd.f32 %v6313, %v6888
      %v6890 = vpop.f32.mrf.mxu0
      %6891 = vmatprep.mubr.f32.mxu0 0.0
      %v6892 = vand.u32 %v4622, 4294901760
      %v6893 = vsub.f32 %v4622, %v6892
      %v6894 = vand.u32 %v6893, 4294901760
      %6895 = vmatmul.mubr.f32.gmra.mxu0 %v6894
      %v6896 = vpop.f32.mrf.mxu0
      %v6897 = vadd.f32 %v6320, %v6896
      %v6898 = vpop.f32.mrf.mxu0
      %6899 = vmatprep.mubr.f32.mxu0 0.0
      %v6900 = vand.u32 %v4625, 4294901760
      %v6901 = vsub.f32 %v4625, %v6900
      %v6902 = vand.u32 %v6901, 4294901760
      %6903 = vmatmul.mubr.f32.gmra.mxu0 %v6902
      %v6904 = vpop.f32.mrf.mxu0
      %v6905 = vadd.f32 %v6327, %v6904
      %v6906 = vpop.f32.mrf.mxu0
      %6907 = vmatprep.mubr.f32.mxu0 0.0
      %v6908 = vand.u32 %v4628, 4294901760
      %v6909 = vsub.f32 %v4628, %v6908
      %v6910 = vand.u32 %v6909, 4294901760
      %6911 = vmatmul.mubr.f32.gmra.mxu0 %v6910
      %v6912 = vpop.f32.mrf.mxu0
      %v6913 = vadd.f32 %v6334, %v6912
      %v6914 = vpop.f32.mrf.mxu0
      %6915 = vmatprep.mubr.f32.mxu0 0.0
      %v6916 = vand.u32 %v4631, 4294901760
      %v6917 = vsub.f32 %v4631, %v6916
      %v6918 = vand.u32 %v6917, 4294901760
      %6919 = vmatmul.mubr.f32.gmra.mxu0 %v6918
      %v6920 = vpop.f32.mrf.mxu0
      %v6921 = vadd.f32 %v6341, %v6920
      %v6922 = vpop.f32.mrf.mxu0
      %6923 = vmatprep.mubr.f32.mxu0 0.0
      %v6924 = vand.u32 %v4634, 4294901760
      %v6925 = vsub.f32 %v4634, %v6924
      %v6926 = vand.u32 %v6925, 4294901760
      %6927 = vmatmul.mubr.f32.gmra.mxu0 %v6926
      %v6928 = vpop.f32.mrf.mxu0
      %v6929 = vadd.f32 %v6348, %v6928
      %v6930 = vpop.f32.mrf.mxu0
      %6931 = vmatprep.mubr.f32.mxu0 0.0
      %v6932 = vand.u32 %v4637, 4294901760
      %v6933 = vsub.f32 %v4637, %v6932
      %v6934 = vand.u32 %v6933, 4294901760
      %6935 = vmatmul.mubr.f32.gmra.mxu0 %v6934
      %v6936 = vpop.f32.mrf.mxu0
      %v6937 = vadd.f32 %v6355, %v6936
      %v6938 = vpop.f32.mrf.mxu0
      %6939 = vmatprep.mubr.f32.mxu0 0.0
      %v6940 = vand.u32 %v4640, 4294901760
      %v6941 = vsub.f32 %v4640, %v6940
      %v6942 = vand.u32 %v6941, 4294901760
      %6943 = vmatmul.mubr.f32.gmra.mxu0 %v6942
      %v6944 = vpop.f32.mrf.mxu0
      %v6945 = vadd.f32 %v6362, %v6944
      %v6946 = vpop.f32.mrf.mxu0
      %6947 = vmatprep.mubr.f32.mxu0 0.0
      %v6948 = vand.u32 %v4643, 4294901760
      %v6949 = vsub.f32 %v4643, %v6948
      %v6950 = vand.u32 %v6949, 4294901760
      %6951 = vmatmul.mubr.f32.gmra.mxu0 %v6950
      %v6952 = vpop.f32.mrf.mxu0
      %v6953 = vadd.f32 %v6369, %v6952
      %v6954 = vpop.f32.mrf.mxu0
      %6955 = vmatprep.mubr.f32.mxu0 0.0
      %v6956 = vand.u32 %v4646, 4294901760
      %v6957 = vsub.f32 %v4646, %v6956
      %v6958 = vand.u32 %v6957, 4294901760
      %6959 = vmatmul.mubr.f32.gmra.mxu0 %v6958
      %v6960 = vpop.f32.mrf.mxu0
      %v6961 = vadd.f32 %v6376, %v6960
      %v6962 = vpop.f32.mrf.mxu0
      %6963 = vdwg.mxu0
      %6964 = vmatprep.subr.mxu0 0.0
      %6965 = vmatpush1.msra.mxu0 0.0
      %6966 = vmatprep.subr.mxu0 0.0
      %6967 = vmatpush1.msra.mxu0 0.0
      %6968 = vmatprep.subr.mxu0 0.0
      %6969 = vmatpush1.msra.mxu0 0.0
      %6970 = vmatprep.subr.mxu0 0.0
      %6971 = vmatpush1.msra.mxu0 0.0
      %6972 = vmatprep.subr.mxu0 0.0
      %6973 = vmatpush1.msra.mxu0 0.0
      %6974 = vmatprep.subr.mxu0 0.0
      %6975 = vmatpush1.msra.mxu0 0.0
      %6976 = vmatprep.subr.mxu0 0.0
      %6977 = vmatpush1.msra.mxu0 0.0
      %6978 = vmatprep.subr.mxu0 0.0
      %6979 = vmatpush1.msra.mxu0 0.0
      %6980 = vmatprep.subr.mxu0 0.0
      %v6981 = vand.u32 %v4447, 4294901760
      %v6982 = vsub.f32 %v4447, %v6981
      %v6983 = vand.u32 %v6982, 4294901760
      %6984 = vmatpush1.msra.mxu0 %v6983
      %6985 = vmatprep.subr.mxu0 0.0
      %v6986 = vand.u32 %v4446, 4294901760
      %v6987 = vsub.f32 %v4446, %v6986
      %v6988 = vand.u32 %v6987, 4294901760
      %6989 = vmatpush1.msra.mxu0 %v6988
      %6990 = vmatprep.subr.mxu0 0.0
      %v6991 = vand.u32 %v4445, 4294901760
      %v6992 = vsub.f32 %v4445, %v6991
      %v6993 = vand.u32 %v6992, 4294901760
      %6994 = vmatpush1.msra.mxu0 %v6993
      %6995 = vmatprep.subr.mxu0 0.0
      %v6996 = vand.u32 %v4444, 4294901760
      %v6997 = vsub.f32 %v4444, %v6996
      %v6998 = vand.u32 %v6997, 4294901760
      %6999 = vmatpush1.msra.mxu0 %v6998
      %7000 = vmatprep.subr.mxu0 0.0
      %v7001 = vand.u32 %v4443, 4294901760
      %v7002 = vsub.f32 %v4443, %v7001
      %v7003 = vand.u32 %v7002, 4294901760
      %7004 = vmatpush1.msra.mxu0 %v7003
      %7005 = vmatprep.subr.mxu0 0.0
      %v7006 = vand.u32 %v4442, 4294901760
      %v7007 = vsub.f32 %v4442, %v7006
      %v7008 = vand.u32 %v7007, 4294901760
      %7009 = vmatpush1.msra.mxu0 %v7008
      %7010 = vmatprep.subr.mxu0 0.0
      %v7011 = vand.u32 %v4441, 4294901760
      %v7012 = vsub.f32 %v4441, %v7011
      %v7013 = vand.u32 %v7012, 4294901760
      %7014 = vmatpush1.msra.mxu0 %v7013
      %7015 = vmatprep.subr.mxu0 0.0
      %v7016 = vand.u32 %v4440, 4294901760
      %v7017 = vsub.f32 %v4440, %v7016
      %v7018 = vand.u32 %v7017, 4294901760
      %7019 = vmatpush1.msra.mxu0 %v7018
      %7020 = vmatprep.subr.mxu0 0.0
      %7021 = vmatpush2.msra.mxu0 0.0
      %7022 = vmatprep.subr.mxu0 0.0
      %7023 = vmatpush2.msra.mxu0 0.0
      %7024 = vmatprep.subr.mxu0 0.0
      %7025 = vmatpush2.msra.mxu0 0.0
      %7026 = vmatprep.subr.mxu0 0.0
      %7027 = vmatpush2.msra.mxu0 0.0
      %7028 = vmatprep.subr.mxu0 0.0
      %7029 = vmatpush2.msra.mxu0 0.0
      %7030 = vmatprep.subr.mxu0 0.0
      %7031 = vmatpush2.msra.mxu0 0.0
      %7032 = vmatprep.subr.mxu0 0.0
      %7033 = vmatpush2.msra.mxu0 0.0
      %7034 = vmatprep.subr.mxu0 0.0
      %7035 = vmatpush2.msra.mxu0 0.0
      %7036 = vmatprep.subr.mxu0 0.0
      %7037 = vmatpush2.msra.mxu0 0.0
      %7038 = vmatprep.subr.mxu0 0.0
      %7039 = vmatpush2.msra.mxu0 0.0
      %7040 = vmatprep.subr.mxu0 0.0
      %7041 = vmatpush2.msra.mxu0 0.0
      %7042 = vmatprep.subr.mxu0 0.0
      %7043 = vmatpush2.msra.mxu0 0.0
      %7044 = vmatprep.subr.mxu0 0.0
      %7045 = vmatpush2.msra.mxu0 0.0
      %7046 = vmatprep.subr.mxu0 0.0
      %7047 = vmatpush2.msra.mxu0 0.0
      %7048 = vmatprep.subr.mxu0 0.0
      %7049 = vmatpush2.msra.mxu0 0.0
      %7050 = vmatprep.subr.mxu0 0.0
      %7051 = vmatpush2.msra.mxu0 0.0
      %7052 = vmatprep.mubr.f32.mxu0 0.0
      %v7053 = vand.u32 %v4457, 4294901760
      %7054 = vmatmul.mubr.f32.gmra.mxu0 %v7053
      %v7055 = vpop.f32.mrf.mxu0
      %v7056 = vadd.f32 %v6457, %v7055
      %v7057 = vpop.f32.mrf.mxu0
      %7058 = vmatprep.mubr.f32.mxu0 0.0
      %v7059 = vand.u32 %v4460, 4294901760
      %7060 = vmatmul.mubr.f32.gmra.mxu0 %v7059
      %v7061 = vpop.f32.mrf.mxu0
      %v7062 = vadd.f32 %v6465, %v7061
      %v7063 = vpop.f32.mrf.mxu0
      %7064 = vmatprep.mubr.f32.mxu0 0.0
      %v7065 = vand.u32 %v4463, 4294901760
      %7066 = vmatmul.mubr.f32.gmra.mxu0 %v7065
      %v7067 = vpop.f32.mrf.mxu0
      %v7068 = vadd.f32 %v6473, %v7067
      %v7069 = vpop.f32.mrf.mxu0
      %7070 = vmatprep.mubr.f32.mxu0 0.0
      %v7071 = vand.u32 %v4466, 4294901760
      %7072 = vmatmul.mubr.f32.gmra.mxu0 %v7071
      %v7073 = vpop.f32.mrf.mxu0
      %v7074 = vadd.f32 %v6481, %v7073
      %v7075 = vpop.f32.mrf.mxu0
      %7076 = vmatprep.mubr.f32.mxu0 0.0
      %v7077 = vand.u32 %v4469, 4294901760
      %7078 = vmatmul.mubr.f32.gmra.mxu0 %v7077
      %v7079 = vpop.f32.mrf.mxu0
      %v7080 = vadd.f32 %v6489, %v7079
      %v7081 = vpop.f32.mrf.mxu0
      %7082 = vmatprep.mubr.f32.mxu0 0.0
      %v7083 = vand.u32 %v4472, 4294901760
      %7084 = vmatmul.mubr.f32.gmra.mxu0 %v7083
      %v7085 = vpop.f32.mrf.mxu0
      %v7086 = vadd.f32 %v6497, %v7085
      %v7087 = vpop.f32.mrf.mxu0
      %7088 = vmatprep.mubr.f32.mxu0 0.0
      %v7089 = vand.u32 %v4475, 4294901760
      %7090 = vmatmul.mubr.f32.gmra.mxu0 %v7089
      %v7091 = vpop.f32.mrf.mxu0
      %v7092 = vadd.f32 %v6505, %v7091
      %v7093 = vpop.f32.mrf.mxu0
      %7094 = vmatprep.mubr.f32.mxu0 0.0
      %v7095 = vand.u32 %v4478, 4294901760
      %7096 = vmatmul.mubr.f32.gmra.mxu0 %v7095
      %v7097 = vpop.f32.mrf.mxu0
      %v7098 = vadd.f32 %v6513, %v7097
      %v7099 = vpop.f32.mrf.mxu0
      %7100 = vmatprep.mubr.f32.mxu0 0.0
      %v7101 = vand.u32 %v4481, 4294901760
      %7102 = vmatmul.mubr.f32.gmra.mxu0 %v7101
      %v7103 = vpop.f32.mrf.mxu0
      %v7104 = vadd.f32 %v6521, %v7103
      %v7105 = vpop.f32.mrf.mxu0
      %7106 = vmatprep.mubr.f32.mxu0 0.0
      %v7107 = vand.u32 %v4484, 4294901760
      %7108 = vmatmul.mubr.f32.gmra.mxu0 %v7107
      %v7109 = vpop.f32.mrf.mxu0
      %v7110 = vadd.f32 %v6529, %v7109
      %v7111 = vpop.f32.mrf.mxu0
      %7112 = vmatprep.mubr.f32.mxu0 0.0
      %v7113 = vand.u32 %v4487, 4294901760
      %7114 = vmatmul.mubr.f32.gmra.mxu0 %v7113
      %v7115 = vpop.f32.mrf.mxu0
      %v7116 = vadd.f32 %v6537, %v7115
      %v7117 = vpop.f32.mrf.mxu0
      %7118 = vmatprep.mubr.f32.mxu0 0.0
      %v7119 = vand.u32 %v4490, 4294901760
      %7120 = vmatmul.mubr.f32.gmra.mxu0 %v7119
      %v7121 = vpop.f32.mrf.mxu0
      %v7122 = vadd.f32 %v6545, %v7121
      %v7123 = vpop.f32.mrf.mxu0
      %7124 = vmatprep.mubr.f32.mxu0 0.0
      %v7125 = vand.u32 %v4493, 4294901760
      %7126 = vmatmul.mubr.f32.gmra.mxu0 %v7125
      %v7127 = vpop.f32.mrf.mxu0
      %v7128 = vadd.f32 %v6553, %v7127
      %v7129 = vpop.f32.mrf.mxu0
      %7130 = vmatprep.mubr.f32.mxu0 0.0
      %v7131 = vand.u32 %v4496, 4294901760
      %7132 = vmatmul.mubr.f32.gmra.mxu0 %v7131
      %v7133 = vpop.f32.mrf.mxu0
      %v7134 = vadd.f32 %v6561, %v7133
      %v7135 = vpop.f32.mrf.mxu0
      %7136 = vmatprep.mubr.f32.mxu0 0.0
      %v7137 = vand.u32 %v4499, 4294901760
      %7138 = vmatmul.mubr.f32.gmra.mxu0 %v7137
      %v7139 = vpop.f32.mrf.mxu0
      %v7140 = vadd.f32 %v6569, %v7139
      %v7141 = vpop.f32.mrf.mxu0
      %7142 = vmatprep.mubr.f32.mxu0 0.0
      %v7143 = vand.u32 %v4502, 4294901760
      %7144 = vmatmul.mubr.f32.gmra.mxu0 %v7143
      %v7145 = vpop.f32.mrf.mxu0
      %v7146 = vadd.f32 %v6577, %v7145
      %v7147 = vpop.f32.mrf.mxu0
      %7148 = vmatprep.mubr.f32.mxu0 0.0
      %v7149 = vand.u32 %v4505, 4294901760
      %7150 = vmatmul.mubr.f32.gmra.mxu0 %v7149
      %v7151 = vpop.f32.mrf.mxu0
      %v7152 = vadd.f32 %v6585, %v7151
      %v7153 = vpop.f32.mrf.mxu0
      %7154 = vmatprep.mubr.f32.mxu0 0.0
      %v7155 = vand.u32 %v4508, 4294901760
      %7156 = vmatmul.mubr.f32.gmra.mxu0 %v7155
      %v7157 = vpop.f32.mrf.mxu0
      %v7158 = vadd.f32 %v6593, %v7157
      %v7159 = vpop.f32.mrf.mxu0
      %7160 = vmatprep.mubr.f32.mxu0 0.0
      %v7161 = vand.u32 %v4511, 4294901760
      %7162 = vmatmul.mubr.f32.gmra.mxu0 %v7161
      %v7163 = vpop.f32.mrf.mxu0
      %v7164 = vadd.f32 %v6601, %v7163
      %v7165 = vpop.f32.mrf.mxu0
      %7166 = vmatprep.mubr.f32.mxu0 0.0
      %v7167 = vand.u32 %v4514, 4294901760
      %7168 = vmatmul.mubr.f32.gmra.mxu0 %v7167
      %v7169 = vpop.f32.mrf.mxu0
      %v7170 = vadd.f32 %v6609, %v7169
      %v7171 = vpop.f32.mrf.mxu0
      %7172 = vmatprep.mubr.f32.mxu0 0.0
      %v7173 = vand.u32 %v4517, 4294901760
      %7174 = vmatmul.mubr.f32.gmra.mxu0 %v7173
      %v7175 = vpop.f32.mrf.mxu0
      %v7176 = vadd.f32 %v6617, %v7175
      %v7177 = vpop.f32.mrf.mxu0
      %7178 = vmatprep.mubr.f32.mxu0 0.0
      %v7179 = vand.u32 %v4520, 4294901760
      %7180 = vmatmul.mubr.f32.gmra.mxu0 %v7179
      %v7181 = vpop.f32.mrf.mxu0
      %v7182 = vadd.f32 %v6625, %v7181
      %v7183 = vpop.f32.mrf.mxu0
      %7184 = vmatprep.mubr.f32.mxu0 0.0
      %v7185 = vand.u32 %v4523, 4294901760
      %7186 = vmatmul.mubr.f32.gmra.mxu0 %v7185
      %v7187 = vpop.f32.mrf.mxu0
      %v7188 = vadd.f32 %v6633, %v7187
      %v7189 = vpop.f32.mrf.mxu0
      %7190 = vmatprep.mubr.f32.mxu0 0.0
      %v7191 = vand.u32 %v4526, 4294901760
      %7192 = vmatmul.mubr.f32.gmra.mxu0 %v7191
      %v7193 = vpop.f32.mrf.mxu0
      %v7194 = vadd.f32 %v6641, %v7193
      %v7195 = vpop.f32.mrf.mxu0
      %7196 = vmatprep.mubr.f32.mxu0 0.0
      %v7197 = vand.u32 %v4529, 4294901760
      %7198 = vmatmul.mubr.f32.gmra.mxu0 %v7197
      %v7199 = vpop.f32.mrf.mxu0
      %v7200 = vadd.f32 %v6649, %v7199
      %v7201 = vpop.f32.mrf.mxu0
      %7202 = vmatprep.mubr.f32.mxu0 0.0
      %v7203 = vand.u32 %v4532, 4294901760
      %7204 = vmatmul.mubr.f32.gmra.mxu0 %v7203
      %v7205 = vpop.f32.mrf.mxu0
      %v7206 = vadd.f32 %v6657, %v7205
      %v7207 = vpop.f32.mrf.mxu0
      %7208 = vmatprep.mubr.f32.mxu0 0.0
      %v7209 = vand.u32 %v4535, 4294901760
      %7210 = vmatmul.mubr.f32.gmra.mxu0 %v7209
      %v7211 = vpop.f32.mrf.mxu0
      %v7212 = vadd.f32 %v6665, %v7211
      %v7213 = vpop.f32.mrf.mxu0
      %7214 = vmatprep.mubr.f32.mxu0 0.0
      %v7215 = vand.u32 %v4538, 4294901760
      %7216 = vmatmul.mubr.f32.gmra.mxu0 %v7215
      %v7217 = vpop.f32.mrf.mxu0
      %v7218 = vadd.f32 %v6673, %v7217
      %v7219 = vpop.f32.mrf.mxu0
      %7220 = vmatprep.mubr.f32.mxu0 0.0
      %v7221 = vand.u32 %v4541, 4294901760
      %7222 = vmatmul.mubr.f32.gmra.mxu0 %v7221
      %v7223 = vpop.f32.mrf.mxu0
      %v7224 = vadd.f32 %v6681, %v7223
      %v7225 = vpop.f32.mrf.mxu0
      %7226 = vmatprep.mubr.f32.mxu0 0.0
      %v7227 = vand.u32 %v4544, 4294901760
      %7228 = vmatmul.mubr.f32.gmra.mxu0 %v7227
      %v7229 = vpop.f32.mrf.mxu0
      %v7230 = vadd.f32 %v6689, %v7229
      %v7231 = vpop.f32.mrf.mxu0
      %7232 = vmatprep.mubr.f32.mxu0 0.0
      %v7233 = vand.u32 %v4547, 4294901760
      %7234 = vmatmul.mubr.f32.gmra.mxu0 %v7233
      %v7235 = vpop.f32.mrf.mxu0
      %v7236 = vadd.f32 %v6697, %v7235
      %v7237 = vpop.f32.mrf.mxu0
      %7238 = vmatprep.mubr.f32.mxu0 0.0
      %v7239 = vand.u32 %v4550, 4294901760
      %7240 = vmatmul.mubr.f32.gmra.mxu0 %v7239
      %v7241 = vpop.f32.mrf.mxu0
      %v7242 = vadd.f32 %v6705, %v7241
      %v7243 = vpop.f32.mrf.mxu0
      %7244 = vmatprep.mubr.f32.mxu0 0.0
      %v7245 = vand.u32 %v4553, 4294901760
      %7246 = vmatmul.mubr.f32.gmra.mxu0 %v7245
      %v7247 = vpop.f32.mrf.mxu0
      %v7248 = vadd.f32 %v6713, %v7247
      %v7249 = vpop.f32.mrf.mxu0
      %7250 = vmatprep.mubr.f32.mxu0 0.0
      %v7251 = vand.u32 %v4556, 4294901760
      %7252 = vmatmul.mubr.f32.gmra.mxu0 %v7251
      %v7253 = vpop.f32.mrf.mxu0
      %v7254 = vadd.f32 %v6721, %v7253
      %v7255 = vpop.f32.mrf.mxu0
      %7256 = vmatprep.mubr.f32.mxu0 0.0
      %v7257 = vand.u32 %v4559, 4294901760
      %7258 = vmatmul.mubr.f32.gmra.mxu0 %v7257
      %v7259 = vpop.f32.mrf.mxu0
      %v7260 = vadd.f32 %v6729, %v7259
      %v7261 = vpop.f32.mrf.mxu0
      %7262 = vmatprep.mubr.f32.mxu0 0.0
      %v7263 = vand.u32 %v4562, 4294901760
      %7264 = vmatmul.mubr.f32.gmra.mxu0 %v7263
      %v7265 = vpop.f32.mrf.mxu0
      %v7266 = vadd.f32 %v6737, %v7265
      %v7267 = vpop.f32.mrf.mxu0
      %7268 = vmatprep.mubr.f32.mxu0 0.0
      %v7269 = vand.u32 %v4565, 4294901760
      %7270 = vmatmul.mubr.f32.gmra.mxu0 %v7269
      %v7271 = vpop.f32.mrf.mxu0
      %v7272 = vadd.f32 %v6745, %v7271
      %v7273 = vpop.f32.mrf.mxu0
      %7274 = vmatprep.mubr.f32.mxu0 0.0
      %v7275 = vand.u32 %v4568, 4294901760
      %7276 = vmatmul.mubr.f32.gmra.mxu0 %v7275
      %v7277 = vpop.f32.mrf.mxu0
      %v7278 = vadd.f32 %v6753, %v7277
      %v7279 = vpop.f32.mrf.mxu0
      %7280 = vmatprep.mubr.f32.mxu0 0.0
      %v7281 = vand.u32 %v4571, 4294901760
      %7282 = vmatmul.mubr.f32.gmra.mxu0 %v7281
      %v7283 = vpop.f32.mrf.mxu0
      %v7284 = vadd.f32 %v6761, %v7283
      %v7285 = vpop.f32.mrf.mxu0
      %7286 = vmatprep.mubr.f32.mxu0 0.0
      %v7287 = vand.u32 %v4574, 4294901760
      %7288 = vmatmul.mubr.f32.gmra.mxu0 %v7287
      %v7289 = vpop.f32.mrf.mxu0
      %v7290 = vadd.f32 %v6769, %v7289
      %v7291 = vpop.f32.mrf.mxu0
      %7292 = vmatprep.mubr.f32.mxu0 0.0
      %v7293 = vand.u32 %v4577, 4294901760
      %7294 = vmatmul.mubr.f32.gmra.mxu0 %v7293
      %v7295 = vpop.f32.mrf.mxu0
      %v7296 = vadd.f32 %v6777, %v7295
      %v7297 = vpop.f32.mrf.mxu0
      %7298 = vmatprep.mubr.f32.mxu0 0.0
      %v7299 = vand.u32 %v4580, 4294901760
      %7300 = vmatmul.mubr.f32.gmra.mxu0 %v7299
      %v7301 = vpop.f32.mrf.mxu0
      %v7302 = vadd.f32 %v6785, %v7301
      %v7303 = vpop.f32.mrf.mxu0
      %7304 = vmatprep.mubr.f32.mxu0 0.0
      %v7305 = vand.u32 %v4583, 4294901760
      %7306 = vmatmul.mubr.f32.gmra.mxu0 %v7305
      %v7307 = vpop.f32.mrf.mxu0
      %v7308 = vadd.f32 %v6793, %v7307
      %v7309 = vpop.f32.mrf.mxu0
      %7310 = vmatprep.mubr.f32.mxu0 0.0
      %v7311 = vand.u32 %v4586, 4294901760
      %7312 = vmatmul.mubr.f32.gmra.mxu0 %v7311
      %v7313 = vpop.f32.mrf.mxu0
      %v7314 = vadd.f32 %v6801, %v7313
      %v7315 = vpop.f32.mrf.mxu0
      %7316 = vmatprep.mubr.f32.mxu0 0.0
      %v7317 = vand.u32 %v4589, 4294901760
      %7318 = vmatmul.mubr.f32.gmra.mxu0 %v7317
      %v7319 = vpop.f32.mrf.mxu0
      %v7320 = vadd.f32 %v6809, %v7319
      %v7321 = vpop.f32.mrf.mxu0
      %7322 = vmatprep.mubr.f32.mxu0 0.0
      %v7323 = vand.u32 %v4592, 4294901760
      %7324 = vmatmul.mubr.f32.gmra.mxu0 %v7323
      %v7325 = vpop.f32.mrf.mxu0
      %v7326 = vadd.f32 %v6817, %v7325
      %v7327 = vpop.f32.mrf.mxu0
      %7328 = vmatprep.mubr.f32.mxu0 0.0
      %v7329 = vand.u32 %v4595, 4294901760
      %7330 = vmatmul.mubr.f32.gmra.mxu0 %v7329
      %v7331 = vpop.f32.mrf.mxu0
      %v7332 = vadd.f32 %v6825, %v7331
      %v7333 = vpop.f32.mrf.mxu0
      %7334 = vmatprep.mubr.f32.mxu0 0.0
      %v7335 = vand.u32 %v4598, 4294901760
      %7336 = vmatmul.mubr.f32.gmra.mxu0 %v7335
      %v7337 = vpop.f32.mrf.mxu0
      %v7338 = vadd.f32 %v6833, %v7337
      %v7339 = vpop.f32.mrf.mxu0
      %7340 = vmatprep.mubr.f32.mxu0 0.0
      %v7341 = vand.u32 %v4601, 4294901760
      %7342 = vmatmul.mubr.f32.gmra.mxu0 %v7341
      %v7343 = vpop.f32.mrf.mxu0
      %v7344 = vadd.f32 %v6841, %v7343
      %v7345 = vpop.f32.mrf.mxu0
      %7346 = vmatprep.mubr.f32.mxu0 0.0
      %v7347 = vand.u32 %v4604, 4294901760
      %7348 = vmatmul.mubr.f32.gmra.mxu0 %v7347
      %v7349 = vpop.f32.mrf.mxu0
      %v7350 = vadd.f32 %v6849, %v7349
      %v7351 = vpop.f32.mrf.mxu0
      %7352 = vmatprep.mubr.f32.mxu0 0.0
      %v7353 = vand.u32 %v4607, 4294901760
      %7354 = vmatmul.mubr.f32.gmra.mxu0 %v7353
      %v7355 = vpop.f32.mrf.mxu0
      %v7356 = vadd.f32 %v6857, %v7355
      %v7357 = vpop.f32.mrf.mxu0
      %7358 = vmatprep.mubr.f32.mxu0 0.0
      %v7359 = vand.u32 %v4610, 4294901760
      %7360 = vmatmul.mubr.f32.gmra.mxu0 %v7359
      %v7361 = vpop.f32.mrf.mxu0
      %v7362 = vadd.f32 %v6865, %v7361
      %v7363 = vpop.f32.mrf.mxu0
      %7364 = vmatprep.mubr.f32.mxu0 0.0
      %v7365 = vand.u32 %v4613, 4294901760
      %7366 = vmatmul.mubr.f32.gmra.mxu0 %v7365
      %v7367 = vpop.f32.mrf.mxu0
      %v7368 = vadd.f32 %v6873, %v7367
      %v7369 = vpop.f32.mrf.mxu0
      %7370 = vmatprep.mubr.f32.mxu0 0.0
      %v7371 = vand.u32 %v4616, 4294901760
      %7372 = vmatmul.mubr.f32.gmra.mxu0 %v7371
      %v7373 = vpop.f32.mrf.mxu0
      %v7374 = vadd.f32 %v6881, %v7373
      %v7375 = vpop.f32.mrf.mxu0
      %7376 = vmatprep.mubr.f32.mxu0 0.0
      %v7377 = vand.u32 %v4619, 4294901760
      %7378 = vmatmul.mubr.f32.gmra.mxu0 %v7377
      %v7379 = vpop.f32.mrf.mxu0
      %v7380 = vadd.f32 %v6889, %v7379
      %v7381 = vpop.f32.mrf.mxu0
      %7382 = vmatprep.mubr.f32.mxu0 0.0
      %v7383 = vand.u32 %v4622, 4294901760
      %7384 = vmatmul.mubr.f32.gmra.mxu0 %v7383
      %v7385 = vpop.f32.mrf.mxu0
      %v7386 = vadd.f32 %v6897, %v7385
      %v7387 = vpop.f32.mrf.mxu0
      %7388 = vmatprep.mubr.f32.mxu0 0.0
      %v7389 = vand.u32 %v4625, 4294901760
      %7390 = vmatmul.mubr.f32.gmra.mxu0 %v7389
      %v7391 = vpop.f32.mrf.mxu0
      %v7392 = vadd.f32 %v6905, %v7391
      %v7393 = vpop.f32.mrf.mxu0
      %7394 = vmatprep.mubr.f32.mxu0 0.0
      %v7395 = vand.u32 %v4628, 4294901760
      %7396 = vmatmul.mubr.f32.gmra.mxu0 %v7395
      %v7397 = vpop.f32.mrf.mxu0
      %v7398 = vadd.f32 %v6913, %v7397
      %v7399 = vpop.f32.mrf.mxu0
      %7400 = vmatprep.mubr.f32.mxu0 0.0
      %v7401 = vand.u32 %v4631, 4294901760
      %7402 = vmatmul.mubr.f32.gmra.mxu0 %v7401
      %v7403 = vpop.f32.mrf.mxu0
      %v7404 = vadd.f32 %v6921, %v7403
      %v7405 = vpop.f32.mrf.mxu0
      %7406 = vmatprep.mubr.f32.mxu0 0.0
      %v7407 = vand.u32 %v4634, 4294901760
      %7408 = vmatmul.mubr.f32.gmra.mxu0 %v7407
      %v7409 = vpop.f32.mrf.mxu0
      %v7410 = vadd.f32 %v6929, %v7409
      %v7411 = vpop.f32.mrf.mxu0
      %7412 = vmatprep.mubr.f32.mxu0 0.0
      %v7413 = vand.u32 %v4637, 4294901760
      %7414 = vmatmul.mubr.f32.gmra.mxu0 %v7413
      %v7415 = vpop.f32.mrf.mxu0
      %v7416 = vadd.f32 %v6937, %v7415
      %v7417 = vpop.f32.mrf.mxu0
      %7418 = vmatprep.mubr.f32.mxu0 0.0
      %v7419 = vand.u32 %v4640, 4294901760
      %7420 = vmatmul.mubr.f32.gmra.mxu0 %v7419
      %v7421 = vpop.f32.mrf.mxu0
      %v7422 = vadd.f32 %v6945, %v7421
      %v7423 = vpop.f32.mrf.mxu0
      %7424 = vmatprep.mubr.f32.mxu0 0.0
      %v7425 = vand.u32 %v4643, 4294901760
      %7426 = vmatmul.mubr.f32.gmra.mxu0 %v7425
      %v7427 = vpop.f32.mrf.mxu0
      %v7428 = vadd.f32 %v6953, %v7427
      %v7429 = vpop.f32.mrf.mxu0
      %7430 = vmatprep.mubr.f32.mxu0 0.0
      %v7431 = vand.u32 %v4646, 4294901760
      %7432 = vmatmul.mubr.f32.gmra.mxu0 %v7431
      %v7433 = vpop.f32.mrf.mxu0
      %v7434 = vadd.f32 %v6961, %v7433
      %v7435 = vpop.f32.mrf.mxu0
      %7436 = vdwg.mxu0
      %7437 = vmatprep.subr.mxu0 0.0
      %7438 = vmatpush1.msra.mxu0 0.0
      %7439 = vmatprep.subr.mxu0 0.0
      %7440 = vmatpush1.msra.mxu0 0.0
      %7441 = vmatprep.subr.mxu0 0.0
      %7442 = vmatpush1.msra.mxu0 0.0
      %7443 = vmatprep.subr.mxu0 0.0
      %7444 = vmatpush1.msra.mxu0 0.0
      %7445 = vmatprep.subr.mxu0 0.0
      %7446 = vmatpush1.msra.mxu0 0.0
      %7447 = vmatprep.subr.mxu0 0.0
      %7448 = vmatpush1.msra.mxu0 0.0
      %7449 = vmatprep.subr.mxu0 0.0
      %7450 = vmatpush1.msra.mxu0 0.0
      %7451 = vmatprep.subr.mxu0 0.0
      %7452 = vmatpush1.msra.mxu0 0.0
      %7453 = vmatprep.subr.mxu0 0.0
      %v7454 = vand.u32 %v4447, 4294901760
      %7455 = vmatpush1.msra.mxu0 %v7454
      %7456 = vmatprep.subr.mxu0 0.0
      %v7457 = vand.u32 %v4446, 4294901760
      %7458 = vmatpush1.msra.mxu0 %v7457
      %7459 = vmatprep.subr.mxu0 0.0
      %v7460 = vand.u32 %v4445, 4294901760
      %7461 = vmatpush1.msra.mxu0 %v7460
      %7462 = vmatprep.subr.mxu0 0.0
      %v7463 = vand.u32 %v4444, 4294901760
      %7464 = vmatpush1.msra.mxu0 %v7463
      %7465 = vmatprep.subr.mxu0 0.0
      %v7466 = vand.u32 %v4443, 4294901760
      %7467 = vmatpush1.msra.mxu0 %v7466
      %7468 = vmatprep.subr.mxu0 0.0
      %v7469 = vand.u32 %v4442, 4294901760
      %7470 = vmatpush1.msra.mxu0 %v7469
      %7471 = vmatprep.subr.mxu0 0.0
      %v7472 = vand.u32 %v4441, 4294901760
      %7473 = vmatpush1.msra.mxu0 %v7472
      %7474 = vmatprep.subr.mxu0 0.0
      %v7475 = vand.u32 %v4440, 4294901760
      %7476 = vmatpush1.msra.mxu0 %v7475
      %7477 = vmatprep.subr.mxu0 0.0
      %7478 = vmatpush2.msra.mxu0 0.0
      %7479 = vmatprep.subr.mxu0 0.0
      %7480 = vmatpush2.msra.mxu0 0.0
      %7481 = vmatprep.subr.mxu0 0.0
      %7482 = vmatpush2.msra.mxu0 0.0
      %7483 = vmatprep.subr.mxu0 0.0
      %7484 = vmatpush2.msra.mxu0 0.0
      %7485 = vmatprep.subr.mxu0 0.0
      %7486 = vmatpush2.msra.mxu0 0.0
      %7487 = vmatprep.subr.mxu0 0.0
      %7488 = vmatpush2.msra.mxu0 0.0
      %7489 = vmatprep.subr.mxu0 0.0
      %7490 = vmatpush2.msra.mxu0 0.0
      %7491 = vmatprep.subr.mxu0 0.0
      %7492 = vmatpush2.msra.mxu0 0.0
      %7493 = vmatprep.subr.mxu0 0.0
      %7494 = vmatpush2.msra.mxu0 0.0
      %7495 = vmatprep.subr.mxu0 0.0
      %7496 = vmatpush2.msra.mxu0 0.0
      %7497 = vmatprep.subr.mxu0 0.0
      %7498 = vmatpush2.msra.mxu0 0.0
      %7499 = vmatprep.subr.mxu0 0.0
      %7500 = vmatpush2.msra.mxu0 0.0
      %7501 = vmatprep.subr.mxu0 0.0
      %7502 = vmatpush2.msra.mxu0 0.0
      %7503 = vmatprep.subr.mxu0 0.0
      %7504 = vmatpush2.msra.mxu0 0.0
      %7505 = vmatprep.subr.mxu0 0.0
      %7506 = vmatpush2.msra.mxu0 0.0
      %7507 = vmatprep.subr.mxu0 0.0
      %7508 = vmatpush2.msra.mxu0 0.0
      %7509 = vmatprep.mubr.f32.mxu0 0.0
      %v7510 = vand.u32 %v4457, 4294901760
      %7511 = vmatmul.mubr.f32.gmra.mxu0 %v7510
      %v7512 = vpop.f32.mrf.mxu0
      %v7513 = vadd.f32 %v7056, %v7512
      %v7514 = vpop.f32.mrf.mxu0
      %7515 = vmatprep.mubr.f32.mxu0 0.0
      %v7516 = vand.u32 %v4460, 4294901760
      %7517 = vmatmul.mubr.f32.gmra.mxu0 %v7516
      %v7518 = vpop.f32.mrf.mxu0
      %v7519 = vadd.f32 %v7062, %v7518
      %v7520 = vpop.f32.mrf.mxu0
      %7521 = vmatprep.mubr.f32.mxu0 0.0
      %v7522 = vand.u32 %v4463, 4294901760
      %7523 = vmatmul.mubr.f32.gmra.mxu0 %v7522
      %v7524 = vpop.f32.mrf.mxu0
      %v7525 = vadd.f32 %v7068, %v7524
      %v7526 = vpop.f32.mrf.mxu0
      %7527 = vmatprep.mubr.f32.mxu0 0.0
      %v7528 = vand.u32 %v4466, 4294901760
      %7529 = vmatmul.mubr.f32.gmra.mxu0 %v7528
      %v7530 = vpop.f32.mrf.mxu0
      %v7531 = vadd.f32 %v7074, %v7530
      %v7532 = vpop.f32.mrf.mxu0
      %7533 = vmatprep.mubr.f32.mxu0 0.0
      %v7534 = vand.u32 %v4469, 4294901760
      %7535 = vmatmul.mubr.f32.gmra.mxu0 %v7534
      %v7536 = vpop.f32.mrf.mxu0
      %v7537 = vadd.f32 %v7080, %v7536
      %v7538 = vpop.f32.mrf.mxu0
      %7539 = vmatprep.mubr.f32.mxu0 0.0
      %v7540 = vand.u32 %v4472, 4294901760
      %7541 = vmatmul.mubr.f32.gmra.mxu0 %v7540
      %v7542 = vpop.f32.mrf.mxu0
      %v7543 = vadd.f32 %v7086, %v7542
      %v7544 = vpop.f32.mrf.mxu0
      %7545 = vmatprep.mubr.f32.mxu0 0.0
      %v7546 = vand.u32 %v4475, 4294901760
      %7547 = vmatmul.mubr.f32.gmra.mxu0 %v7546
      %v7548 = vpop.f32.mrf.mxu0
      %v7549 = vadd.f32 %v7092, %v7548
      %v7550 = vpop.f32.mrf.mxu0
      %7551 = vmatprep.mubr.f32.mxu0 0.0
      %v7552 = vand.u32 %v4478, 4294901760
      %7553 = vmatmul.mubr.f32.gmra.mxu0 %v7552
      %v7554 = vpop.f32.mrf.mxu0
      %v7555 = vadd.f32 %v7098, %v7554
      %v7556 = vpop.f32.mrf.mxu0
      %7557 = vmatprep.mubr.f32.mxu0 0.0
      %v7558 = vand.u32 %v4481, 4294901760
      %7559 = vmatmul.mubr.f32.gmra.mxu0 %v7558
      %v7560 = vpop.f32.mrf.mxu0
      %v7561 = vadd.f32 %v7104, %v7560
      %v7562 = vpop.f32.mrf.mxu0
      %7563 = vmatprep.mubr.f32.mxu0 0.0
      %v7564 = vand.u32 %v4484, 4294901760
      %7565 = vmatmul.mubr.f32.gmra.mxu0 %v7564
      %v7566 = vpop.f32.mrf.mxu0
      %v7567 = vadd.f32 %v7110, %v7566
      %v7568 = vpop.f32.mrf.mxu0
      %7569 = vmatprep.mubr.f32.mxu0 0.0
      %v7570 = vand.u32 %v4487, 4294901760
      %7571 = vmatmul.mubr.f32.gmra.mxu0 %v7570
      %v7572 = vpop.f32.mrf.mxu0
      %v7573 = vadd.f32 %v7116, %v7572
      %v7574 = vpop.f32.mrf.mxu0
      %7575 = vmatprep.mubr.f32.mxu0 0.0
      %v7576 = vand.u32 %v4490, 4294901760
      %7577 = vmatmul.mubr.f32.gmra.mxu0 %v7576
      %v7578 = vpop.f32.mrf.mxu0
      %v7579 = vadd.f32 %v7122, %v7578
      %v7580 = vpop.f32.mrf.mxu0
      %7581 = vmatprep.mubr.f32.mxu0 0.0
      %v7582 = vand.u32 %v4493, 4294901760
      %7583 = vmatmul.mubr.f32.gmra.mxu0 %v7582
      %v7584 = vpop.f32.mrf.mxu0
      %v7585 = vadd.f32 %v7128, %v7584
      %v7586 = vpop.f32.mrf.mxu0
      %7587 = vmatprep.mubr.f32.mxu0 0.0
      %v7588 = vand.u32 %v4496, 4294901760
      %7589 = vmatmul.mubr.f32.gmra.mxu0 %v7588
      %v7590 = vpop.f32.mrf.mxu0
      %v7591 = vadd.f32 %v7134, %v7590
      %v7592 = vpop.f32.mrf.mxu0
      %7593 = vmatprep.mubr.f32.mxu0 0.0
      %v7594 = vand.u32 %v4499, 4294901760
      %7595 = vmatmul.mubr.f32.gmra.mxu0 %v7594
      %v7596 = vpop.f32.mrf.mxu0
      %v7597 = vadd.f32 %v7140, %v7596
      %v7598 = vpop.f32.mrf.mxu0
      %7599 = vmatprep.mubr.f32.mxu0 0.0
      %v7600 = vand.u32 %v4502, 4294901760
      %7601 = vmatmul.mubr.f32.gmra.mxu0 %v7600
      %v7602 = vpop.f32.mrf.mxu0
      %v7603 = vadd.f32 %v7146, %v7602
      %v7604 = vpop.f32.mrf.mxu0
      %7605 = vmatprep.mubr.f32.mxu0 0.0
      %v7606 = vand.u32 %v4505, 4294901760
      %7607 = vmatmul.mubr.f32.gmra.mxu0 %v7606
      %v7608 = vpop.f32.mrf.mxu0
      %v7609 = vadd.f32 %v7152, %v7608
      %v7610 = vpop.f32.mrf.mxu0
      %7611 = vmatprep.mubr.f32.mxu0 0.0
      %v7612 = vand.u32 %v4508, 4294901760
      %7613 = vmatmul.mubr.f32.gmra.mxu0 %v7612
      %v7614 = vpop.f32.mrf.mxu0
      %v7615 = vadd.f32 %v7158, %v7614
      %v7616 = vpop.f32.mrf.mxu0
      %7617 = vmatprep.mubr.f32.mxu0 0.0
      %v7618 = vand.u32 %v4511, 4294901760
      %7619 = vmatmul.mubr.f32.gmra.mxu0 %v7618
      %v7620 = vpop.f32.mrf.mxu0
      %v7621 = vadd.f32 %v7164, %v7620
      %v7622 = vpop.f32.mrf.mxu0
      %7623 = vmatprep.mubr.f32.mxu0 0.0
      %v7624 = vand.u32 %v4514, 4294901760
      %7625 = vmatmul.mubr.f32.gmra.mxu0 %v7624
      %v7626 = vpop.f32.mrf.mxu0
      %v7627 = vadd.f32 %v7170, %v7626
      %v7628 = vpop.f32.mrf.mxu0
      %7629 = vmatprep.mubr.f32.mxu0 0.0
      %v7630 = vand.u32 %v4517, 4294901760
      %7631 = vmatmul.mubr.f32.gmra.mxu0 %v7630
      %v7632 = vpop.f32.mrf.mxu0
      %v7633 = vadd.f32 %v7176, %v7632
      %v7634 = vpop.f32.mrf.mxu0
      %7635 = vmatprep.mubr.f32.mxu0 0.0
      %v7636 = vand.u32 %v4520, 4294901760
      %7637 = vmatmul.mubr.f32.gmra.mxu0 %v7636
      %v7638 = vpop.f32.mrf.mxu0
      %v7639 = vadd.f32 %v7182, %v7638
      %v7640 = vpop.f32.mrf.mxu0
      %7641 = vmatprep.mubr.f32.mxu0 0.0
      %v7642 = vand.u32 %v4523, 4294901760
      %7643 = vmatmul.mubr.f32.gmra.mxu0 %v7642
      %v7644 = vpop.f32.mrf.mxu0
      %v7645 = vadd.f32 %v7188, %v7644
      %v7646 = vpop.f32.mrf.mxu0
      %7647 = vmatprep.mubr.f32.mxu0 0.0
      %v7648 = vand.u32 %v4526, 4294901760
      %7649 = vmatmul.mubr.f32.gmra.mxu0 %v7648
      %v7650 = vpop.f32.mrf.mxu0
      %v7651 = vadd.f32 %v7194, %v7650
      %v7652 = vpop.f32.mrf.mxu0
      %7653 = vmatprep.mubr.f32.mxu0 0.0
      %v7654 = vand.u32 %v4529, 4294901760
      %7655 = vmatmul.mubr.f32.gmra.mxu0 %v7654
      %v7656 = vpop.f32.mrf.mxu0
      %v7657 = vadd.f32 %v7200, %v7656
      %v7658 = vpop.f32.mrf.mxu0
      %7659 = vmatprep.mubr.f32.mxu0 0.0
      %v7660 = vand.u32 %v4532, 4294901760
      %7661 = vmatmul.mubr.f32.gmra.mxu0 %v7660
      %v7662 = vpop.f32.mrf.mxu0
      %v7663 = vadd.f32 %v7206, %v7662
      %v7664 = vpop.f32.mrf.mxu0
      %7665 = vmatprep.mubr.f32.mxu0 0.0
      %v7666 = vand.u32 %v4535, 4294901760
      %7667 = vmatmul.mubr.f32.gmra.mxu0 %v7666
      %v7668 = vpop.f32.mrf.mxu0
      %v7669 = vadd.f32 %v7212, %v7668
      %v7670 = vpop.f32.mrf.mxu0
      %7671 = vmatprep.mubr.f32.mxu0 0.0
      %v7672 = vand.u32 %v4538, 4294901760
      %7673 = vmatmul.mubr.f32.gmra.mxu0 %v7672
      %v7674 = vpop.f32.mrf.mxu0
      %v7675 = vadd.f32 %v7218, %v7674
      %v7676 = vpop.f32.mrf.mxu0
      %7677 = vmatprep.mubr.f32.mxu0 0.0
      %v7678 = vand.u32 %v4541, 4294901760
      %7679 = vmatmul.mubr.f32.gmra.mxu0 %v7678
      %v7680 = vpop.f32.mrf.mxu0
      %v7681 = vadd.f32 %v7224, %v7680
      %v7682 = vpop.f32.mrf.mxu0
      %7683 = vmatprep.mubr.f32.mxu0 0.0
      %v7684 = vand.u32 %v4544, 4294901760
      %7685 = vmatmul.mubr.f32.gmra.mxu0 %v7684
      %v7686 = vpop.f32.mrf.mxu0
      %v7687 = vadd.f32 %v7230, %v7686
      %v7688 = vpop.f32.mrf.mxu0
      %7689 = vmatprep.mubr.f32.mxu0 0.0
      %v7690 = vand.u32 %v4547, 4294901760
      %7691 = vmatmul.mubr.f32.gmra.mxu0 %v7690
      %v7692 = vpop.f32.mrf.mxu0
      %v7693 = vadd.f32 %v7236, %v7692
      %v7694 = vpop.f32.mrf.mxu0
      %7695 = vmatprep.mubr.f32.mxu0 0.0
      %v7696 = vand.u32 %v4550, 4294901760
      %7697 = vmatmul.mubr.f32.gmra.mxu0 %v7696
      %v7698 = vpop.f32.mrf.mxu0
      %v7699 = vadd.f32 %v7242, %v7698
      %v7700 = vpop.f32.mrf.mxu0
      %7701 = vmatprep.mubr.f32.mxu0 0.0
      %v7702 = vand.u32 %v4553, 4294901760
      %7703 = vmatmul.mubr.f32.gmra.mxu0 %v7702
      %v7704 = vpop.f32.mrf.mxu0
      %v7705 = vadd.f32 %v7248, %v7704
      %v7706 = vpop.f32.mrf.mxu0
      %7707 = vmatprep.mubr.f32.mxu0 0.0
      %v7708 = vand.u32 %v4556, 4294901760
      %7709 = vmatmul.mubr.f32.gmra.mxu0 %v7708
      %v7710 = vpop.f32.mrf.mxu0
      %v7711 = vadd.f32 %v7254, %v7710
      %v7712 = vpop.f32.mrf.mxu0
      %7713 = vmatprep.mubr.f32.mxu0 0.0
      %v7714 = vand.u32 %v4559, 4294901760
      %7715 = vmatmul.mubr.f32.gmra.mxu0 %v7714
      %v7716 = vpop.f32.mrf.mxu0
      %v7717 = vadd.f32 %v7260, %v7716
      %v7718 = vpop.f32.mrf.mxu0
      %7719 = vmatprep.mubr.f32.mxu0 0.0
      %v7720 = vand.u32 %v4562, 4294901760
      %7721 = vmatmul.mubr.f32.gmra.mxu0 %v7720
      %v7722 = vpop.f32.mrf.mxu0
      %v7723 = vadd.f32 %v7266, %v7722
      %v7724 = vpop.f32.mrf.mxu0
      %7725 = vmatprep.mubr.f32.mxu0 0.0
      %v7726 = vand.u32 %v4565, 4294901760
      %7727 = vmatmul.mubr.f32.gmra.mxu0 %v7726
      %v7728 = vpop.f32.mrf.mxu0
      %v7729 = vadd.f32 %v7272, %v7728
      %v7730 = vpop.f32.mrf.mxu0
      %7731 = vmatprep.mubr.f32.mxu0 0.0
      %v7732 = vand.u32 %v4568, 4294901760
      %7733 = vmatmul.mubr.f32.gmra.mxu0 %v7732
      %v7734 = vpop.f32.mrf.mxu0
      %v7735 = vadd.f32 %v7278, %v7734
      %v7736 = vpop.f32.mrf.mxu0
      %7737 = vmatprep.mubr.f32.mxu0 0.0
      %v7738 = vand.u32 %v4571, 4294901760
      %7739 = vmatmul.mubr.f32.gmra.mxu0 %v7738
      %v7740 = vpop.f32.mrf.mxu0
      %v7741 = vadd.f32 %v7284, %v7740
      %v7742 = vpop.f32.mrf.mxu0
      %7743 = vmatprep.mubr.f32.mxu0 0.0
      %v7744 = vand.u32 %v4574, 4294901760
      %7745 = vmatmul.mubr.f32.gmra.mxu0 %v7744
      %v7746 = vpop.f32.mrf.mxu0
      %v7747 = vadd.f32 %v7290, %v7746
      %v7748 = vpop.f32.mrf.mxu0
      %7749 = vmatprep.mubr.f32.mxu0 0.0
      %v7750 = vand.u32 %v4577, 4294901760
      %7751 = vmatmul.mubr.f32.gmra.mxu0 %v7750
      %v7752 = vpop.f32.mrf.mxu0
      %v7753 = vadd.f32 %v7296, %v7752
      %v7754 = vpop.f32.mrf.mxu0
      %7755 = vmatprep.mubr.f32.mxu0 0.0
      %v7756 = vand.u32 %v4580, 4294901760
      %7757 = vmatmul.mubr.f32.gmra.mxu0 %v7756
      %v7758 = vpop.f32.mrf.mxu0
      %v7759 = vadd.f32 %v7302, %v7758
      %v7760 = vpop.f32.mrf.mxu0
      %7761 = vmatprep.mubr.f32.mxu0 0.0
      %v7762 = vand.u32 %v4583, 4294901760
      %7763 = vmatmul.mubr.f32.gmra.mxu0 %v7762
      %v7764 = vpop.f32.mrf.mxu0
      %v7765 = vadd.f32 %v7308, %v7764
      %v7766 = vpop.f32.mrf.mxu0
      %7767 = vmatprep.mubr.f32.mxu0 0.0
      %v7768 = vand.u32 %v4586, 4294901760
      %7769 = vmatmul.mubr.f32.gmra.mxu0 %v7768
      %v7770 = vpop.f32.mrf.mxu0
      %v7771 = vadd.f32 %v7314, %v7770
      %v7772 = vpop.f32.mrf.mxu0
      %7773 = vmatprep.mubr.f32.mxu0 0.0
      %v7774 = vand.u32 %v4589, 4294901760
      %7775 = vmatmul.mubr.f32.gmra.mxu0 %v7774
      %v7776 = vpop.f32.mrf.mxu0
      %v7777 = vadd.f32 %v7320, %v7776
      %v7778 = vpop.f32.mrf.mxu0
      %7779 = vmatprep.mubr.f32.mxu0 0.0
      %v7780 = vand.u32 %v4592, 4294901760
      %7781 = vmatmul.mubr.f32.gmra.mxu0 %v7780
      %v7782 = vpop.f32.mrf.mxu0
      %v7783 = vadd.f32 %v7326, %v7782
      %v7784 = vpop.f32.mrf.mxu0
      %7785 = vmatprep.mubr.f32.mxu0 0.0
      %v7786 = vand.u32 %v4595, 4294901760
      %7787 = vmatmul.mubr.f32.gmra.mxu0 %v7786
      %v7788 = vpop.f32.mrf.mxu0
      %v7789 = vadd.f32 %v7332, %v7788
      %v7790 = vpop.f32.mrf.mxu0
      %7791 = vmatprep.mubr.f32.mxu0 0.0
      %v7792 = vand.u32 %v4598, 4294901760
      %7793 = vmatmul.mubr.f32.gmra.mxu0 %v7792
      %v7794 = vpop.f32.mrf.mxu0
      %v7795 = vadd.f32 %v7338, %v7794
      %v7796 = vpop.f32.mrf.mxu0
      %7797 = vmatprep.mubr.f32.mxu0 0.0
      %v7798 = vand.u32 %v4601, 4294901760
      %7799 = vmatmul.mubr.f32.gmra.mxu0 %v7798
      %v7800 = vpop.f32.mrf.mxu0
      %v7801 = vadd.f32 %v7344, %v7800
      %v7802 = vpop.f32.mrf.mxu0
      %7803 = vmatprep.mubr.f32.mxu0 0.0
      %v7804 = vand.u32 %v4604, 4294901760
      %7805 = vmatmul.mubr.f32.gmra.mxu0 %v7804
      %v7806 = vpop.f32.mrf.mxu0
      %v7807 = vadd.f32 %v7350, %v7806
      %v7808 = vpop.f32.mrf.mxu0
      %7809 = vmatprep.mubr.f32.mxu0 0.0
      %v7810 = vand.u32 %v4607, 4294901760
      %7811 = vmatmul.mubr.f32.gmra.mxu0 %v7810
      %v7812 = vpop.f32.mrf.mxu0
      %v7813 = vadd.f32 %v7356, %v7812
      %v7814 = vpop.f32.mrf.mxu0
      %7815 = vmatprep.mubr.f32.mxu0 0.0
      %v7816 = vand.u32 %v4610, 4294901760
      %7817 = vmatmul.mubr.f32.gmra.mxu0 %v7816
      %v7818 = vpop.f32.mrf.mxu0
      %v7819 = vadd.f32 %v7362, %v7818
      %v7820 = vpop.f32.mrf.mxu0
      %7821 = vmatprep.mubr.f32.mxu0 0.0
      %v7822 = vand.u32 %v4613, 4294901760
      %7823 = vmatmul.mubr.f32.gmra.mxu0 %v7822
      %v7824 = vpop.f32.mrf.mxu0
      %v7825 = vadd.f32 %v7368, %v7824
      %v7826 = vpop.f32.mrf.mxu0
      %7827 = vmatprep.mubr.f32.mxu0 0.0
      %v7828 = vand.u32 %v4616, 4294901760
      %7829 = vmatmul.mubr.f32.gmra.mxu0 %v7828
      %v7830 = vpop.f32.mrf.mxu0
      %v7831 = vadd.f32 %v7374, %v7830
      %v7832 = vpop.f32.mrf.mxu0
      %7833 = vmatprep.mubr.f32.mxu0 0.0
      %v7834 = vand.u32 %v4619, 4294901760
      %7835 = vmatmul.mubr.f32.gmra.mxu0 %v7834
      %v7836 = vpop.f32.mrf.mxu0
      %v7837 = vadd.f32 %v7380, %v7836
      %v7838 = vpop.f32.mrf.mxu0
      %7839 = vmatprep.mubr.f32.mxu0 0.0
      %v7840 = vand.u32 %v4622, 4294901760
      %7841 = vmatmul.mubr.f32.gmra.mxu0 %v7840
      %v7842 = vpop.f32.mrf.mxu0
      %v7843 = vadd.f32 %v7386, %v7842
      %v7844 = vpop.f32.mrf.mxu0
      %7845 = vmatprep.mubr.f32.mxu0 0.0
      %v7846 = vand.u32 %v4625, 4294901760
      %7847 = vmatmul.mubr.f32.gmra.mxu0 %v7846
      %v7848 = vpop.f32.mrf.mxu0
      %v7849 = vadd.f32 %v7392, %v7848
      %v7850 = vpop.f32.mrf.mxu0
      %7851 = vmatprep.mubr.f32.mxu0 0.0
      %v7852 = vand.u32 %v4628, 4294901760
      %7853 = vmatmul.mubr.f32.gmra.mxu0 %v7852
      %v7854 = vpop.f32.mrf.mxu0
      %v7855 = vadd.f32 %v7398, %v7854
      %v7856 = vpop.f32.mrf.mxu0
      %7857 = vmatprep.mubr.f32.mxu0 0.0
      %v7858 = vand.u32 %v4631, 4294901760
      %7859 = vmatmul.mubr.f32.gmra.mxu0 %v7858
      %v7860 = vpop.f32.mrf.mxu0
      %v7861 = vadd.f32 %v7404, %v7860
      %v7862 = vpop.f32.mrf.mxu0
      %7863 = vmatprep.mubr.f32.mxu0 0.0
      %v7864 = vand.u32 %v4634, 4294901760
      %7865 = vmatmul.mubr.f32.gmra.mxu0 %v7864
      %v7866 = vpop.f32.mrf.mxu0
      %v7867 = vadd.f32 %v7410, %v7866
      %v7868 = vpop.f32.mrf.mxu0
      %7869 = vmatprep.mubr.f32.mxu0 0.0
      %v7870 = vand.u32 %v4637, 4294901760
      %7871 = vmatmul.mubr.f32.gmra.mxu0 %v7870
      %v7872 = vpop.f32.mrf.mxu0
      %v7873 = vadd.f32 %v7416, %v7872
      %v7874 = vpop.f32.mrf.mxu0
      %7875 = vmatprep.mubr.f32.mxu0 0.0
      %v7876 = vand.u32 %v4640, 4294901760
      %7877 = vmatmul.mubr.f32.gmra.mxu0 %v7876
      %v7878 = vpop.f32.mrf.mxu0
      %v7879 = vadd.f32 %v7422, %v7878
      %v7880 = vpop.f32.mrf.mxu0
      %7881 = vmatprep.mubr.f32.mxu0 0.0
      %v7882 = vand.u32 %v4643, 4294901760
      %7883 = vmatmul.mubr.f32.gmra.mxu0 %v7882
      %v7884 = vpop.f32.mrf.mxu0
      %v7885 = vadd.f32 %v7428, %v7884
      %v7886 = vpop.f32.mrf.mxu0
      %7887 = vmatprep.mubr.f32.mxu0 0.0
      %v7888 = vand.u32 %v4646, 4294901760
      %7889 = vmatmul.mubr.f32.gmra.mxu0 %v7888
      %v7890 = vpop.f32.mrf.mxu0
      %v7891 = vadd.f32 %v7434, %v7890
      %v7892 = vpop.f32.mrf.mxu0
      %7893 = vdwg.mxu0
      %v7894 = vmax.f32 %v7513, 0.0
      %v7895 = vmax.f32 %v7519, 0.0
      %v7896 = vmax.f32 %v7525, 0.0
      %v7897 = vmax.f32 %v7531, 0.0
      %v7898 = vmax.f32 %v7537, 0.0
      %v7899 = vmax.f32 %v7543, 0.0
      %v7900 = vmax.f32 %v7549, 0.0
      %v7901 = vmax.f32 %v7555, 0.0
      %v7902 = vmax.f32 %v7561, 0.0
      %v7903 = vmax.f32 %v7567, 0.0
      %v7904 = vmax.f32 %v7573, 0.0
      %v7905 = vmax.f32 %v7579, 0.0
      %v7906 = vmax.f32 %v7585, 0.0
      %v7907 = vmax.f32 %v7591, 0.0
      %v7908 = vmax.f32 %v7597, 0.0
      %v7909 = vmax.f32 %v7603, 0.0
      %v7910 = vmax.f32 %v7609, 0.0
      %v7911 = vmax.f32 %v7615, 0.0
      %v7912 = vmax.f32 %v7621, 0.0
      %v7913 = vmax.f32 %v7627, 0.0
      %v7914 = vmax.f32 %v7633, 0.0
      %v7915 = vmax.f32 %v7639, 0.0
      %v7916 = vmax.f32 %v7645, 0.0
      %v7917 = vmax.f32 %v7651, 0.0
      %v7918 = vmax.f32 %v7657, 0.0
      %v7919 = vmax.f32 %v7663, 0.0
      %v7920 = vmax.f32 %v7669, 0.0
      %v7921 = vmax.f32 %v7675, 0.0
      %v7922 = vmax.f32 %v7681, 0.0
      %v7923 = vmax.f32 %v7687, 0.0
      %v7924 = vmax.f32 %v7693, 0.0
      %v7925 = vmax.f32 %v7699, 0.0
      %v7926 = vmax.f32 %v7705, 0.0
      %v7927 = vmax.f32 %v7711, 0.0
      %v7928 = vmax.f32 %v7717, 0.0
      %v7929 = vmax.f32 %v7723, 0.0
      %v7930 = vmax.f32 %v7729, 0.0
      %v7931 = vmax.f32 %v7735, 0.0
      %v7932 = vmax.f32 %v7741, 0.0
      %v7933 = vmax.f32 %v7747, 0.0
      %v7934 = vmax.f32 %v7753, 0.0
      %v7935 = vmax.f32 %v7759, 0.0
      %v7936 = vmax.f32 %v7765, 0.0
      %v7937 = vmax.f32 %v7771, 0.0
      %v7938 = vmax.f32 %v7777, 0.0
      %v7939 = vmax.f32 %v7783, 0.0
      %v7940 = vmax.f32 %v7789, 0.0
      %v7941 = vmax.f32 %v7795, 0.0
      %v7942 = vmax.f32 %v7801, 0.0
      %v7943 = vmax.f32 %v7807, 0.0
      %v7944 = vmax.f32 %v7813, 0.0
      %v7945 = vmax.f32 %v7819, 0.0
      %v7946 = vmax.f32 %v7825, 0.0
      %v7947 = vmax.f32 %v7831, 0.0
      %v7948 = vmax.f32 %v7837, 0.0
      %v7949 = vmax.f32 %v7843, 0.0
      %v7950 = vmax.f32 %v7849, 0.0
      %v7951 = vmax.f32 %v7855, 0.0
      %v7952 = vmax.f32 %v7861, 0.0
      %v7953 = vmax.f32 %v7867, 0.0
      %v7954 = vmax.f32 %v7873, 0.0
      %v7955 = vmax.f32 %v7879, 0.0
      %v7956 = vmax.f32 %v7885, 0.0
      %v7957 = vmax.f32 %v7891, 0.0
      %v7958 = vand.u32 2147483647, %v7513
      %v7959 = vand.u32 2147483647, %v7519
      %v7960 = vand.u32 2147483647, %v7525
      %v7961 = vand.u32 2147483647, %v7531
      %v7962 = vand.u32 2147483647, %v7537
      %v7963 = vand.u32 2147483647, %v7543
      %v7964 = vand.u32 2147483647, %v7549
      %v7965 = vand.u32 2147483647, %v7555
      %v7966 = vand.u32 2147483647, %v7561
      %v7967 = vand.u32 2147483647, %v7567
      %v7968 = vand.u32 2147483647, %v7573
      %v7969 = vand.u32 2147483647, %v7579
      %v7970 = vand.u32 2147483647, %v7585
      %v7971 = vand.u32 2147483647, %v7591
      %v7972 = vand.u32 2147483647, %v7597
      %v7973 = vand.u32 2147483647, %v7603
      %v7974 = vand.u32 2147483647, %v7609
      %v7975 = vand.u32 2147483647, %v7615
      %v7976 = vand.u32 2147483647, %v7621
      %v7977 = vand.u32 2147483647, %v7627
      %v7978 = vand.u32 2147483647, %v7633
      %v7979 = vand.u32 2147483647, %v7639
      %v7980 = vand.u32 2147483647, %v7645
      %v7981 = vand.u32 2147483647, %v7651
      %v7982 = vand.u32 2147483647, %v7657
      %v7983 = vand.u32 2147483647, %v7663
      %v7984 = vand.u32 2147483647, %v7669
      %v7985 = vand.u32 2147483647, %v7675
      %v7986 = vand.u32 2147483647, %v7681
      %v7987 = vand.u32 2147483647, %v7687
      %v7988 = vand.u32 2147483647, %v7693
      %v7989 = vand.u32 2147483647, %v7699
      %v7990 = vand.u32 2147483647, %v7705
      %v7991 = vand.u32 2147483647, %v7711
      %v7992 = vand.u32 2147483647, %v7717
      %v7993 = vand.u32 2147483647, %v7723
      %v7994 = vand.u32 2147483647, %v7729
      %v7995 = vand.u32 2147483647, %v7735
      %v7996 = vand.u32 2147483647, %v7741
      %v7997 = vand.u32 2147483647, %v7747
      %v7998 = vand.u32 2147483647, %v7753
      %v7999 = vand.u32 2147483647, %v7759
      %v8000 = vand.u32 2147483647, %v7765
      %v8001 = vand.u32 2147483647, %v7771
      %v8002 = vand.u32 2147483647, %v7777
      %v8003 = vand.u32 2147483647, %v7783
      %v8004 = vand.u32 2147483647, %v7789
      %v8005 = vand.u32 2147483647, %v7795
      %v8006 = vand.u32 2147483647, %v7801
      %v8007 = vand.u32 2147483647, %v7807
      %v8008 = vand.u32 2147483647, %v7813
      %v8009 = vand.u32 2147483647, %v7819
      %v8010 = vand.u32 2147483647, %v7825
      %v8011 = vand.u32 2147483647, %v7831
      %v8012 = vand.u32 2147483647, %v7837
      %v8013 = vand.u32 2147483647, %v7843
      %v8014 = vand.u32 2147483647, %v7849
      %v8015 = vand.u32 2147483647, %v7855
      %v8016 = vand.u32 2147483647, %v7861
      %v8017 = vand.u32 2147483647, %v7867
      %v8018 = vand.u32 2147483647, %v7873
      %v8019 = vand.u32 2147483647, %v7879
      %v8020 = vand.u32 2147483647, %v7885
      %v8021 = vand.u32 2147483647, %v7891
      %v8022 = vsub.f32 0.0, %v7958
      %v8023 = vsub.f32 0.0, %v7959
      %v8024 = vsub.f32 0.0, %v7960
      %v8025 = vsub.f32 0.0, %v7961
      %v8026 = vsub.f32 0.0, %v7962
      %v8027 = vsub.f32 0.0, %v7963
      %v8028 = vsub.f32 0.0, %v7964
      %v8029 = vsub.f32 0.0, %v7965
      %v8030 = vsub.f32 0.0, %v7966
      %v8031 = vsub.f32 0.0, %v7967
      %v8032 = vsub.f32 0.0, %v7968
      %v8033 = vsub.f32 0.0, %v7969
      %v8034 = vsub.f32 0.0, %v7970
      %v8035 = vsub.f32 0.0, %v7971
      %v8036 = vsub.f32 0.0, %v7972
      %v8037 = vsub.f32 0.0, %v7973
      %v8038 = vsub.f32 0.0, %v7974
      %v8039 = vsub.f32 0.0, %v7975
      %v8040 = vsub.f32 0.0, %v7976
      %v8041 = vsub.f32 0.0, %v7977
      %v8042 = vsub.f32 0.0, %v7978
      %v8043 = vsub.f32 0.0, %v7979
      %v8044 = vsub.f32 0.0, %v7980
      %v8045 = vsub.f32 0.0, %v7981
      %v8046 = vsub.f32 0.0, %v7982
      %v8047 = vsub.f32 0.0, %v7983
      %v8048 = vsub.f32 0.0, %v7984
      %v8049 = vsub.f32 0.0, %v7985
      %v8050 = vsub.f32 0.0, %v7986
      %v8051 = vsub.f32 0.0, %v7987
      %v8052 = vsub.f32 0.0, %v7988
      %v8053 = vsub.f32 0.0, %v7989
      %v8054 = vsub.f32 0.0, %v7990
      %v8055 = vsub.f32 0.0, %v7991
      %v8056 = vsub.f32 0.0, %v7992
      %v8057 = vsub.f32 0.0, %v7993
      %v8058 = vsub.f32 0.0, %v7994
      %v8059 = vsub.f32 0.0, %v7995
      %v8060 = vsub.f32 0.0, %v7996
      %v8061 = vsub.f32 0.0, %v7997
      %v8062 = vsub.f32 0.0, %v7998
      %v8063 = vsub.f32 0.0, %v7999
      %v8064 = vsub.f32 0.0, %v8000
      %v8065 = vsub.f32 0.0, %v8001
      %v8066 = vsub.f32 0.0, %v8002
      %v8067 = vsub.f32 0.0, %v8003
      %v8068 = vsub.f32 0.0, %v8004
      %v8069 = vsub.f32 0.0, %v8005
      %v8070 = vsub.f32 0.0, %v8006
      %v8071 = vsub.f32 0.0, %v8007
      %v8072 = vsub.f32 0.0, %v8008
      %v8073 = vsub.f32 0.0, %v8009
      %v8074 = vsub.f32 0.0, %v8010
      %v8075 = vsub.f32 0.0, %v8011
      %v8076 = vsub.f32 0.0, %v8012
      %v8077 = vsub.f32 0.0, %v8013
      %v8078 = vsub.f32 0.0, %v8014
      %v8079 = vsub.f32 0.0, %v8015
      %v8080 = vsub.f32 0.0, %v8016
      %v8081 = vsub.f32 0.0, %v8017
      %v8082 = vsub.f32 0.0, %v8018
      %v8083 = vsub.f32 0.0, %v8019
      %v8084 = vsub.f32 0.0, %v8020
      %v8085 = vsub.f32 0.0, %v8021
      %v8086 = vmul.f32 %v8022, 1.442695
      %v8087 = vpow.pop %v8086
      %v8088 = vmul.f32 %v8023, 1.442695
      %v8089 = vpow.pop %v8088
      %v8090 = vmul.f32 %v8024, 1.442695
      %v8091 = vpow.pop %v8090
      %v8092 = vmul.f32 %v8025, 1.442695
      %v8093 = vpow.pop %v8092
      %v8094 = vmul.f32 %v8026, 1.442695
      %v8095 = vpow.pop %v8094
      %v8096 = vmul.f32 %v8027, 1.442695
      %v8097 = vpow.pop %v8096
      %v8098 = vmul.f32 %v8028, 1.442695
      %v8099 = vpow.pop %v8098
      %v8100 = vmul.f32 %v8029, 1.442695
      %v8101 = vpow.pop %v8100
      %v8102 = vmul.f32 %v8030, 1.442695
      %v8103 = vpow.pop %v8102
      %v8104 = vmul.f32 %v8031, 1.442695
      %v8105 = vpow.pop %v8104
      %v8106 = vmul.f32 %v8032, 1.442695
      %v8107 = vpow.pop %v8106
      %v8108 = vmul.f32 %v8033, 1.442695
      %v8109 = vpow.pop %v8108
      %v8110 = vmul.f32 %v8034, 1.442695
      %v8111 = vpow.pop %v8110
      %v8112 = vmul.f32 %v8035, 1.442695
      %v8113 = vpow.pop %v8112
      %v8114 = vmul.f32 %v8036, 1.442695
      %v8115 = vpow.pop %v8114
      %v8116 = vmul.f32 %v8037, 1.442695
      %v8117 = vpow.pop %v8116
      %v8118 = vmul.f32 %v8038, 1.442695
      %v8119 = vpow.pop %v8118
      %v8120 = vmul.f32 %v8039, 1.442695
      %v8121 = vpow.pop %v8120
      %v8122 = vmul.f32 %v8040, 1.442695
      %v8123 = vpow.pop %v8122
      %v8124 = vmul.f32 %v8041, 1.442695
      %v8125 = vpow.pop %v8124
      %v8126 = vmul.f32 %v8042, 1.442695
      %v8127 = vpow.pop %v8126
      %v8128 = vmul.f32 %v8043, 1.442695
      %v8129 = vpow.pop %v8128
      %v8130 = vmul.f32 %v8044, 1.442695
      %v8131 = vpow.pop %v8130
      %v8132 = vmul.f32 %v8045, 1.442695
      %v8133 = vpow.pop %v8132
      %v8134 = vmul.f32 %v8046, 1.442695
      %v8135 = vpow.pop %v8134
      %v8136 = vmul.f32 %v8047, 1.442695
      %v8137 = vpow.pop %v8136
      %v8138 = vmul.f32 %v8048, 1.442695
      %v8139 = vpow.pop %v8138
      %v8140 = vmul.f32 %v8049, 1.442695
      %v8141 = vpow.pop %v8140
      %v8142 = vmul.f32 %v8050, 1.442695
      %v8143 = vpow.pop %v8142
      %v8144 = vmul.f32 %v8051, 1.442695
      %v8145 = vpow.pop %v8144
      %v8146 = vmul.f32 %v8052, 1.442695
      %v8147 = vpow.pop %v8146
      %v8148 = vmul.f32 %v8053, 1.442695
      %v8149 = vpow.pop %v8148
      %v8150 = vmul.f32 %v8054, 1.442695
      %v8151 = vpow.pop %v8150
      %v8152 = vmul.f32 %v8055, 1.442695
      %v8153 = vpow.pop %v8152
      %v8154 = vmul.f32 %v8056, 1.442695
      %v8155 = vpow.pop %v8154
      %v8156 = vmul.f32 %v8057, 1.442695
      %v8157 = vpow.pop %v8156
      %v8158 = vmul.f32 %v8058, 1.442695
      %v8159 = vpow.pop %v8158
      %v8160 = vmul.f32 %v8059, 1.442695
      %v8161 = vpow.pop %v8160
      %v8162 = vmul.f32 %v8060, 1.442695
      %v8163 = vpow.pop %v8162
      %v8164 = vmul.f32 %v8061, 1.442695
      %v8165 = vpow.pop %v8164
      %v8166 = vmul.f32 %v8062, 1.442695
      %v8167 = vpow.pop %v8166
      %v8168 = vmul.f32 %v8063, 1.442695
      %v8169 = vpow.pop %v8168
      %v8170 = vmul.f32 %v8064, 1.442695
      %v8171 = vpow.pop %v8170
      %v8172 = vmul.f32 %v8065, 1.442695
      %v8173 = vpow.pop %v8172
      %v8174 = vmul.f32 %v8066, 1.442695
      %v8175 = vpow.pop %v8174
      %v8176 = vmul.f32 %v8067, 1.442695
      %v8177 = vpow.pop %v8176
      %v8178 = vmul.f32 %v8068, 1.442695
      %v8179 = vpow.pop %v8178
      %v8180 = vmul.f32 %v8069, 1.442695
      %v8181 = vpow.pop %v8180
      %v8182 = vmul.f32 %v8070, 1.442695
      %v8183 = vpow.pop %v8182
      %v8184 = vmul.f32 %v8071, 1.442695
      %v8185 = vpow.pop %v8184
      %v8186 = vmul.f32 %v8072, 1.442695
      %v8187 = vpow.pop %v8186
      %v8188 = vmul.f32 %v8073, 1.442695
      %v8189 = vpow.pop %v8188
      %v8190 = vmul.f32 %v8074, 1.442695
      %v8191 = vpow.pop %v8190
      %v8192 = vmul.f32 %v8075, 1.442695
      %v8193 = vpow.pop %v8192
      %v8194 = vmul.f32 %v8076, 1.442695
      %v8195 = vpow.pop %v8194
      %v8196 = vmul.f32 %v8077, 1.442695
      %v8197 = vpow.pop %v8196
      %v8198 = vmul.f32 %v8078, 1.442695
      %v8199 = vpow.pop %v8198
      %v8200 = vmul.f32 %v8079, 1.442695
      %v8201 = vpow.pop %v8200
      %v8202 = vmul.f32 %v8080, 1.442695
      %v8203 = vpow.pop %v8202
      %v8204 = vmul.f32 %v8081, 1.442695
      %v8205 = vpow.pop %v8204
      %v8206 = vmul.f32 %v8082, 1.442695
      %v8207 = vpow.pop %v8206
      %v8208 = vmul.f32 %v8083, 1.442695
      %v8209 = vpow.pop %v8208
      %v8210 = vmul.f32 %v8084, 1.442695
      %v8211 = vpow.pop %v8210
      %v8212 = vmul.f32 %v8085, 1.442695
      %v8213 = vpow.pop %v8212
      %v8214 = vadd.f32 %v8087, 1.0
      %v8215 = vadd.f32 %v8089, 1.0
      %v8216 = vadd.f32 %v8091, 1.0
      %v8217 = vadd.f32 %v8093, 1.0
      %v8218 = vadd.f32 %v8095, 1.0
      %v8219 = vadd.f32 %v8097, 1.0
      %v8220 = vadd.f32 %v8099, 1.0
      %v8221 = vadd.f32 %v8101, 1.0
      %v8222 = vadd.f32 %v8103, 1.0
      %v8223 = vadd.f32 %v8105, 1.0
      %v8224 = vadd.f32 %v8107, 1.0
      %v8225 = vadd.f32 %v8109, 1.0
      %v8226 = vadd.f32 %v8111, 1.0
      %v8227 = vadd.f32 %v8113, 1.0
      %v8228 = vadd.f32 %v8115, 1.0
      %v8229 = vadd.f32 %v8117, 1.0
      %v8230 = vadd.f32 %v8119, 1.0
      %v8231 = vadd.f32 %v8121, 1.0
      %v8232 = vadd.f32 %v8123, 1.0
      %v8233 = vadd.f32 %v8125, 1.0
      %v8234 = vadd.f32 %v8127, 1.0
      %v8235 = vadd.f32 %v8129, 1.0
      %v8236 = vadd.f32 %v8131, 1.0
      %v8237 = vadd.f32 %v8133, 1.0
      %v8238 = vadd.f32 %v8135, 1.0
      %v8239 = vadd.f32 %v8137, 1.0
      %v8240 = vadd.f32 %v8139, 1.0
      %v8241 = vadd.f32 %v8141, 1.0
      %v8242 = vadd.f32 %v8143, 1.0
      %v8243 = vadd.f32 %v8145, 1.0
      %v8244 = vadd.f32 %v8147, 1.0
      %v8245 = vadd.f32 %v8149, 1.0
      %v8246 = vadd.f32 %v8151, 1.0
      %v8247 = vadd.f32 %v8153, 1.0
      %v8248 = vadd.f32 %v8155, 1.0
      %v8249 = vadd.f32 %v8157, 1.0
      %v8250 = vadd.f32 %v8159, 1.0
      %v8251 = vadd.f32 %v8161, 1.0
      %v8252 = vadd.f32 %v8163, 1.0
      %v8253 = vadd.f32 %v8165, 1.0
      %v8254 = vadd.f32 %v8167, 1.0
      %v8255 = vadd.f32 %v8169, 1.0
      %v8256 = vadd.f32 %v8171, 1.0
      %v8257 = vadd.f32 %v8173, 1.0
      %v8258 = vadd.f32 %v8175, 1.0
      %v8259 = vadd.f32 %v8177, 1.0
      %v8260 = vadd.f32 %v8179, 1.0
      %v8261 = vadd.f32 %v8181, 1.0
      %v8262 = vadd.f32 %v8183, 1.0
      %v8263 = vadd.f32 %v8185, 1.0
      %v8264 = vadd.f32 %v8187, 1.0
      %v8265 = vadd.f32 %v8189, 1.0
      %v8266 = vadd.f32 %v8191, 1.0
      %v8267 = vadd.f32 %v8193, 1.0
      %v8268 = vadd.f32 %v8195, 1.0
      %v8269 = vadd.f32 %v8197, 1.0
      %v8270 = vadd.f32 %v8199, 1.0
      %v8271 = vadd.f32 %v8201, 1.0
      %v8272 = vadd.f32 %v8203, 1.0
      %v8273 = vadd.f32 %v8205, 1.0
      %v8274 = vadd.f32 %v8207, 1.0
      %v8275 = vadd.f32 %v8209, 1.0
      %v8276 = vadd.f32 %v8211, 1.0
      %v8277 = vadd.f32 %v8213, 1.0
      %v8278 = vlog2.pop %v8214
      %v8279 = vmul.f32 %v8278, 0.6931472
      %v8280 = vlog2.pop %v8215
      %v8281 = vmul.f32 %v8280, 0.6931472
      %v8282 = vlog2.pop %v8216
      %v8283 = vmul.f32 %v8282, 0.6931472
      %v8284 = vlog2.pop %v8217
      %v8285 = vmul.f32 %v8284, 0.6931472
      %v8286 = vlog2.pop %v8218
      %v8287 = vmul.f32 %v8286, 0.6931472
      %v8288 = vlog2.pop %v8219
      %v8289 = vmul.f32 %v8288, 0.6931472
      %v8290 = vlog2.pop %v8220
      %v8291 = vmul.f32 %v8290, 0.6931472
      %v8292 = vlog2.pop %v8221
      %v8293 = vmul.f32 %v8292, 0.6931472
      %v8294 = vlog2.pop %v8222
      %v8295 = vmul.f32 %v8294, 0.6931472
      %v8296 = vlog2.pop %v8223
      %v8297 = vmul.f32 %v8296, 0.6931472
      %v8298 = vlog2.pop %v8224
      %v8299 = vmul.f32 %v8298, 0.6931472
      %v8300 = vlog2.pop %v8225
      %v8301 = vmul.f32 %v8300, 0.6931472
      %v8302 = vlog2.pop %v8226
      %v8303 = vmul.f32 %v8302, 0.6931472
      %v8304 = vlog2.pop %v8227
      %v8305 = vmul.f32 %v8304, 0.6931472
      %v8306 = vlog2.pop %v8228
      %v8307 = vmul.f32 %v8306, 0.6931472
      %v8308 = vlog2.pop %v8229
      %v8309 = vmul.f32 %v8308, 0.6931472
      %v8310 = vlog2.pop %v8230
      %v8311 = vmul.f32 %v8310, 0.6931472
      %v8312 = vlog2.pop %v8231
      %v8313 = vmul.f32 %v8312, 0.6931472
      %v8314 = vlog2.pop %v8232
      %v8315 = vmul.f32 %v8314, 0.6931472
      %v8316 = vlog2.pop %v8233
      %v8317 = vmul.f32 %v8316, 0.6931472
      %v8318 = vlog2.pop %v8234
      %v8319 = vmul.f32 %v8318, 0.6931472
      %v8320 = vlog2.pop %v8235
      %v8321 = vmul.f32 %v8320, 0.6931472
      %v8322 = vlog2.pop %v8236
      %v8323 = vmul.f32 %v8322, 0.6931472
      %v8324 = vlog2.pop %v8237
      %v8325 = vmul.f32 %v8324, 0.6931472
      %v8326 = vlog2.pop %v8238
      %v8327 = vmul.f32 %v8326, 0.6931472
      %v8328 = vlog2.pop %v8239
      %v8329 = vmul.f32 %v8328, 0.6931472
      %v8330 = vlog2.pop %v8240
      %v8331 = vmul.f32 %v8330, 0.6931472
      %v8332 = vlog2.pop %v8241
      %v8333 = vmul.f32 %v8332, 0.6931472
      %v8334 = vlog2.pop %v8242
      %v8335 = vmul.f32 %v8334, 0.6931472
      %v8336 = vlog2.pop %v8243
      %v8337 = vmul.f32 %v8336, 0.6931472
      %v8338 = vlog2.pop %v8244
      %v8339 = vmul.f32 %v8338, 0.6931472
      %v8340 = vlog2.pop %v8245
      %v8341 = vmul.f32 %v8340, 0.6931472
      %v8342 = vlog2.pop %v8246
      %v8343 = vmul.f32 %v8342, 0.6931472
      %v8344 = vlog2.pop %v8247
      %v8345 = vmul.f32 %v8344, 0.6931472
      %v8346 = vlog2.pop %v8248
      %v8347 = vmul.f32 %v8346, 0.6931472
      %v8348 = vlog2.pop %v8249
      %v8349 = vmul.f32 %v8348, 0.6931472
      %v8350 = vlog2.pop %v8250
      %v8351 = vmul.f32 %v8350, 0.6931472
      %v8352 = vlog2.pop %v8251
      %v8353 = vmul.f32 %v8352, 0.6931472
      %v8354 = vlog2.pop %v8252
      %v8355 = vmul.f32 %v8354, 0.6931472
      %v8356 = vlog2.pop %v8253
      %v8357 = vmul.f32 %v8356, 0.6931472
      %v8358 = vlog2.pop %v8254
      %v8359 = vmul.f32 %v8358, 0.6931472
      %v8360 = vlog2.pop %v8255
      %v8361 = vmul.f32 %v8360, 0.6931472
      %v8362 = vlog2.pop %v8256
      %v8363 = vmul.f32 %v8362, 0.6931472
      %v8364 = vlog2.pop %v8257
      %v8365 = vmul.f32 %v8364, 0.6931472
      %v8366 = vlog2.pop %v8258
      %v8367 = vmul.f32 %v8366, 0.6931472
      %v8368 = vlog2.pop %v8259
      %v8369 = vmul.f32 %v8368, 0.6931472
      %v8370 = vlog2.pop %v8260
      %v8371 = vmul.f32 %v8370, 0.6931472
      %v8372 = vlog2.pop %v8261
      %v8373 = vmul.f32 %v8372, 0.6931472
      %v8374 = vlog2.pop %v8262
      %v8375 = vmul.f32 %v8374, 0.6931472
      %v8376 = vlog2.pop %v8263
      %v8377 = vmul.f32 %v8376, 0.6931472
      %v8378 = vlog2.pop %v8264
      %v8379 = vmul.f32 %v8378, 0.6931472
      %v8380 = vlog2.pop %v8265
      %v8381 = vmul.f32 %v8380, 0.6931472
      %v8382 = vlog2.pop %v8266
      %v8383 = vmul.f32 %v8382, 0.6931472
      %v8384 = vlog2.pop %v8267
      %v8385 = vmul.f32 %v8384, 0.6931472
      %v8386 = vlog2.pop %v8268
      %v8387 = vmul.f32 %v8386, 0.6931472
      %v8388 = vlog2.pop %v8269
      %v8389 = vmul.f32 %v8388, 0.6931472
      %v8390 = vlog2.pop %v8270
      %v8391 = vmul.f32 %v8390, 0.6931472
      %v8392 = vlog2.pop %v8271
      %v8393 = vmul.f32 %v8392, 0.6931472
      %v8394 = vlog2.pop %v8272
      %v8395 = vmul.f32 %v8394, 0.6931472
      %v8396 = vlog2.pop %v8273
      %v8397 = vmul.f32 %v8396, 0.6931472
      %v8398 = vlog2.pop %v8274
      %v8399 = vmul.f32 %v8398, 0.6931472
      %v8400 = vlog2.pop %v8275
      %v8401 = vmul.f32 %v8400, 0.6931472
      %v8402 = vlog2.pop %v8276
      %v8403 = vmul.f32 %v8402, 0.6931472
      %v8404 = vlog2.pop %v8277
      %v8405 = vmul.f32 %v8404, 0.6931472
      %v8406 = vadd.f32 %v7894, %v8279
      %v8407 = vadd.f32 %v7895, %v8281
      %v8408 = vadd.f32 %v7896, %v8283
      %v8409 = vadd.f32 %v7897, %v8285
      %v8410 = vadd.f32 %v7898, %v8287
      %v8411 = vadd.f32 %v7899, %v8289
      %v8412 = vadd.f32 %v7900, %v8291
      %v8413 = vadd.f32 %v7901, %v8293
      %v8414 = vadd.f32 %v7902, %v8295
      %v8415 = vadd.f32 %v7903, %v8297
      %v8416 = vadd.f32 %v7904, %v8299
      %v8417 = vadd.f32 %v7905, %v8301
      %v8418 = vadd.f32 %v7906, %v8303
      %v8419 = vadd.f32 %v7907, %v8305
      %v8420 = vadd.f32 %v7908, %v8307
      %v8421 = vadd.f32 %v7909, %v8309
      %v8422 = vadd.f32 %v7910, %v8311
      %v8423 = vadd.f32 %v7911, %v8313
      %v8424 = vadd.f32 %v7912, %v8315
      %v8425 = vadd.f32 %v7913, %v8317
      %v8426 = vadd.f32 %v7914, %v8319
      %v8427 = vadd.f32 %v7915, %v8321
      %v8428 = vadd.f32 %v7916, %v8323
      %v8429 = vadd.f32 %v7917, %v8325
      %v8430 = vadd.f32 %v7918, %v8327
      %v8431 = vadd.f32 %v7919, %v8329
      %v8432 = vadd.f32 %v7920, %v8331
      %v8433 = vadd.f32 %v7921, %v8333
      %v8434 = vadd.f32 %v7922, %v8335
      %v8435 = vadd.f32 %v7923, %v8337
      %v8436 = vadd.f32 %v7924, %v8339
      %v8437 = vadd.f32 %v7925, %v8341
      %v8438 = vadd.f32 %v7926, %v8343
      %v8439 = vadd.f32 %v7927, %v8345
      %v8440 = vadd.f32 %v7928, %v8347
      %v8441 = vadd.f32 %v7929, %v8349
      %v8442 = vadd.f32 %v7930, %v8351
      %v8443 = vadd.f32 %v7931, %v8353
      %v8444 = vadd.f32 %v7932, %v8355
      %v8445 = vadd.f32 %v7933, %v8357
      %v8446 = vadd.f32 %v7934, %v8359
      %v8447 = vadd.f32 %v7935, %v8361
      %v8448 = vadd.f32 %v7936, %v8363
      %v8449 = vadd.f32 %v7937, %v8365
      %v8450 = vadd.f32 %v7938, %v8367
      %v8451 = vadd.f32 %v7939, %v8369
      %v8452 = vadd.f32 %v7940, %v8371
      %v8453 = vadd.f32 %v7941, %v8373
      %v8454 = vadd.f32 %v7942, %v8375
      %v8455 = vadd.f32 %v7943, %v8377
      %v8456 = vadd.f32 %v7944, %v8379
      %v8457 = vadd.f32 %v7945, %v8381
      %v8458 = vadd.f32 %v7946, %v8383
      %v8459 = vadd.f32 %v7947, %v8385
      %v8460 = vadd.f32 %v7948, %v8387
      %v8461 = vadd.f32 %v7949, %v8389
      %v8462 = vadd.f32 %v7950, %v8391
      %v8463 = vadd.f32 %v7951, %v8393
      %v8464 = vadd.f32 %v7952, %v8395
      %v8465 = vadd.f32 %v7953, %v8397
      %v8466 = vadd.f32 %v7954, %v8399
      %v8467 = vadd.f32 %v7955, %v8401
      %v8468 = vadd.f32 %v7956, %v8403
      %v8469 = vadd.f32 %v7957, %v8405
      %v8470 = vld [vmem:[%s5] sm:$0x1]
      %s8471 = sld [smem:[#allocation2]]
      %v8472 = vstv %s8471
      %vm8473 = vcmask 130048
      %v8475 = vsel %vm8473, %v8470, 0
      %v8478 = vsel %vm8473, %v8406, 0
      %v8481 = vsel %vm8473, %v8407, 0
      %v8484 = vsel %vm8473, %v8408, 0
      %v8487 = vsel %vm8473, %v8409, 0
      %v8490 = vsel %vm8473, %v8410, 0
      %v8493 = vsel %vm8473, %v8411, 0
      %v8496 = vsel %vm8473, %v8412, 0
      %v8499 = vsel %vm8473, %v8413, 0
      %v8502 = vsel %vm8473, %v8414, 0
      %v8505 = vsel %vm8473, %v8415, 0
      %v8508 = vsel %vm8473, %v8416, 0
      %v8511 = vsel %vm8473, %v8417, 0
      %v8514 = vsel %vm8473, %v8418, 0
      %v8517 = vsel %vm8473, %v8419, 0
      %v8520 = vsel %vm8473, %v8420, 0
      %v8523 = vsel %vm8473, %v8421, 0
      %v8526 = vsel %vm8473, %v8422, 0
      %v8529 = vsel %vm8473, %v8423, 0
      %v8532 = vsel %vm8473, %v8424, 0
      %v8535 = vsel %vm8473, %v8425, 0
      %v8538 = vsel %vm8473, %v8426, 0
      %v8541 = vsel %vm8473, %v8427, 0
      %v8544 = vsel %vm8473, %v8428, 0
      %v8547 = vsel %vm8473, %v8429, 0
      %v8550 = vsel %vm8473, %v8430, 0
      %v8553 = vsel %vm8473, %v8431, 0
      %v8556 = vsel %vm8473, %v8432, 0
      %v8559 = vsel %vm8473, %v8433, 0
      %v8562 = vsel %vm8473, %v8434, 0
      %v8565 = vsel %vm8473, %v8435, 0
      %v8568 = vsel %vm8473, %v8436, 0
      %v8571 = vsel %vm8473, %v8437, 0
      %v8574 = vsel %vm8473, %v8438, 0
      %v8577 = vsel %vm8473, %v8439, 0
      %v8580 = vsel %vm8473, %v8440, 0
      %v8583 = vsel %vm8473, %v8441, 0
      %v8586 = vsel %vm8473, %v8442, 0
      %v8589 = vsel %vm8473, %v8443, 0
      %v8592 = vsel %vm8473, %v8444, 0
      %v8595 = vsel %vm8473, %v8445, 0
      %v8598 = vsel %vm8473, %v8446, 0
      %v8601 = vsel %vm8473, %v8447, 0
      %v8604 = vsel %vm8473, %v8448, 0
      %v8607 = vsel %vm8473, %v8449, 0
      %v8610 = vsel %vm8473, %v8450, 0
      %v8613 = vsel %vm8473, %v8451, 0
      %v8616 = vsel %vm8473, %v8452, 0
      %v8619 = vsel %vm8473, %v8453, 0
      %v8622 = vsel %vm8473, %v8454, 0
      %v8625 = vsel %vm8473, %v8455, 0
      %v8628 = vsel %vm8473, %v8456, 0
      %v8631 = vsel %vm8473, %v8457, 0
      %v8634 = vsel %vm8473, %v8458, 0
      %v8637 = vsel %vm8473, %v8459, 0
      %v8640 = vsel %vm8473, %v8460, 0
      %v8643 = vsel %vm8473, %v8461, 0
      %v8646 = vsel %vm8473, %v8462, 0
      %v8649 = vsel %vm8473, %v8463, 0
      %v8652 = vsel %vm8473, %v8464, 0
      %v8655 = vsel %vm8473, %v8465, 0
      %v8658 = vsel %vm8473, %v8466, 0
      %v8661 = vsel %vm8473, %v8467, 0
      %v8664 = vsel %vm8473, %v8468, 0
      %v8667 = vsel %vm8473, %v8469, 0
      %8669 = vmatprep.subr.mxu0 0.0
      %v8670 = vand.u32 %v8523, 4294901760
      %8671 = vmatpush1.xpose.msra.mxu0 %v8670
      %8672 = vmatprep.subr.mxu0 0.0
      %v8673 = vand.u32 %v8520, 4294901760
      %8674 = vmatpush1.xpose.msra.mxu0 %v8673
      %8675 = vmatprep.subr.mxu0 0.0
      %v8676 = vand.u32 %v8517, 4294901760
      %8677 = vmatpush1.xpose.msra.mxu0 %v8676
      %8678 = vmatprep.subr.mxu0 0.0
      %v8679 = vand.u32 %v8514, 4294901760
      %8680 = vmatpush1.xpose.msra.mxu0 %v8679
      %8681 = vmatprep.subr.mxu0 0.0
      %v8682 = vand.u32 %v8511, 4294901760
      %8683 = vmatpush1.xpose.msra.mxu0 %v8682
      %8684 = vmatprep.subr.mxu0 0.0
      %v8685 = vand.u32 %v8508, 4294901760
      %8686 = vmatpush1.xpose.msra.mxu0 %v8685
      %8687 = vmatprep.subr.mxu0 0.0
      %v8688 = vand.u32 %v8505, 4294901760
      %8689 = vmatpush1.xpose.msra.mxu0 %v8688
      %8690 = vmatprep.subr.mxu0 0.0
      %v8691 = vand.u32 %v8502, 4294901760
      %8692 = vmatpush1.xpose.msra.mxu0 %v8691
      %8693 = vmatprep.subr.mxu0 0.0
      %v8694 = vand.u32 %v8499, 4294901760
      %8695 = vmatpush1.xpose.msra.mxu0 %v8694
      %8696 = vmatprep.subr.mxu0 0.0
      %v8697 = vand.u32 %v8496, 4294901760
      %8698 = vmatpush1.xpose.msra.mxu0 %v8697
      %8699 = vmatprep.subr.mxu0 0.0
      %v8700 = vand.u32 %v8493, 4294901760
      %8701 = vmatpush1.xpose.msra.mxu0 %v8700
      %8702 = vmatprep.subr.mxu0 0.0
      %v8703 = vand.u32 %v8490, 4294901760
      %8704 = vmatpush1.xpose.msra.mxu0 %v8703
      %8705 = vmatprep.subr.mxu0 0.0
      %v8706 = vand.u32 %v8487, 4294901760
      %8707 = vmatpush1.xpose.msra.mxu0 %v8706
      %8708 = vmatprep.subr.mxu0 0.0
      %v8709 = vand.u32 %v8484, 4294901760
      %8710 = vmatpush1.xpose.msra.mxu0 %v8709
      %8711 = vmatprep.subr.mxu0 0.0
      %v8712 = vand.u32 %v8481, 4294901760
      %8713 = vmatpush1.xpose.msra.mxu0 %v8712
      %8714 = vmatprep.subr.mxu0 0.0
      %v8715 = vand.u32 %v8478, 4294901760
      %8716 = vmatpush1.xpose.msra.mxu0 %v8715
      %8717 = vmatprep.subr.mxu0 0.0
      %v8718 = vand.u32 %v8571, 4294901760
      %8719 = vmatpush2.xpose.msra.mxu0 %v8718
      %8720 = vmatprep.subr.mxu0 0.0
      %v8721 = vand.u32 %v8568, 4294901760
      %8722 = vmatpush2.xpose.msra.mxu0 %v8721
      %8723 = vmatprep.subr.mxu0 0.0
      %v8724 = vand.u32 %v8565, 4294901760
      %8725 = vmatpush2.xpose.msra.mxu0 %v8724
      %8726 = vmatprep.subr.mxu0 0.0
      %v8727 = vand.u32 %v8562, 4294901760
      %8728 = vmatpush2.xpose.msra.mxu0 %v8727
      %8729 = vmatprep.subr.mxu0 0.0
      %v8730 = vand.u32 %v8559, 4294901760
      %8731 = vmatpush2.xpose.msra.mxu0 %v8730
      %8732 = vmatprep.subr.mxu0 0.0
      %v8733 = vand.u32 %v8556, 4294901760
      %8734 = vmatpush2.xpose.msra.mxu0 %v8733
      %8735 = vmatprep.subr.mxu0 0.0
      %v8736 = vand.u32 %v8553, 4294901760
      %8737 = vmatpush2.xpose.msra.mxu0 %v8736
      %8738 = vmatprep.subr.mxu0 0.0
      %v8739 = vand.u32 %v8550, 4294901760
      %8740 = vmatpush2.xpose.msra.mxu0 %v8739
      %8741 = vmatprep.subr.mxu0 0.0
      %v8742 = vand.u32 %v8547, 4294901760
      %8743 = vmatpush2.xpose.msra.mxu0 %v8742
      %8744 = vmatprep.subr.mxu0 0.0
      %v8745 = vand.u32 %v8544, 4294901760
      %8746 = vmatpush2.xpose.msra.mxu0 %v8745
      %8747 = vmatprep.subr.mxu0 0.0
      %v8748 = vand.u32 %v8541, 4294901760
      %8749 = vmatpush2.xpose.msra.mxu0 %v8748
      %8750 = vmatprep.subr.mxu0 0.0
      %v8751 = vand.u32 %v8538, 4294901760
      %8752 = vmatpush2.xpose.msra.mxu0 %v8751
      %8753 = vmatprep.subr.mxu0 0.0
      %v8754 = vand.u32 %v8535, 4294901760
      %8755 = vmatpush2.xpose.msra.mxu0 %v8754
      %8756 = vmatprep.subr.mxu0 0.0
      %v8757 = vand.u32 %v8532, 4294901760
      %8758 = vmatpush2.xpose.msra.mxu0 %v8757
      %8759 = vmatprep.subr.mxu0 0.0
      %v8760 = vand.u32 %v8529, 4294901760
      %8761 = vmatpush2.xpose.msra.mxu0 %v8760
      %8762 = vmatprep.subr.mxu0 0.0
      %v8763 = vand.u32 %v8526, 4294901760
      %8764 = vmatpush2.xpose.msra.mxu0 %v8763
      %8765 = vmatprep.mubr.f32.mxu0 0.0
      %v8766 = vand.u32 %v8475, 4294901760
      %v8767 = vsub.f32 %v8475, %v8766
      %v8768 = vand.u32 %v8767, 4294901760
      %v8769 = vsub.f32 %v8767, %v8768
      %v8770 = vand.u32 %v8769, 4294901760
      %8771 = vmatmul.mubr.f32.gmra.mxu0 %v8770
      %v8772 = vpop.f32.mrf.mxu0
      %v8773 = vadd.f32 %v8472, %v8772
      %v8774 = vpop.f32.mrf.mxu0
      %v8775 = vadd.f32 %v8472, %v8774
      %8776 = vdwg.mxu0
      %8777 = vmatprep.subr.mxu0 0.0
      %v8778 = vand.u32 %v8523, 4294901760
      %v8779 = vsub.f32 %v8523, %v8778
      %v8780 = vand.u32 %v8779, 4294901760
      %v8781 = vsub.f32 %v8779, %v8780
      %v8782 = vand.u32 %v8781, 4294901760
      %8783 = vmatpush1.xpose.msra.mxu0 %v8782
      %8784 = vmatprep.subr.mxu0 0.0
      %v8785 = vand.u32 %v8520, 4294901760
      %v8786 = vsub.f32 %v8520, %v8785
      %v8787 = vand.u32 %v8786, 4294901760
      %v8788 = vsub.f32 %v8786, %v8787
      %v8789 = vand.u32 %v8788, 4294901760
      %8790 = vmatpush1.xpose.msra.mxu0 %v8789
      %8791 = vmatprep.subr.mxu0 0.0
      %v8792 = vand.u32 %v8517, 4294901760
      %v8793 = vsub.f32 %v8517, %v8792
      %v8794 = vand.u32 %v8793, 4294901760
      %v8795 = vsub.f32 %v8793, %v8794
      %v8796 = vand.u32 %v8795, 4294901760
      %8797 = vmatpush1.xpose.msra.mxu0 %v8796
      %8798 = vmatprep.subr.mxu0 0.0
      %v8799 = vand.u32 %v8514, 4294901760
      %v8800 = vsub.f32 %v8514, %v8799
      %v8801 = vand.u32 %v8800, 4294901760
      %v8802 = vsub.f32 %v8800, %v8801
      %v8803 = vand.u32 %v8802, 4294901760
      %8804 = vmatpush1.xpose.msra.mxu0 %v8803
      %8805 = vmatprep.subr.mxu0 0.0
      %v8806 = vand.u32 %v8511, 4294901760
      %v8807 = vsub.f32 %v8511, %v8806
      %v8808 = vand.u32 %v8807, 4294901760
      %v8809 = vsub.f32 %v8807, %v8808
      %v8810 = vand.u32 %v8809, 4294901760
      %8811 = vmatpush1.xpose.msra.mxu0 %v8810
      %8812 = vmatprep.subr.mxu0 0.0
      %v8813 = vand.u32 %v8508, 4294901760
      %v8814 = vsub.f32 %v8508, %v8813
      %v8815 = vand.u32 %v8814, 4294901760
      %v8816 = vsub.f32 %v8814, %v8815
      %v8817 = vand.u32 %v8816, 4294901760
      %8818 = vmatpush1.xpose.msra.mxu0 %v8817
      %8819 = vmatprep.subr.mxu0 0.0
      %v8820 = vand.u32 %v8505, 4294901760
      %v8821 = vsub.f32 %v8505, %v8820
      %v8822 = vand.u32 %v8821, 4294901760
      %v8823 = vsub.f32 %v8821, %v8822
      %v8824 = vand.u32 %v8823, 4294901760
      %8825 = vmatpush1.xpose.msra.mxu0 %v8824
      %8826 = vmatprep.subr.mxu0 0.0
      %v8827 = vand.u32 %v8502, 4294901760
      %v8828 = vsub.f32 %v8502, %v8827
      %v8829 = vand.u32 %v8828, 4294901760
      %v8830 = vsub.f32 %v8828, %v8829
      %v8831 = vand.u32 %v8830, 4294901760
      %8832 = vmatpush1.xpose.msra.mxu0 %v8831
      %8833 = vmatprep.subr.mxu0 0.0
      %v8834 = vand.u32 %v8499, 4294901760
      %v8835 = vsub.f32 %v8499, %v8834
      %v8836 = vand.u32 %v8835, 4294901760
      %v8837 = vsub.f32 %v8835, %v8836
      %v8838 = vand.u32 %v8837, 4294901760
      %8839 = vmatpush1.xpose.msra.mxu0 %v8838
      %8840 = vmatprep.subr.mxu0 0.0
      %v8841 = vand.u32 %v8496, 4294901760
      %v8842 = vsub.f32 %v8496, %v8841
      %v8843 = vand.u32 %v8842, 4294901760
      %v8844 = vsub.f32 %v8842, %v8843
      %v8845 = vand.u32 %v8844, 4294901760
      %8846 = vmatpush1.xpose.msra.mxu0 %v8845
      %8847 = vmatprep.subr.mxu0 0.0
      %v8848 = vand.u32 %v8493, 4294901760
      %v8849 = vsub.f32 %v8493, %v8848
      %v8850 = vand.u32 %v8849, 4294901760
      %v8851 = vsub.f32 %v8849, %v8850
      %v8852 = vand.u32 %v8851, 4294901760
      %8853 = vmatpush1.xpose.msra.mxu0 %v8852
      %8854 = vmatprep.subr.mxu0 0.0
      %v8855 = vand.u32 %v8490, 4294901760
      %v8856 = vsub.f32 %v8490, %v8855
      %v8857 = vand.u32 %v8856, 4294901760
      %v8858 = vsub.f32 %v8856, %v8857
      %v8859 = vand.u32 %v8858, 4294901760
      %8860 = vmatpush1.xpose.msra.mxu0 %v8859
      %8861 = vmatprep.subr.mxu0 0.0
      %v8862 = vand.u32 %v8487, 4294901760
      %v8863 = vsub.f32 %v8487, %v8862
      %v8864 = vand.u32 %v8863, 4294901760
      %v8865 = vsub.f32 %v8863, %v8864
      %v8866 = vand.u32 %v8865, 4294901760
      %8867 = vmatpush1.xpose.msra.mxu0 %v8866
      %8868 = vmatprep.subr.mxu0 0.0
      %v8869 = vand.u32 %v8484, 4294901760
      %v8870 = vsub.f32 %v8484, %v8869
      %v8871 = vand.u32 %v8870, 4294901760
      %v8872 = vsub.f32 %v8870, %v8871
      %v8873 = vand.u32 %v8872, 4294901760
      %8874 = vmatpush1.xpose.msra.mxu0 %v8873
      %8875 = vmatprep.subr.mxu0 0.0
      %v8876 = vand.u32 %v8481, 4294901760
      %v8877 = vsub.f32 %v8481, %v8876
      %v8878 = vand.u32 %v8877, 4294901760
      %v8879 = vsub.f32 %v8877, %v8878
      %v8880 = vand.u32 %v8879, 4294901760
      %8881 = vmatpush1.xpose.msra.mxu0 %v8880
      %8882 = vmatprep.subr.mxu0 0.0
      %v8883 = vand.u32 %v8478, 4294901760
      %v8884 = vsub.f32 %v8478, %v8883
      %v8885 = vand.u32 %v8884, 4294901760
      %v8886 = vsub.f32 %v8884, %v8885
      %v8887 = vand.u32 %v8886, 4294901760
      %8888 = vmatpush1.xpose.msra.mxu0 %v8887
      %8889 = vmatprep.subr.mxu0 0.0
      %v8890 = vand.u32 %v8571, 4294901760
      %v8891 = vsub.f32 %v8571, %v8890
      %v8892 = vand.u32 %v8891, 4294901760
      %v8893 = vsub.f32 %v8891, %v8892
      %v8894 = vand.u32 %v8893, 4294901760
      %8895 = vmatpush2.xpose.msra.mxu0 %v8894
      %8896 = vmatprep.subr.mxu0 0.0
      %v8897 = vand.u32 %v8568, 4294901760
      %v8898 = vsub.f32 %v8568, %v8897
      %v8899 = vand.u32 %v8898, 4294901760
      %v8900 = vsub.f32 %v8898, %v8899
      %v8901 = vand.u32 %v8900, 4294901760
      %8902 = vmatpush2.xpose.msra.mxu0 %v8901
      %8903 = vmatprep.subr.mxu0 0.0
      %v8904 = vand.u32 %v8565, 4294901760
      %v8905 = vsub.f32 %v8565, %v8904
      %v8906 = vand.u32 %v8905, 4294901760
      %v8907 = vsub.f32 %v8905, %v8906
      %v8908 = vand.u32 %v8907, 4294901760
      %8909 = vmatpush2.xpose.msra.mxu0 %v8908
      %8910 = vmatprep.subr.mxu0 0.0
      %v8911 = vand.u32 %v8562, 4294901760
      %v8912 = vsub.f32 %v8562, %v8911
      %v8913 = vand.u32 %v8912, 4294901760
      %v8914 = vsub.f32 %v8912, %v8913
      %v8915 = vand.u32 %v8914, 4294901760
      %8916 = vmatpush2.xpose.msra.mxu0 %v8915
      %8917 = vmatprep.subr.mxu0 0.0
      %v8918 = vand.u32 %v8559, 4294901760
      %v8919 = vsub.f32 %v8559, %v8918
      %v8920 = vand.u32 %v8919, 4294901760
      %v8921 = vsub.f32 %v8919, %v8920
      %v8922 = vand.u32 %v8921, 4294901760
      %8923 = vmatpush2.xpose.msra.mxu0 %v8922
      %8924 = vmatprep.subr.mxu0 0.0
      %v8925 = vand.u32 %v8556, 4294901760
      %v8926 = vsub.f32 %v8556, %v8925
      %v8927 = vand.u32 %v8926, 4294901760
      %v8928 = vsub.f32 %v8926, %v8927
      %v8929 = vand.u32 %v8928, 4294901760
      %8930 = vmatpush2.xpose.msra.mxu0 %v8929
      %8931 = vmatprep.subr.mxu0 0.0
      %v8932 = vand.u32 %v8553, 4294901760
      %v8933 = vsub.f32 %v8553, %v8932
      %v8934 = vand.u32 %v8933, 4294901760
      %v8935 = vsub.f32 %v8933, %v8934
      %v8936 = vand.u32 %v8935, 4294901760
      %8937 = vmatpush2.xpose.msra.mxu0 %v8936
      %8938 = vmatprep.subr.mxu0 0.0
      %v8939 = vand.u32 %v8550, 4294901760
      %v8940 = vsub.f32 %v8550, %v8939
      %v8941 = vand.u32 %v8940, 4294901760
      %v8942 = vsub.f32 %v8940, %v8941
      %v8943 = vand.u32 %v8942, 4294901760
      %8944 = vmatpush2.xpose.msra.mxu0 %v8943
      %8945 = vmatprep.subr.mxu0 0.0
      %v8946 = vand.u32 %v8547, 4294901760
      %v8947 = vsub.f32 %v8547, %v8946
      %v8948 = vand.u32 %v8947, 4294901760
      %v8949 = vsub.f32 %v8947, %v8948
      %v8950 = vand.u32 %v8949, 4294901760
      %8951 = vmatpush2.xpose.msra.mxu0 %v8950
      %8952 = vmatprep.subr.mxu0 0.0
      %v8953 = vand.u32 %v8544, 4294901760
      %v8954 = vsub.f32 %v8544, %v8953
      %v8955 = vand.u32 %v8954, 4294901760
      %v8956 = vsub.f32 %v8954, %v8955
      %v8957 = vand.u32 %v8956, 4294901760
      %8958 = vmatpush2.xpose.msra.mxu0 %v8957
      %8959 = vmatprep.subr.mxu0 0.0
      %v8960 = vand.u32 %v8541, 4294901760
      %v8961 = vsub.f32 %v8541, %v8960
      %v8962 = vand.u32 %v8961, 4294901760
      %v8963 = vsub.f32 %v8961, %v8962
      %v8964 = vand.u32 %v8963, 4294901760
      %8965 = vmatpush2.xpose.msra.mxu0 %v8964
      %8966 = vmatprep.subr.mxu0 0.0
      %v8967 = vand.u32 %v8538, 4294901760
      %v8968 = vsub.f32 %v8538, %v8967
      %v8969 = vand.u32 %v8968, 4294901760
      %v8970 = vsub.f32 %v8968, %v8969
      %v8971 = vand.u32 %v8970, 4294901760
      %8972 = vmatpush2.xpose.msra.mxu0 %v8971
      %8973 = vmatprep.subr.mxu0 0.0
      %v8974 = vand.u32 %v8535, 4294901760
      %v8975 = vsub.f32 %v8535, %v8974
      %v8976 = vand.u32 %v8975, 4294901760
      %v8977 = vsub.f32 %v8975, %v8976
      %v8978 = vand.u32 %v8977, 4294901760
      %8979 = vmatpush2.xpose.msra.mxu0 %v8978
      %8980 = vmatprep.subr.mxu0 0.0
      %v8981 = vand.u32 %v8532, 4294901760
      %v8982 = vsub.f32 %v8532, %v8981
      %v8983 = vand.u32 %v8982, 4294901760
      %v8984 = vsub.f32 %v8982, %v8983
      %v8985 = vand.u32 %v8984, 4294901760
      %8986 = vmatpush2.xpose.msra.mxu0 %v8985
      %8987 = vmatprep.subr.mxu0 0.0
      %v8988 = vand.u32 %v8529, 4294901760
      %v8989 = vsub.f32 %v8529, %v8988
      %v8990 = vand.u32 %v8989, 4294901760
      %v8991 = vsub.f32 %v8989, %v8990
      %v8992 = vand.u32 %v8991, 4294901760
      %8993 = vmatpush2.xpose.msra.mxu0 %v8992
      %8994 = vmatprep.subr.mxu0 0.0
      %v8995 = vand.u32 %v8526, 4294901760
      %v8996 = vsub.f32 %v8526, %v8995
      %v8997 = vand.u32 %v8996, 4294901760
      %v8998 = vsub.f32 %v8996, %v8997
      %v8999 = vand.u32 %v8998, 4294901760
      %9000 = vmatpush2.xpose.msra.mxu0 %v8999
      %9001 = vmatprep.mubr.f32.mxu0 0.0
      %v9002 = vand.u32 %v8475, 4294901760
      %9003 = vmatmul.mubr.f32.gmra.mxu0 %v9002
      %v9004 = vpop.f32.mrf.mxu0
      %v9005 = vadd.f32 %v8773, %v9004
      %v9006 = vpop.f32.mrf.mxu0
      %v9007 = vadd.f32 %v8775, %v9006
      %9008 = vdwg.mxu0
      %9009 = vmatprep.subr.mxu0 0.0
      %v9010 = vand.u32 %v8523, 4294901760
      %v9011 = vsub.f32 %v8523, %v9010
      %9012 = vmatpush1.xpose.msra.mxu0 %v9011
      %9013 = vmatprep.subr.mxu0 0.0
      %v9014 = vand.u32 %v8520, 4294901760
      %v9015 = vsub.f32 %v8520, %v9014
      %9016 = vmatpush1.xpose.msra.mxu0 %v9015
      %9017 = vmatprep.subr.mxu0 0.0
      %v9018 = vand.u32 %v8517, 4294901760
      %v9019 = vsub.f32 %v8517, %v9018
      %9020 = vmatpush1.xpose.msra.mxu0 %v9019
      %9021 = vmatprep.subr.mxu0 0.0
      %v9022 = vand.u32 %v8514, 4294901760
      %v9023 = vsub.f32 %v8514, %v9022
      %9024 = vmatpush1.xpose.msra.mxu0 %v9023
      %9025 = vmatprep.subr.mxu0 0.0
      %v9026 = vand.u32 %v8511, 4294901760
      %v9027 = vsub.f32 %v8511, %v9026
      %9028 = vmatpush1.xpose.msra.mxu0 %v9027
      %9029 = vmatprep.subr.mxu0 0.0
      %v9030 = vand.u32 %v8508, 4294901760
      %v9031 = vsub.f32 %v8508, %v9030
      %9032 = vmatpush1.xpose.msra.mxu0 %v9031
      %9033 = vmatprep.subr.mxu0 0.0
      %v9034 = vand.u32 %v8505, 4294901760
      %v9035 = vsub.f32 %v8505, %v9034
      %9036 = vmatpush1.xpose.msra.mxu0 %v9035
      %9037 = vmatprep.subr.mxu0 0.0
      %v9038 = vand.u32 %v8502, 4294901760
      %v9039 = vsub.f32 %v8502, %v9038
      %9040 = vmatpush1.xpose.msra.mxu0 %v9039
      %9041 = vmatprep.subr.mxu0 0.0
      %v9042 = vand.u32 %v8499, 4294901760
      %v9043 = vsub.f32 %v8499, %v9042
      %9044 = vmatpush1.xpose.msra.mxu0 %v9043
      %9045 = vmatprep.subr.mxu0 0.0
      %v9046 = vand.u32 %v8496, 4294901760
      %v9047 = vsub.f32 %v8496, %v9046
      %9048 = vmatpush1.xpose.msra.mxu0 %v9047
      %9049 = vmatprep.subr.mxu0 0.0
      %v9050 = vand.u32 %v8493, 4294901760
      %v9051 = vsub.f32 %v8493, %v9050
      %9052 = vmatpush1.xpose.msra.mxu0 %v9051
      %9053 = vmatprep.subr.mxu0 0.0
      %v9054 = vand.u32 %v8490, 4294901760
      %v9055 = vsub.f32 %v8490, %v9054
      %9056 = vmatpush1.xpose.msra.mxu0 %v9055
      %9057 = vmatprep.subr.mxu0 0.0
      %v9058 = vand.u32 %v8487, 4294901760
      %v9059 = vsub.f32 %v8487, %v9058
      %9060 = vmatpush1.xpose.msra.mxu0 %v9059
      %9061 = vmatprep.subr.mxu0 0.0
      %v9062 = vand.u32 %v8484, 4294901760
      %v9063 = vsub.f32 %v8484, %v9062
      %9064 = vmatpush1.xpose.msra.mxu0 %v9063
      %9065 = vmatprep.subr.mxu0 0.0
      %v9066 = vand.u32 %v8481, 4294901760
      %v9067 = vsub.f32 %v8481, %v9066
      %9068 = vmatpush1.xpose.msra.mxu0 %v9067
      %9069 = vmatprep.subr.mxu0 0.0
      %v9070 = vand.u32 %v8478, 4294901760
      %v9071 = vsub.f32 %v8478, %v9070
      %9072 = vmatpush1.xpose.msra.mxu0 %v9071
      %9073 = vmatprep.subr.mxu0 0.0
      %v9074 = vand.u32 %v8571, 4294901760
      %v9075 = vsub.f32 %v8571, %v9074
      %9076 = vmatpush2.xpose.msra.mxu0 %v9075
      %9077 = vmatprep.subr.mxu0 0.0
      %v9078 = vand.u32 %v8568, 4294901760
      %v9079 = vsub.f32 %v8568, %v9078
      %9080 = vmatpush2.xpose.msra.mxu0 %v9079
      %9081 = vmatprep.subr.mxu0 0.0
      %v9082 = vand.u32 %v8565, 4294901760
      %v9083 = vsub.f32 %v8565, %v9082
      %9084 = vmatpush2.xpose.msra.mxu0 %v9083
      %9085 = vmatprep.subr.mxu0 0.0
      %v9086 = vand.u32 %v8562, 4294901760
      %v9087 = vsub.f32 %v8562, %v9086
      %9088 = vmatpush2.xpose.msra.mxu0 %v9087
      %9089 = vmatprep.subr.mxu0 0.0
      %v9090 = vand.u32 %v8559, 4294901760
      %v9091 = vsub.f32 %v8559, %v9090
      %9092 = vmatpush2.xpose.msra.mxu0 %v9091
      %9093 = vmatprep.subr.mxu0 0.0
      %v9094 = vand.u32 %v8556, 4294901760
      %v9095 = vsub.f32 %v8556, %v9094
      %9096 = vmatpush2.xpose.msra.mxu0 %v9095
      %9097 = vmatprep.subr.mxu0 0.0
      %v9098 = vand.u32 %v8553, 4294901760
      %v9099 = vsub.f32 %v8553, %v9098
      %9100 = vmatpush2.xpose.msra.mxu0 %v9099
      %9101 = vmatprep.subr.mxu0 0.0
      %v9102 = vand.u32 %v8550, 4294901760
      %v9103 = vsub.f32 %v8550, %v9102
      %9104 = vmatpush2.xpose.msra.mxu0 %v9103
      %9105 = vmatprep.subr.mxu0 0.0
      %v9106 = vand.u32 %v8547, 4294901760
      %v9107 = vsub.f32 %v8547, %v9106
      %9108 = vmatpush2.xpose.msra.mxu0 %v9107
      %9109 = vmatprep.subr.mxu0 0.0
      %v9110 = vand.u32 %v8544, 4294901760
      %v9111 = vsub.f32 %v8544, %v9110
      %9112 = vmatpush2.xpose.msra.mxu0 %v9111
      %9113 = vmatprep.subr.mxu0 0.0
      %v9114 = vand.u32 %v8541, 4294901760
      %v9115 = vsub.f32 %v8541, %v9114
      %9116 = vmatpush2.xpose.msra.mxu0 %v9115
      %9117 = vmatprep.subr.mxu0 0.0
      %v9118 = vand.u32 %v8538, 4294901760
      %v9119 = vsub.f32 %v8538, %v9118
      %9120 = vmatpush2.xpose.msra.mxu0 %v9119
      %9121 = vmatprep.subr.mxu0 0.0
      %v9122 = vand.u32 %v8535, 4294901760
      %v9123 = vsub.f32 %v8535, %v9122
      %9124 = vmatpush2.xpose.msra.mxu0 %v9123
      %9125 = vmatprep.subr.mxu0 0.0
      %v9126 = vand.u32 %v8532, 4294901760
      %v9127 = vsub.f32 %v8532, %v9126
      %9128 = vmatpush2.xpose.msra.mxu0 %v9127
      %9129 = vmatprep.subr.mxu0 0.0
      %v9130 = vand.u32 %v8529, 4294901760
      %v9131 = vsub.f32 %v8529, %v9130
      %9132 = vmatpush2.xpose.msra.mxu0 %v9131
      %9133 = vmatprep.subr.mxu0 0.0
      %v9134 = vand.u32 %v8526, 4294901760
      %v9135 = vsub.f32 %v8526, %v9134
      %9136 = vmatpush2.xpose.msra.mxu0 %v9135
      %9137 = vmatprep.mubr.f32.mxu0 0.0
      %v9138 = vand.u32 %v8475, 4294901760
      %v9139 = vsub.f32 %v8475, %v9138
      %9140 = vmatmul.mubr.f32.gmra.mxu0 %v9139
      %v9141 = vpop.f32.mrf.mxu0
      %v9142 = vadd.f32 %v9005, %v9141
      %v9143 = vpop.f32.mrf.mxu0
      %v9144 = vadd.f32 %v9007, %v9143
      %9145 = vdwg.mxu0
      %9146 = vmatprep.subr.mxu0 0.0
      %v9147 = vand.u32 %v8523, 4294901760
      %9148 = vmatpush1.xpose.msra.mxu0 %v9147
      %9149 = vmatprep.subr.mxu0 0.0
      %v9150 = vand.u32 %v8520, 4294901760
      %9151 = vmatpush1.xpose.msra.mxu0 %v9150
      %9152 = vmatprep.subr.mxu0 0.0
      %v9153 = vand.u32 %v8517, 4294901760
      %9154 = vmatpush1.xpose.msra.mxu0 %v9153
      %9155 = vmatprep.subr.mxu0 0.0
      %v9156 = vand.u32 %v8514, 4294901760
      %9157 = vmatpush1.xpose.msra.mxu0 %v9156
      %9158 = vmatprep.subr.mxu0 0.0
      %v9159 = vand.u32 %v8511, 4294901760
      %9160 = vmatpush1.xpose.msra.mxu0 %v9159
      %9161 = vmatprep.subr.mxu0 0.0
      %v9162 = vand.u32 %v8508, 4294901760
      %9163 = vmatpush1.xpose.msra.mxu0 %v9162
      %9164 = vmatprep.subr.mxu0 0.0
      %v9165 = vand.u32 %v8505, 4294901760
      %9166 = vmatpush1.xpose.msra.mxu0 %v9165
      %9167 = vmatprep.subr.mxu0 0.0
      %v9168 = vand.u32 %v8502, 4294901760
      %9169 = vmatpush1.xpose.msra.mxu0 %v9168
      %9170 = vmatprep.subr.mxu0 0.0
      %v9171 = vand.u32 %v8499, 4294901760
      %9172 = vmatpush1.xpose.msra.mxu0 %v9171
      %9173 = vmatprep.subr.mxu0 0.0
      %v9174 = vand.u32 %v8496, 4294901760
      %9175 = vmatpush1.xpose.msra.mxu0 %v9174
      %9176 = vmatprep.subr.mxu0 0.0
      %v9177 = vand.u32 %v8493, 4294901760
      %9178 = vmatpush1.xpose.msra.mxu0 %v9177
      %9179 = vmatprep.subr.mxu0 0.0
      %v9180 = vand.u32 %v8490, 4294901760
      %9181 = vmatpush1.xpose.msra.mxu0 %v9180
      %9182 = vmatprep.subr.mxu0 0.0
      %v9183 = vand.u32 %v8487, 4294901760
      %9184 = vmatpush1.xpose.msra.mxu0 %v9183
      %9185 = vmatprep.subr.mxu0 0.0
      %v9186 = vand.u32 %v8484, 4294901760
      %9187 = vmatpush1.xpose.msra.mxu0 %v9186
      %9188 = vmatprep.subr.mxu0 0.0
      %v9189 = vand.u32 %v8481, 4294901760
      %9190 = vmatpush1.xpose.msra.mxu0 %v9189
      %9191 = vmatprep.subr.mxu0 0.0
      %v9192 = vand.u32 %v8478, 4294901760
      %9193 = vmatpush1.xpose.msra.mxu0 %v9192
      %9194 = vmatprep.subr.mxu0 0.0
      %v9195 = vand.u32 %v8571, 4294901760
      %9196 = vmatpush2.xpose.msra.mxu0 %v9195
      %9197 = vmatprep.subr.mxu0 0.0
      %v9198 = vand.u32 %v8568, 4294901760
      %9199 = vmatpush2.xpose.msra.mxu0 %v9198
      %9200 = vmatprep.subr.mxu0 0.0
      %v9201 = vand.u32 %v8565, 4294901760
      %9202 = vmatpush2.xpose.msra.mxu0 %v9201
      %9203 = vmatprep.subr.mxu0 0.0
      %v9204 = vand.u32 %v8562, 4294901760
      %9205 = vmatpush2.xpose.msra.mxu0 %v9204
      %9206 = vmatprep.subr.mxu0 0.0
      %v9207 = vand.u32 %v8559, 4294901760
      %9208 = vmatpush2.xpose.msra.mxu0 %v9207
      %9209 = vmatprep.subr.mxu0 0.0
      %v9210 = vand.u32 %v8556, 4294901760
      %9211 = vmatpush2.xpose.msra.mxu0 %v9210
      %9212 = vmatprep.subr.mxu0 0.0
      %v9213 = vand.u32 %v8553, 4294901760
      %9214 = vmatpush2.xpose.msra.mxu0 %v9213
      %9215 = vmatprep.subr.mxu0 0.0
      %v9216 = vand.u32 %v8550, 4294901760
      %9217 = vmatpush2.xpose.msra.mxu0 %v9216
      %9218 = vmatprep.subr.mxu0 0.0
      %v9219 = vand.u32 %v8547, 4294901760
      %9220 = vmatpush2.xpose.msra.mxu0 %v9219
      %9221 = vmatprep.subr.mxu0 0.0
      %v9222 = vand.u32 %v8544, 4294901760
      %9223 = vmatpush2.xpose.msra.mxu0 %v9222
      %9224 = vmatprep.subr.mxu0 0.0
      %v9225 = vand.u32 %v8541, 4294901760
      %9226 = vmatpush2.xpose.msra.mxu0 %v9225
      %9227 = vmatprep.subr.mxu0 0.0
      %v9228 = vand.u32 %v8538, 4294901760
      %9229 = vmatpush2.xpose.msra.mxu0 %v9228
      %9230 = vmatprep.subr.mxu0 0.0
      %v9231 = vand.u32 %v8535, 4294901760
      %9232 = vmatpush2.xpose.msra.mxu0 %v9231
      %9233 = vmatprep.subr.mxu0 0.0
      %v9234 = vand.u32 %v8532, 4294901760
      %9235 = vmatpush2.xpose.msra.mxu0 %v9234
      %9236 = vmatprep.subr.mxu0 0.0
      %v9237 = vand.u32 %v8529, 4294901760
      %9238 = vmatpush2.xpose.msra.mxu0 %v9237
      %9239 = vmatprep.subr.mxu0 0.0
      %v9240 = vand.u32 %v8526, 4294901760
      %9241 = vmatpush2.xpose.msra.mxu0 %v9240
      %9242 = vmatprep.mubr.f32.mxu0 0.0
      %v9243 = vand.u32 %v8475, 4294901760
      %v9244 = vsub.f32 %v8475, %v9243
      %v9245 = vand.u32 %v9244, 4294901760
      %9246 = vmatmul.mubr.f32.gmra.mxu0 %v9245
      %v9247 = vpop.f32.mrf.mxu0
      %v9248 = vadd.f32 %v9142, %v9247
      %v9249 = vpop.f32.mrf.mxu0
      %v9250 = vadd.f32 %v9144, %v9249
      %9251 = vdwg.mxu0
      %9252 = vmatprep.subr.mxu0 0.0
      %v9253 = vand.u32 %v8523, 4294901760
      %v9254 = vsub.f32 %v8523, %v9253
      %v9255 = vand.u32 %v9254, 4294901760
      %9256 = vmatpush1.xpose.msra.mxu0 %v9255
      %9257 = vmatprep.subr.mxu0 0.0
      %v9258 = vand.u32 %v8520, 4294901760
      %v9259 = vsub.f32 %v8520, %v9258
      %v9260 = vand.u32 %v9259, 4294901760
      %9261 = vmatpush1.xpose.msra.mxu0 %v9260
      %9262 = vmatprep.subr.mxu0 0.0
      %v9263 = vand.u32 %v8517, 4294901760
      %v9264 = vsub.f32 %v8517, %v9263
      %v9265 = vand.u32 %v9264, 4294901760
      %9266 = vmatpush1.xpose.msra.mxu0 %v9265
      %9267 = vmatprep.subr.mxu0 0.0
      %v9268 = vand.u32 %v8514, 4294901760
      %v9269 = vsub.f32 %v8514, %v9268
      %v9270 = vand.u32 %v9269, 4294901760
      %9271 = vmatpush1.xpose.msra.mxu0 %v9270
      %9272 = vmatprep.subr.mxu0 0.0
      %v9273 = vand.u32 %v8511, 4294901760
      %v9274 = vsub.f32 %v8511, %v9273
      %v9275 = vand.u32 %v9274, 4294901760
      %9276 = vmatpush1.xpose.msra.mxu0 %v9275
      %9277 = vmatprep.subr.mxu0 0.0
      %v9278 = vand.u32 %v8508, 4294901760
      %v9279 = vsub.f32 %v8508, %v9278
      %v9280 = vand.u32 %v9279, 4294901760
      %9281 = vmatpush1.xpose.msra.mxu0 %v9280
      %9282 = vmatprep.subr.mxu0 0.0
      %v9283 = vand.u32 %v8505, 4294901760
      %v9284 = vsub.f32 %v8505, %v9283
      %v9285 = vand.u32 %v9284, 4294901760
      %9286 = vmatpush1.xpose.msra.mxu0 %v9285
      %9287 = vmatprep.subr.mxu0 0.0
      %v9288 = vand.u32 %v8502, 4294901760
      %v9289 = vsub.f32 %v8502, %v9288
      %v9290 = vand.u32 %v9289, 4294901760
      %9291 = vmatpush1.xpose.msra.mxu0 %v9290
      %9292 = vmatprep.subr.mxu0 0.0
      %v9293 = vand.u32 %v8499, 4294901760
      %v9294 = vsub.f32 %v8499, %v9293
      %v9295 = vand.u32 %v9294, 4294901760
      %9296 = vmatpush1.xpose.msra.mxu0 %v9295
      %9297 = vmatprep.subr.mxu0 0.0
      %v9298 = vand.u32 %v8496, 4294901760
      %v9299 = vsub.f32 %v8496, %v9298
      %v9300 = vand.u32 %v9299, 4294901760
      %9301 = vmatpush1.xpose.msra.mxu0 %v9300
      %9302 = vmatprep.subr.mxu0 0.0
      %v9303 = vand.u32 %v8493, 4294901760
      %v9304 = vsub.f32 %v8493, %v9303
      %v9305 = vand.u32 %v9304, 4294901760
      %9306 = vmatpush1.xpose.msra.mxu0 %v9305
      %9307 = vmatprep.subr.mxu0 0.0
      %v9308 = vand.u32 %v8490, 4294901760
      %v9309 = vsub.f32 %v8490, %v9308
      %v9310 = vand.u32 %v9309, 4294901760
      %9311 = vmatpush1.xpose.msra.mxu0 %v9310
      %9312 = vmatprep.subr.mxu0 0.0
      %v9313 = vand.u32 %v8487, 4294901760
      %v9314 = vsub.f32 %v8487, %v9313
      %v9315 = vand.u32 %v9314, 4294901760
      %9316 = vmatpush1.xpose.msra.mxu0 %v9315
      %9317 = vmatprep.subr.mxu0 0.0
      %v9318 = vand.u32 %v8484, 4294901760
      %v9319 = vsub.f32 %v8484, %v9318
      %v9320 = vand.u32 %v9319, 4294901760
      %9321 = vmatpush1.xpose.msra.mxu0 %v9320
      %9322 = vmatprep.subr.mxu0 0.0
      %v9323 = vand.u32 %v8481, 4294901760
      %v9324 = vsub.f32 %v8481, %v9323
      %v9325 = vand.u32 %v9324, 4294901760
      %9326 = vmatpush1.xpose.msra.mxu0 %v9325
      %9327 = vmatprep.subr.mxu0 0.0
      %v9328 = vand.u32 %v8478, 4294901760
      %v9329 = vsub.f32 %v8478, %v9328
      %v9330 = vand.u32 %v9329, 4294901760
      %9331 = vmatpush1.xpose.msra.mxu0 %v9330
      %9332 = vmatprep.subr.mxu0 0.0
      %v9333 = vand.u32 %v8571, 4294901760
      %v9334 = vsub.f32 %v8571, %v9333
      %v9335 = vand.u32 %v9334, 4294901760
      %9336 = vmatpush2.xpose.msra.mxu0 %v9335
      %9337 = vmatprep.subr.mxu0 0.0
      %v9338 = vand.u32 %v8568, 4294901760
      %v9339 = vsub.f32 %v8568, %v9338
      %v9340 = vand.u32 %v9339, 4294901760
      %9341 = vmatpush2.xpose.msra.mxu0 %v9340
      %9342 = vmatprep.subr.mxu0 0.0
      %v9343 = vand.u32 %v8565, 4294901760
      %v9344 = vsub.f32 %v8565, %v9343
      %v9345 = vand.u32 %v9344, 4294901760
      %9346 = vmatpush2.xpose.msra.mxu0 %v9345
      %9347 = vmatprep.subr.mxu0 0.0
      %v9348 = vand.u32 %v8562, 4294901760
      %v9349 = vsub.f32 %v8562, %v9348
      %v9350 = vand.u32 %v9349, 4294901760
      %9351 = vmatpush2.xpose.msra.mxu0 %v9350
      %9352 = vmatprep.subr.mxu0 0.0
      %v9353 = vand.u32 %v8559, 4294901760
      %v9354 = vsub.f32 %v8559, %v9353
      %v9355 = vand.u32 %v9354, 4294901760
      %9356 = vmatpush2.xpose.msra.mxu0 %v9355
      %9357 = vmatprep.subr.mxu0 0.0
      %v9358 = vand.u32 %v8556, 4294901760
      %v9359 = vsub.f32 %v8556, %v9358
      %v9360 = vand.u32 %v9359, 4294901760
      %9361 = vmatpush2.xpose.msra.mxu0 %v9360
      %9362 = vmatprep.subr.mxu0 0.0
      %v9363 = vand.u32 %v8553, 4294901760
      %v9364 = vsub.f32 %v8553, %v9363
      %v9365 = vand.u32 %v9364, 4294901760
      %9366 = vmatpush2.xpose.msra.mxu0 %v9365
      %9367 = vmatprep.subr.mxu0 0.0
      %v9368 = vand.u32 %v8550, 4294901760
      %v9369 = vsub.f32 %v8550, %v9368
      %v9370 = vand.u32 %v9369, 4294901760
      %9371 = vmatpush2.xpose.msra.mxu0 %v9370
      %9372 = vmatprep.subr.mxu0 0.0
      %v9373 = vand.u32 %v8547, 4294901760
      %v9374 = vsub.f32 %v8547, %v9373
      %v9375 = vand.u32 %v9374, 4294901760
      %9376 = vmatpush2.xpose.msra.mxu0 %v9375
      %9377 = vmatprep.subr.mxu0 0.0
      %v9378 = vand.u32 %v8544, 4294901760
      %v9379 = vsub.f32 %v8544, %v9378
      %v9380 = vand.u32 %v9379, 4294901760
      %9381 = vmatpush2.xpose.msra.mxu0 %v9380
      %9382 = vmatprep.subr.mxu0 0.0
      %v9383 = vand.u32 %v8541, 4294901760
      %v9384 = vsub.f32 %v8541, %v9383
      %v9385 = vand.u32 %v9384, 4294901760
      %9386 = vmatpush2.xpose.msra.mxu0 %v9385
      %9387 = vmatprep.subr.mxu0 0.0
      %v9388 = vand.u32 %v8538, 4294901760
      %v9389 = vsub.f32 %v8538, %v9388
      %v9390 = vand.u32 %v9389, 4294901760
      %9391 = vmatpush2.xpose.msra.mxu0 %v9390
      %9392 = vmatprep.subr.mxu0 0.0
      %v9393 = vand.u32 %v8535, 4294901760
      %v9394 = vsub.f32 %v8535, %v9393
      %v9395 = vand.u32 %v9394, 4294901760
      %9396 = vmatpush2.xpose.msra.mxu0 %v9395
      %9397 = vmatprep.subr.mxu0 0.0
      %v9398 = vand.u32 %v8532, 4294901760
      %v9399 = vsub.f32 %v8532, %v9398
      %v9400 = vand.u32 %v9399, 4294901760
      %9401 = vmatpush2.xpose.msra.mxu0 %v9400
      %9402 = vmatprep.subr.mxu0 0.0
      %v9403 = vand.u32 %v8529, 4294901760
      %v9404 = vsub.f32 %v8529, %v9403
      %v9405 = vand.u32 %v9404, 4294901760
      %9406 = vmatpush2.xpose.msra.mxu0 %v9405
      %9407 = vmatprep.subr.mxu0 0.0
      %v9408 = vand.u32 %v8526, 4294901760
      %v9409 = vsub.f32 %v8526, %v9408
      %v9410 = vand.u32 %v9409, 4294901760
      %9411 = vmatpush2.xpose.msra.mxu0 %v9410
      %9412 = vmatprep.mubr.f32.mxu0 0.0
      %v9413 = vand.u32 %v8475, 4294901760
      %9414 = vmatmul.mubr.f32.gmra.mxu0 %v9413
      %v9415 = vpop.f32.mrf.mxu0
      %v9416 = vadd.f32 %v9248, %v9415
      %v9417 = vpop.f32.mrf.mxu0
      %v9418 = vadd.f32 %v9250, %v9417
      %9419 = vdwg.mxu0
      %9420 = vmatprep.subr.mxu0 0.0
      %v9421 = vand.u32 %v8523, 4294901760
      %9422 = vmatpush1.xpose.msra.mxu0 %v9421
      %9423 = vmatprep.subr.mxu0 0.0
      %v9424 = vand.u32 %v8520, 4294901760
      %9425 = vmatpush1.xpose.msra.mxu0 %v9424
      %9426 = vmatprep.subr.mxu0 0.0
      %v9427 = vand.u32 %v8517, 4294901760
      %9428 = vmatpush1.xpose.msra.mxu0 %v9427
      %9429 = vmatprep.subr.mxu0 0.0
      %v9430 = vand.u32 %v8514, 4294901760
      %9431 = vmatpush1.xpose.msra.mxu0 %v9430
      %9432 = vmatprep.subr.mxu0 0.0
      %v9433 = vand.u32 %v8511, 4294901760
      %9434 = vmatpush1.xpose.msra.mxu0 %v9433
      %9435 = vmatprep.subr.mxu0 0.0
      %v9436 = vand.u32 %v8508, 4294901760
      %9437 = vmatpush1.xpose.msra.mxu0 %v9436
      %9438 = vmatprep.subr.mxu0 0.0
      %v9439 = vand.u32 %v8505, 4294901760
      %9440 = vmatpush1.xpose.msra.mxu0 %v9439
      %9441 = vmatprep.subr.mxu0 0.0
      %v9442 = vand.u32 %v8502, 4294901760
      %9443 = vmatpush1.xpose.msra.mxu0 %v9442
      %9444 = vmatprep.subr.mxu0 0.0
      %v9445 = vand.u32 %v8499, 4294901760
      %9446 = vmatpush1.xpose.msra.mxu0 %v9445
      %9447 = vmatprep.subr.mxu0 0.0
      %v9448 = vand.u32 %v8496, 4294901760
      %9449 = vmatpush1.xpose.msra.mxu0 %v9448
      %9450 = vmatprep.subr.mxu0 0.0
      %v9451 = vand.u32 %v8493, 4294901760
      %9452 = vmatpush1.xpose.msra.mxu0 %v9451
      %9453 = vmatprep.subr.mxu0 0.0
      %v9454 = vand.u32 %v8490, 4294901760
      %9455 = vmatpush1.xpose.msra.mxu0 %v9454
      %9456 = vmatprep.subr.mxu0 0.0
      %v9457 = vand.u32 %v8487, 4294901760
      %9458 = vmatpush1.xpose.msra.mxu0 %v9457
      %9459 = vmatprep.subr.mxu0 0.0
      %v9460 = vand.u32 %v8484, 4294901760
      %9461 = vmatpush1.xpose.msra.mxu0 %v9460
      %9462 = vmatprep.subr.mxu0 0.0
      %v9463 = vand.u32 %v8481, 4294901760
      %9464 = vmatpush1.xpose.msra.mxu0 %v9463
      %9465 = vmatprep.subr.mxu0 0.0
      %v9466 = vand.u32 %v8478, 4294901760
      %9467 = vmatpush1.xpose.msra.mxu0 %v9466
      %9468 = vmatprep.subr.mxu0 0.0
      %v9469 = vand.u32 %v8571, 4294901760
      %9470 = vmatpush2.xpose.msra.mxu0 %v9469
      %9471 = vmatprep.subr.mxu0 0.0
      %v9472 = vand.u32 %v8568, 4294901760
      %9473 = vmatpush2.xpose.msra.mxu0 %v9472
      %9474 = vmatprep.subr.mxu0 0.0
      %v9475 = vand.u32 %v8565, 4294901760
      %9476 = vmatpush2.xpose.msra.mxu0 %v9475
      %9477 = vmatprep.subr.mxu0 0.0
      %v9478 = vand.u32 %v8562, 4294901760
      %9479 = vmatpush2.xpose.msra.mxu0 %v9478
      %9480 = vmatprep.subr.mxu0 0.0
      %v9481 = vand.u32 %v8559, 4294901760
      %9482 = vmatpush2.xpose.msra.mxu0 %v9481
      %9483 = vmatprep.subr.mxu0 0.0
      %v9484 = vand.u32 %v8556, 4294901760
      %9485 = vmatpush2.xpose.msra.mxu0 %v9484
      %9486 = vmatprep.subr.mxu0 0.0
      %v9487 = vand.u32 %v8553, 4294901760
      %9488 = vmatpush2.xpose.msra.mxu0 %v9487
      %9489 = vmatprep.subr.mxu0 0.0
      %v9490 = vand.u32 %v8550, 4294901760
      %9491 = vmatpush2.xpose.msra.mxu0 %v9490
      %9492 = vmatprep.subr.mxu0 0.0
      %v9493 = vand.u32 %v8547, 4294901760
      %9494 = vmatpush2.xpose.msra.mxu0 %v9493
      %9495 = vmatprep.subr.mxu0 0.0
      %v9496 = vand.u32 %v8544, 4294901760
      %9497 = vmatpush2.xpose.msra.mxu0 %v9496
      %9498 = vmatprep.subr.mxu0 0.0
      %v9499 = vand.u32 %v8541, 4294901760
      %9500 = vmatpush2.xpose.msra.mxu0 %v9499
      %9501 = vmatprep.subr.mxu0 0.0
      %v9502 = vand.u32 %v8538, 4294901760
      %9503 = vmatpush2.xpose.msra.mxu0 %v9502
      %9504 = vmatprep.subr.mxu0 0.0
      %v9505 = vand.u32 %v8535, 4294901760
      %9506 = vmatpush2.xpose.msra.mxu0 %v9505
      %9507 = vmatprep.subr.mxu0 0.0
      %v9508 = vand.u32 %v8532, 4294901760
      %9509 = vmatpush2.xpose.msra.mxu0 %v9508
      %9510 = vmatprep.subr.mxu0 0.0
      %v9511 = vand.u32 %v8529, 4294901760
      %9512 = vmatpush2.xpose.msra.mxu0 %v9511
      %9513 = vmatprep.subr.mxu0 0.0
      %v9514 = vand.u32 %v8526, 4294901760
      %9515 = vmatpush2.xpose.msra.mxu0 %v9514
      %9516 = vmatprep.mubr.f32.mxu0 0.0
      %v9517 = vand.u32 %v8475, 4294901760
      %9518 = vmatmul.mubr.f32.gmra.mxu0 %v9517
      %v9519 = vpop.f32.mrf.mxu0
      %v9520 = vadd.f32 %v9416, %v9519
      %v9521 = vpop.f32.mrf.mxu0
      %v9522 = vadd.f32 %v9418, %v9521
      %9523 = vdwg.mxu0
      %9524 = vmatprep.subr.mxu0 0.0
      %v9525 = vand.u32 %v8619, 4294901760
      %9526 = vmatpush1.xpose.msra.mxu0 %v9525
      %9527 = vmatprep.subr.mxu0 0.0
      %v9528 = vand.u32 %v8616, 4294901760
      %9529 = vmatpush1.xpose.msra.mxu0 %v9528
      %9530 = vmatprep.subr.mxu0 0.0
      %v9531 = vand.u32 %v8613, 4294901760
      %9532 = vmatpush1.xpose.msra.mxu0 %v9531
      %9533 = vmatprep.subr.mxu0 0.0
      %v9534 = vand.u32 %v8610, 4294901760
      %9535 = vmatpush1.xpose.msra.mxu0 %v9534
      %9536 = vmatprep.subr.mxu0 0.0
      %v9537 = vand.u32 %v8607, 4294901760
      %9538 = vmatpush1.xpose.msra.mxu0 %v9537
      %9539 = vmatprep.subr.mxu0 0.0
      %v9540 = vand.u32 %v8604, 4294901760
      %9541 = vmatpush1.xpose.msra.mxu0 %v9540
      %9542 = vmatprep.subr.mxu0 0.0
      %v9543 = vand.u32 %v8601, 4294901760
      %9544 = vmatpush1.xpose.msra.mxu0 %v9543
      %9545 = vmatprep.subr.mxu0 0.0
      %v9546 = vand.u32 %v8598, 4294901760
      %9547 = vmatpush1.xpose.msra.mxu0 %v9546
      %9548 = vmatprep.subr.mxu0 0.0
      %v9549 = vand.u32 %v8595, 4294901760
      %9550 = vmatpush1.xpose.msra.mxu0 %v9549
      %9551 = vmatprep.subr.mxu0 0.0
      %v9552 = vand.u32 %v8592, 4294901760
      %9553 = vmatpush1.xpose.msra.mxu0 %v9552
      %9554 = vmatprep.subr.mxu0 0.0
      %v9555 = vand.u32 %v8589, 4294901760
      %9556 = vmatpush1.xpose.msra.mxu0 %v9555
      %9557 = vmatprep.subr.mxu0 0.0
      %v9558 = vand.u32 %v8586, 4294901760
      %9559 = vmatpush1.xpose.msra.mxu0 %v9558
      %9560 = vmatprep.subr.mxu0 0.0
      %v9561 = vand.u32 %v8583, 4294901760
      %9562 = vmatpush1.xpose.msra.mxu0 %v9561
      %9563 = vmatprep.subr.mxu0 0.0
      %v9564 = vand.u32 %v8580, 4294901760
      %9565 = vmatpush1.xpose.msra.mxu0 %v9564
      %9566 = vmatprep.subr.mxu0 0.0
      %v9567 = vand.u32 %v8577, 4294901760
      %9568 = vmatpush1.xpose.msra.mxu0 %v9567
      %9569 = vmatprep.subr.mxu0 0.0
      %v9570 = vand.u32 %v8574, 4294901760
      %9571 = vmatpush1.xpose.msra.mxu0 %v9570
      %9572 = vmatprep.subr.mxu0 0.0
      %v9573 = vand.u32 %v8667, 4294901760
      %9574 = vmatpush2.xpose.msra.mxu0 %v9573
      %9575 = vmatprep.subr.mxu0 0.0
      %v9576 = vand.u32 %v8664, 4294901760
      %9577 = vmatpush2.xpose.msra.mxu0 %v9576
      %9578 = vmatprep.subr.mxu0 0.0
      %v9579 = vand.u32 %v8661, 4294901760
      %9580 = vmatpush2.xpose.msra.mxu0 %v9579
      %9581 = vmatprep.subr.mxu0 0.0
      %v9582 = vand.u32 %v8658, 4294901760
      %9583 = vmatpush2.xpose.msra.mxu0 %v9582
      %9584 = vmatprep.subr.mxu0 0.0
      %v9585 = vand.u32 %v8655, 4294901760
      %9586 = vmatpush2.xpose.msra.mxu0 %v9585
      %9587 = vmatprep.subr.mxu0 0.0
      %v9588 = vand.u32 %v8652, 4294901760
      %9589 = vmatpush2.xpose.msra.mxu0 %v9588
      %9590 = vmatprep.subr.mxu0 0.0
      %v9591 = vand.u32 %v8649, 4294901760
      %9592 = vmatpush2.xpose.msra.mxu0 %v9591
      %9593 = vmatprep.subr.mxu0 0.0
      %v9594 = vand.u32 %v8646, 4294901760
      %9595 = vmatpush2.xpose.msra.mxu0 %v9594
      %9596 = vmatprep.subr.mxu0 0.0
      %v9597 = vand.u32 %v8643, 4294901760
      %9598 = vmatpush2.xpose.msra.mxu0 %v9597
      %9599 = vmatprep.subr.mxu0 0.0
      %v9600 = vand.u32 %v8640, 4294901760
      %9601 = vmatpush2.xpose.msra.mxu0 %v9600
      %9602 = vmatprep.subr.mxu0 0.0
      %v9603 = vand.u32 %v8637, 4294901760
      %9604 = vmatpush2.xpose.msra.mxu0 %v9603
      %9605 = vmatprep.subr.mxu0 0.0
      %v9606 = vand.u32 %v8634, 4294901760
      %9607 = vmatpush2.xpose.msra.mxu0 %v9606
      %9608 = vmatprep.subr.mxu0 0.0
      %v9609 = vand.u32 %v8631, 4294901760
      %9610 = vmatpush2.xpose.msra.mxu0 %v9609
      %9611 = vmatprep.subr.mxu0 0.0
      %v9612 = vand.u32 %v8628, 4294901760
      %9613 = vmatpush2.xpose.msra.mxu0 %v9612
      %9614 = vmatprep.subr.mxu0 0.0
      %v9615 = vand.u32 %v8625, 4294901760
      %9616 = vmatpush2.xpose.msra.mxu0 %v9615
      %9617 = vmatprep.subr.mxu0 0.0
      %v9618 = vand.u32 %v8622, 4294901760
      %9619 = vmatpush2.xpose.msra.mxu0 %v9618
      %9620 = vmatprep.mubr.f32.mxu0 0.0
      %v9621 = vand.u32 %v8475, 4294901760
      %v9622 = vsub.f32 %v8475, %v9621
      %v9623 = vand.u32 %v9622, 4294901760
      %v9624 = vsub.f32 %v9622, %v9623
      %v9625 = vand.u32 %v9624, 4294901760
      %9626 = vmatmul.mubr.f32.gmra.mxu0 %v9625
      %v9627 = vpop.f32.mrf.mxu0
      %v9628 = vadd.f32 %v8472, %v9627
      %v9629 = vpop.f32.mrf.mxu0
      %v9630 = vadd.f32 %v8472, %v9629
      %9631 = vdwg.mxu0
      %9632 = vmatprep.subr.mxu0 0.0
      %v9633 = vand.u32 %v8619, 4294901760
      %v9634 = vsub.f32 %v8619, %v9633
      %v9635 = vand.u32 %v9634, 4294901760
      %v9636 = vsub.f32 %v9634, %v9635
      %v9637 = vand.u32 %v9636, 4294901760
      %9638 = vmatpush1.xpose.msra.mxu0 %v9637
      %9639 = vmatprep.subr.mxu0 0.0
      %v9640 = vand.u32 %v8616, 4294901760
      %v9641 = vsub.f32 %v8616, %v9640
      %v9642 = vand.u32 %v9641, 4294901760
      %v9643 = vsub.f32 %v9641, %v9642
      %v9644 = vand.u32 %v9643, 4294901760
      %9645 = vmatpush1.xpose.msra.mxu0 %v9644
      %9646 = vmatprep.subr.mxu0 0.0
      %v9647 = vand.u32 %v8613, 4294901760
      %v9648 = vsub.f32 %v8613, %v9647
      %v9649 = vand.u32 %v9648, 4294901760
      %v9650 = vsub.f32 %v9648, %v9649
      %v9651 = vand.u32 %v9650, 4294901760
      %9652 = vmatpush1.xpose.msra.mxu0 %v9651
      %9653 = vmatprep.subr.mxu0 0.0
      %v9654 = vand.u32 %v8610, 4294901760
      %v9655 = vsub.f32 %v8610, %v9654
      %v9656 = vand.u32 %v9655, 4294901760
      %v9657 = vsub.f32 %v9655, %v9656
      %v9658 = vand.u32 %v9657, 4294901760
      %9659 = vmatpush1.xpose.msra.mxu0 %v9658
      %9660 = vmatprep.subr.mxu0 0.0
      %v9661 = vand.u32 %v8607, 4294901760
      %v9662 = vsub.f32 %v8607, %v9661
      %v9663 = vand.u32 %v9662, 4294901760
      %v9664 = vsub.f32 %v9662, %v9663
      %v9665 = vand.u32 %v9664, 4294901760
      %9666 = vmatpush1.xpose.msra.mxu0 %v9665
      %9667 = vmatprep.subr.mxu0 0.0
      %v9668 = vand.u32 %v8604, 4294901760
      %v9669 = vsub.f32 %v8604, %v9668
      %v9670 = vand.u32 %v9669, 4294901760
      %v9671 = vsub.f32 %v9669, %v9670
      %v9672 = vand.u32 %v9671, 4294901760
      %9673 = vmatpush1.xpose.msra.mxu0 %v9672
      %9674 = vmatprep.subr.mxu0 0.0
      %v9675 = vand.u32 %v8601, 4294901760
      %v9676 = vsub.f32 %v8601, %v9675
      %v9677 = vand.u32 %v9676, 4294901760
      %v9678 = vsub.f32 %v9676, %v9677
      %v9679 = vand.u32 %v9678, 4294901760
      %9680 = vmatpush1.xpose.msra.mxu0 %v9679
      %9681 = vmatprep.subr.mxu0 0.0
      %v9682 = vand.u32 %v8598, 4294901760
      %v9683 = vsub.f32 %v8598, %v9682
      %v9684 = vand.u32 %v9683, 4294901760
      %v9685 = vsub.f32 %v9683, %v9684
      %v9686 = vand.u32 %v9685, 4294901760
      %9687 = vmatpush1.xpose.msra.mxu0 %v9686
      %9688 = vmatprep.subr.mxu0 0.0
      %v9689 = vand.u32 %v8595, 4294901760
      %v9690 = vsub.f32 %v8595, %v9689
      %v9691 = vand.u32 %v9690, 4294901760
      %v9692 = vsub.f32 %v9690, %v9691
      %v9693 = vand.u32 %v9692, 4294901760
      %9694 = vmatpush1.xpose.msra.mxu0 %v9693
      %9695 = vmatprep.subr.mxu0 0.0
      %v9696 = vand.u32 %v8592, 4294901760
      %v9697 = vsub.f32 %v8592, %v9696
      %v9698 = vand.u32 %v9697, 4294901760
      %v9699 = vsub.f32 %v9697, %v9698
      %v9700 = vand.u32 %v9699, 4294901760
      %9701 = vmatpush1.xpose.msra.mxu0 %v9700
      %9702 = vmatprep.subr.mxu0 0.0
      %v9703 = vand.u32 %v8589, 4294901760
      %v9704 = vsub.f32 %v8589, %v9703
      %v9705 = vand.u32 %v9704, 4294901760
      %v9706 = vsub.f32 %v9704, %v9705
      %v9707 = vand.u32 %v9706, 4294901760
      %9708 = vmatpush1.xpose.msra.mxu0 %v9707
      %9709 = vmatprep.subr.mxu0 0.0
      %v9710 = vand.u32 %v8586, 4294901760
      %v9711 = vsub.f32 %v8586, %v9710
      %v9712 = vand.u32 %v9711, 4294901760
      %v9713 = vsub.f32 %v9711, %v9712
      %v9714 = vand.u32 %v9713, 4294901760
      %9715 = vmatpush1.xpose.msra.mxu0 %v9714
      %9716 = vmatprep.subr.mxu0 0.0
      %v9717 = vand.u32 %v8583, 4294901760
      %v9718 = vsub.f32 %v8583, %v9717
      %v9719 = vand.u32 %v9718, 4294901760
      %v9720 = vsub.f32 %v9718, %v9719
      %v9721 = vand.u32 %v9720, 4294901760
      %9722 = vmatpush1.xpose.msra.mxu0 %v9721
      %9723 = vmatprep.subr.mxu0 0.0
      %v9724 = vand.u32 %v8580, 4294901760
      %v9725 = vsub.f32 %v8580, %v9724
      %v9726 = vand.u32 %v9725, 4294901760
      %v9727 = vsub.f32 %v9725, %v9726
      %v9728 = vand.u32 %v9727, 4294901760
      %9729 = vmatpush1.xpose.msra.mxu0 %v9728
      %9730 = vmatprep.subr.mxu0 0.0
      %v9731 = vand.u32 %v8577, 4294901760
      %v9732 = vsub.f32 %v8577, %v9731
      %v9733 = vand.u32 %v9732, 4294901760
      %v9734 = vsub.f32 %v9732, %v9733
      %v9735 = vand.u32 %v9734, 4294901760
      %9736 = vmatpush1.xpose.msra.mxu0 %v9735
      %9737 = vmatprep.subr.mxu0 0.0
      %v9738 = vand.u32 %v8574, 4294901760
      %v9739 = vsub.f32 %v8574, %v9738
      %v9740 = vand.u32 %v9739, 4294901760
      %v9741 = vsub.f32 %v9739, %v9740
      %v9742 = vand.u32 %v9741, 4294901760
      %9743 = vmatpush1.xpose.msra.mxu0 %v9742
      %9744 = vmatprep.subr.mxu0 0.0
      %v9745 = vand.u32 %v8667, 4294901760
      %v9746 = vsub.f32 %v8667, %v9745
      %v9747 = vand.u32 %v9746, 4294901760
      %v9748 = vsub.f32 %v9746, %v9747
      %v9749 = vand.u32 %v9748, 4294901760
      %9750 = vmatpush2.xpose.msra.mxu0 %v9749
      %9751 = vmatprep.subr.mxu0 0.0
      %v9752 = vand.u32 %v8664, 4294901760
      %v9753 = vsub.f32 %v8664, %v9752
      %v9754 = vand.u32 %v9753, 4294901760
      %v9755 = vsub.f32 %v9753, %v9754
      %v9756 = vand.u32 %v9755, 4294901760
      %9757 = vmatpush2.xpose.msra.mxu0 %v9756
      %9758 = vmatprep.subr.mxu0 0.0
      %v9759 = vand.u32 %v8661, 4294901760
      %v9760 = vsub.f32 %v8661, %v9759
      %v9761 = vand.u32 %v9760, 4294901760
      %v9762 = vsub.f32 %v9760, %v9761
      %v9763 = vand.u32 %v9762, 4294901760
      %9764 = vmatpush2.xpose.msra.mxu0 %v9763
      %9765 = vmatprep.subr.mxu0 0.0
      %v9766 = vand.u32 %v8658, 4294901760
      %v9767 = vsub.f32 %v8658, %v9766
      %v9768 = vand.u32 %v9767, 4294901760
      %v9769 = vsub.f32 %v9767, %v9768
      %v9770 = vand.u32 %v9769, 4294901760
      %9771 = vmatpush2.xpose.msra.mxu0 %v9770
      %9772 = vmatprep.subr.mxu0 0.0
      %v9773 = vand.u32 %v8655, 4294901760
      %v9774 = vsub.f32 %v8655, %v9773
      %v9775 = vand.u32 %v9774, 4294901760
      %v9776 = vsub.f32 %v9774, %v9775
      %v9777 = vand.u32 %v9776, 4294901760
      %9778 = vmatpush2.xpose.msra.mxu0 %v9777
      %9779 = vmatprep.subr.mxu0 0.0
      %v9780 = vand.u32 %v8652, 4294901760
      %v9781 = vsub.f32 %v8652, %v9780
      %v9782 = vand.u32 %v9781, 4294901760
      %v9783 = vsub.f32 %v9781, %v9782
      %v9784 = vand.u32 %v9783, 4294901760
      %9785 = vmatpush2.xpose.msra.mxu0 %v9784
      %9786 = vmatprep.subr.mxu0 0.0
      %v9787 = vand.u32 %v8649, 4294901760
      %v9788 = vsub.f32 %v8649, %v9787
      %v9789 = vand.u32 %v9788, 4294901760
      %v9790 = vsub.f32 %v9788, %v9789
      %v9791 = vand.u32 %v9790, 4294901760
      %9792 = vmatpush2.xpose.msra.mxu0 %v9791
      %9793 = vmatprep.subr.mxu0 0.0
      %v9794 = vand.u32 %v8646, 4294901760
      %v9795 = vsub.f32 %v8646, %v9794
      %v9796 = vand.u32 %v9795, 4294901760
      %v9797 = vsub.f32 %v9795, %v9796
      %v9798 = vand.u32 %v9797, 4294901760
      %9799 = vmatpush2.xpose.msra.mxu0 %v9798
      %9800 = vmatprep.subr.mxu0 0.0
      %v9801 = vand.u32 %v8643, 4294901760
      %v9802 = vsub.f32 %v8643, %v9801
      %v9803 = vand.u32 %v9802, 4294901760
      %v9804 = vsub.f32 %v9802, %v9803
      %v9805 = vand.u32 %v9804, 4294901760
      %9806 = vmatpush2.xpose.msra.mxu0 %v9805
      %9807 = vmatprep.subr.mxu0 0.0
      %v9808 = vand.u32 %v8640, 4294901760
      %v9809 = vsub.f32 %v8640, %v9808
      %v9810 = vand.u32 %v9809, 4294901760
      %v9811 = vsub.f32 %v9809, %v9810
      %v9812 = vand.u32 %v9811, 4294901760
      %9813 = vmatpush2.xpose.msra.mxu0 %v9812
      %9814 = vmatprep.subr.mxu0 0.0
      %v9815 = vand.u32 %v8637, 4294901760
      %v9816 = vsub.f32 %v8637, %v9815
      %v9817 = vand.u32 %v9816, 4294901760
      %v9818 = vsub.f32 %v9816, %v9817
      %v9819 = vand.u32 %v9818, 4294901760
      %9820 = vmatpush2.xpose.msra.mxu0 %v9819
      %9821 = vmatprep.subr.mxu0 0.0
      %v9822 = vand.u32 %v8634, 4294901760
      %v9823 = vsub.f32 %v8634, %v9822
      %v9824 = vand.u32 %v9823, 4294901760
      %v9825 = vsub.f32 %v9823, %v9824
      %v9826 = vand.u32 %v9825, 4294901760
      %9827 = vmatpush2.xpose.msra.mxu0 %v9826
      %9828 = vmatprep.subr.mxu0 0.0
      %v9829 = vand.u32 %v8631, 4294901760
      %v9830 = vsub.f32 %v8631, %v9829
      %v9831 = vand.u32 %v9830, 4294901760
      %v9832 = vsub.f32 %v9830, %v9831
      %v9833 = vand.u32 %v9832, 4294901760
      %9834 = vmatpush2.xpose.msra.mxu0 %v9833
      %9835 = vmatprep.subr.mxu0 0.0
      %v9836 = vand.u32 %v8628, 4294901760
      %v9837 = vsub.f32 %v8628, %v9836
      %v9838 = vand.u32 %v9837, 4294901760
      %v9839 = vsub.f32 %v9837, %v9838
      %v9840 = vand.u32 %v9839, 4294901760
      %9841 = vmatpush2.xpose.msra.mxu0 %v9840
      %9842 = vmatprep.subr.mxu0 0.0
      %v9843 = vand.u32 %v8625, 4294901760
      %v9844 = vsub.f32 %v8625, %v9843
      %v9845 = vand.u32 %v9844, 4294901760
      %v9846 = vsub.f32 %v9844, %v9845
      %v9847 = vand.u32 %v9846, 4294901760
      %9848 = vmatpush2.xpose.msra.mxu0 %v9847
      %9849 = vmatprep.subr.mxu0 0.0
      %v9850 = vand.u32 %v8622, 4294901760
      %v9851 = vsub.f32 %v8622, %v9850
      %v9852 = vand.u32 %v9851, 4294901760
      %v9853 = vsub.f32 %v9851, %v9852
      %v9854 = vand.u32 %v9853, 4294901760
      %9855 = vmatpush2.xpose.msra.mxu0 %v9854
      %9856 = vmatprep.mubr.f32.mxu0 0.0
      %v9857 = vand.u32 %v8475, 4294901760
      %9858 = vmatmul.mubr.f32.gmra.mxu0 %v9857
      %v9859 = vpop.f32.mrf.mxu0
      %v9860 = vadd.f32 %v9628, %v9859
      %v9861 = vpop.f32.mrf.mxu0
      %v9862 = vadd.f32 %v9630, %v9861
      %9863 = vdwg.mxu0
      %9864 = vmatprep.subr.mxu0 0.0
      %v9865 = vand.u32 %v8619, 4294901760
      %v9866 = vsub.f32 %v8619, %v9865
      %9867 = vmatpush1.xpose.msra.mxu0 %v9866
      %9868 = vmatprep.subr.mxu0 0.0
      %v9869 = vand.u32 %v8616, 4294901760
      %v9870 = vsub.f32 %v8616, %v9869
      %9871 = vmatpush1.xpose.msra.mxu0 %v9870
      %9872 = vmatprep.subr.mxu0 0.0
      %v9873 = vand.u32 %v8613, 4294901760
      %v9874 = vsub.f32 %v8613, %v9873
      %9875 = vmatpush1.xpose.msra.mxu0 %v9874
      %9876 = vmatprep.subr.mxu0 0.0
      %v9877 = vand.u32 %v8610, 4294901760
      %v9878 = vsub.f32 %v8610, %v9877
      %9879 = vmatpush1.xpose.msra.mxu0 %v9878
      %9880 = vmatprep.subr.mxu0 0.0
      %v9881 = vand.u32 %v8607, 4294901760
      %v9882 = vsub.f32 %v8607, %v9881
      %9883 = vmatpush1.xpose.msra.mxu0 %v9882
      %9884 = vmatprep.subr.mxu0 0.0
      %v9885 = vand.u32 %v8604, 4294901760
      %v9886 = vsub.f32 %v8604, %v9885
      %9887 = vmatpush1.xpose.msra.mxu0 %v9886
      %9888 = vmatprep.subr.mxu0 0.0
      %v9889 = vand.u32 %v8601, 4294901760
      %v9890 = vsub.f32 %v8601, %v9889
      %9891 = vmatpush1.xpose.msra.mxu0 %v9890
      %9892 = vmatprep.subr.mxu0 0.0
      %v9893 = vand.u32 %v8598, 4294901760
      %v9894 = vsub.f32 %v8598, %v9893
      %9895 = vmatpush1.xpose.msra.mxu0 %v9894
      %9896 = vmatprep.subr.mxu0 0.0
      %v9897 = vand.u32 %v8595, 4294901760
      %v9898 = vsub.f32 %v8595, %v9897
      %9899 = vmatpush1.xpose.msra.mxu0 %v9898
      %9900 = vmatprep.subr.mxu0 0.0
      %v9901 = vand.u32 %v8592, 4294901760
      %v9902 = vsub.f32 %v8592, %v9901
      %9903 = vmatpush1.xpose.msra.mxu0 %v9902
      %9904 = vmatprep.subr.mxu0 0.0
      %v9905 = vand.u32 %v8589, 4294901760
      %v9906 = vsub.f32 %v8589, %v9905
      %9907 = vmatpush1.xpose.msra.mxu0 %v9906
      %9908 = vmatprep.subr.mxu0 0.0
      %v9909 = vand.u32 %v8586, 4294901760
      %v9910 = vsub.f32 %v8586, %v9909
      %9911 = vmatpush1.xpose.msra.mxu0 %v9910
      %9912 = vmatprep.subr.mxu0 0.0
      %v9913 = vand.u32 %v8583, 4294901760
      %v9914 = vsub.f32 %v8583, %v9913
      %9915 = vmatpush1.xpose.msra.mxu0 %v9914
      %9916 = vmatprep.subr.mxu0 0.0
      %v9917 = vand.u32 %v8580, 4294901760
      %v9918 = vsub.f32 %v8580, %v9917
      %9919 = vmatpush1.xpose.msra.mxu0 %v9918
      %9920 = vmatprep.subr.mxu0 0.0
      %v9921 = vand.u32 %v8577, 4294901760
      %v9922 = vsub.f32 %v8577, %v9921
      %9923 = vmatpush1.xpose.msra.mxu0 %v9922
      %9924 = vmatprep.subr.mxu0 0.0
      %v9925 = vand.u32 %v8574, 4294901760
      %v9926 = vsub.f32 %v8574, %v9925
      %9927 = vmatpush1.xpose.msra.mxu0 %v9926
      %9928 = vmatprep.subr.mxu0 0.0
      %v9929 = vand.u32 %v8667, 4294901760
      %v9930 = vsub.f32 %v8667, %v9929
      %9931 = vmatpush2.xpose.msra.mxu0 %v9930
      %9932 = vmatprep.subr.mxu0 0.0
      %v9933 = vand.u32 %v8664, 4294901760
      %v9934 = vsub.f32 %v8664, %v9933
      %9935 = vmatpush2.xpose.msra.mxu0 %v9934
      %9936 = vmatprep.subr.mxu0 0.0
      %v9937 = vand.u32 %v8661, 4294901760
      %v9938 = vsub.f32 %v8661, %v9937
      %9939 = vmatpush2.xpose.msra.mxu0 %v9938
      %9940 = vmatprep.subr.mxu0 0.0
      %v9941 = vand.u32 %v8658, 4294901760
      %v9942 = vsub.f32 %v8658, %v9941
      %9943 = vmatpush2.xpose.msra.mxu0 %v9942
      %9944 = vmatprep.subr.mxu0 0.0
      %v9945 = vand.u32 %v8655, 4294901760
      %v9946 = vsub.f32 %v8655, %v9945
      %9947 = vmatpush2.xpose.msra.mxu0 %v9946
      %9948 = vmatprep.subr.mxu0 0.0
      %v9949 = vand.u32 %v8652, 4294901760
      %v9950 = vsub.f32 %v8652, %v9949
      %9951 = vmatpush2.xpose.msra.mxu0 %v9950
      %9952 = vmatprep.subr.mxu0 0.0
      %v9953 = vand.u32 %v8649, 4294901760
      %v9954 = vsub.f32 %v8649, %v9953
      %9955 = vmatpush2.xpose.msra.mxu0 %v9954
      %9956 = vmatprep.subr.mxu0 0.0
      %v9957 = vand.u32 %v8646, 4294901760
      %v9958 = vsub.f32 %v8646, %v9957
      %9959 = vmatpush2.xpose.msra.mxu0 %v9958
      %9960 = vmatprep.subr.mxu0 0.0
      %v9961 = vand.u32 %v8643, 4294901760
      %v9962 = vsub.f32 %v8643, %v9961
      %9963 = vmatpush2.xpose.msra.mxu0 %v9962
      %9964 = vmatprep.subr.mxu0 0.0
      %v9965 = vand.u32 %v8640, 4294901760
      %v9966 = vsub.f32 %v8640, %v9965
      %9967 = vmatpush2.xpose.msra.mxu0 %v9966
      %9968 = vmatprep.subr.mxu0 0.0
      %v9969 = vand.u32 %v8637, 4294901760
      %v9970 = vsub.f32 %v8637, %v9969
      %9971 = vmatpush2.xpose.msra.mxu0 %v9970
      %9972 = vmatprep.subr.mxu0 0.0
      %v9973 = vand.u32 %v8634, 4294901760
      %v9974 = vsub.f32 %v8634, %v9973
      %9975 = vmatpush2.xpose.msra.mxu0 %v9974
      %9976 = vmatprep.subr.mxu0 0.0
      %v9977 = vand.u32 %v8631, 4294901760
      %v9978 = vsub.f32 %v8631, %v9977
      %9979 = vmatpush2.xpose.msra.mxu0 %v9978
      %9980 = vmatprep.subr.mxu0 0.0
      %v9981 = vand.u32 %v8628, 4294901760
      %v9982 = vsub.f32 %v8628, %v9981
      %9983 = vmatpush2.xpose.msra.mxu0 %v9982
      %9984 = vmatprep.subr.mxu0 0.0
      %v9985 = vand.u32 %v8625, 4294901760
      %v9986 = vsub.f32 %v8625, %v9985
      %9987 = vmatpush2.xpose.msra.mxu0 %v9986
      %9988 = vmatprep.subr.mxu0 0.0
      %v9989 = vand.u32 %v8622, 4294901760
      %v9990 = vsub.f32 %v8622, %v9989
      %9991 = vmatpush2.xpose.msra.mxu0 %v9990
      %9992 = vmatprep.mubr.f32.mxu0 0.0
      %v9993 = vand.u32 %v8475, 4294901760
      %v9994 = vsub.f32 %v8475, %v9993
      %9995 = vmatmul.mubr.f32.gmra.mxu0 %v9994
      %v9996 = vpop.f32.mrf.mxu0
      %v9997 = vadd.f32 %v9860, %v9996
      %v9998 = vpop.f32.mrf.mxu0
      %v9999 = vadd.f32 %v9862, %v9998
      %10000 = vdwg.mxu0
      %10001 = vmatprep.subr.mxu0 0.0
      %v10002 = vand.u32 %v8619, 4294901760
      %10003 = vmatpush1.xpose.msra.mxu0 %v10002
      %10004 = vmatprep.subr.mxu0 0.0
      %v10005 = vand.u32 %v8616, 4294901760
      %10006 = vmatpush1.xpose.msra.mxu0 %v10005
      %10007 = vmatprep.subr.mxu0 0.0
      %v10008 = vand.u32 %v8613, 4294901760
      %10009 = vmatpush1.xpose.msra.mxu0 %v10008
      %10010 = vmatprep.subr.mxu0 0.0
      %v10011 = vand.u32 %v8610, 4294901760
      %10012 = vmatpush1.xpose.msra.mxu0 %v10011
      %10013 = vmatprep.subr.mxu0 0.0
      %v10014 = vand.u32 %v8607, 4294901760
      %10015 = vmatpush1.xpose.msra.mxu0 %v10014
      %10016 = vmatprep.subr.mxu0 0.0
      %v10017 = vand.u32 %v8604, 4294901760
      %10018 = vmatpush1.xpose.msra.mxu0 %v10017
      %10019 = vmatprep.subr.mxu0 0.0
      %v10020 = vand.u32 %v8601, 4294901760
      %10021 = vmatpush1.xpose.msra.mxu0 %v10020
      %10022 = vmatprep.subr.mxu0 0.0
      %v10023 = vand.u32 %v8598, 4294901760
      %10024 = vmatpush1.xpose.msra.mxu0 %v10023
      %10025 = vmatprep.subr.mxu0 0.0
      %v10026 = vand.u32 %v8595, 4294901760
      %10027 = vmatpush1.xpose.msra.mxu0 %v10026
      %10028 = vmatprep.subr.mxu0 0.0
      %v10029 = vand.u32 %v8592, 4294901760
      %10030 = vmatpush1.xpose.msra.mxu0 %v10029
      %10031 = vmatprep.subr.mxu0 0.0
      %v10032 = vand.u32 %v8589, 4294901760
      %10033 = vmatpush1.xpose.msra.mxu0 %v10032
      %10034 = vmatprep.subr.mxu0 0.0
      %v10035 = vand.u32 %v8586, 4294901760
      %10036 = vmatpush1.xpose.msra.mxu0 %v10035
      %10037 = vmatprep.subr.mxu0 0.0
      %v10038 = vand.u32 %v8583, 4294901760
      %10039 = vmatpush1.xpose.msra.mxu0 %v10038
      %10040 = vmatprep.subr.mxu0 0.0
      %v10041 = vand.u32 %v8580, 4294901760
      %10042 = vmatpush1.xpose.msra.mxu0 %v10041
      %10043 = vmatprep.subr.mxu0 0.0
      %v10044 = vand.u32 %v8577, 4294901760
      %10045 = vmatpush1.xpose.msra.mxu0 %v10044
      %10046 = vmatprep.subr.mxu0 0.0
      %v10047 = vand.u32 %v8574, 4294901760
      %10048 = vmatpush1.xpose.msra.mxu0 %v10047
      %10049 = vmatprep.subr.mxu0 0.0
      %v10050 = vand.u32 %v8667, 4294901760
      %10051 = vmatpush2.xpose.msra.mxu0 %v10050
      %10052 = vmatprep.subr.mxu0 0.0
      %v10053 = vand.u32 %v8664, 4294901760
      %10054 = vmatpush2.xpose.msra.mxu0 %v10053
      %10055 = vmatprep.subr.mxu0 0.0
      %v10056 = vand.u32 %v8661, 4294901760
      %10057 = vmatpush2.xpose.msra.mxu0 %v10056
      %10058 = vmatprep.subr.mxu0 0.0
      %v10059 = vand.u32 %v8658, 4294901760
      %10060 = vmatpush2.xpose.msra.mxu0 %v10059
      %10061 = vmatprep.subr.mxu0 0.0
      %v10062 = vand.u32 %v8655, 4294901760
      %10063 = vmatpush2.xpose.msra.mxu0 %v10062
      %10064 = vmatprep.subr.mxu0 0.0
      %v10065 = vand.u32 %v8652, 4294901760
      %10066 = vmatpush2.xpose.msra.mxu0 %v10065
      %10067 = vmatprep.subr.mxu0 0.0
      %v10068 = vand.u32 %v8649, 4294901760
      %10069 = vmatpush2.xpose.msra.mxu0 %v10068
      %10070 = vmatprep.subr.mxu0 0.0
      %v10071 = vand.u32 %v8646, 4294901760
      %10072 = vmatpush2.xpose.msra.mxu0 %v10071
      %10073 = vmatprep.subr.mxu0 0.0
      %v10074 = vand.u32 %v8643, 4294901760
      %10075 = vmatpush2.xpose.msra.mxu0 %v10074
      %10076 = vmatprep.subr.mxu0 0.0
      %v10077 = vand.u32 %v8640, 4294901760
      %10078 = vmatpush2.xpose.msra.mxu0 %v10077
      %10079 = vmatprep.subr.mxu0 0.0
      %v10080 = vand.u32 %v8637, 4294901760
      %10081 = vmatpush2.xpose.msra.mxu0 %v10080
      %10082 = vmatprep.subr.mxu0 0.0
      %v10083 = vand.u32 %v8634, 4294901760
      %10084 = vmatpush2.xpose.msra.mxu0 %v10083
      %10085 = vmatprep.subr.mxu0 0.0
      %v10086 = vand.u32 %v8631, 4294901760
      %10087 = vmatpush2.xpose.msra.mxu0 %v10086
      %10088 = vmatprep.subr.mxu0 0.0
      %v10089 = vand.u32 %v8628, 4294901760
      %10090 = vmatpush2.xpose.msra.mxu0 %v10089
      %10091 = vmatprep.subr.mxu0 0.0
      %v10092 = vand.u32 %v8625, 4294901760
      %10093 = vmatpush2.xpose.msra.mxu0 %v10092
      %10094 = vmatprep.subr.mxu0 0.0
      %v10095 = vand.u32 %v8622, 4294901760
      %10096 = vmatpush2.xpose.msra.mxu0 %v10095
      %10097 = vmatprep.mubr.f32.mxu0 0.0
      %v10098 = vand.u32 %v8475, 4294901760
      %v10099 = vsub.f32 %v8475, %v10098
      %v10100 = vand.u32 %v10099, 4294901760
      %10101 = vmatmul.mubr.f32.gmra.mxu0 %v10100
      %v10102 = vpop.f32.mrf.mxu0
      %v10103 = vadd.f32 %v9997, %v10102
      %v10104 = vpop.f32.mrf.mxu0
      %v10105 = vadd.f32 %v9999, %v10104
      %10106 = vdwg.mxu0
      %10107 = vmatprep.subr.mxu0 0.0
      %v10108 = vand.u32 %v8619, 4294901760
      %v10109 = vsub.f32 %v8619, %v10108
      %v10110 = vand.u32 %v10109, 4294901760
      %10111 = vmatpush1.xpose.msra.mxu0 %v10110
      %10112 = vmatprep.subr.mxu0 0.0
      %v10113 = vand.u32 %v8616, 4294901760
      %v10114 = vsub.f32 %v8616, %v10113
      %v10115 = vand.u32 %v10114, 4294901760
      %10116 = vmatpush1.xpose.msra.mxu0 %v10115
      %10117 = vmatprep.subr.mxu0 0.0
      %v10118 = vand.u32 %v8613, 4294901760
      %v10119 = vsub.f32 %v8613, %v10118
      %v10120 = vand.u32 %v10119, 4294901760
      %10121 = vmatpush1.xpose.msra.mxu0 %v10120
      %10122 = vmatprep.subr.mxu0 0.0
      %v10123 = vand.u32 %v8610, 4294901760
      %v10124 = vsub.f32 %v8610, %v10123
      %v10125 = vand.u32 %v10124, 4294901760
      %10126 = vmatpush1.xpose.msra.mxu0 %v10125
      %10127 = vmatprep.subr.mxu0 0.0
      %v10128 = vand.u32 %v8607, 4294901760
      %v10129 = vsub.f32 %v8607, %v10128
      %v10130 = vand.u32 %v10129, 4294901760
      %10131 = vmatpush1.xpose.msra.mxu0 %v10130
      %10132 = vmatprep.subr.mxu0 0.0
      %v10133 = vand.u32 %v8604, 4294901760
      %v10134 = vsub.f32 %v8604, %v10133
      %v10135 = vand.u32 %v10134, 4294901760
      %10136 = vmatpush1.xpose.msra.mxu0 %v10135
      %10137 = vmatprep.subr.mxu0 0.0
      %v10138 = vand.u32 %v8601, 4294901760
      %v10139 = vsub.f32 %v8601, %v10138
      %v10140 = vand.u32 %v10139, 4294901760
      %10141 = vmatpush1.xpose.msra.mxu0 %v10140
      %10142 = vmatprep.subr.mxu0 0.0
      %v10143 = vand.u32 %v8598, 4294901760
      %v10144 = vsub.f32 %v8598, %v10143
      %v10145 = vand.u32 %v10144, 4294901760
      %10146 = vmatpush1.xpose.msra.mxu0 %v10145
      %10147 = vmatprep.subr.mxu0 0.0
      %v10148 = vand.u32 %v8595, 4294901760
      %v10149 = vsub.f32 %v8595, %v10148
      %v10150 = vand.u32 %v10149, 4294901760
      %10151 = vmatpush1.xpose.msra.mxu0 %v10150
      %10152 = vmatprep.subr.mxu0 0.0
      %v10153 = vand.u32 %v8592, 4294901760
      %v10154 = vsub.f32 %v8592, %v10153
      %v10155 = vand.u32 %v10154, 4294901760
      %10156 = vmatpush1.xpose.msra.mxu0 %v10155
      %10157 = vmatprep.subr.mxu0 0.0
      %v10158 = vand.u32 %v8589, 4294901760
      %v10159 = vsub.f32 %v8589, %v10158
      %v10160 = vand.u32 %v10159, 4294901760
      %10161 = vmatpush1.xpose.msra.mxu0 %v10160
      %10162 = vmatprep.subr.mxu0 0.0
      %v10163 = vand.u32 %v8586, 4294901760
      %v10164 = vsub.f32 %v8586, %v10163
      %v10165 = vand.u32 %v10164, 4294901760
      %10166 = vmatpush1.xpose.msra.mxu0 %v10165
      %10167 = vmatprep.subr.mxu0 0.0
      %v10168 = vand.u32 %v8583, 4294901760
      %v10169 = vsub.f32 %v8583, %v10168
      %v10170 = vand.u32 %v10169, 4294901760
      %10171 = vmatpush1.xpose.msra.mxu0 %v10170
      %10172 = vmatprep.subr.mxu0 0.0
      %v10173 = vand.u32 %v8580, 4294901760
      %v10174 = vsub.f32 %v8580, %v10173
      %v10175 = vand.u32 %v10174, 4294901760
      %10176 = vmatpush1.xpose.msra.mxu0 %v10175
      %10177 = vmatprep.subr.mxu0 0.0
      %v10178 = vand.u32 %v8577, 4294901760
      %v10179 = vsub.f32 %v8577, %v10178
      %v10180 = vand.u32 %v10179, 4294901760
      %10181 = vmatpush1.xpose.msra.mxu0 %v10180
      %10182 = vmatprep.subr.mxu0 0.0
      %v10183 = vand.u32 %v8574, 4294901760
      %v10184 = vsub.f32 %v8574, %v10183
      %v10185 = vand.u32 %v10184, 4294901760
      %10186 = vmatpush1.xpose.msra.mxu0 %v10185
      %10187 = vmatprep.subr.mxu0 0.0
      %v10188 = vand.u32 %v8667, 4294901760
      %v10189 = vsub.f32 %v8667, %v10188
      %v10190 = vand.u32 %v10189, 4294901760
      %10191 = vmatpush2.xpose.msra.mxu0 %v10190
      %10192 = vmatprep.subr.mxu0 0.0
      %v10193 = vand.u32 %v8664, 4294901760
      %v10194 = vsub.f32 %v8664, %v10193
      %v10195 = vand.u32 %v10194, 4294901760
      %10196 = vmatpush2.xpose.msra.mxu0 %v10195
      %10197 = vmatprep.subr.mxu0 0.0
      %v10198 = vand.u32 %v8661, 4294901760
      %v10199 = vsub.f32 %v8661, %v10198
      %v10200 = vand.u32 %v10199, 4294901760
      %10201 = vmatpush2.xpose.msra.mxu0 %v10200
      %10202 = vmatprep.subr.mxu0 0.0
      %v10203 = vand.u32 %v8658, 4294901760
      %v10204 = vsub.f32 %v8658, %v10203
      %v10205 = vand.u32 %v10204, 4294901760
      %10206 = vmatpush2.xpose.msra.mxu0 %v10205
      %10207 = vmatprep.subr.mxu0 0.0
      %v10208 = vand.u32 %v8655, 4294901760
      %v10209 = vsub.f32 %v8655, %v10208
      %v10210 = vand.u32 %v10209, 4294901760
      %10211 = vmatpush2.xpose.msra.mxu0 %v10210
      %10212 = vmatprep.subr.mxu0 0.0
      %v10213 = vand.u32 %v8652, 4294901760
      %v10214 = vsub.f32 %v8652, %v10213
      %v10215 = vand.u32 %v10214, 4294901760
      %10216 = vmatpush2.xpose.msra.mxu0 %v10215
      %10217 = vmatprep.subr.mxu0 0.0
      %v10218 = vand.u32 %v8649, 4294901760
      %v10219 = vsub.f32 %v8649, %v10218
      %v10220 = vand.u32 %v10219, 4294901760
      %10221 = vmatpush2.xpose.msra.mxu0 %v10220
      %10222 = vmatprep.subr.mxu0 0.0
      %v10223 = vand.u32 %v8646, 4294901760
      %v10224 = vsub.f32 %v8646, %v10223
      %v10225 = vand.u32 %v10224, 4294901760
      %10226 = vmatpush2.xpose.msra.mxu0 %v10225
      %10227 = vmatprep.subr.mxu0 0.0
      %v10228 = vand.u32 %v8643, 4294901760
      %v10229 = vsub.f32 %v8643, %v10228
      %v10230 = vand.u32 %v10229, 4294901760
      %10231 = vmatpush2.xpose.msra.mxu0 %v10230
      %10232 = vmatprep.subr.mxu0 0.0
      %v10233 = vand.u32 %v8640, 4294901760
      %v10234 = vsub.f32 %v8640, %v10233
      %v10235 = vand.u32 %v10234, 4294901760
      %10236 = vmatpush2.xpose.msra.mxu0 %v10235
      %10237 = vmatprep.subr.mxu0 0.0
      %v10238 = vand.u32 %v8637, 4294901760
      %v10239 = vsub.f32 %v8637, %v10238
      %v10240 = vand.u32 %v10239, 4294901760
      %10241 = vmatpush2.xpose.msra.mxu0 %v10240
      %10242 = vmatprep.subr.mxu0 0.0
      %v10243 = vand.u32 %v8634, 4294901760
      %v10244 = vsub.f32 %v8634, %v10243
      %v10245 = vand.u32 %v10244, 4294901760
      %10246 = vmatpush2.xpose.msra.mxu0 %v10245
      %10247 = vmatprep.subr.mxu0 0.0
      %v10248 = vand.u32 %v8631, 4294901760
      %v10249 = vsub.f32 %v8631, %v10248
      %v10250 = vand.u32 %v10249, 4294901760
      %10251 = vmatpush2.xpose.msra.mxu0 %v10250
      %10252 = vmatprep.subr.mxu0 0.0
      %v10253 = vand.u32 %v8628, 4294901760
      %v10254 = vsub.f32 %v8628, %v10253
      %v10255 = vand.u32 %v10254, 4294901760
      %10256 = vmatpush2.xpose.msra.mxu0 %v10255
      %10257 = vmatprep.subr.mxu0 0.0
      %v10258 = vand.u32 %v8625, 4294901760
      %v10259 = vsub.f32 %v8625, %v10258
      %v10260 = vand.u32 %v10259, 4294901760
      %10261 = vmatpush2.xpose.msra.mxu0 %v10260
      %10262 = vmatprep.subr.mxu0 0.0
      %v10263 = vand.u32 %v8622, 4294901760
      %v10264 = vsub.f32 %v8622, %v10263
      %v10265 = vand.u32 %v10264, 4294901760
      %10266 = vmatpush2.xpose.msra.mxu0 %v10265
      %10267 = vmatprep.mubr.f32.mxu0 0.0
      %v10268 = vand.u32 %v8475, 4294901760
      %10269 = vmatmul.mubr.f32.gmra.mxu0 %v10268
      %v10270 = vpop.f32.mrf.mxu0
      %v10271 = vadd.f32 %v10103, %v10270
      %v10272 = vpop.f32.mrf.mxu0
      %v10273 = vadd.f32 %v10105, %v10272
      %10274 = vdwg.mxu0
      %10275 = vmatprep.subr.mxu0 0.0
      %v10276 = vand.u32 %v8619, 4294901760
      %10277 = vmatpush1.xpose.msra.mxu0 %v10276
      %10278 = vmatprep.subr.mxu0 0.0
      %v10279 = vand.u32 %v8616, 4294901760
      %10280 = vmatpush1.xpose.msra.mxu0 %v10279
      %10281 = vmatprep.subr.mxu0 0.0
      %v10282 = vand.u32 %v8613, 4294901760
      %10283 = vmatpush1.xpose.msra.mxu0 %v10282
      %10284 = vmatprep.subr.mxu0 0.0
      %v10285 = vand.u32 %v8610, 4294901760
      %10286 = vmatpush1.xpose.msra.mxu0 %v10285
      %10287 = vmatprep.subr.mxu0 0.0
      %v10288 = vand.u32 %v8607, 4294901760
      %10289 = vmatpush1.xpose.msra.mxu0 %v10288
      %10290 = vmatprep.subr.mxu0 0.0
      %v10291 = vand.u32 %v8604, 4294901760
      %10292 = vmatpush1.xpose.msra.mxu0 %v10291
      %10293 = vmatprep.subr.mxu0 0.0
      %v10294 = vand.u32 %v8601, 4294901760
      %10295 = vmatpush1.xpose.msra.mxu0 %v10294
      %10296 = vmatprep.subr.mxu0 0.0
      %v10297 = vand.u32 %v8598, 4294901760
      %10298 = vmatpush1.xpose.msra.mxu0 %v10297
      %10299 = vmatprep.subr.mxu0 0.0
      %v10300 = vand.u32 %v8595, 4294901760
      %10301 = vmatpush1.xpose.msra.mxu0 %v10300
      %10302 = vmatprep.subr.mxu0 0.0
      %v10303 = vand.u32 %v8592, 4294901760
      %10304 = vmatpush1.xpose.msra.mxu0 %v10303
      %10305 = vmatprep.subr.mxu0 0.0
      %v10306 = vand.u32 %v8589, 4294901760
      %10307 = vmatpush1.xpose.msra.mxu0 %v10306
      %10308 = vmatprep.subr.mxu0 0.0
      %v10309 = vand.u32 %v8586, 4294901760
      %10310 = vmatpush1.xpose.msra.mxu0 %v10309
      %10311 = vmatprep.subr.mxu0 0.0
      %v10312 = vand.u32 %v8583, 4294901760
      %10313 = vmatpush1.xpose.msra.mxu0 %v10312
      %10314 = vmatprep.subr.mxu0 0.0
      %v10315 = vand.u32 %v8580, 4294901760
      %10316 = vmatpush1.xpose.msra.mxu0 %v10315
      %10317 = vmatprep.subr.mxu0 0.0
      %v10318 = vand.u32 %v8577, 4294901760
      %10319 = vmatpush1.xpose.msra.mxu0 %v10318
      %10320 = vmatprep.subr.mxu0 0.0
      %v10321 = vand.u32 %v8574, 4294901760
      %10322 = vmatpush1.xpose.msra.mxu0 %v10321
      %10323 = vmatprep.subr.mxu0 0.0
      %v10324 = vand.u32 %v8667, 4294901760
      %10325 = vmatpush2.xpose.msra.mxu0 %v10324
      %10326 = vmatprep.subr.mxu0 0.0
      %v10327 = vand.u32 %v8664, 4294901760
      %10328 = vmatpush2.xpose.msra.mxu0 %v10327
      %10329 = vmatprep.subr.mxu0 0.0
      %v10330 = vand.u32 %v8661, 4294901760
      %10331 = vmatpush2.xpose.msra.mxu0 %v10330
      %10332 = vmatprep.subr.mxu0 0.0
      %v10333 = vand.u32 %v8658, 4294901760
      %10334 = vmatpush2.xpose.msra.mxu0 %v10333
      %10335 = vmatprep.subr.mxu0 0.0
      %v10336 = vand.u32 %v8655, 4294901760
      %10337 = vmatpush2.xpose.msra.mxu0 %v10336
      %10338 = vmatprep.subr.mxu0 0.0
      %v10339 = vand.u32 %v8652, 4294901760
      %10340 = vmatpush2.xpose.msra.mxu0 %v10339
      %10341 = vmatprep.subr.mxu0 0.0
      %v10342 = vand.u32 %v8649, 4294901760
      %10343 = vmatpush2.xpose.msra.mxu0 %v10342
      %10344 = vmatprep.subr.mxu0 0.0
      %v10345 = vand.u32 %v8646, 4294901760
      %10346 = vmatpush2.xpose.msra.mxu0 %v10345
      %10347 = vmatprep.subr.mxu0 0.0
      %v10348 = vand.u32 %v8643, 4294901760
      %10349 = vmatpush2.xpose.msra.mxu0 %v10348
      %10350 = vmatprep.subr.mxu0 0.0
      %v10351 = vand.u32 %v8640, 4294901760
      %10352 = vmatpush2.xpose.msra.mxu0 %v10351
      %10353 = vmatprep.subr.mxu0 0.0
      %v10354 = vand.u32 %v8637, 4294901760
      %10355 = vmatpush2.xpose.msra.mxu0 %v10354
      %10356 = vmatprep.subr.mxu0 0.0
      %v10357 = vand.u32 %v8634, 4294901760
      %10358 = vmatpush2.xpose.msra.mxu0 %v10357
      %10359 = vmatprep.subr.mxu0 0.0
      %v10360 = vand.u32 %v8631, 4294901760
      %10361 = vmatpush2.xpose.msra.mxu0 %v10360
      %10362 = vmatprep.subr.mxu0 0.0
      %v10363 = vand.u32 %v8628, 4294901760
      %10364 = vmatpush2.xpose.msra.mxu0 %v10363
      %10365 = vmatprep.subr.mxu0 0.0
      %v10366 = vand.u32 %v8625, 4294901760
      %10367 = vmatpush2.xpose.msra.mxu0 %v10366
      %10368 = vmatprep.subr.mxu0 0.0
      %v10369 = vand.u32 %v8622, 4294901760
      %10370 = vmatpush2.xpose.msra.mxu0 %v10369
      %10371 = vmatprep.mubr.f32.mxu0 0.0
      %v10372 = vand.u32 %v8475, 4294901760
      %10373 = vmatmul.mubr.f32.gmra.mxu0 %v10372
      %v10374 = vpop.f32.mrf.mxu0
      %v10375 = vadd.f32 %v10271, %v10374
      %v10376 = vpop.f32.mrf.mxu0
      %v10377 = vadd.f32 %v10273, %v10376
      %10378 = vdwg.mxu0
      %v10379 = vmax.f32 %v9520, 0.0
      %v10380 = vmax.f32 %v9522, 0.0
      %v10381 = vmax.f32 %v10375, 0.0
      %v10382 = vmax.f32 %v10377, 0.0
      %v10383 = vand.u32 2147483647, %v9520
      %v10384 = vand.u32 2147483647, %v9522
      %v10385 = vand.u32 2147483647, %v10375
      %v10386 = vand.u32 2147483647, %v10377
      %v10387 = vsub.f32 0.0, %v10383
      %v10388 = vsub.f32 0.0, %v10384
      %v10389 = vsub.f32 0.0, %v10385
      %v10390 = vsub.f32 0.0, %v10386
      %v10391 = vmul.f32 %v10387, 1.442695
      %v10392 = vpow.pop %v10391
      %v10393 = vmul.f32 %v10388, 1.442695
      %v10394 = vpow.pop %v10393
      %v10395 = vmul.f32 %v10389, 1.442695
      %v10396 = vpow.pop %v10395
      %v10397 = vmul.f32 %v10390, 1.442695
      %v10398 = vpow.pop %v10397
      %v10399 = vadd.f32 %v10392, 1.0
      %v10400 = vadd.f32 %v10394, 1.0
      %v10401 = vadd.f32 %v10396, 1.0
      %v10402 = vadd.f32 %v10398, 1.0
      %v10403 = vlog2.pop %v10399
      %v10404 = vmul.f32 %v10403, 0.6931472
      %v10405 = vlog2.pop %v10400
      %v10406 = vmul.f32 %v10405, 0.6931472
      %v10407 = vlog2.pop %v10401
      %v10408 = vmul.f32 %v10407, 0.6931472
      %v10409 = vlog2.pop %v10402
      %v10410 = vmul.f32 %v10409, 0.6931472
      %v10411 = vadd.f32 %v10379, %v10404
      %v10412 = vadd.f32 %v10380, %v10406
      %v10413 = vadd.f32 %v10381, %v10408
      %v10414 = vadd.f32 %v10382, %v10410
      %v10415 = vmul.f32 %v10411, 1e+08
      %v10416 = vmul.f32 %v10412, 1e+08
      %v10417 = vmul.f32 %v10413, 1e+08
      %v10418 = vmul.f32 %v10414, 1e+08
      %v10423 = vcombine.low %v10415, %v10416
      %v10424 = vcombine.low %v10417, %v10418
      %v10426 = vunpack.c.l.s4 1966171168
      %v10427 = vunpack.c.0.s8 %v10426
      %v10428 = vlaneseq
      %v10429 = vshrl.u32 %v10428, 7
      %v10430 = vsub.s32 %v10427, %v10429
      %v10431 = vrot.slane %v10423, %v10430
      %v10433 = vunpack.c.l.s4 1966171168
      %v10434 = vunpack.c.0.s8 %v10433
      %v10435 = vlaneseq
      %v10436 = vshrl.u32 %v10435, 7
      %v10437 = vsub.s32 %v10434, %v10436
      %v10438 = vrot.slane %v10424, %v10437
      %v10439 = vcombine.low %v10431, %v10438
      %v10441 = vunpack.c.l.s4 1966171168
      %v10442 = vunpack.c.0.s8 %v10441
      %v10443 = vlaneseq
      %v10444 = vshrl.u32 %v10443, 7
      %v10445 = vsub.s32 %v10442, %v10444
      %v10446 = vrot.slane %v10439, %v10445
      %v10448 = vlaneseq
      %vm10449 = vcmp.ge.s32.totalorder %v10448, 0
      %vm10450 = vcmp.lt.s32.totalorder %v10448, 512
      %vm10451 = vmand %vm10449, %vm10450
      %10452 = vst.msk [vmem:[%s299] sm:$0xf] %vm10451, %v10446
      %p10453 = scmp.lt.s32.totalorder %s19, 1
      %s10454 = scalar_select %p10453, %s19, 1
      %s10455 = smul.addr %s10454, 4
      %s10456 = scalar_lea.vmem %s7, %s10455
      // Predicated region
      $region49: #{my_model_forward.2} parent=47 // pred_check
        %p10457 = pneg %p189
      $region50: #{my_model_forward.2} parent=47 // pred_check_branch
        %10459 = sbr.rel (%p10457) target = $region52
      $region51: #{my_model_forward.2} parent=47 // pred_region
        _
      $region52: #{my_model_forward.2} parent=47 // pred_fallthru
        _
    $region48: #{my_model_forward.2} parent=5 // pred_fallthru
      _
    %p10460 = scmp.le.s32.totalorder 2, %s14
    // Predicated region
    $region53: #{my_model_forward.2} parent=5 // pred_check
      %p10461 = pneg %p10460
    $region54: #{my_model_forward.2} parent=5 // pred_check_branch
      %10463 = sbr.rel (%p10461) target = $region56
    $region55: #{my_model_forward.2} parent=5 // pred_region
      %s10464 = ssub.s32 %s14, 2
      // Predicated region
      $region57: #{my_model_forward.2} parent=55 // pred_check
        %p10465 = pneg %p195
      $region58: #{my_model_forward.2} parent=55 // pred_check_branch
        %10467 = sbr.rel (%p10465) target = $region60
      $region59: #{my_model_forward.2} parent=55 // pred_region
        %p10468 = scmp.lt.s32.totalorder %s20, 1
        %s10469 = scalar_select %p10468, %s20, 1
        %s10470 = smul.addr %s10469, 4
        %s10471 = scalar_lea.vmem %s7, %s10470
      $region60: #{my_model_forward.2} parent=55 // pred_fallthru
        _
    $region56: #{my_model_forward.2} parent=5 // pred_fallthru
      _
  $region6: #{my_model_forward.2} parent=0 // loop_footer
    %s18 = sadd.s32 1, %s14
  $region7: #{my_model_forward.2} parent=0 // loop_footer_branch
    %13 = sbr.rel target = $region3
  $region8: #{my_model_forward.2} parent=0 // loop_exit
    _

</llo_original>
